<compile_context>
chip_gen: v5e
topology: v5e:2x2
jax: 0.10.0
libtpu: 0.0.40
codegen_flags: <defaults>
</compile_context>

<pallas_src>
import functools

import jax
import jax.numpy as jnp
from jax.experimental import pallas as pl
from jax.experimental.pallas import tpu as pltpu

Z_SIZE = 100
BN_EPS = 1e-5
K = 4  # kernel size of every ConvTranspose2d in the module


def _cdiv(a, b):
    return -(-a // b)


def _round_up(a, m):
    return _cdiv(a, m) * m


def _vmem_limit_bytes():
    """Generation-aware scoped-VMEM limit: ~48 MiB on 64 MiB parts (v7x),
    ~96 MiB on 128 MiB parts (v5e/v6e)."""
    cap = 128 * 1024 * 1024
    try:
        cap = int(pltpu.get_tpu_info().vmem_capacity_bytes)
    except Exception:
        pass
    return int(min(max(cap - 16 * 1024 * 1024, 16 * 1024 * 1024),
                   96 * 1024 * 1024))


# ------------------------------ Pallas kernels ------------------------------ #
def _fused_matmul_kernel(x_ref, w_ref, s_ref, b_ref, o_ref, *, act):
    # (tm, Kd)bf16 @ (Kd, N)bf16 on the MXU with f32 accumulation, fused
    # per-column affine (eval BatchNorm) + activation on the VPU/EUP.
    y = jnp.dot(x_ref[...], w_ref[...], preferred_element_type=jnp.float32)
    y = y * s_ref[...] + b_ref[...]
    if act == "relu":
        y = jnp.maximum(y, 0.0)
    elif act == "tanh":
        y = jnp.tanh(y)
    o_ref[...] = y.astype(o_ref.dtype)


def _head_kernel(x_ref, wfc_ref, bfc_ref, w1_ref, s1_ref, b1_ref, o_ref):
    # Linear(101,384) + ConvTranspose2d(384,192,4,1,0)-as-matmul + BN + ReLU,
    # fused into one kernel (two MXU dots, no HBM round trip in between).
    fc = jnp.dot(x_ref[...], wfc_ref[...], preferred_element_type=jnp.float32)
    fc = fc + bfc_ref[...]
    y = jnp.dot(fc.astype(jnp.bfloat16), w1_ref[...],
                preferred_element_type=jnp.float32)
    y = jnp.maximum(y * s1_ref[...] + b1_ref[...], 0.0)
    o_ref[...] = y.astype(o_ref.dtype)


# ------------------------------ fused matmul -------------------------------- #
def _pick_tm(M, Kd, N, vmem_limit):
    """Single whole-M tile whenever the double-buffered blocks fit the VMEM
    budget (per-step overhead ~0.35 us dwarfs the MXU work at these sizes);
    otherwise split into 256-row multiples (fills v6e/v7x's 256-wide MXU and
    is a 128 multiple for v5e)."""
    budget = vmem_limit // 2
    fixed = 4 * Kd * N + 32 * N            # double-buffered bf16 weight + scale/bias
    row_bytes = 4 * (Kd + N)               # double-buffered bf16 in + out blocks
    rows_fit = max(256, (budget - fixed) // row_bytes)
    if M <= rows_fit:
        return _round_up(M, 8)
    return int(max(256, (rows_fit // 256) * 256))


def fused_matmul(x, w, scale, bias, act=None, out_dtype=jnp.bfloat16):
    """y = act((x @ w) * scale + bias), tiled over rows of x (bf16 in, f32 acc).
    N must be a multiple of 128 (lane-dense stores)."""
    M, Kd = x.shape
    N = w.shape[1]
    vmem_limit = _vmem_limit_bytes()
    tm = _pick_tm(M, Kd, N, vmem_limit)
    Mp = _round_up(M, tm)
    xp = x.astype(jnp.bfloat16)
    if Mp != M:
        xp = jnp.pad(xp, ((0, Mp - M), (0, 0)))
    n_steps = Mp // tm
    out = pl.pallas_call(
        functools.partial(_fused_matmul_kernel, act=act),
        out_shape=jax.ShapeDtypeStruct((Mp, N), out_dtype),
        grid=(n_steps,),
        in_specs=[
            pl.BlockSpec((tm, Kd), lambda i: (i, 0)),
            pl.BlockSpec((Kd, N), lambda i: (0, 0)),
            pl.BlockSpec((1, N), lambda i: (0, 0)),
            pl.BlockSpec((1, N), lambda i: (0, 0)),
        ],
        out_specs=pl.BlockSpec((tm, N), lambda i: (i, 0)),
        compiler_params=pltpu.CompilerParams(
            dimension_semantics=("parallel",) if n_steps > 1 else ("arbitrary",),
            vmem_limit_bytes=vmem_limit,
        ),
    )(xp,
      w.astype(jnp.bfloat16),
      scale.reshape(1, N).astype(jnp.float32),
      bias.reshape(1, N).astype(jnp.float32))
    # NOTE: rows M..Mp contain act(bias) garbage — must be sliced off here.
    return out[:M] if Mp != M else out


# ----------------------- ConvTranspose2d(4,2,1) layer ----------------------- #
def conv_transpose_s2_fused(x_pad, wt, scale_c, bias_c, act, pad_for_next,
                            out_dtype=jnp.bfloat16):
    """ConvTranspose2d(Cin,Cout,4,stride=2,padding=1,bias=False) + per-channel
    affine (eval BatchNorm) + activation via the sub-pixel phase decomposition.

    x_pad: (B, H+2, W+2, Cinp) NHWC bf16, spatially zero-padded by 1 pixel and
           channel-zero-padded to Cinp (>= Cin, multiple of 32).
    wt:    (Cin, Cout, 4, 4)  (PyTorch ConvTranspose2d layout).

    With Coutp = round_up(Cout, 32):
      pad_for_next=True : returns (B, 2H+2, 2W+2, Coutp) — directly the next
                          layer's x_pad (zero spatial border, zero pad channels).
      pad_for_next=False: returns (B, 2H, 2W, Coutp); padded channels are zero.
    """
    B, Hp2, Wp2, Cinp = x_pad.shape
    H, W = Hp2 - 2, Wp2 - 2
    Cin, Cout = wt.shape[0], wt.shape[1]
    Coutp = _round_up(Cout, 32)
    N = 4 * Coutp

    # Patch rows over the (H+1, W+1) grid of 2x2 input windows (no structural
    # zeros).  Column order: (di, dj, ci).
    cols = [x_pad[:, di:di + H + 1, dj:dj + W + 1, :]
            for di in (0, 1) for dj in (0, 1)]
    patches = jnp.concatenate(cols, axis=-1).reshape(
        B * (H + 1) * (W + 1), 4 * Cinp)

    # Phase-fused weight: rows (di, dj, ci), cols (s, t, co) with s=1-r, t=1-c:
    #   wmat[(di,dj,ci),(s,t,co)] = W[ci, co, 2 + s - 2*di, 2 + t - 2*dj]
    # The reversed phase order makes the interleave below a pure reshape+crop.
    wf = wt[:, :, ::-1, ::-1].reshape(Cin, Cout, 2, 2, 2, 2)   # (ci,co,di,r,dj,c)
    w6 = wf.transpose(2, 4, 0, 3, 5, 1)                        # (di,dj,ci,r,c,co)
    w6 = w6[:, :, :, ::-1, ::-1, :]                            # (di,dj,ci,s,t,co)
    w6 = jnp.pad(w6, ((0, 0), (0, 0), (0, Cinp - Cin),
                      (0, 0), (0, 0), (0, Coutp - Cout)))
    wmat = w6.reshape(4 * Cinp, N)

    sc = jnp.tile(jnp.pad(scale_c.astype(jnp.float32), (0, Coutp - Cout)), 4)
    bi = jnp.tile(jnp.pad(bias_c.astype(jnp.float32), (0, Coutp - Cout)), 4)

    y = fused_matmul(patches, wmat, sc, bi, act=act, out_dtype=out_dtype)

    # Interleave: slab[b, 2I+s, 2J+t, :] = y[(b,I,J), (s,t,:)].
    # True deconv output is slab[:, 1:2H+1, 1:2W+1, :Cout].
    slab = y.reshape(B, H + 1, W + 1, 2, 2, Coutp)
    slab = slab.transpose(0, 1, 3, 2, 4, 5).reshape(
        B, 2 * H + 2, 2 * W + 2, Coutp)

    if pad_for_next:
        # Zero the 1-pixel border so the slab doubles as the next layer's
        # spatially padded input (no slice + re-pad round trip).
        rh = jnp.arange(2 * H + 2)
        rw = jnp.arange(2 * W + 2)
        mh = ((rh > 0) & (rh < 2 * H + 1)).astype(slab.dtype)
        mw = ((rw > 0) & (rw < 2 * W + 1)).astype(slab.dtype)
        return slab * mh[None, :, None, None] * mw[None, None, :, None]
    return slab[:, 1:2 * H + 1, 1:2 * W + 1, :]


# ------------------------------ head (fc + layer1) --------------------------- #
def head_forward(params, x):
    """layer0 Linear + layer1 ConvTranspose(1x1 -> 4x4, == matmul) + BN + ReLU.
    Returns NHWC (B, 4, 4, 192) bf16."""
    B = x.shape[0]
    Bp = _round_up(max(B, 16), 16)
    Kin = Z_SIZE + 1
    Kp = _round_up(Kin, 128)                     # lane-align the contraction dim
    xp = jnp.pad(x.astype(jnp.bfloat16), ((0, Bp - B), (0, Kp - Kin)))

    wfc = jnp.pad(params["fc_w"].T, ((0, Kp - Kin), (0, 0))).astype(jnp.bfloat16)
    bfc = params["fc_b"].reshape(1, -1).astype(jnp.float32)

    n1 = K * K * 192
    # layer1 weight as a (384, 16*192) matmul; column order (kh, kw, co) -> NHWC.
    w1 = params["w1"].transpose(0, 2, 3, 1).reshape(384, n1).astype(jnp.bfloat16)
    bn_scale = 1.0 / jnp.sqrt(1.0 + BN_EPS)
    s1 = jnp.tile(params["gamma1"] * bn_scale, K * K).reshape(1, n1)
    b1 = jnp.tile(params["beta1"], K * K).reshape(1, n1)

    y = pl.pallas_call(
        _head_kernel,
        out_shape=jax.ShapeDtypeStruct((Bp, n1), jnp.bfloat16),
        compiler_params=pltpu.CompilerParams(
            vmem_limit_bytes=_vmem_limit_bytes()),
    )(xp, wfc, bfc, w1, s1.astype(jnp.float32), b1.astype(jnp.float32))
    return y[:B].reshape(B, K, K, 192)           # NHWC


# --------------------------------- parameters -------------------------------- #
def init_params(key):
    ks = list(jax.random.split(key, 20))
    p = {}
    p["fc_w"] = 0.05 * jax.random.normal(ks[0], (384, Z_SIZE + 1), jnp.float32)
    p["fc_b"] = 0.05 * jax.random.normal(ks[1], (384,), jnp.float32)
    chans = [(384, 192), (192, 96), (96, 48), (48, 24), (24, 3)]
    kidx = 2
    for li, (cin, cout) in enumerate(chans, start=1):
        p[f"w{li}"] = 0.05 * jax.random.normal(ks[kidx], (cin, cout, K, K),
                                               jnp.float32)
        kidx += 1
        if li < 5:  # layers 1..4 carry BatchNorm2d
            p[f"gamma{li}"] = 1.0 + 0.01 * jax.random.normal(
                ks[kidx], (cout,), jnp.float32)
            kidx += 1
            p[f"beta{li}"] = 0.01 * jax.random.normal(ks[kidx], (cout,),
                                                      jnp.float32)
            kidx += 1
    return p


# ---------------------------------- forward ---------------------------------- #
def generator_forward(params, x):
    x = x.reshape(-1, Z_SIZE + 1)
    bn_scale = 1.0 / jnp.sqrt(1.0 + BN_EPS)   # running_var=1, running_mean=0

    z = head_forward(params, x)                              # (B,4,4,192) NHWC
    z = jnp.pad(z, ((0, 0), (1, 1), (1, 1), (0, 0)))         # layer2 spatial halo

    for li in (2, 3, 4):
        z = conv_transpose_s2_fused(
            z, params[f"w{li}"],
            params[f"gamma{li}"] * bn_scale, params[f"beta{li}"],
            act="relu", pad_for_next=True)                   # padded next input

    z = conv_transpose_s2_fused(
        z, params["w5"],
        jnp.ones((3,), jnp.float32), jnp.zeros((3,), jnp.float32),
        act="tanh", pad_for_next=False)                      # (B,64,64,32) bf16

    # Channel crop + f32 cast + NHWC->NCHW only at the module boundary.
    return z[..., :3].astype(jnp.float32).transpose(0, 3, 1, 2)


# ------------------------- pure-JAX reference (f32) -------------------------- #
def reference_forward(params, x):
    x = x.reshape(-1, Z_SIZE + 1).astype(jnp.float32)
    bn_scale = 1.0 / jnp.sqrt(1.0 + BN_EPS)

    fc = x @ params["fc_w"].T + params["fc_b"]
    z = jnp.einsum("bi,iokl->bokl", fc, params["w1"])        # (B,192,4,4)
    z = jnp.maximum(
        z * (params["gamma1"] * bn_scale)[None, :, None, None]
        + params["beta1"][None, :, None, None], 0.0)

    for li in (2, 3, 4, 5):
        wt = params[f"w{li}"]
        rhs = wt.transpose(1, 0, 2, 3)[:, :, ::-1, ::-1]     # OIHW, flipped
        z = jax.lax.conv_general_dilated(
            z, rhs, window_strides=(1, 1), padding=((2, 2), (2, 2)),
            lhs_dilation=(2, 2), dimension_numbers=("NCHW", "OIHW", "NCHW"))
        if li < 5:
            s = (params[f"gamma{li}"] * bn_scale)[None, :, None, None]
            b = params[f"beta{li}"][None, :, None, None]
            z = jnp.maximum(z * s + b, 0.0)
        else:
            z = jnp.tanh(z)
    return z


if __name__ == "__main__":
    key = jax.random.PRNGKey(0)
    pkey, xkey = jax.random.split(key)
    params = init_params(pkey)

    B = 2
    x = jax.random.normal(xkey, (B, Z_SIZE + 1), jnp.float32)

    out = jax.block_until_ready(jax.jit(generator_forward)(params, x))
    ref = jax.block_until_ready(jax.jit(reference_forward)(params, x))

    assert out.shape == (B, 3, 64, 64), out.shape
    assert bool(jnp.all(jnp.isfinite(out)))
    assert float(jnp.max(jnp.abs(out))) <= 1.0 + 1e-6            # tanh range
    err = float(jnp.max(jnp.abs(out.astype(jnp.float32) - ref)))
    assert err < 5e-2, f"max |pallas - reference| = {err}"
    print("KERNEL_OK")
</pallas_src>

<mosaic_0001>
module attributes {stable_mosaic.version = 11 : i64} {
  func.func @_head_kernel(%arg0: memref<16x128xbf16, #tpu.memory_space<vmem>>, %arg1: memref<128x384xbf16, #tpu.memory_space<vmem>>, %arg2: memref<1x384xf32, #tpu.memory_space<vmem>>, %arg3: memref<384x3072xbf16, #tpu.memory_space<vmem>>, %arg4: memref<1x3072xf32, #tpu.memory_space<vmem>>, %arg5: memref<1x3072xf32, #tpu.memory_space<vmem>>, %arg6: memref<16x3072xbf16, #tpu.memory_space<vmem>>) attributes {dimension_semantics = [], scalar_prefetch = 0 : i64, scratch_operands = 0 : i64, tpu.core_type = #tpu.core_type<tc>} {
    %c0 = arith.constant 0 : index
    %c0_0 = arith.constant 0 : index
    %0 = vector.load %arg0[%c0, %c0_0] : memref<16x128xbf16, #tpu.memory_space<vmem>>, vector<16x128xbf16>
    %c0_1 = arith.constant 0 : index
    %c0_2 = arith.constant 0 : index
    %1 = vector.load %arg1[%c0_1, %c0_2] : memref<128x384xbf16, #tpu.memory_space<vmem>>, vector<128x384xbf16>
    %cst = arith.constant dense<0.000000e+00> : vector<16x384xf32>
    %2 = tpu.matmul %0, %1, %cst {dimension_numbers = #tpu.dot_dimension_numbers<[1], [0], [0], [1], [0, 0, 1, 1], [], []>} : vector<16x128xbf16>, vector<128x384xbf16>, vector<16x384xf32> -> vector<16x384xf32>
    %c0_3 = arith.constant 0 : index
    %c0_4 = arith.constant 0 : index
    %3 = vector.load %arg2[%c0_3, %c0_4] : memref<1x384xf32, #tpu.memory_space<vmem>>, vector<1x384xf32>
    %4 = vector.broadcast %3 : vector<1x384xf32> to vector<16x384xf32>
    %5 = arith.addf %2, %4 : vector<16x384xf32>
    %6 = arith.truncf %5 : vector<16x384xf32> to vector<16x384xbf16>
    %c0_5 = arith.constant 0 : index
    %c0_6 = arith.constant 0 : index
    %7 = vector.load %arg3[%c0_5, %c0_6] : memref<384x3072xbf16, #tpu.memory_space<vmem>>, vector<384x3072xbf16>
    %cst_7 = arith.constant dense<0.000000e+00> : vector<16x3072xf32>
    %8 = tpu.matmul %6, %7, %cst_7 {dimension_numbers = #tpu.dot_dimension_numbers<[1], [0], [0], [1], [0, 0, 1, 1], [], []>} : vector<16x384xbf16>, vector<384x3072xbf16>, vector<16x3072xf32> -> vector<16x3072xf32>
    %c0_8 = arith.constant 0 : index
    %c0_9 = arith.constant 0 : index
    %9 = vector.load %arg4[%c0_8, %c0_9] : memref<1x3072xf32, #tpu.memory_space<vmem>>, vector<1x3072xf32>
    %10 = vector.broadcast %9 : vector<1x3072xf32> to vector<16x3072xf32>
    %11 = arith.mulf %8, %10 : vector<16x3072xf32>
    %c0_10 = arith.constant 0 : index
    %c0_11 = arith.constant 0 : index
    %12 = vector.load %arg5[%c0_10, %c0_11] : memref<1x3072xf32, #tpu.memory_space<vmem>>, vector<1x3072xf32>
    %13 = vector.broadcast %12 : vector<1x3072xf32> to vector<16x3072xf32>
    %14 = arith.addf %11, %13 : vector<16x3072xf32>
    %cst_12 = arith.constant 0.000000e+00 : f32
    %15 = vector.broadcast %cst_12 : f32 to vector<16x3072xf32>
    %16 = arith.maximumf %14, %15 : vector<16x3072xf32>
    %17 = arith.truncf %16 : vector<16x3072xf32> to vector<16x3072xbf16>
    %c0_13 = arith.constant 0 : index
    %c0_14 = arith.constant 0 : index
    %18 = vector.load %arg6[%c0_13, %c0_14] : memref<16x3072xbf16, #tpu.memory_space<vmem>>, vector<16x3072xbf16>
    tpu.vector_store %arg6[%c0_13, %c0_14], %17 {strides = array<i32>} : memref<16x3072xbf16, #tpu.memory_space<vmem>>, vector<16x3072xbf16>,
    return
  }
}

module attributes {stable_mosaic.version = 11 : i64} {
  func.func @_fused_matmul_kernel(%arg0: i32, %arg1: memref<56x768xbf16, #tpu.memory_space<vmem>>, %arg2: memref<768x384xbf16, #tpu.memory_space<vmem>>, %arg3: memref<1x384xf32, #tpu.memory_space<vmem>>, %arg4: memref<1x384xf32, #tpu.memory_space<vmem>>, %arg5: memref<56x384xbf16, #tpu.memory_space<vmem>>) attributes {dimension_semantics = [#tpu.dimension_semantics<arbitrary>], iteration_bounds = array<i64: 1>, scalar_prefetch = 0 : i64, scratch_operands = 0 : i64, tpu.core_type = #tpu.core_type<tc>, window_params = [{transform_indices = @transform_0, window_bounds = array<i64: 56, 768>}, {pipeline_mode = #tpu.pipeline_mode<synchronous>, transform_indices = @transform_1, window_bounds = array<i64: 768, 384>}, {pipeline_mode = #tpu.pipeline_mode<synchronous>, transform_indices = @transform_2, window_bounds = array<i64: 1, 384>}, {pipeline_mode = #tpu.pipeline_mode<synchronous>, transform_indices = @transform_3, window_bounds = array<i64: 1, 384>}, {transform_indices = @transform_4, window_bounds = array<i64: 56, 384>}]} {
    %c0 = arith.constant 0 : index
    %c0_0 = arith.constant 0 : index
    %0 = vector.load %arg1[%c0, %c0_0] : memref<56x768xbf16, #tpu.memory_space<vmem>>, vector<56x768xbf16>
    %c0_1 = arith.constant 0 : index
    %c0_2 = arith.constant 0 : index
    %1 = vector.load %arg2[%c0_1, %c0_2] : memref<768x384xbf16, #tpu.memory_space<vmem>>, vector<768x384xbf16>
    %cst = arith.constant dense<0.000000e+00> : vector<56x384xf32>
    %2 = tpu.matmul %0, %1, %cst {dimension_numbers = #tpu.dot_dimension_numbers<[1], [0], [0], [1], [0, 0, 1, 1], [], []>} : vector<56x768xbf16>, vector<768x384xbf16>, vector<56x384xf32> -> vector<56x384xf32>
    %c0_3 = arith.constant 0 : index
    %c0_4 = arith.constant 0 : index
    %3 = vector.load %arg3[%c0_3, %c0_4] : memref<1x384xf32, #tpu.memory_space<vmem>>, vector<1x384xf32>
    %4 = vector.broadcast %3 : vector<1x384xf32> to vector<56x384xf32>
    %5 = arith.mulf %2, %4 : vector<56x384xf32>
    %c0_5 = arith.constant 0 : index
    %c0_6 = arith.constant 0 : index
    %6 = vector.load %arg4[%c0_5, %c0_6] : memref<1x384xf32, #tpu.memory_space<vmem>>, vector<1x384xf32>
    %7 = vector.broadcast %6 : vector<1x384xf32> to vector<56x384xf32>
    %8 = arith.addf %5, %7 : vector<56x384xf32>
    %cst_7 = arith.constant 0.000000e+00 : f32
    %9 = vector.broadcast %cst_7 : f32 to vector<56x384xf32>
    %10 = arith.maximumf %8, %9 : vector<56x384xf32>
    %11 = arith.truncf %10 : vector<56x384xf32> to vector<56x384xbf16>
    %c0_8 = arith.constant 0 : index
    %c0_9 = arith.constant 0 : index
    %12 = vector.load %arg5[%c0_8, %c0_9] : memref<56x384xbf16, #tpu.memory_space<vmem>>, vector<56x384xbf16>
    tpu.vector_store %arg5[%c0_8, %c0_9], %11 {strides = array<i32>} : memref<56x384xbf16, #tpu.memory_space<vmem>>, vector<56x384xbf16>,
    return
  }
  func.func @transform_0(%arg0: i32) -> (i32, i32) {
    %c0_i32 = arith.constant 0 : i32
    %c0_i32_0 = arith.constant 0 : i32
    return %arg0, %c0_i32 : i32, i32
  }
  func.func @transform_1(%arg0: i32) -> (i32, i32) {
    %c0_i32 = arith.constant 0 : i32
    %c0_i32_0 = arith.constant 0 : i32
    %c0_i32_1 = arith.constant 0 : i32
    return %c0_i32, %c0_i32_0 : i32, i32
  }
  func.func @transform_2(%arg0: i32) -> (i32, i32) {
    %c0_i32 = arith.constant 0 : i32
    %c0_i32_0 = arith.constant 0 : i32
    %c0_i32_1 = arith.constant 0 : i32
    return %c0_i32, %c0_i32_0 : i32, i32
  }
  func.func @transform_3(%arg0: i32) -> (i32, i32) {
    %c0_i32 = arith.constant 0 : i32
    %c0_i32_0 = arith.constant 0 : i32
    %c0_i32_1 = arith.constant 0 : i32
    return %c0_i32, %c0_i32_0 : i32, i32
  }
  func.func @transform_4(%arg0: i32) -> (i32, i32) {
    %c0_i32 = arith.constant 0 : i32
    %c0_i32_0 = arith.constant 0 : i32
    return %arg0, %c0_i32 : i32, i32
  }
}

module attributes {stable_mosaic.version = 11 : i64} {
  func.func @_fused_matmul_kernel(%arg0: i32, %arg1: memref<168x384xbf16, #tpu.memory_space<vmem>>, %arg2: memref<384x256xbf16, #tpu.memory_space<vmem>>, %arg3: memref<1x256xf32, #tpu.memory_space<vmem>>, %arg4: memref<1x256xf32, #tpu.memory_space<vmem>>, %arg5: memref<168x256xbf16, #tpu.memory_space<vmem>>) attributes {dimension_semantics = [#tpu.dimension_semantics<arbitrary>], iteration_bounds = array<i64: 1>, scalar_prefetch = 0 : i64, scratch_operands = 0 : i64, tpu.core_type = #tpu.core_type<tc>, window_params = [{transform_indices = @transform_0, window_bounds = array<i64: 168, 384>}, {pipeline_mode = #tpu.pipeline_mode<synchronous>, transform_indices = @transform_1, window_bounds = array<i64: 384, 256>}, {pipeline_mode = #tpu.pipeline_mode<synchronous>, transform_indices = @transform_2, window_bounds = array<i64: 1, 256>}, {pipeline_mode = #tpu.pipeline_mode<synchronous>, transform_indices = @transform_3, window_bounds = array<i64: 1, 256>}, {transform_indices = @transform_4, window_bounds = array<i64: 168, 256>}]} {
    %c0 = arith.constant 0 : index
    %c0_0 = arith.constant 0 : index
    %0 = vector.load %arg1[%c0, %c0_0] : memref<168x384xbf16, #tpu.memory_space<vmem>>, vector<168x384xbf16>
    %c0_1 = arith.constant 0 : index
    %c0_2 = arith.constant 0 : index
    %1 = vector.load %arg2[%c0_1, %c0_2] : memref<384x256xbf16, #tpu.memory_space<vmem>>, vector<384x256xbf16>
    %cst = arith.constant dense<0.000000e+00> : vector<168x256xf32>
    %2 = tpu.matmul %0, %1, %cst {dimension_numbers = #tpu.dot_dimension_numbers<[1], [0], [0], [1], [0, 0, 1, 1], [], []>} : vector<168x384xbf16>, vector<384x256xbf16>, vector<168x256xf32> -> vector<168x256xf32>
    %c0_3 = arith.constant 0 : index
    %c0_4 = arith.constant 0 : index
    %3 = vector.load %arg3[%c0_3, %c0_4] : memref<1x256xf32, #tpu.memory_space<vmem>>, vector<1x256xf32>
    %4 = vector.broadcast %3 : vector<1x256xf32> to vector<168x256xf32>
    %5 = arith.mulf %2, %4 : vector<168x256xf32>
    %c0_5 = arith.constant 0 : index
    %c0_6 = arith.constant 0 : index
    %6 = vector.load %arg4[%c0_5, %c0_6] : memref<1x256xf32, #tpu.memory_space<vmem>>, vector<1x256xf32>
    %7 = vector.broadcast %6 : vector<1x256xf32> to vector<168x256xf32>
    %8 = arith.addf %5, %7 : vector<168x256xf32>
    %cst_7 = arith.constant 0.000000e+00 : f32
    %9 = vector.broadcast %cst_7 : f32 to vector<168x256xf32>
    %10 = arith.maximumf %8, %9 : vector<168x256xf32>
    %11 = arith.truncf %10 : vector<168x256xf32> to vector<168x256xbf16>
    %c0_8 = arith.constant 0 : index
    %c0_9 = arith.constant 0 : index
    %12 = vector.load %arg5[%c0_8, %c0_9] : memref<168x256xbf16, #tpu.memory_space<vmem>>, vector<168x256xbf16>
    tpu.vector_store %arg5[%c0_8, %c0_9], %11 {strides = array<i32>} : memref<168x256xbf16, #tpu.memory_space<vmem>>, vector<168x256xbf16>,
    return
  }
  func.func @transform_0(%arg0: i32) -> (i32, i32) {
    %c0_i32 = arith.constant 0 : i32
    %c0_i32_0 = arith.constant 0 : i32
    return %arg0, %c0_i32 : i32, i32
  }
  func.func @transform_1(%arg0: i32) -> (i32, i32) {
    %c0_i32 = arith.constant 0 : i32
    %c0_i32_0 = arith.constant 0 : i32
    %c0_i32_1 = arith.constant 0 : i32
    return %c0_i32, %c0_i32_0 : i32, i32
  }
  func.func @transform_2(%arg0: i32) -> (i32, i32) {
    %c0_i32 = arith.constant 0 : i32
    %c0_i32_0 = arith.constant 0 : i32
    %c0_i32_1 = arith.constant 0 : i32
    return %c0_i32, %c0_i32_0 : i32, i32
  }
  func.func @transform_3(%arg0: i32) -> (i32, i32) {
    %c0_i32 = arith.constant 0 : i32
    %c0_i32_0 = arith.constant 0 : i32
    %c0_i32_1 = arith.constant 0 : i32
    return %c0_i32, %c0_i32_0 : i32, i32
  }
  func.func @transform_4(%arg0: i32) -> (i32, i32) {
    %c0_i32 = arith.constant 0 : i32
    %c0_i32_0 = arith.constant 0 : i32
    return %arg0, %c0_i32 : i32, i32
  }
}

module attributes {stable_mosaic.version = 11 : i64} {
  func.func @_fused_matmul_kernel(%arg0: i32, %arg1: memref<584x256xbf16, #tpu.memory_space<vmem>>, %arg2: memref<256x128xbf16, #tpu.memory_space<vmem>>, %arg3: memref<1x128xf32, #tpu.memory_space<vmem>>, %arg4: memref<1x128xf32, #tpu.memory_space<vmem>>, %arg5: memref<584x128xbf16, #tpu.memory_space<vmem>>) attributes {dimension_semantics = [#tpu.dimension_semantics<arbitrary>], iteration_bounds = array<i64: 1>, scalar_prefetch = 0 : i64, scratch_operands = 0 : i64, tpu.core_type = #tpu.core_type<tc>, window_params = [{transform_indices = @transform_0, window_bounds = array<i64: 584, 256>}, {pipeline_mode = #tpu.pipeline_mode<synchronous>, transform_indices = @transform_1, window_bounds = array<i64: 256, 128>}, {pipeline_mode = #tpu.pipeline_mode<synchronous>, transform_indices = @transform_2, window_bounds = array<i64: 1, 128>}, {pipeline_mode = #tpu.pipeline_mode<synchronous>, transform_indices = @transform_3, window_bounds = array<i64: 1, 128>}, {transform_indices = @transform_4, window_bounds = array<i64: 584, 128>}]} {
    %c0 = arith.constant 0 : index
    %c0_0 = arith.constant 0 : index
    %0 = vector.load %arg1[%c0, %c0_0] : memref<584x256xbf16, #tpu.memory_space<vmem>>, vector<584x256xbf16>
    %c0_1 = arith.constant 0 : index
    %c0_2 = arith.constant 0 : index
    %1 = vector.load %arg2[%c0_1, %c0_2] : memref<256x128xbf16, #tpu.memory_space<vmem>>, vector<256x128xbf16>
    %cst = arith.constant dense<0.000000e+00> : vector<584x128xf32>
    %2 = tpu.matmul %0, %1, %cst {dimension_numbers = #tpu.dot_dimension_numbers<[1], [0], [0], [1], [0, 0, 1, 1], [], []>} : vector<584x256xbf16>, vector<256x128xbf16>, vector<584x128xf32> -> vector<584x128xf32>
    %c0_3 = arith.constant 0 : index
    %c0_4 = arith.constant 0 : index
    %3 = vector.load %arg3[%c0_3, %c0_4] : memref<1x128xf32, #tpu.memory_space<vmem>>, vector<1x128xf32>
    %4 = vector.broadcast %3 : vector<1x128xf32> to vector<584x128xf32>
    %5 = arith.mulf %2, %4 : vector<584x128xf32>
    %c0_5 = arith.constant 0 : index
    %c0_6 = arith.constant 0 : index
    %6 = vector.load %arg4[%c0_5, %c0_6] : memref<1x128xf32, #tpu.memory_space<vmem>>, vector<1x128xf32>
    %7 = vector.broadcast %6 : vector<1x128xf32> to vector<584x128xf32>
    %8 = arith.addf %5, %7 : vector<584x128xf32>
    %cst_7 = arith.constant 0.000000e+00 : f32
    %9 = vector.broadcast %cst_7 : f32 to vector<584x128xf32>
    %10 = arith.maximumf %8, %9 : vector<584x128xf32>
    %11 = arith.truncf %10 : vector<584x128xf32> to vector<584x128xbf16>
    %c0_8 = arith.constant 0 : index
    %c0_9 = arith.constant 0 : index
    %12 = vector.load %arg5[%c0_8, %c0_9] : memref<584x128xbf16, #tpu.memory_space<vmem>>, vector<584x128xbf16>
    tpu.vector_store %arg5[%c0_8, %c0_9], %11 {strides = array<i32>} : memref<584x128xbf16, #tpu.memory_space<vmem>>, vector<584x128xbf16>,
    return
  }
  func.func @transform_0(%arg0: i32) -> (i32, i32) {
    %c0_i32 = arith.constant 0 : i32
    %c0_i32_0 = arith.constant 0 : i32
    return %arg0, %c0_i32 : i32, i32
  }
  func.func @transform_1(%arg0: i32) -> (i32, i32) {
    %c0_i32 = arith.constant 0 : i32
    %c0_i32_0 = arith.constant 0 : i32
    %c0_i32_1 = arith.constant 0 : i32
    return %c0_i32, %c0_i32_0 : i32, i32
  }
  func.func @transform_2(%arg0: i32) -> (i32, i32) {
    %c0_i32 = arith.constant 0 : i32
    %c0_i32_0 = arith.constant 0 : i32
    %c0_i32_1 = arith.constant 0 : i32
    return %c0_i32, %c0_i32_0 : i32, i32
  }
  func.func @transform_3(%arg0: i32) -> (i32, i32) {
    %c0_i32 = arith.constant 0 : i32
    %c0_i32_0 = arith.constant 0 : i32
    %c0_i32_1 = arith.constant 0 : i32
    return %c0_i32, %c0_i32_0 : i32, i32
  }
  func.func @transform_4(%arg0: i32) -> (i32, i32) {
    %c0_i32 = arith.constant 0 : i32
    %c0_i32_0 = arith.constant 0 : i32
    return %arg0, %c0_i32 : i32, i32
  }
}

module attributes {stable_mosaic.version = 11 : i64} {
  func.func @_fused_matmul_kernel(%arg0: i32, %arg1: memref<2184x128xbf16, #tpu.memory_space<vmem>>, %arg2: memref<128x128xbf16, #tpu.memory_space<vmem>>, %arg3: memref<1x128xf32, #tpu.memory_space<vmem>>, %arg4: memref<1x128xf32, #tpu.memory_space<vmem>>, %arg5: memref<2184x128xbf16, #tpu.memory_space<vmem>>) attributes {dimension_semantics = [#tpu.dimension_semantics<arbitrary>], iteration_bounds = array<i64: 1>, scalar_prefetch = 0 : i64, scratch_operands = 0 : i64, tpu.core_type = #tpu.core_type<tc>, window_params = [{transform_indices = @transform_0, window_bounds = array<i64: 2184, 128>}, {pipeline_mode = #tpu.pipeline_mode<synchronous>, transform_indices = @transform_1, window_bounds = array<i64: 128, 128>}, {pipeline_mode = #tpu.pipeline_mode<synchronous>, transform_indices = @transform_2, window_bounds = array<i64: 1, 128>}, {pipeline_mode = #tpu.pipeline_mode<synchronous>, transform_indices = @transform_3, window_bounds = array<i64: 1, 128>}, {transform_indices = @transform_4, window_bounds = array<i64: 2184, 128>}]} {
    %c0 = arith.constant 0 : index
    %c0_0 = arith.constant 0 : index
    %0 = vector.load %arg1[%c0, %c0_0] : memref<2184x128xbf16, #tpu.memory_space<vmem>>, vector<2184x128xbf16>
    %c0_1 = arith.constant 0 : index
    %c0_2 = arith.constant 0 : index
    %1 = vector.load %arg2[%c0_1, %c0_2] : memref<128x128xbf16, #tpu.memory_space<vmem>>, vector<128x128xbf16>
    %cst = arith.constant dense<0.000000e+00> : vector<2184x128xf32>
    %2 = tpu.matmul %0, %1, %cst {dimension_numbers = #tpu.dot_dimension_numbers<[1], [0], [0], [1], [0, 0, 1, 1], [], []>} : vector<2184x128xbf16>, vector<128x128xbf16>, vector<2184x128xf32> -> vector<2184x128xf32>
    %c0_3 = arith.constant 0 : index
    %c0_4 = arith.constant 0 : index
    %3 = vector.load %arg3[%c0_3, %c0_4] : memref<1x128xf32, #tpu.memory_space<vmem>>, vector<1x128xf32>
    %4 = vector.broadcast %3 : vector<1x128xf32> to vector<2184x128xf32>
    %5 = arith.mulf %2, %4 : vector<2184x128xf32>
    %c0_5 = arith.constant 0 : index
    %c0_6 = arith.constant 0 : index
    %6 = vector.load %arg4[%c0_5, %c0_6] : memref<1x128xf32, #tpu.memory_space<vmem>>, vector<1x128xf32>
    %7 = vector.broadcast %6 : vector<1x128xf32> to vector<2184x128xf32>
    %8 = arith.addf %5, %7 : vector<2184x128xf32>
    %9 = math.tanh %8 : vector<2184x128xf32>
    %10 = arith.truncf %9 : vector<2184x128xf32> to vector<2184x128xbf16>
    %c0_7 = arith.constant 0 : index
    %c0_8 = arith.constant 0 : index
    %11 = vector.load %arg5[%c0_7, %c0_8] : memref<2184x128xbf16, #tpu.memory_space<vmem>>, vector<2184x128xbf16>
    tpu.vector_store %arg5[%c0_7, %c0_8], %10 {strides = array<i32>} : memref<2184x128xbf16, #tpu.memory_space<vmem>>, vector<2184x128xbf16>,
    return
  }
  func.func @transform_0(%arg0: i32) -> (i32, i32) {
    %c0_i32 = arith.constant 0 : i32
    %c0_i32_0 = arith.constant 0 : i32
    return %arg0, %c0_i32 : i32, i32
  }
  func.func @transform_1(%arg0: i32) -> (i32, i32) {
    %c0_i32 = arith.constant 0 : i32
    %c0_i32_0 = arith.constant 0 : i32
    %c0_i32_1 = arith.constant 0 : i32
    return %c0_i32, %c0_i32_0 : i32, i32
  }
  func.func @transform_2(%arg0: i32) -> (i32, i32) {
    %c0_i32 = arith.constant 0 : i32
    %c0_i32_0 = arith.constant 0 : i32
    %c0_i32_1 = arith.constant 0 : i32
    return %c0_i32, %c0_i32_0 : i32, i32
  }
  func.func @transform_3(%arg0: i32) -> (i32, i32) {
    %c0_i32 = arith.constant 0 : i32
    %c0_i32_0 = arith.constant 0 : i32
    %c0_i32_1 = arith.constant 0 : i32
    return %c0_i32, %c0_i32_0 : i32, i32
  }
  func.func @transform_4(%arg0: i32) -> (i32, i32) {
    %c0_i32 = arith.constant 0 : i32
    %c0_i32_0 = arith.constant 0 : i32
    return %arg0, %c0_i32 : i32, i32
  }
}

</mosaic_0001>

<llo_original>
// kernel: tile.93
$region0: #{tile.93}
  #allocation0 [shape = 's32[1]{0}', space=sflag, size = 0x4, scoped, tag = 'scoped memory for tile.93']
  %s0 = inlined_call_operand.vmem [shape: f32[32], index: 0, kind: input, shape index: {}]
  %s1 = inlined_call_operand.vmem [shape: f32[4,32], index: 1, kind: output, shape index: {}]
  // Predicated region
  $region2: #{tile.93} parent=0 // pred_check
    _
  $region3: #{tile.93} parent=0 // pred_check_branch
    %3 = sbr.rel (0) target = $region5
  $region4: #{tile.93} parent=0 // pred_region
    _
  $region5: #{tile.93} parent=0 // pred_fallthru
    _
  %v4 = vld [vmem:[%s0] ss:$0 sm:$0xff]
  %5 = vst [vmem:[%s1] sm:$0xf] %v4

// kernel: tile.73
$region0: #{tile.73}
  #allocation0 [shape = 's32[1]{0}', space=sflag, size = 0x4, scoped, tag = 'scoped memory for tile.73']
  %s0 = inlined_call_operand.vmem [shape: f32[64], index: 0, kind: input, shape index: {}]
  %s1 = inlined_call_operand.vmem [shape: f32[4,64], index: 1, kind: output, shape index: {}]
  // Predicated region
  $region2: #{tile.73} parent=0 // pred_check
    _
  $region3: #{tile.73} parent=0 // pred_check_branch
    %3 = sbr.rel (0) target = $region5
  $region4: #{tile.73} parent=0 // pred_region
    _
  $region5: #{tile.73} parent=0 // pred_fallthru
    _
  %v4 = vld [vmem:[%s0] ss:$0 sm:$0xff]
  %5 = vst [vmem:[%s1] sm:$0xf] %v4

// kernel: tile.98
$region0: #{tile.98}
  %s0 = inlined_call_operand.vmem [shape: f32[4,32], index: 0, kind: input, shape index: {}]
  %s1 = inlined_call_operand.vmem [shape: f32[1,128], index: 1, kind: output, shape index: {}]
  $region1: #{tile.98} parent=0
    #allocation0 [shape = 'u8[4096]{0}', space=vmem, size = 0x1000, scoped, tag = 'scoped mem for output reshape']
    #allocation1 [shape = 'u8[4096]{0}', space=vmem, size = 0x1000, scoped, tag = 'scoped mem for input reshape']
    %s3 = ssub.s32 16, 1
    %v4 = vld [vmem:[%s0] sm:%s3]
    %5 = vst [vmem:[#allocation1] sm:%s3] %v4
    %v6 = vld [vmem:[#allocation1] sm:$0x1]
    %vm7 = vcmask 261120
    %8 = vst.msk [vmem:[#allocation0] sm:$0x1] %vm7, %v6
    %s9 = scalar_lea.vmem [#allocation1], 3
    %v10 = vld [vmem:[%s9] sm:$0x1]
    %11 = vrot.lane.b32.xlu0 %v10, 96
    %v12 = vpop.permute.xlu0 %11
    %vm13 = vcmask 1048320
    %14 = vst.msk [vmem:[#allocation0] sm:$0x1] %vm13, %v12
    %s15 = scalar_lea.vmem [#allocation1], 2
    %v16 = vld [vmem:[%s15] sm:$0x1]
    %17 = vrot.lane.b32.xlu0 %v16, 64
    %v18 = vpop.permute.xlu0 %17
    %vm19 = vcmask 785920
    %20 = vst.msk [vmem:[#allocation0] sm:$0x1] %vm19, %v18
    %s21 = scalar_lea.vmem [#allocation1], 1
    %v22 = vld [vmem:[%s21] sm:$0x1]
    %23 = vrot.lane.b32.xlu0 %v22, 32
    %v24 = vpop.permute.xlu0 %23
    %vm25 = vcmask 523520
    %26 = vst.msk [vmem:[#allocation0] sm:$0x1] %vm25, %v24
    %s28 = ssub.s32 2, 1
    %v29 = vld [vmem:[#allocation0] sm:%s28]
    %s31 = ssub.s32 2, 1
    %32 = vst [vmem:[%s1] sm:%s31] %v29

// kernel: tile.78
$region0: #{tile.78}
  %s0 = inlined_call_operand.vmem [shape: f32[4,64], index: 0, kind: input, shape index: {}]
  %s1 = inlined_call_operand.vmem [shape: f32[1,256], index: 1, kind: output, shape index: {}]
  $region1: #{tile.78} parent=0
    #allocation0 [shape = 'u8[8192]{0}', space=vmem, size = 0x2000, scoped, tag = 'scoped mem for output reshape']
    #allocation1 [shape = 'u8[4096]{0}', space=vmem, size = 0x1000, scoped, tag = 'scoped mem for input reshape']
    %s3 = ssub.s32 16, 1
    %v4 = vld [vmem:[%s0] sm:%s3]
    %5 = vst [vmem:[#allocation1] sm:%s3] %v4
    %s6 = smov 3
    %v7 = vld [vmem:[#allocation1] ss:$2 sm:%s6]
    %vm8 = vcmask 523264
    %9 = vst.msk [vmem:[#allocation0] ss:$8 sm:$0x3] %vm8, %v7
    %s10 = scalar_lea.vmem [#allocation1], 1
    %s11 = smov 3
    %v12 = vld [vmem:[%s10] ss:$2 sm:%s11]
    %13 = vrot.lane.b32.xlu0 %v12, 64
    %v14 = vpop.permute.xlu0 %13
    %vm15 = vcmask 1048064
    %16 = vst.msk [vmem:[#allocation0] ss:$8 sm:$0x3] %vm15, %v14
    %s18 = ssub.s32 2, 1
    %v19 = vld [vmem:[#allocation0] sm:%s18]
    %s21 = ssub.s32 2, 1
    %22 = vst [vmem:[%s1] sm:%s21] %v19
    %s23 = scalar_lea.vmem [#allocation0], 8
    %v24 = vld [vmem:[%s23] sm:%s18]
    %s26 = ssub.s32 2, 1
    %s27 = scalar_lea.vmem %s1, 1
    %28 = vst [vmem:[%s27] sm:%s26] %v24

// kernel: tile.63
$region0: #{tile.63}
  #allocation0 [shape = 's32[1]{0}', space=sflag, size = 0x4, scoped, tag = 'scoped memory for tile.63']
  %s0 = inlined_call_operand.vmem [shape: f32[96], index: 0, kind: input, shape index: {}]
  %s1 = inlined_call_operand.vmem [shape: f32[4,96], index: 1, kind: output, shape index: {}]
  // Predicated region
  $region2: #{tile.63} parent=0 // pred_check
    _
  $region3: #{tile.63} parent=0 // pred_check_branch
    %3 = sbr.rel (0) target = $region5
  $region4: #{tile.63} parent=0 // pred_region
    _
  $region5: #{tile.63} parent=0 // pred_fallthru
    _
  %v4 = vld [vmem:[%s0] ss:$0 sm:$0xff]
  %5 = vst [vmem:[%s1] sm:$0xf] %v4

// kernel: tile.68
$region0: #{tile.68}
  %s0 = inlined_call_operand.vmem [shape: f32[4,96], index: 0, kind: input, shape index: {}]
  %s1 = inlined_call_operand.vmem [shape: f32[1,384], index: 1, kind: output, shape index: {}]
  $region1: #{tile.68} parent=0
    #allocation0 [shape = 'u8[12288]{0}', space=vmem, size = 0x3000, scoped, tag = 'scoped mem for output reshape']
    #allocation1 [shape = 'u8[4096]{0}', space=vmem, size = 0x1000, scoped, tag = 'scoped mem for input reshape']
    %s3 = ssub.s32 16, 1
    %v4 = vld [vmem:[%s0] sm:%s3]
    %5 = vst [vmem:[#allocation1] sm:%s3] %v4
    %v6 = vld [vmem:[#allocation1] sm:$0x1]
    %vm7 = vcmask 785408
    %8 = vst.msk [vmem:[#allocation0] sm:$0x1] %vm7, %v6
    %s9 = scalar_lea.vmem [#allocation1], 1
    %v10 = vld [vmem:[%s9] sm:$0x1]
    %s11 = scalar_lea.vmem [#allocation1], 1
    %v12 = vld [vmem:[%s11] sm:$0x1]
    %vm13 = vcmask 261120
    %v14 = vsel %vm13, %v12, %v10
    %15 = vrot.lane.b32.xlu0 %v14, 96
    %v16 = vpop.permute.xlu0 %15
    %vm17 = vcmask 523264
    %s18 = scalar_lea.vmem [#allocation0], 8
    %19 = vst.msk [vmem:[%s18] sm:$0x1] %vm17, %v16
    %vm20 = vcmask 1048320
    %21 = vst.msk [vmem:[#allocation0] sm:$0x1] %vm20, %v16
    %s22 = scalar_lea.vmem [#allocation1], 2
    %v23 = vld [vmem:[%s22] sm:$0x1]
    %s24 = scalar_lea.vmem [#allocation1], 2
    %v25 = vld [vmem:[%s24] sm:$0x1]
    %vm26 = vcmask 523264
    %v27 = vsel %vm26, %v25, %v23
    %28 = vrot.lane.b32.xlu0 %v27, 64
    %v29 = vpop.permute.xlu0 %28
    %vm30 = vcmask 261120
    %s31 = scalar_lea.vmem [#allocation0], 16
    %32 = vst.msk [vmem:[%s31] sm:$0x1] %vm30, %v29
    %vm33 = vcmask 1048064
    %s34 = scalar_lea.vmem [#allocation0], 8
    %35 = vst.msk [vmem:[%s34] sm:$0x1] %vm33, %v29
    %s36 = scalar_lea.vmem [#allocation1], 3
    %v37 = vld [vmem:[%s36] sm:$0x1]
    %38 = vrot.lane.b32.xlu0 %v37, 32
    %v39 = vpop.permute.xlu0 %38
    %vm40 = vcmask 1047808
    %s41 = scalar_lea.vmem [#allocation0], 16
    %42 = vst.msk [vmem:[%s41] sm:$0x1] %vm40, %v39
    %s44 = ssub.s32 2, 1
    %v45 = vld [vmem:[#allocation0] sm:%s44]
    %s47 = ssub.s32 2, 1
    %48 = vst [vmem:[%s1] sm:%s47] %v45
    %s49 = scalar_lea.vmem [#allocation0], 8
    %v50 = vld [vmem:[%s49] sm:%s44]
    %s52 = ssub.s32 2, 1
    %s53 = scalar_lea.vmem %s1, 1
    %54 = vst [vmem:[%s53] sm:%s52] %v50
    %s55 = scalar_lea.vmem [#allocation0], 16
    %v56 = vld [vmem:[%s55] sm:%s44]
    %s58 = ssub.s32 2, 1
    %s59 = scalar_lea.vmem %s1, 2
    %60 = vst [vmem:[%s59] sm:%s58] %v56

// kernel: tile.67
$region0: #{tile.67}
  #allocation2 [shape = 's32[1]{0}', space=sflag, size = 0x4, scoped, tag = 'scoped memory for tile.67']
  %s0 = inlined_call_operand.hbm [shape: f32[96], index: 0, kind: input, shape index: {}]
  %s1 = inlined_call_operand.vmem [shape: f32[4,96], index: 1, kind: output, shape index: {}]
  $region1: #{tile.67} parent=0
    #allocation0 [shape = 'u8[512]{0}', space=vmem, size = 0x400, scoped, tag = 'operand span for operand 0']
    #allocation1 [shape = 's32[1]{0}', space=sflag, size = 0x4, scoped, tag = 'scoped memory for tile.67']
    %2 = vsyncpa [#allocation1], 0
    // Predicated region
    $region2: #{tile.67} parent=1 // pred_check
      _
    $region3: #{tile.67} parent=1 // pred_check_branch
      %4 = sbr.rel (0) target = $region5
    $region4: #{tile.67} parent=1 // pred_region
      %6 = vsyncadd [#allocation1], 0
      %s8 = sshll.u32 %s0, 4
      %s9 = int_to_ptr.hbm [resolvable:$true] %s8
      %s10 = sshll.u32 [#allocation0], 4
      %s11 = int_to_ptr.vmem [resolvable:$true] %s10
      %13 = dma.hbm_to_vmem [thread:$0]  %s9, 16, %s11, [#allocation1]
    $region5: #{tile.67} parent=1 // pred_fallthru
      _
    // Predicated region
    $region6: #{tile.67} parent=1 // pred_check
      _
    $region7: #{tile.67} parent=1 // pred_check_branch
      %15 = sbr.rel (0) target = $region9
    $region8: #{tile.67} parent=1 // pred_region
      %17 = dma.done [#allocation1], 16
    $region9: #{tile.67} parent=1 // pred_fallthru
      _
    %v18 = vld [vmem:[#allocation0] ss:$0 sm:$0xff]
    %19 = vst [vmem:[%s1] sm:$0xf] %v18
    %20 = vsyncpa [#allocation1], 1

// kernel: tile.53
$region0: #{tile.53}
  #allocation0 [shape = 's32[1]{0}', space=sflag, size = 0x4, scoped, tag = 'scoped memory for tile.53']
  %s0 = inlined_call_operand.vmem [shape: f32[192], index: 0, kind: input, shape index: {}]
  %s1 = inlined_call_operand.vmem [shape: f32[16,192], index: 1, kind: output, shape index: {}]
  // Predicated region
  $region2: #{tile.53} parent=0 // pred_check
    _
  $region3: #{tile.53} parent=0 // pred_check_branch
    %3 = sbr.rel (0) target = $region5
  $region4: #{tile.53} parent=0 // pred_region
    _
  $region5: #{tile.53} parent=0 // pred_fallthru
    _
  %v4 = vld [vmem:[%s0] ss:$0 sm:$0xff]
  %5 = vst [vmem:[%s1] sm:$0xff] %v4
  %s6 = scalar_lea.vmem %s1, 16
  %7 = vst [vmem:[%s6] sm:$0xff] %v4
  %s8 = scalar_lea.vmem %s0, 1
  %v9 = vld [vmem:[%s8] ss:$0 sm:$0xff]
  %s10 = scalar_lea.vmem %s1, 8
  %11 = vst [vmem:[%s10] sm:$0xff] %v9
  %s12 = scalar_lea.vmem %s1, 24
  %13 = vst [vmem:[%s12] sm:$0xff] %v9

// kernel: tile.54
$region0: #{tile.54}
  %s0 = inlined_call_operand.vmem [shape: f32[16,192], index: 0, kind: input, shape index: {}]
  %s1 = inlined_call_operand.vmem [shape: f32[1,3072], index: 1, kind: output, shape index: {}]
  $region1: #{tile.54} parent=0
    #allocation0 [shape = 'u8[98304]{0}', space=vmem, size = 0x18000, scoped, tag = 'scoped mem for output reshape']
    %s2 = scalar_lea.vmem %s0, 8
    %v3 = vld [vmem:[%s2] ss:$2 sm:$0xf]
    %vm4 = vcmask 523264
    %s5 = scalar_lea.vmem [#allocation0], 8
    %6 = vst.msk [vmem:[%s5] ss:$24 sm:$0xf] %vm4, %v3
    %s7 = scalar_lea.vmem %s0, 24
    %v8 = vld [vmem:[%s7] ss:$2 sm:$0xf]
    %vm9 = vcmask 523264
    %s10 = scalar_lea.vmem [#allocation0], 104
    %11 = vst.msk [vmem:[%s10] ss:$24 sm:$0xf] %vm9, %v8
    %v12 = vld [vmem:[%s0] ss:$2 sm:$0xf]
    %13 = vst [vmem:[#allocation0] ss:$24 sm:$0xf] %v12
    %s14 = scalar_lea.vmem %s0, 16
    %v15 = vld [vmem:[%s14] ss:$2 sm:$0xf]
    %s16 = scalar_lea.vmem [#allocation0], 96
    %17 = vst [vmem:[%s16] ss:$24 sm:$0xf] %v15
    %s18 = scalar_lea.vmem %s0, 1
    %v19 = vld.sshfl [vmem:[%s18] sm:$0xff pattern:$0x66666024]
    %s20 = scalar_lea.vmem %s0, 17
    %v21 = vld.sshfl [vmem:[%s20] sm:$0xff pattern:$0x60244444]
    %vm22 = vcmask 1047556
    %v23 = vsel %vm22, %v21, %v19
    %s24 = scalar_lea.vmem %s0, 1
    %v25 = vld.sshfl [vmem:[%s24] sm:$0xff pattern:$0xe8ac4602]
    %vm26 = vcmask 523264
    %v27 = vsel %vm26, %v25, %v23
    %28 = vrot.lane.b32.xlu0 %v27, 64
    %v29 = vpop.permute.xlu0 %28
    %vm30 = vcmask 523264
    %s31 = scalar_lea.vmem [#allocation0], 64
    %32 = vst.msk [vmem:[%s31] ss:$-24 sm:$0x7] %vm30, %v29
    %s33 = scalar_lea.vmem [#allocation0], 4294967168
    %34 = vst.msk [vmem:[%s33] ss:$72 sm:$0x18] %vm30, %v29
    %s35 = scalar_lea.vmem [#allocation0], 256
    %36 = vst.msk [vmem:[%s35] ss:$-24 sm:$0x60] %vm30, %v29
    %s37 = scalar_lea.vmem [#allocation0], 177
    %38 = vst.msk [vmem:[%s37] sm:$0x80] %vm30, %v29
    %vm39 = vcmask 1048064
    %s40 = scalar_lea.vmem [#allocation0], 32
    %41 = vst.msk [vmem:[%s40] ss:$-24 sm:$0x3] %vm39, %v29
    %s42 = scalar_lea.vmem [#allocation0], 128
    %43 = vst.msk [vmem:[%s42] ss:$-24 sm:$0xc] %vm39, %v29
    %s44 = scalar_lea.vmem [#allocation0], 160
    %45 = vst.msk [vmem:[%s44] ss:$-24 sm:$0x70] %vm39, %v29
    %s46 = scalar_lea.vmem [#allocation0], 81
    %47 = vst.msk [vmem:[%s46] sm:$0x80] %vm39, %v29
    %s48 = scalar_lea.vmem %s0, 17
    %v49 = vld.sshfl [vmem:[%s48] sm:$0xff pattern:$0xe8ac4602]
    %50 = vrot.lane.b32.xlu0 %v49, 64
    %v51 = vpop.permute.xlu0 %50
    %vm52 = vcmask 1048064
    %s53 = scalar_lea.vmem [#allocation0], 128
    %54 = vst.msk [vmem:[%s53] ss:$-24 sm:$0x3] %vm52, %v51
    %s55 = scalar_lea.vmem [#allocation0], 224
    %56 = vst.msk [vmem:[%s55] ss:$-24 sm:$0xc] %vm52, %v51
    %s57 = scalar_lea.vmem [#allocation0], 256
    %58 = vst.msk [vmem:[%s57] ss:$-24 sm:$0x70] %vm52, %v51
    %s59 = scalar_lea.vmem [#allocation0], 177
    %60 = vst.msk [vmem:[%s59] sm:$0x80] %vm52, %v51
    %s62 = ssub.s32 2, 1
    %v63 = vld [vmem:[#allocation0] sm:%s62]
    %s65 = ssub.s32 2, 1
    %66 = vst [vmem:[%s1] sm:%s65] %v63
    %s67 = scalar_lea.vmem [#allocation0], 8
    %v68 = vld [vmem:[%s67] sm:%s62]
    %s70 = ssub.s32 2, 1
    %s71 = scalar_lea.vmem %s1, 1
    %72 = vst [vmem:[%s71] sm:%s70] %v68
    %s73 = scalar_lea.vmem [#allocation0], 16
    %v74 = vld [vmem:[%s73] sm:%s62]
    %s76 = ssub.s32 2, 1
    %s77 = scalar_lea.vmem %s1, 2
    %78 = vst [vmem:[%s77] sm:%s76] %v74
    %s79 = scalar_lea.vmem [#allocation0], 24
    %v80 = vld [vmem:[%s79] sm:%s62]
    %s82 = ssub.s32 2, 1
    %s83 = scalar_lea.vmem %s1, 3
    %84 = vst [vmem:[%s83] sm:%s82] %v80
    %s85 = scalar_lea.vmem [#allocation0], 32
    %v86 = vld [vmem:[%s85] sm:%s62]
    %s88 = ssub.s32 2, 1
    %s89 = scalar_lea.vmem %s1, 4
    %90 = vst [vmem:[%s89] sm:%s88] %v86
    %s91 = scalar_lea.vmem [#allocation0], 40
    %v92 = vld [vmem:[%s91] sm:%s62]
    %s94 = ssub.s32 2, 1
    %s95 = scalar_lea.vmem %s1, 5
    %96 = vst [vmem:[%s95] sm:%s94] %v92
    %s97 = scalar_lea.vmem [#allocation0], 48
    %v98 = vld [vmem:[%s97] sm:%s62]
    %s100 = ssub.s32 2, 1
    %s101 = scalar_lea.vmem %s1, 6
    %102 = vst [vmem:[%s101] sm:%s100] %v98
    %s103 = scalar_lea.vmem [#allocation0], 56
    %v104 = vld [vmem:[%s103] sm:%s62]
    %s106 = ssub.s32 2, 1
    %s107 = scalar_lea.vmem %s1, 7
    %108 = vst [vmem:[%s107] sm:%s106] %v104
    %s109 = scalar_lea.vmem [#allocation0], 64
    %v110 = vld [vmem:[%s109] sm:%s62]
    %s112 = ssub.s32 2, 1
    %s113 = scalar_lea.vmem %s1, 8
    %114 = vst [vmem:[%s113] sm:%s112] %v110
    %s115 = scalar_lea.vmem [#allocation0], 72
    %v116 = vld [vmem:[%s115] sm:%s62]
    %s118 = ssub.s32 2, 1
    %s119 = scalar_lea.vmem %s1, 9
    %120 = vst [vmem:[%s119] sm:%s118] %v116
    %s121 = scalar_lea.vmem [#allocation0], 80
    %v122 = vld [vmem:[%s121] sm:%s62]
    %s124 = ssub.s32 2, 1
    %s125 = scalar_lea.vmem %s1, 10
    %126 = vst [vmem:[%s125] sm:%s124] %v122
    %s127 = scalar_lea.vmem [#allocation0], 88
    %v128 = vld [vmem:[%s127] sm:%s62]
    %s130 = ssub.s32 2, 1
    %s131 = scalar_lea.vmem %s1, 11
    %132 = vst [vmem:[%s131] sm:%s130] %v128
    %s133 = scalar_lea.vmem [#allocation0], 96
    %v134 = vld [vmem:[%s133] sm:%s62]
    %s136 = ssub.s32 2, 1
    %s137 = scalar_lea.vmem %s1, 12
    %138 = vst [vmem:[%s137] sm:%s136] %v134
    %s139 = scalar_lea.vmem [#allocation0], 104
    %v140 = vld [vmem:[%s139] sm:%s62]
    %s142 = ssub.s32 2, 1
    %s143 = scalar_lea.vmem %s1, 13
    %144 = vst [vmem:[%s143] sm:%s142] %v140
    %s145 = scalar_lea.vmem [#allocation0], 112
    %v146 = vld [vmem:[%s145] sm:%s62]
    %s148 = ssub.s32 2, 1
    %s149 = scalar_lea.vmem %s1, 14
    %150 = vst [vmem:[%s149] sm:%s148] %v146
    %s151 = scalar_lea.vmem [#allocation0], 120
    %v152 = vld [vmem:[%s151] sm:%s62]
    %s154 = ssub.s32 2, 1
    %s155 = scalar_lea.vmem %s1, 15
    %156 = vst [vmem:[%s155] sm:%s154] %v152
    %s157 = scalar_lea.vmem [#allocation0], 128
    %v158 = vld [vmem:[%s157] sm:%s62]
    %s160 = ssub.s32 2, 1
    %s161 = scalar_lea.vmem %s1, 16
    %162 = vst [vmem:[%s161] sm:%s160] %v158
    %s163 = scalar_lea.vmem [#allocation0], 136
    %v164 = vld [vmem:[%s163] sm:%s62]
    %s166 = ssub.s32 2, 1
    %s167 = scalar_lea.vmem %s1, 17
    %168 = vst [vmem:[%s167] sm:%s166] %v164
    %s169 = scalar_lea.vmem [#allocation0], 144
    %v170 = vld [vmem:[%s169] sm:%s62]
    %s172 = ssub.s32 2, 1
    %s173 = scalar_lea.vmem %s1, 18
    %174 = vst [vmem:[%s173] sm:%s172] %v170
    %s175 = scalar_lea.vmem [#allocation0], 152
    %v176 = vld [vmem:[%s175] sm:%s62]
    %s178 = ssub.s32 2, 1
    %s179 = scalar_lea.vmem %s1, 19
    %180 = vst [vmem:[%s179] sm:%s178] %v176
    %s181 = scalar_lea.vmem [#allocation0], 160
    %v182 = vld [vmem:[%s181] sm:%s62]
    %s184 = ssub.s32 2, 1
    %s185 = scalar_lea.vmem %s1, 20
    %186 = vst [vmem:[%s185] sm:%s184] %v182
    %s187 = scalar_lea.vmem [#allocation0], 168
    %v188 = vld [vmem:[%s187] sm:%s62]
    %s190 = ssub.s32 2, 1
    %s191 = scalar_lea.vmem %s1, 21
    %192 = vst [vmem:[%s191] sm:%s190] %v188
    %s193 = scalar_lea.vmem [#allocation0], 176
    %v194 = vld [vmem:[%s193] sm:%s62]
    %s196 = ssub.s32 2, 1
    %s197 = scalar_lea.vmem %s1, 22
    %198 = vst [vmem:[%s197] sm:%s196] %v194
    %s199 = scalar_lea.vmem [#allocation0], 184
    %v200 = vld [vmem:[%s199] sm:%s62]
    %s202 = ssub.s32 2, 1
    %s203 = scalar_lea.vmem %s1, 23
    %204 = vst [vmem:[%s203] sm:%s202] %v200

// kernel: tile.58
$region0: #{tile.58}
  #allocation2 [shape = 's32[1]{0}', space=sflag, size = 0x4, scoped, tag = 'scoped memory for tile.58']
  %s0 = inlined_call_operand.hbm [shape: f32[192], index: 0, kind: input, shape index: {}]
  %s1 = inlined_call_operand.vmem [shape: f32[16,192], index: 1, kind: output, shape index: {}]
  $region1: #{tile.58} parent=0
    #allocation0 [shape = 'u8[1024]{0}', space=vmem, size = 0x400, scoped, tag = 'operand span for operand 0']
    #allocation1 [shape = 's32[1]{0}', space=sflag, size = 0x4, scoped, tag = 'scoped memory for tile.58']
    %2 = vsyncpa [#allocation1], 0
    // Predicated region
    $region2: #{tile.58} parent=1 // pred_check
      _
    $region3: #{tile.58} parent=1 // pred_check_branch
      %4 = sbr.rel (0) target = $region5
    $region4: #{tile.58} parent=1 // pred_region
      %6 = vsyncadd [#allocation1], 0
      %s8 = sshll.u32 %s0, 4
      %s9 = int_to_ptr.hbm [resolvable:$true] %s8
      %s10 = sshll.u32 [#allocation0], 4
      %s11 = int_to_ptr.vmem [resolvable:$true] %s10
      %13 = dma.hbm_to_vmem [thread:$0]  %s9, 32, %s11, [#allocation1]
    $region5: #{tile.58} parent=1 // pred_fallthru
      _
    // Predicated region
    $region6: #{tile.58} parent=1 // pred_check
      _
    $region7: #{tile.58} parent=1 // pred_check_branch
      %15 = sbr.rel (0) target = $region9
    $region8: #{tile.58} parent=1 // pred_region
      %17 = dma.done [#allocation1], 32
    $region9: #{tile.58} parent=1 // pred_fallthru
      _
    %v18 = vld [vmem:[#allocation0] ss:$0 sm:$0xff]
    %19 = vst [vmem:[%s1] sm:$0xff] %v18
    %s20 = scalar_lea.vmem %s1, 16
    %21 = vst [vmem:[%s20] sm:$0xff] %v18
    %s22 = scalar_lea.vmem [#allocation0], 1
    %v23 = vld [vmem:[%s22] ss:$0 sm:$0xff]
    %s24 = scalar_lea.vmem %s1, 8
    %25 = vst [vmem:[%s24] sm:$0xff] %v23
    %s26 = scalar_lea.vmem %s1, 24
    %27 = vst [vmem:[%s26] sm:$0xff] %v23
    %28 = vsyncpa [#allocation1], 1

// kernel: generator_forward.5
$region0: #{generator_forward.5}
  #allocation0 [shape = 'u32[]', space=smem, size = 0x4, offset = 0x4, fixed_abs, tag = 'smem constant byte address 0x4 - core index']
  #allocation1 [shape = 'u32[72,128]{1,0:T(1,128)}', space=vmem, size = 0x9000, scoped, tag = 'internal scratch']
  %s0 = inlined_call_operand.vmem [shape: bf16[16,128], index: 0, kind: input, shape index: {}]
  %s1 = inlined_call_operand.vmem [shape: bf16[128,384], index: 1, kind: input, shape index: {}]
  %s2 = inlined_call_operand.vmem [shape: f32[1,384], index: 2, kind: input, shape index: {}]
  %s3 = inlined_call_operand.vmem [shape: bf16[384,3072], index: 3, kind: input, shape index: {}]
  %s4 = inlined_call_operand.vmem [shape: f32[1,3072], index: 4, kind: input, shape index: {}]
  %s5 = inlined_call_operand.vmem [shape: f32[1,3072], index: 5, kind: input, shape index: {}]
  %s6 = inlined_call_operand.vmem [shape: bf16[16,3072], index: 6, kind: output, shape index: {}]
  %s7 = sld [smem:[#allocation0]]
  $region34: #{generator_forward.5} parent=0
    _
  %s9 = ssub.s32 1, %s7
  %s10 = scalar_select 0, %s9, %s7
  // Predicated region
  $region2: #{generator_forward.5} parent=0 // pred_check
    _
  $region3: #{generator_forward.5} parent=0 // pred_check_branch
    %12 = sbr.rel (0) target = $region5
  $region4: #{generator_forward.5} parent=0 // pred_region
    _
  $region5: #{generator_forward.5} parent=0 // pred_fallthru
    _
  // Predicated region
  $region6: #{generator_forward.5} parent=0 // pred_check
    _
  $region7: #{generator_forward.5} parent=0 // pred_check_branch
    %14 = sbr.rel (0) target = $region9
  $region8: #{generator_forward.5} parent=0 // pred_region
    _
  $region9: #{generator_forward.5} parent=0 // pred_fallthru
    _
  // Predicated region
  $region10: #{generator_forward.5} parent=0 // pred_check
    _
  $region11: #{generator_forward.5} parent=0 // pred_check_branch
    %16 = sbr.rel (0) target = $region13
  $region12: #{generator_forward.5} parent=0 // pred_region
    _
  $region13: #{generator_forward.5} parent=0 // pred_fallthru
    _
  // Predicated region
  $region14: #{generator_forward.5} parent=0 // pred_check
    _
  $region15: #{generator_forward.5} parent=0 // pred_check_branch
    %18 = sbr.rel (0) target = $region17
  $region16: #{generator_forward.5} parent=0 // pred_region
    _
  $region17: #{generator_forward.5} parent=0 // pred_fallthru
    _
  // Predicated region
  $region18: #{generator_forward.5} parent=0 // pred_check
    _
  $region19: #{generator_forward.5} parent=0 // pred_check_branch
    %20 = sbr.rel (0) target = $region21
  $region20: #{generator_forward.5} parent=0 // pred_region
    _
  $region21: #{generator_forward.5} parent=0 // pred_fallthru
    _
  // Predicated region
  $region22: #{generator_forward.5} parent=0 // pred_check
    _
  $region23: #{generator_forward.5} parent=0 // pred_check_branch
    %22 = sbr.rel (0) target = $region25
  $region24: #{generator_forward.5} parent=0 // pred_region
    _
  $region25: #{generator_forward.5} parent=0 // pred_fallthru
    _
  %v23 = vld [vmem:[%s0] sm:$0xf]
  %v24 = vld [vmem:[%s0 + $0x4] sm:$0xf]
  %v25 = vld [vmem:[%s1] sm:$0xff]
  %v26 = vld [vmem:[%s1 + $0x8] sm:$0xf]
  %v27 = vld [vmem:[%s1 + $0xc] sm:$0xff]
  %v28 = vld [vmem:[%s1 + $0x14] sm:$0xf]
  %v29 = vld [vmem:[%s1 + $0x18] sm:$0xff]
  %v30 = vld [vmem:[%s1 + $0x20] sm:$0xf]
  %v31 = vld [vmem:[%s1 + $0x24] sm:$0xff]
  %v32 = vld [vmem:[%s1 + $0x2c] sm:$0xf]
  %v33 = vld [vmem:[%s1 + $0x30] sm:$0xff]
  %v34 = vld [vmem:[%s1 + $0x38] sm:$0xf]
  %v35 = vld [vmem:[%s1 + $0x3c] sm:$0xff]
  %v36 = vld [vmem:[%s1 + $0x44] sm:$0xf]
  %v37 = vld [vmem:[%s1 + $0x48] sm:$0xff]
  %v38 = vld [vmem:[%s1 + $0x50] sm:$0xf]
  %v39 = vld [vmem:[%s1 + $0x54] sm:$0xff]
  %v40 = vld [vmem:[%s1 + $0x5c] sm:$0xf]
  %v41 = vld [vmem:[%s1 + $0x60] sm:$0xff]
  %v42 = vld [vmem:[%s1 + $0x68] sm:$0xf]
  %v43 = vld [vmem:[%s1 + $0x6c] sm:$0xff]
  %v44 = vld [vmem:[%s1 + $0x74] sm:$0xf]
  %v45 = vld [vmem:[%s1 + $0x78] sm:$0xff]
  %v46 = vld [vmem:[%s1 + $0x80] sm:$0xf]
  %v47 = vld [vmem:[%s1 + $0x84] sm:$0xff]
  %v48 = vld [vmem:[%s1 + $0x8c] sm:$0xf]
  %v49 = vld [vmem:[%s1 + $0x90] sm:$0xff]
  %v50 = vld [vmem:[%s1 + $0x98] sm:$0xf]
  %v51 = vld [vmem:[%s1 + $0x9c] sm:$0xff]
  %v52 = vld [vmem:[%s1 + $0xa4] sm:$0xf]
  %v53 = vld [vmem:[%s1 + $0xa8] sm:$0xff]
  %v54 = vld [vmem:[%s1 + $0xb0] sm:$0xf]
  %v55 = vld [vmem:[%s1 + $0xb4] sm:$0xff]
  %v56 = vld [vmem:[%s1 + $0xbc] sm:$0xf]
  %v57 = vld [vmem:[%s2] sm:$0x7]
  %v59 = vperm.slane %v57, 0
  %v60 = vperm.slane %v57, 1
  %v61 = vperm.slane %v57, 2
  %v67 = vunpack.c.l.b16 %v23
  %v68 = vunpack.c.l.b16 %v24
  %v69 = vpack.c.b16 %v68, %v67
  %v103 = vunpack.c.l.b16 %v25
  %v104 = vunpack.c.h.b16 %v25
  %v105 = vunpack.c.l.b16 %v26
  %v106 = vunpack.c.l.b16 %v27
  %v107 = vunpack.c.h.b16 %v27
  %v108 = vunpack.c.l.b16 %v28
  %v109 = vunpack.c.l.b16 %v29
  %v110 = vunpack.c.h.b16 %v29
  %v111 = vunpack.c.l.b16 %v30
  %v112 = vunpack.c.l.b16 %v31
  %v113 = vunpack.c.h.b16 %v31
  %v114 = vunpack.c.l.b16 %v32
  %v115 = vunpack.c.l.b16 %v33
  %v116 = vunpack.c.h.b16 %v33
  %v117 = vunpack.c.l.b16 %v34
  %v118 = vunpack.c.l.b16 %v35
  %v119 = vunpack.c.h.b16 %v35
  %v120 = vunpack.c.l.b16 %v36
  %v121 = vunpack.c.l.b16 %v37
  %v122 = vunpack.c.h.b16 %v37
  %v123 = vunpack.c.l.b16 %v38
  %v124 = vunpack.c.l.b16 %v39
  %v125 = vunpack.c.h.b16 %v39
  %v126 = vunpack.c.l.b16 %v40
  %v127 = vunpack.c.l.b16 %v41
  %v128 = vunpack.c.h.b16 %v41
  %v129 = vunpack.c.l.b16 %v42
  %v130 = vunpack.c.l.b16 %v43
  %v131 = vunpack.c.h.b16 %v43
  %v132 = vunpack.c.l.b16 %v44
  %v133 = vunpack.c.l.b16 %v45
  %v134 = vunpack.c.h.b16 %v45
  %v135 = vunpack.c.l.b16 %v46
  %v136 = vunpack.c.l.b16 %v47
  %v137 = vunpack.c.h.b16 %v47
  %v138 = vunpack.c.l.b16 %v48
  %v139 = vunpack.c.l.b16 %v49
  %v140 = vunpack.c.h.b16 %v49
  %v141 = vunpack.c.l.b16 %v50
  %v142 = vunpack.c.l.b16 %v51
  %v143 = vunpack.c.h.b16 %v51
  %v144 = vunpack.c.l.b16 %v52
  %v145 = vunpack.c.l.b16 %v53
  %v146 = vunpack.c.h.b16 %v53
  %v147 = vunpack.c.l.b16 %v54
  %v148 = vunpack.c.l.b16 %v55
  %v149 = vunpack.c.h.b16 %v55
  %v150 = vunpack.c.l.b16 %v56
  %v151 = vpack.c.b16 %v106, %v103
  %v152 = vpack.c.b16 %v107, %v104
  %v153 = vpack.c.b16 %v108, %v105
  %v154 = vpack.c.b16 %v112, %v109
  %v155 = vpack.c.b16 %v113, %v110
  %v156 = vpack.c.b16 %v114, %v111
  %v157 = vpack.c.b16 %v118, %v115
  %v158 = vpack.c.b16 %v119, %v116
  %v159 = vpack.c.b16 %v120, %v117
  %v160 = vpack.c.b16 %v124, %v121
  %v161 = vpack.c.b16 %v125, %v122
  %v162 = vpack.c.b16 %v126, %v123
  %v163 = vpack.c.b16 %v130, %v127
  %v164 = vpack.c.b16 %v131, %v128
  %v165 = vpack.c.b16 %v132, %v129
  %v166 = vpack.c.b16 %v136, %v133
  %v167 = vpack.c.b16 %v137, %v134
  %v168 = vpack.c.b16 %v138, %v135
  %v169 = vpack.c.b16 %v142, %v139
  %v170 = vpack.c.b16 %v143, %v140
  %v171 = vpack.c.b16 %v144, %v141
  %v172 = vpack.c.b16 %v148, %v145
  %v173 = vpack.c.b16 %v149, %v146
  %v174 = vpack.c.b16 %v150, %v147
  %199 = vmatpush.bf16.msra.mxu0 %v172
  %200 = vmatpush.bf16.msra.mxu0 %v169
  %201 = vmatpush.bf16.msra.mxu0 %v166
  %202 = vmatpush.bf16.msra.mxu0 %v163
  %203 = vmatpush.bf16.msra.mxu0 %v160
  %204 = vmatpush.bf16.msra.mxu0 %v157
  %205 = vmatpush.bf16.msra.mxu0 %v154
  %206 = vmatpush.bf16.msra.mxu0 %v151
  %207 = vmatmul.bf16.gmra.mxu0 %v69
  %v208 = vpop.f32.mrf.mxu0
  %v209 = vadd.f32 %v59, %v208
  %v210 = vpop.f32.mrf.mxu0
  %v211 = vadd.f32 %v59, %v210
  %212 = vdwg.mxu0
  %213 = vmatpush.bf16.msra.mxu0 %v173
  %214 = vmatpush.bf16.msra.mxu0 %v170
  %215 = vmatpush.bf16.msra.mxu0 %v167
  %216 = vmatpush.bf16.msra.mxu0 %v164
  %217 = vmatpush.bf16.msra.mxu0 %v161
  %218 = vmatpush.bf16.msra.mxu0 %v158
  %219 = vmatpush.bf16.msra.mxu0 %v155
  %220 = vmatpush.bf16.msra.mxu0 %v152
  %221 = vmatmul.bf16.gmra.mxu0 %v69
  %v222 = vpop.f32.mrf.mxu0
  %v223 = vadd.f32 %v60, %v222
  %v224 = vpop.f32.mrf.mxu0
  %v225 = vadd.f32 %v60, %v224
  %226 = vdwg.mxu0
  %227 = vmatpush.bf16.msra.mxu0 %v174
  %228 = vmatpush.bf16.msra.mxu0 %v171
  %229 = vmatpush.bf16.msra.mxu0 %v168
  %230 = vmatpush.bf16.msra.mxu0 %v165
  %231 = vmatpush.bf16.msra.mxu0 %v162
  %232 = vmatpush.bf16.msra.mxu0 %v159
  %233 = vmatpush.bf16.msra.mxu0 %v156
  %234 = vmatpush.bf16.msra.mxu0 %v153
  %235 = vmatmul.bf16.gmra.mxu0 %v69
  %v236 = vpop.f32.mrf.mxu0
  %v237 = vadd.f32 %v61, %v236
  %v238 = vpop.f32.mrf.mxu0
  %v239 = vadd.f32 %v61, %v238
  %240 = vdwg.mxu0
  %v241 = vpack.c.bf16 %v211, %v209
  %v242 = vpack.c.bf16 %v225, %v223
  %v243 = vpack.c.bf16 %v239, %v237
  %v244 = vld [vmem:[%s3] sm:$0xff]
  %v245 = vld [vmem:[%s3 + $0x8] sm:$0xff]
  %v246 = vld [vmem:[%s3 + $0x10] sm:$0xff]
  %v247 = vld [vmem:[%s3 + $0x18] sm:$0xff]
  %v248 = vld [vmem:[%s3 + $0x20] sm:$0xff]
  %v249 = vld [vmem:[%s3 + $0x28] sm:$0xff]
  %v250 = vld [vmem:[%s3 + $0x30] sm:$0xff]
  %v251 = vld [vmem:[%s3 + $0x38] sm:$0xff]
  %v252 = vld [vmem:[%s3 + $0x40] sm:$0xff]
  %v253 = vld [vmem:[%s3 + $0x48] sm:$0xff]
  %v254 = vld [vmem:[%s3 + $0x50] sm:$0xff]
  %v255 = vld [vmem:[%s3 + $0x58] sm:$0xff]
  %v256 = vld [vmem:[%s3 + $0x60] sm:$0xff]
  %v257 = vld [vmem:[%s3 + $0x68] sm:$0xff]
  %v258 = vld [vmem:[%s3 + $0x70] sm:$0xff]
  %v259 = vld [vmem:[%s3 + $0x78] sm:$0xff]
  %v260 = vld [vmem:[%s3 + $0x80] sm:$0xff]
  %v261 = vld [vmem:[%s3 + $0x88] sm:$0xff]
  %v262 = vld [vmem:[%s3 + $0x90] sm:$0xff]
  %v263 = vld [vmem:[%s3 + $0x98] sm:$0xff]
  %v264 = vld [vmem:[%s3 + $0xa0] sm:$0xff]
  %v265 = vld [vmem:[%s3 + $0xa8] sm:$0xff]
  %v266 = vld [vmem:[%s3 + $0xb0] sm:$0xff]
  %v267 = vld [vmem:[%s3 + $0xb8] sm:$0xff]
  %v268 = vld [vmem:[%s3 + $0xc0] sm:$0xff]
  %v269 = vld [vmem:[%s3 + $0xc8] sm:$0xff]
  %v270 = vld [vmem:[%s3 + $0xd0] sm:$0xff]
  %v271 = vld [vmem:[%s3 + $0xd8] sm:$0xff]
  %v272 = vld [vmem:[%s3 + $0xe0] sm:$0xff]
  %v273 = vld [vmem:[%s3 + $0xe8] sm:$0xff]
  %v274 = vld [vmem:[%s3 + $0xf0] sm:$0xff]
  %v275 = vld [vmem:[%s3 + $0xf8] sm:$0xff]
  %v276 = vld [vmem:[%s3 + $0x100] sm:$0xff]
  %v277 = vld [vmem:[%s3 + $0x108] sm:$0xff]
  %v278 = vld [vmem:[%s3 + $0x110] sm:$0xff]
  %v279 = vld [vmem:[%s3 + $0x118] sm:$0xff]
  %v280 = vld [vmem:[%s3 + $0x120] sm:$0xff]
  %v281 = vld [vmem:[%s3 + $0x128] sm:$0xff]
  %v282 = vld [vmem:[%s3 + $0x130] sm:$0xff]
  %v283 = vld [vmem:[%s3 + $0x138] sm:$0xff]
  %v284 = vld [vmem:[%s3 + $0x140] sm:$0xff]
  %v285 = vld [vmem:[%s3 + $0x148] sm:$0xff]
  %v286 = vld [vmem:[%s3 + $0x150] sm:$0xff]
  %v287 = vld [vmem:[%s3 + $0x158] sm:$0xff]
  %v288 = vld [vmem:[%s3 + $0x160] sm:$0xff]
  %v289 = vld [vmem:[%s3 + $0x168] sm:$0xff]
  %v290 = vld [vmem:[%s3 + $0x170] sm:$0xff]
  %v291 = vld [vmem:[%s3 + $0x178] sm:$0xff]
  %v292 = vld [vmem:[%s3 + $0x180] sm:$0xff]
  %v293 = vld [vmem:[%s3 + $0x188] sm:$0xff]
  %v294 = vld [vmem:[%s3 + $0x190] sm:$0xff]
  %v295 = vld [vmem:[%s3 + $0x198] sm:$0xff]
  %v296 = vld [vmem:[%s3 + $0x1a0] sm:$0xff]
  %v297 = vld [vmem:[%s3 + $0x1a8] sm:$0xff]
  %v298 = vld [vmem:[%s3 + $0x1b0] sm:$0xff]
  %v299 = vld [vmem:[%s3 + $0x1b8] sm:$0xff]
  %v300 = vld [vmem:[%s3 + $0x1c0] sm:$0xff]
  %v301 = vld [vmem:[%s3 + $0x1c8] sm:$0xff]
  %v302 = vld [vmem:[%s3 + $0x1d0] sm:$0xff]
  %v303 = vld [vmem:[%s3 + $0x1d8] sm:$0xff]
  %v304 = vld [vmem:[%s3 + $0x1e0] sm:$0xff]
  %v305 = vld [vmem:[%s3 + $0x1e8] sm:$0xff]
  %v306 = vld [vmem:[%s3 + $0x1f0] sm:$0xff]
  %v307 = vld [vmem:[%s3 + $0x1f8] sm:$0xff]
  %v308 = vld [vmem:[%s3 + $0x200] sm:$0xff]
  %v309 = vld [vmem:[%s3 + $0x208] sm:$0xff]
  %v310 = vld [vmem:[%s3 + $0x210] sm:$0xff]
  %v311 = vld [vmem:[%s3 + $0x218] sm:$0xff]
  %v312 = vld [vmem:[%s3 + $0x220] sm:$0xff]
  %v313 = vld [vmem:[%s3 + $0x228] sm:$0xff]
  %v314 = vld [vmem:[%s3 + $0x230] sm:$0xff]
  %v315 = vld [vmem:[%s3 + $0x238] sm:$0xff]
  %v316 = vld [vmem:[%s3 + $0x240] sm:$0xff]
  %v317 = vld [vmem:[%s3 + $0x248] sm:$0xff]
  %v318 = vld [vmem:[%s3 + $0x250] sm:$0xff]
  %v319 = vld [vmem:[%s3 + $0x258] sm:$0xff]
  %v320 = vld [vmem:[%s3 + $0x260] sm:$0xff]
  %v321 = vld [vmem:[%s3 + $0x268] sm:$0xff]
  %v322 = vld [vmem:[%s3 + $0x270] sm:$0xff]
  %v323 = vld [vmem:[%s3 + $0x278] sm:$0xff]
  %v324 = vld [vmem:[%s3 + $0x280] sm:$0xff]
  %v325 = vld [vmem:[%s3 + $0x288] sm:$0xff]
  %v326 = vld [vmem:[%s3 + $0x290] sm:$0xff]
  %v327 = vld [vmem:[%s3 + $0x298] sm:$0xff]
  %v328 = vld [vmem:[%s3 + $0x2a0] sm:$0xff]
  %v329 = vld [vmem:[%s3 + $0x2a8] sm:$0xff]
  %v330 = vld [vmem:[%s3 + $0x2b0] sm:$0xff]
  %v331 = vld [vmem:[%s3 + $0x2b8] sm:$0xff]
  %v332 = vld [vmem:[%s3 + $0x2c0] sm:$0xff]
  %v333 = vld [vmem:[%s3 + $0x2c8] sm:$0xff]
  %v334 = vld [vmem:[%s3 + $0x2d0] sm:$0xff]
  %v335 = vld [vmem:[%s3 + $0x2d8] sm:$0xff]
  %v336 = vld [vmem:[%s3 + $0x2e0] sm:$0xff]
  %v337 = vld [vmem:[%s3 + $0x2e8] sm:$0xff]
  %v338 = vld [vmem:[%s3 + $0x2f0] sm:$0xff]
  %v339 = vld [vmem:[%s3 + $0x2f8] sm:$0xff]
  %v340 = vld [vmem:[%s3 + $0x300] sm:$0xff]
  %v341 = vld [vmem:[%s3 + $0x308] sm:$0xff]
  %v342 = vld [vmem:[%s3 + $0x310] sm:$0xff]
  %v343 = vld [vmem:[%s3 + $0x318] sm:$0xff]
  %v344 = vld [vmem:[%s3 + $0x320] sm:$0xff]
  %v345 = vld [vmem:[%s3 + $0x328] sm:$0xff]
  %v346 = vld [vmem:[%s3 + $0x330] sm:$0xff]
  %v347 = vld [vmem:[%s3 + $0x338] sm:$0xff]
  %v348 = vld [vmem:[%s3 + $0x340] sm:$0xff]
  %v349 = vld [vmem:[%s3 + $0x348] sm:$0xff]
  %v350 = vld [vmem:[%s3 + $0x350] sm:$0xff]
  %v351 = vld [vmem:[%s3 + $0x358] sm:$0xff]
  %v352 = vld [vmem:[%s3 + $0x360] sm:$0xff]
  %v353 = vld [vmem:[%s3 + $0x368] sm:$0xff]
  %v354 = vld [vmem:[%s3 + $0x370] sm:$0xff]
  %v355 = vld [vmem:[%s3 + $0x378] sm:$0xff]
  %v356 = vld [vmem:[%s3 + $0x380] sm:$0xff]
  %v357 = vld [vmem:[%s3 + $0x388] sm:$0xff]
  %v358 = vld [vmem:[%s3 + $0x390] sm:$0xff]
  %v359 = vld [vmem:[%s3 + $0x398] sm:$0xff]
  %v360 = vld [vmem:[%s3 + $0x3a0] sm:$0xff]
  %v361 = vld [vmem:[%s3 + $0x3a8] sm:$0xff]
  %v362 = vld [vmem:[%s3 + $0x3b0] sm:$0xff]
  %v363 = vld [vmem:[%s3 + $0x3b8] sm:$0xff]
  %v364 = vld [vmem:[%s3 + $0x3c0] sm:$0xff]
  %v365 = vld [vmem:[%s3 + $0x3c8] sm:$0xff]
  %v366 = vld [vmem:[%s3 + $0x3d0] sm:$0xff]
  %v367 = vld [vmem:[%s3 + $0x3d8] sm:$0xff]
  %v368 = vld [vmem:[%s3 + $0x3e0] sm:$0xff]
  %v369 = vld [vmem:[%s3 + $0x3e8] sm:$0xff]
  %v370 = vld [vmem:[%s3 + $0x3f0] sm:$0xff]
  %v371 = vld [vmem:[%s3 + $0x3f8] sm:$0xff]
  %v372 = vld [vmem:[%s3 + $0x400] sm:$0xff]
  %v373 = vld [vmem:[%s3 + $0x408] sm:$0xff]
  %v374 = vld [vmem:[%s3 + $0x410] sm:$0xff]
  %v375 = vld [vmem:[%s3 + $0x418] sm:$0xff]
  %v376 = vld [vmem:[%s3 + $0x420] sm:$0xff]
  %v377 = vld [vmem:[%s3 + $0x428] sm:$0xff]
  %v378 = vld [vmem:[%s3 + $0x430] sm:$0xff]
  %v379 = vld [vmem:[%s3 + $0x438] sm:$0xff]
  %v380 = vld [vmem:[%s3 + $0x440] sm:$0xff]
  %v381 = vld [vmem:[%s3 + $0x448] sm:$0xff]
  %v382 = vld [vmem:[%s3 + $0x450] sm:$0xff]
  %v383 = vld [vmem:[%s3 + $0x458] sm:$0xff]
  %v384 = vld [vmem:[%s3 + $0x460] sm:$0xff]
  %v385 = vld [vmem:[%s3 + $0x468] sm:$0xff]
  %v386 = vld [vmem:[%s3 + $0x470] sm:$0xff]
  %v387 = vld [vmem:[%s3 + $0x478] sm:$0xff]
  %v388 = vld [vmem:[%s3 + $0x480] sm:$0xff]
  %v389 = vld [vmem:[%s3 + $0x488] sm:$0xff]
  %v390 = vld [vmem:[%s3 + $0x490] sm:$0xff]
  %v391 = vld [vmem:[%s3 + $0x498] sm:$0xff]
  %v392 = vld [vmem:[%s3 + $0x4a0] sm:$0xff]
  %v393 = vld [vmem:[%s3 + $0x4a8] sm:$0xff]
  %v394 = vld [vmem:[%s3 + $0x4b0] sm:$0xff]
  %v395 = vld [vmem:[%s3 + $0x4b8] sm:$0xff]
  %v396 = vld [vmem:[%s3 + $0x4c0] sm:$0xff]
  %v397 = vld [vmem:[%s3 + $0x4c8] sm:$0xff]
  %v398 = vld [vmem:[%s3 + $0x4d0] sm:$0xff]
  %v399 = vld [vmem:[%s3 + $0x4d8] sm:$0xff]
  %v400 = vld [vmem:[%s3 + $0x4e0] sm:$0xff]
  %v401 = vld [vmem:[%s3 + $0x4e8] sm:$0xff]
  %v402 = vld [vmem:[%s3 + $0x4f0] sm:$0xff]
  %v403 = vld [vmem:[%s3 + $0x4f8] sm:$0xff]
  %v404 = vld [vmem:[%s3 + $0x500] sm:$0xff]
  %v405 = vld [vmem:[%s3 + $0x508] sm:$0xff]
  %v406 = vld [vmem:[%s3 + $0x510] sm:$0xff]
  %v407 = vld [vmem:[%s3 + $0x518] sm:$0xff]
  %v408 = vld [vmem:[%s3 + $0x520] sm:$0xff]
  %v409 = vld [vmem:[%s3 + $0x528] sm:$0xff]
  %v410 = vld [vmem:[%s3 + $0x530] sm:$0xff]
  %v411 = vld [vmem:[%s3 + $0x538] sm:$0xff]
  %v412 = vld [vmem:[%s3 + $0x540] sm:$0xff]
  %v413 = vld [vmem:[%s3 + $0x548] sm:$0xff]
  %v414 = vld [vmem:[%s3 + $0x550] sm:$0xff]
  %v415 = vld [vmem:[%s3 + $0x558] sm:$0xff]
  %v416 = vld [vmem:[%s3 + $0x560] sm:$0xff]
  %v417 = vld [vmem:[%s3 + $0x568] sm:$0xff]
  %v418 = vld [vmem:[%s3 + $0x570] sm:$0xff]
  %v419 = vld [vmem:[%s3 + $0x578] sm:$0xff]
  %v420 = vld [vmem:[%s3 + $0x580] sm:$0xff]
  %v421 = vld [vmem:[%s3 + $0x588] sm:$0xff]
  %v422 = vld [vmem:[%s3 + $0x590] sm:$0xff]
  %v423 = vld [vmem:[%s3 + $0x598] sm:$0xff]
  %v424 = vld [vmem:[%s3 + $0x5a0] sm:$0xff]
  %v425 = vld [vmem:[%s3 + $0x5a8] sm:$0xff]
  %v426 = vld [vmem:[%s3 + $0x5b0] sm:$0xff]
  %v427 = vld [vmem:[%s3 + $0x5b8] sm:$0xff]
  %v428 = vld [vmem:[%s3 + $0x5c0] sm:$0xff]
  %v429 = vld [vmem:[%s3 + $0x5c8] sm:$0xff]
  %v430 = vld [vmem:[%s3 + $0x5d0] sm:$0xff]
  %v431 = vld [vmem:[%s3 + $0x5d8] sm:$0xff]
  %v432 = vld [vmem:[%s3 + $0x5e0] sm:$0xff]
  %v433 = vld [vmem:[%s3 + $0x5e8] sm:$0xff]
  %v434 = vld [vmem:[%s3 + $0x5f0] sm:$0xff]
  %v435 = vld [vmem:[%s3 + $0x5f8] sm:$0xff]
  %v436 = vld [vmem:[%s3 + $0x600] sm:$0xff]
  %v437 = vld [vmem:[%s3 + $0x608] sm:$0xff]
  %v438 = vld [vmem:[%s3 + $0x610] sm:$0xff]
  %v439 = vld [vmem:[%s3 + $0x618] sm:$0xff]
  %v440 = vld [vmem:[%s3 + $0x620] sm:$0xff]
  %v441 = vld [vmem:[%s3 + $0x628] sm:$0xff]
  %v442 = vld [vmem:[%s3 + $0x630] sm:$0xff]
  %v443 = vld [vmem:[%s3 + $0x638] sm:$0xff]
  %v444 = vld [vmem:[%s3 + $0x640] sm:$0xff]
  %v445 = vld [vmem:[%s3 + $0x648] sm:$0xff]
  %v446 = vld [vmem:[%s3 + $0x650] sm:$0xff]
  %v447 = vld [vmem:[%s3 + $0x658] sm:$0xff]
  %v448 = vld [vmem:[%s3 + $0x660] sm:$0xff]
  %v449 = vld [vmem:[%s3 + $0x668] sm:$0xff]
  %v450 = vld [vmem:[%s3 + $0x670] sm:$0xff]
  %v451 = vld [vmem:[%s3 + $0x678] sm:$0xff]
  %v452 = vld [vmem:[%s3 + $0x680] sm:$0xff]
  %v453 = vld [vmem:[%s3 + $0x688] sm:$0xff]
  %v454 = vld [vmem:[%s3 + $0x690] sm:$0xff]
  %v455 = vld [vmem:[%s3 + $0x698] sm:$0xff]
  %v456 = vld [vmem:[%s3 + $0x6a0] sm:$0xff]
  %v457 = vld [vmem:[%s3 + $0x6a8] sm:$0xff]
  %v458 = vld [vmem:[%s3 + $0x6b0] sm:$0xff]
  %v459 = vld [vmem:[%s3 + $0x6b8] sm:$0xff]
  %v460 = vld [vmem:[%s3 + $0x6c0] sm:$0xff]
  %v461 = vld [vmem:[%s3 + $0x6c8] sm:$0xff]
  %v462 = vld [vmem:[%s3 + $0x6d0] sm:$0xff]
  %v463 = vld [vmem:[%s3 + $0x6d8] sm:$0xff]
  %v464 = vld [vmem:[%s3 + $0x6e0] sm:$0xff]
  %v465 = vld [vmem:[%s3 + $0x6e8] sm:$0xff]
  %v466 = vld [vmem:[%s3 + $0x6f0] sm:$0xff]
  %v467 = vld [vmem:[%s3 + $0x6f8] sm:$0xff]
  %v468 = vld [vmem:[%s3 + $0x700] sm:$0xff]
  %v469 = vld [vmem:[%s3 + $0x708] sm:$0xff]
  %v470 = vld [vmem:[%s3 + $0x710] sm:$0xff]
  %v471 = vld [vmem:[%s3 + $0x718] sm:$0xff]
  %v472 = vld [vmem:[%s3 + $0x720] sm:$0xff]
  %v473 = vld [vmem:[%s3 + $0x728] sm:$0xff]
  %v474 = vld [vmem:[%s3 + $0x730] sm:$0xff]
  %v475 = vld [vmem:[%s3 + $0x738] sm:$0xff]
  %v476 = vld [vmem:[%s3 + $0x740] sm:$0xff]
  %v477 = vld [vmem:[%s3 + $0x748] sm:$0xff]
  %v478 = vld [vmem:[%s3 + $0x750] sm:$0xff]
  %v479 = vld [vmem:[%s3 + $0x758] sm:$0xff]
  %v480 = vld [vmem:[%s3 + $0x760] sm:$0xff]
  %v481 = vld [vmem:[%s3 + $0x768] sm:$0xff]
  %v482 = vld [vmem:[%s3 + $0x770] sm:$0xff]
  %v483 = vld [vmem:[%s3 + $0x778] sm:$0xff]
  %v484 = vld [vmem:[%s3 + $0x780] sm:$0xff]
  %v485 = vld [vmem:[%s3 + $0x788] sm:$0xff]
  %v486 = vld [vmem:[%s3 + $0x790] sm:$0xff]
  %v487 = vld [vmem:[%s3 + $0x798] sm:$0xff]
  %v488 = vld [vmem:[%s3 + $0x7a0] sm:$0xff]
  %v489 = vld [vmem:[%s3 + $0x7a8] sm:$0xff]
  %v490 = vld [vmem:[%s3 + $0x7b0] sm:$0xff]
  %v491 = vld [vmem:[%s3 + $0x7b8] sm:$0xff]
  %v492 = vld [vmem:[%s3 + $0x7c0] sm:$0xff]
  %v493 = vld [vmem:[%s3 + $0x7c8] sm:$0xff]
  %v494 = vld [vmem:[%s3 + $0x7d0] sm:$0xff]
  %v495 = vld [vmem:[%s3 + $0x7d8] sm:$0xff]
  %v496 = vld [vmem:[%s3 + $0x7e0] sm:$0xff]
  %v497 = vld [vmem:[%s3 + $0x7e8] sm:$0xff]
  %v498 = vld [vmem:[%s3 + $0x7f0] sm:$0xff]
  %v499 = vld [vmem:[%s3 + $0x7f8] sm:$0xff]
  %v500 = vld [vmem:[%s3 + $0x800] sm:$0xff]
  %v501 = vld [vmem:[%s3 + $0x808] sm:$0xff]
  %v502 = vld [vmem:[%s3 + $0x810] sm:$0xff]
  %v503 = vld [vmem:[%s3 + $0x818] sm:$0xff]
  %v504 = vld [vmem:[%s3 + $0x820] sm:$0xff]
  %v505 = vld [vmem:[%s3 + $0x828] sm:$0xff]
  %v506 = vld [vmem:[%s3 + $0x830] sm:$0xff]
  %v507 = vld [vmem:[%s3 + $0x838] sm:$0xff]
  %v508 = vld [vmem:[%s3 + $0x840] sm:$0xff]
  %v509 = vld [vmem:[%s3 + $0x848] sm:$0xff]
  %v510 = vld [vmem:[%s3 + $0x850] sm:$0xff]
  %v511 = vld [vmem:[%s3 + $0x858] sm:$0xff]
  %v512 = vld [vmem:[%s3 + $0x860] sm:$0xff]
  %v513 = vld [vmem:[%s3 + $0x868] sm:$0xff]
  %v514 = vld [vmem:[%s3 + $0x870] sm:$0xff]
  %v515 = vld [vmem:[%s3 + $0x878] sm:$0xff]
  %v516 = vld [vmem:[%s3 + $0x880] sm:$0xff]
  %v517 = vld [vmem:[%s3 + $0x888] sm:$0xff]
  %v518 = vld [vmem:[%s3 + $0x890] sm:$0xff]
  %v519 = vld [vmem:[%s3 + $0x898] sm:$0xff]
  %v520 = vld [vmem:[%s3 + $0x8a0] sm:$0xff]
  %v521 = vld [vmem:[%s3 + $0x8a8] sm:$0xff]
  %v522 = vld [vmem:[%s3 + $0x8b0] sm:$0xff]
  %v523 = vld [vmem:[%s3 + $0x8b8] sm:$0xff]
  %v524 = vld [vmem:[%s3 + $0x8c0] sm:$0xff]
  %v525 = vld [vmem:[%s3 + $0x8c8] sm:$0xff]
  %v526 = vld [vmem:[%s3 + $0x8d0] sm:$0xff]
  %v527 = vld [vmem:[%s3 + $0x8d8] sm:$0xff]
  %v528 = vld [vmem:[%s3 + $0x8e0] sm:$0xff]
  %v529 = vld [vmem:[%s3 + $0x8e8] sm:$0xff]
  %v530 = vld [vmem:[%s3 + $0x8f0] sm:$0xff]
  %v531 = vld [vmem:[%s3 + $0x8f8] sm:$0xff]
  %v532 = vld [vmem:[%s3 + $0x900] sm:$0xff]
  %v533 = vld [vmem:[%s3 + $0x908] sm:$0xff]
  %v534 = vld [vmem:[%s3 + $0x910] sm:$0xff]
  %v535 = vld [vmem:[%s3 + $0x918] sm:$0xff]
  %v536 = vld [vmem:[%s3 + $0x920] sm:$0xff]
  %v537 = vld [vmem:[%s3 + $0x928] sm:$0xff]
  %v538 = vld [vmem:[%s3 + $0x930] sm:$0xff]
  %v539 = vld [vmem:[%s3 + $0x938] sm:$0xff]
  %v540 = vld [vmem:[%s3 + $0x940] sm:$0xff]
  %v541 = vld [vmem:[%s3 + $0x948] sm:$0xff]
  %v542 = vld [vmem:[%s3 + $0x950] sm:$0xff]
  %v543 = vld [vmem:[%s3 + $0x958] sm:$0xff]
  %v544 = vld [vmem:[%s3 + $0x960] sm:$0xff]
  %v545 = vld [vmem:[%s3 + $0x968] sm:$0xff]
  %v546 = vld [vmem:[%s3 + $0x970] sm:$0xff]
  %v547 = vld [vmem:[%s3 + $0x978] sm:$0xff]
  %v548 = vld [vmem:[%s3 + $0x980] sm:$0xff]
  %v549 = vld [vmem:[%s3 + $0x988] sm:$0xff]
  %v550 = vld [vmem:[%s3 + $0x990] sm:$0xff]
  %v551 = vld [vmem:[%s3 + $0x998] sm:$0xff]
  %v552 = vld [vmem:[%s3 + $0x9a0] sm:$0xff]
  %v553 = vld [vmem:[%s3 + $0x9a8] sm:$0xff]
  %v554 = vld [vmem:[%s3 + $0x9b0] sm:$0xff]
  %v555 = vld [vmem:[%s3 + $0x9b8] sm:$0xff]
  %v556 = vld [vmem:[%s3 + $0x9c0] sm:$0xff]
  %v557 = vld [vmem:[%s3 + $0x9c8] sm:$0xff]
  %v558 = vld [vmem:[%s3 + $0x9d0] sm:$0xff]
  %v559 = vld [vmem:[%s3 + $0x9d8] sm:$0xff]
  %v560 = vld [vmem:[%s3 + $0x9e0] sm:$0xff]
  %v561 = vld [vmem:[%s3 + $0x9e8] sm:$0xff]
  %v562 = vld [vmem:[%s3 + $0x9f0] sm:$0xff]
  %v563 = vld [vmem:[%s3 + $0x9f8] sm:$0xff]
  %v564 = vld [vmem:[%s3 + $0xa00] sm:$0xff]
  %v565 = vld [vmem:[%s3 + $0xa08] sm:$0xff]
  %v566 = vld [vmem:[%s3 + $0xa10] sm:$0xff]
  %v567 = vld [vmem:[%s3 + $0xa18] sm:$0xff]
  %v568 = vld [vmem:[%s3 + $0xa20] sm:$0xff]
  %v569 = vld [vmem:[%s3 + $0xa28] sm:$0xff]
  %v570 = vld [vmem:[%s3 + $0xa30] sm:$0xff]
  %v571 = vld [vmem:[%s3 + $0xa38] sm:$0xff]
  %v572 = vld [vmem:[%s3 + $0xa40] sm:$0xff]
  %v573 = vld [vmem:[%s3 + $0xa48] sm:$0xff]
  %v574 = vld [vmem:[%s3 + $0xa50] sm:$0xff]
  %v575 = vld [vmem:[%s3 + $0xa58] sm:$0xff]
  %v576 = vld [vmem:[%s3 + $0xa60] sm:$0xff]
  %v577 = vld [vmem:[%s3 + $0xa68] sm:$0xff]
  %v578 = vld [vmem:[%s3 + $0xa70] sm:$0xff]
  %v579 = vld [vmem:[%s3 + $0xa78] sm:$0xff]
  %v580 = vld [vmem:[%s3 + $0xa80] sm:$0xff]
  %v581 = vld [vmem:[%s3 + $0xa88] sm:$0xff]
  %v582 = vld [vmem:[%s3 + $0xa90] sm:$0xff]
  %v583 = vld [vmem:[%s3 + $0xa98] sm:$0xff]
  %v584 = vld [vmem:[%s3 + $0xaa0] sm:$0xff]
  %v585 = vld [vmem:[%s3 + $0xaa8] sm:$0xff]
  %v586 = vld [vmem:[%s3 + $0xab0] sm:$0xff]
  %v587 = vld [vmem:[%s3 + $0xab8] sm:$0xff]
  %v588 = vld [vmem:[%s3 + $0xac0] sm:$0xff]
  %v589 = vld [vmem:[%s3 + $0xac8] sm:$0xff]
  %v590 = vld [vmem:[%s3 + $0xad0] sm:$0xff]
  %v591 = vld [vmem:[%s3 + $0xad8] sm:$0xff]
  %v592 = vld [vmem:[%s3 + $0xae0] sm:$0xff]
  %v593 = vld [vmem:[%s3 + $0xae8] sm:$0xff]
  %v594 = vld [vmem:[%s3 + $0xaf0] sm:$0xff]
  %v595 = vld [vmem:[%s3 + $0xaf8] sm:$0xff]
  %v596 = vld [vmem:[%s3 + $0xb00] sm:$0xff]
  %v597 = vld [vmem:[%s3 + $0xb08] sm:$0xff]
  %v598 = vld [vmem:[%s3 + $0xb10] sm:$0xff]
  %v599 = vld [vmem:[%s3 + $0xb18] sm:$0xff]
  %v600 = vld [vmem:[%s3 + $0xb20] sm:$0xff]
  %v601 = vld [vmem:[%s3 + $0xb28] sm:$0xff]
  %v602 = vld [vmem:[%s3 + $0xb30] sm:$0xff]
  %v603 = vld [vmem:[%s3 + $0xb38] sm:$0xff]
  %v604 = vld [vmem:[%s3 + $0xb40] sm:$0xff]
  %v605 = vld [vmem:[%s3 + $0xb48] sm:$0xff]
  %v606 = vld [vmem:[%s3 + $0xb50] sm:$0xff]
  %v607 = vld [vmem:[%s3 + $0xb58] sm:$0xff]
  %v608 = vld [vmem:[%s3 + $0xb60] sm:$0xff]
  %v609 = vld [vmem:[%s3 + $0xb68] sm:$0xff]
  %v610 = vld [vmem:[%s3 + $0xb70] sm:$0xff]
  %v611 = vld [vmem:[%s3 + $0xb78] sm:$0xff]
  %v612 = vld [vmem:[%s3 + $0xb80] sm:$0xff]
  %v613 = vld [vmem:[%s3 + $0xb88] sm:$0xff]
  %v614 = vld [vmem:[%s3 + $0xb90] sm:$0xff]
  %v615 = vld [vmem:[%s3 + $0xb98] sm:$0xff]
  %v616 = vld [vmem:[%s3 + $0xba0] sm:$0xff]
  %v617 = vld [vmem:[%s3 + $0xba8] sm:$0xff]
  %v618 = vld [vmem:[%s3 + $0xbb0] sm:$0xff]
  %v619 = vld [vmem:[%s3 + $0xbb8] sm:$0xff]
  %v620 = vld [vmem:[%s3 + $0xbc0] sm:$0xff]
  %v621 = vld [vmem:[%s3 + $0xbc8] sm:$0xff]
  %v622 = vld [vmem:[%s3 + $0xbd0] sm:$0xff]
  %v623 = vld [vmem:[%s3 + $0xbd8] sm:$0xff]
  %v624 = vld [vmem:[%s3 + $0xbe0] sm:$0xff]
  %v625 = vld [vmem:[%s3 + $0xbe8] sm:$0xff]
  %v626 = vld [vmem:[%s3 + $0xbf0] sm:$0xff]
  %v627 = vld [vmem:[%s3 + $0xbf8] sm:$0xff]
  %v628 = vld [vmem:[%s3 + $0xc00] sm:$0xff]
  %v629 = vld [vmem:[%s3 + $0xc08] sm:$0xff]
  %v630 = vld [vmem:[%s3 + $0xc10] sm:$0xff]
  %v631 = vld [vmem:[%s3 + $0xc18] sm:$0xff]
  %v632 = vld [vmem:[%s3 + $0xc20] sm:$0xff]
  %v633 = vld [vmem:[%s3 + $0xc28] sm:$0xff]
  %v634 = vld [vmem:[%s3 + $0xc30] sm:$0xff]
  %v635 = vld [vmem:[%s3 + $0xc38] sm:$0xff]
  %v636 = vld [vmem:[%s3 + $0xc40] sm:$0xff]
  %v637 = vld [vmem:[%s3 + $0xc48] sm:$0xff]
  %v638 = vld [vmem:[%s3 + $0xc50] sm:$0xff]
  %v639 = vld [vmem:[%s3 + $0xc58] sm:$0xff]
  %v640 = vld [vmem:[%s3 + $0xc60] sm:$0xff]
  %v641 = vld [vmem:[%s3 + $0xc68] sm:$0xff]
  %v642 = vld [vmem:[%s3 + $0xc70] sm:$0xff]
  %v643 = vld [vmem:[%s3 + $0xc78] sm:$0xff]
  %v644 = vld [vmem:[%s3 + $0xc80] sm:$0xff]
  %v645 = vld [vmem:[%s3 + $0xc88] sm:$0xff]
  %v646 = vld [vmem:[%s3 + $0xc90] sm:$0xff]
  %v647 = vld [vmem:[%s3 + $0xc98] sm:$0xff]
  %v648 = vld [vmem:[%s3 + $0xca0] sm:$0xff]
  %v649 = vld [vmem:[%s3 + $0xca8] sm:$0xff]
  %v650 = vld [vmem:[%s3 + $0xcb0] sm:$0xff]
  %v651 = vld [vmem:[%s3 + $0xcb8] sm:$0xff]
  %v652 = vld [vmem:[%s3 + $0xcc0] sm:$0xff]
  %v653 = vld [vmem:[%s3 + $0xcc8] sm:$0xff]
  %v654 = vld [vmem:[%s3 + $0xcd0] sm:$0xff]
  %v655 = vld [vmem:[%s3 + $0xcd8] sm:$0xff]
  %v656 = vld [vmem:[%s3 + $0xce0] sm:$0xff]
  %v657 = vld [vmem:[%s3 + $0xce8] sm:$0xff]
  %v658 = vld [vmem:[%s3 + $0xcf0] sm:$0xff]
  %v659 = vld [vmem:[%s3 + $0xcf8] sm:$0xff]
  %v660 = vld [vmem:[%s3 + $0xd00] sm:$0xff]
  %v661 = vld [vmem:[%s3 + $0xd08] sm:$0xff]
  %v662 = vld [vmem:[%s3 + $0xd10] sm:$0xff]
  %v663 = vld [vmem:[%s3 + $0xd18] sm:$0xff]
  %v664 = vld [vmem:[%s3 + $0xd20] sm:$0xff]
  %v665 = vld [vmem:[%s3 + $0xd28] sm:$0xff]
  %v666 = vld [vmem:[%s3 + $0xd30] sm:$0xff]
  %v667 = vld [vmem:[%s3 + $0xd38] sm:$0xff]
  %v668 = vld [vmem:[%s3 + $0xd40] sm:$0xff]
  %v669 = vld [vmem:[%s3 + $0xd48] sm:$0xff]
  %v670 = vld [vmem:[%s3 + $0xd50] sm:$0xff]
  %v671 = vld [vmem:[%s3 + $0xd58] sm:$0xff]
  %v672 = vld [vmem:[%s3 + $0xd60] sm:$0xff]
  %v673 = vld [vmem:[%s3 + $0xd68] sm:$0xff]
  %v674 = vld [vmem:[%s3 + $0xd70] sm:$0xff]
  %v675 = vld [vmem:[%s3 + $0xd78] sm:$0xff]
  %v676 = vld [vmem:[%s3 + $0xd80] sm:$0xff]
  %v677 = vld [vmem:[%s3 + $0xd88] sm:$0xff]
  %v678 = vld [vmem:[%s3 + $0xd90] sm:$0xff]
  %v679 = vld [vmem:[%s3 + $0xd98] sm:$0xff]
  %v680 = vld [vmem:[%s3 + $0xda0] sm:$0xff]
  %v681 = vld [vmem:[%s3 + $0xda8] sm:$0xff]
  %v682 = vld [vmem:[%s3 + $0xdb0] sm:$0xff]
  %v683 = vld [vmem:[%s3 + $0xdb8] sm:$0xff]
  %v684 = vld [vmem:[%s3 + $0xdc0] sm:$0xff]
  %v685 = vld [vmem:[%s3 + $0xdc8] sm:$0xff]
  %v686 = vld [vmem:[%s3 + $0xdd0] sm:$0xff]
  %v687 = vld [vmem:[%s3 + $0xdd8] sm:$0xff]
  %v688 = vld [vmem:[%s3 + $0xde0] sm:$0xff]
  %v689 = vld [vmem:[%s3 + $0xde8] sm:$0xff]
  %v690 = vld [vmem:[%s3 + $0xdf0] sm:$0xff]
  %v691 = vld [vmem:[%s3 + $0xdf8] sm:$0xff]
  %v692 = vld [vmem:[%s3 + $0xe00] sm:$0xff]
  %v693 = vld [vmem:[%s3 + $0xe08] sm:$0xff]
  %v694 = vld [vmem:[%s3 + $0xe10] sm:$0xff]
  %v695 = vld [vmem:[%s3 + $0xe18] sm:$0xff]
  %v696 = vld [vmem:[%s3 + $0xe20] sm:$0xff]
  %v697 = vld [vmem:[%s3 + $0xe28] sm:$0xff]
  %v698 = vld [vmem:[%s3 + $0xe30] sm:$0xff]
  %v699 = vld [vmem:[%s3 + $0xe38] sm:$0xff]
  %v700 = vld [vmem:[%s3 + $0xe40] sm:$0xff]
  %v701 = vld [vmem:[%s3 + $0xe48] sm:$0xff]
  %v702 = vld [vmem:[%s3 + $0xe50] sm:$0xff]
  %v703 = vld [vmem:[%s3 + $0xe58] sm:$0xff]
  %v704 = vld [vmem:[%s3 + $0xe60] sm:$0xff]
  %v705 = vld [vmem:[%s3 + $0xe68] sm:$0xff]
  %v706 = vld [vmem:[%s3 + $0xe70] sm:$0xff]
  %v707 = vld [vmem:[%s3 + $0xe78] sm:$0xff]
  %v708 = vld [vmem:[%s3 + $0xe80] sm:$0xff]
  %v709 = vld [vmem:[%s3 + $0xe88] sm:$0xff]
  %v710 = vld [vmem:[%s3 + $0xe90] sm:$0xff]
  %v711 = vld [vmem:[%s3 + $0xe98] sm:$0xff]
  %v712 = vld [vmem:[%s3 + $0xea0] sm:$0xff]
  %v713 = vld [vmem:[%s3 + $0xea8] sm:$0xff]
  %v714 = vld [vmem:[%s3 + $0xeb0] sm:$0xff]
  %v715 = vld [vmem:[%s3 + $0xeb8] sm:$0xff]
  %v716 = vld [vmem:[%s3 + $0xec0] sm:$0xff]
  %v717 = vld [vmem:[%s3 + $0xec8] sm:$0xff]
  %v718 = vld [vmem:[%s3 + $0xed0] sm:$0xff]
  %v719 = vld [vmem:[%s3 + $0xed8] sm:$0xff]
  %v720 = vld [vmem:[%s3 + $0xee0] sm:$0xff]
  %v721 = vld [vmem:[%s3 + $0xee8] sm:$0xff]
  %v722 = vld [vmem:[%s3 + $0xef0] sm:$0xff]
  %v723 = vld [vmem:[%s3 + $0xef8] sm:$0xff]
  %v724 = vld [vmem:[%s3 + $0xf00] sm:$0xff]
  %v725 = vld [vmem:[%s3 + $0xf08] sm:$0xff]
  %v726 = vld [vmem:[%s3 + $0xf10] sm:$0xff]
  %v727 = vld [vmem:[%s3 + $0xf18] sm:$0xff]
  %v728 = vld [vmem:[%s3 + $0xf20] sm:$0xff]
  %v729 = vld [vmem:[%s3 + $0xf28] sm:$0xff]
  %v730 = vld [vmem:[%s3 + $0xf30] sm:$0xff]
  %v731 = vld [vmem:[%s3 + $0xf38] sm:$0xff]
  %v732 = vld [vmem:[%s3 + $0xf40] sm:$0xff]
  %v733 = vld [vmem:[%s3 + $0xf48] sm:$0xff]
  %v734 = vld [vmem:[%s3 + $0xf50] sm:$0xff]
  %v735 = vld [vmem:[%s3 + $0xf58] sm:$0xff]
  %v736 = vld [vmem:[%s3 + $0xf60] sm:$0xff]
  %v737 = vld [vmem:[%s3 + $0xf68] sm:$0xff]
  %v738 = vld [vmem:[%s3 + $0xf70] sm:$0xff]
  %v739 = vld [vmem:[%s3 + $0xf78] sm:$0xff]
  %v740 = vld [vmem:[%s3 + $0xf80] sm:$0xff]
  %v741 = vld [vmem:[%s3 + $0xf88] sm:$0xff]
  %v742 = vld [vmem:[%s3 + $0xf90] sm:$0xff]
  %v743 = vld [vmem:[%s3 + $0xf98] sm:$0xff]
  %v744 = vld [vmem:[%s3 + $0xfa0] sm:$0xff]
  %v745 = vld [vmem:[%s3 + $0xfa8] sm:$0xff]
  %v746 = vld [vmem:[%s3 + $0xfb0] sm:$0xff]
  %v747 = vld [vmem:[%s3 + $0xfb8] sm:$0xff]
  %v748 = vld [vmem:[%s3 + $0xfc0] sm:$0xff]
  %v749 = vld [vmem:[%s3 + $0xfc8] sm:$0xff]
  %v750 = vld [vmem:[%s3 + $0xfd0] sm:$0xff]
  %v751 = vld [vmem:[%s3 + $0xfd8] sm:$0xff]
  %v752 = vld [vmem:[%s3 + $0xfe0] sm:$0xff]
  %v753 = vld [vmem:[%s3 + $0xfe8] sm:$0xff]
  %v754 = vld [vmem:[%s3 + $0xff0] sm:$0xff]
  %v755 = vld [vmem:[%s3 + $0xff8] sm:$0xff]
  %v756 = vld [vmem:[%s3 + $0x1000] sm:$0xff]
  %v757 = vld [vmem:[%s3 + $0x1008] sm:$0xff]
  %v758 = vld [vmem:[%s3 + $0x1010] sm:$0xff]
  %v759 = vld [vmem:[%s3 + $0x1018] sm:$0xff]
  %v760 = vld [vmem:[%s3 + $0x1020] sm:$0xff]
  %v761 = vld [vmem:[%s3 + $0x1028] sm:$0xff]
  %v762 = vld [vmem:[%s3 + $0x1030] sm:$0xff]
  %v763 = vld [vmem:[%s3 + $0x1038] sm:$0xff]
  %v764 = vld [vmem:[%s3 + $0x1040] sm:$0xff]
  %v765 = vld [vmem:[%s3 + $0x1048] sm:$0xff]
  %v766 = vld [vmem:[%s3 + $0x1050] sm:$0xff]
  %v767 = vld [vmem:[%s3 + $0x1058] sm:$0xff]
  %v768 = vld [vmem:[%s3 + $0x1060] sm:$0xff]
  %v769 = vld [vmem:[%s3 + $0x1068] sm:$0xff]
  %v770 = vld [vmem:[%s3 + $0x1070] sm:$0xff]
  %v771 = vld [vmem:[%s3 + $0x1078] sm:$0xff]
  %v772 = vld [vmem:[%s3 + $0x1080] sm:$0xff]
  %v773 = vld [vmem:[%s3 + $0x1088] sm:$0xff]
  %v774 = vld [vmem:[%s3 + $0x1090] sm:$0xff]
  %v775 = vld [vmem:[%s3 + $0x1098] sm:$0xff]
  %v776 = vld [vmem:[%s3 + $0x10a0] sm:$0xff]
  %v777 = vld [vmem:[%s3 + $0x10a8] sm:$0xff]
  %v778 = vld [vmem:[%s3 + $0x10b0] sm:$0xff]
  %v779 = vld [vmem:[%s3 + $0x10b8] sm:$0xff]
  %v780 = vld [vmem:[%s3 + $0x10c0] sm:$0xff]
  %v781 = vld [vmem:[%s3 + $0x10c8] sm:$0xff]
  %v782 = vld [vmem:[%s3 + $0x10d0] sm:$0xff]
  %v783 = vld [vmem:[%s3 + $0x10d8] sm:$0xff]
  %v784 = vld [vmem:[%s3 + $0x10e0] sm:$0xff]
  %v785 = vld [vmem:[%s3 + $0x10e8] sm:$0xff]
  %v786 = vld [vmem:[%s3 + $0x10f0] sm:$0xff]
  %v787 = vld [vmem:[%s3 + $0x10f8] sm:$0xff]
  %v788 = vld [vmem:[%s3 + $0x1100] sm:$0xff]
  %v789 = vld [vmem:[%s3 + $0x1108] sm:$0xff]
  %v790 = vld [vmem:[%s3 + $0x1110] sm:$0xff]
  %v791 = vld [vmem:[%s3 + $0x1118] sm:$0xff]
  %v792 = vld [vmem:[%s3 + $0x1120] sm:$0xff]
  %v793 = vld [vmem:[%s3 + $0x1128] sm:$0xff]
  %v794 = vld [vmem:[%s3 + $0x1130] sm:$0xff]
  %v795 = vld [vmem:[%s3 + $0x1138] sm:$0xff]
  %v796 = vld [vmem:[%s3 + $0x1140] sm:$0xff]
  %v797 = vld [vmem:[%s3 + $0x1148] sm:$0xff]
  %v798 = vld [vmem:[%s3 + $0x1150] sm:$0xff]
  %v799 = vld [vmem:[%s3 + $0x1158] sm:$0xff]
  %v800 = vld [vmem:[%s3 + $0x1160] sm:$0xff]
  %v801 = vld [vmem:[%s3 + $0x1168] sm:$0xff]
  %v802 = vld [vmem:[%s3 + $0x1170] sm:$0xff]
  %v803 = vld [vmem:[%s3 + $0x1178] sm:$0xff]
  %v804 = vld [vmem:[%s3 + $0x1180] sm:$0xff]
  %v805 = vld [vmem:[%s3 + $0x1188] sm:$0xff]
  %v806 = vld [vmem:[%s3 + $0x1190] sm:$0xff]
  %v807 = vld [vmem:[%s3 + $0x1198] sm:$0xff]
  %v808 = vld [vmem:[%s3 + $0x11a0] sm:$0xff]
  %v809 = vld [vmem:[%s3 + $0x11a8] sm:$0xff]
  %v810 = vld [vmem:[%s3 + $0x11b0] sm:$0xff]
  %v811 = vld [vmem:[%s3 + $0x11b8] sm:$0xff]
  %v812 = vld [vmem:[%s3 + $0x11c0] sm:$0xff]
  %v813 = vld [vmem:[%s3 + $0x11c8] sm:$0xff]
  %v814 = vld [vmem:[%s3 + $0x11d0] sm:$0xff]
  %v815 = vld [vmem:[%s3 + $0x11d8] sm:$0xff]
  %v816 = vld [vmem:[%s3 + $0x11e0] sm:$0xff]
  %v817 = vld [vmem:[%s3 + $0x11e8] sm:$0xff]
  %v818 = vld [vmem:[%s3 + $0x11f0] sm:$0xff]
  %v819 = vld [vmem:[%s3 + $0x11f8] sm:$0xff]
  %v1396 = vunpack.c.l.b16 %v244
  %v1397 = vunpack.c.h.b16 %v244
  %v1398 = vunpack.c.l.b16 %v245
  %v1399 = vunpack.c.h.b16 %v245
  %v1400 = vunpack.c.l.b16 %v246
  %v1401 = vunpack.c.h.b16 %v246
  %v1402 = vunpack.c.l.b16 %v247
  %v1403 = vunpack.c.h.b16 %v247
  %v1404 = vunpack.c.l.b16 %v248
  %v1405 = vunpack.c.h.b16 %v248
  %v1406 = vunpack.c.l.b16 %v249
  %v1407 = vunpack.c.h.b16 %v249
  %v1408 = vunpack.c.l.b16 %v250
  %v1409 = vunpack.c.h.b16 %v250
  %v1410 = vunpack.c.l.b16 %v251
  %v1411 = vunpack.c.h.b16 %v251
  %v1412 = vunpack.c.l.b16 %v252
  %v1413 = vunpack.c.h.b16 %v252
  %v1414 = vunpack.c.l.b16 %v253
  %v1415 = vunpack.c.h.b16 %v253
  %v1416 = vunpack.c.l.b16 %v254
  %v1417 = vunpack.c.h.b16 %v254
  %v1418 = vunpack.c.l.b16 %v255
  %v1419 = vunpack.c.h.b16 %v255
  %v1420 = vunpack.c.l.b16 %v256
  %v1421 = vunpack.c.h.b16 %v256
  %v1422 = vunpack.c.l.b16 %v257
  %v1423 = vunpack.c.h.b16 %v257
  %v1424 = vunpack.c.l.b16 %v258
  %v1425 = vunpack.c.h.b16 %v258
  %v1426 = vunpack.c.l.b16 %v259
  %v1427 = vunpack.c.h.b16 %v259
  %v1428 = vunpack.c.l.b16 %v260
  %v1429 = vunpack.c.h.b16 %v260
  %v1430 = vunpack.c.l.b16 %v261
  %v1431 = vunpack.c.h.b16 %v261
  %v1432 = vunpack.c.l.b16 %v262
  %v1433 = vunpack.c.h.b16 %v262
  %v1434 = vunpack.c.l.b16 %v263
  %v1435 = vunpack.c.h.b16 %v263
  %v1436 = vunpack.c.l.b16 %v264
  %v1437 = vunpack.c.h.b16 %v264
  %v1438 = vunpack.c.l.b16 %v265
  %v1439 = vunpack.c.h.b16 %v265
  %v1440 = vunpack.c.l.b16 %v266
  %v1441 = vunpack.c.h.b16 %v266
  %v1442 = vunpack.c.l.b16 %v267
  %v1443 = vunpack.c.h.b16 %v267
  %v1444 = vunpack.c.l.b16 %v268
  %v1445 = vunpack.c.h.b16 %v268
  %v1446 = vunpack.c.l.b16 %v269
  %v1447 = vunpack.c.h.b16 %v269
  %v1448 = vunpack.c.l.b16 %v270
  %v1449 = vunpack.c.h.b16 %v270
  %v1450 = vunpack.c.l.b16 %v271
  %v1451 = vunpack.c.h.b16 %v271
  %v1452 = vunpack.c.l.b16 %v272
  %v1453 = vunpack.c.h.b16 %v272
  %v1454 = vunpack.c.l.b16 %v273
  %v1455 = vunpack.c.h.b16 %v273
  %v1456 = vunpack.c.l.b16 %v274
  %v1457 = vunpack.c.h.b16 %v274
  %v1458 = vunpack.c.l.b16 %v275
  %v1459 = vunpack.c.h.b16 %v275
  %v1460 = vunpack.c.l.b16 %v276
  %v1461 = vunpack.c.h.b16 %v276
  %v1462 = vunpack.c.l.b16 %v277
  %v1463 = vunpack.c.h.b16 %v277
  %v1464 = vunpack.c.l.b16 %v278
  %v1465 = vunpack.c.h.b16 %v278
  %v1466 = vunpack.c.l.b16 %v279
  %v1467 = vunpack.c.h.b16 %v279
  %v1468 = vunpack.c.l.b16 %v280
  %v1469 = vunpack.c.h.b16 %v280
  %v1470 = vunpack.c.l.b16 %v281
  %v1471 = vunpack.c.h.b16 %v281
  %v1472 = vunpack.c.l.b16 %v282
  %v1473 = vunpack.c.h.b16 %v282
  %v1474 = vunpack.c.l.b16 %v283
  %v1475 = vunpack.c.h.b16 %v283
  %v1476 = vunpack.c.l.b16 %v284
  %v1477 = vunpack.c.h.b16 %v284
  %v1478 = vunpack.c.l.b16 %v285
  %v1479 = vunpack.c.h.b16 %v285
  %v1480 = vunpack.c.l.b16 %v286
  %v1481 = vunpack.c.h.b16 %v286
  %v1482 = vunpack.c.l.b16 %v287
  %v1483 = vunpack.c.h.b16 %v287
  %v1484 = vunpack.c.l.b16 %v288
  %v1485 = vunpack.c.h.b16 %v288
  %v1486 = vunpack.c.l.b16 %v289
  %v1487 = vunpack.c.h.b16 %v289
  %v1488 = vunpack.c.l.b16 %v290
  %v1489 = vunpack.c.h.b16 %v290
  %v1490 = vunpack.c.l.b16 %v291
  %v1491 = vunpack.c.h.b16 %v291
  %v1492 = vunpack.c.l.b16 %v292
  %v1493 = vunpack.c.h.b16 %v292
  %v1494 = vunpack.c.l.b16 %v293
  %v1495 = vunpack.c.h.b16 %v293
  %v1496 = vunpack.c.l.b16 %v294
  %v1497 = vunpack.c.h.b16 %v294
  %v1498 = vunpack.c.l.b16 %v295
  %v1499 = vunpack.c.h.b16 %v295
  %v1500 = vunpack.c.l.b16 %v296
  %v1501 = vunpack.c.h.b16 %v296
  %v1502 = vunpack.c.l.b16 %v297
  %v1503 = vunpack.c.h.b16 %v297
  %v1504 = vunpack.c.l.b16 %v298
  %v1505 = vunpack.c.h.b16 %v298
  %v1506 = vunpack.c.l.b16 %v299
  %v1507 = vunpack.c.h.b16 %v299
  %v1508 = vunpack.c.l.b16 %v300
  %v1509 = vunpack.c.h.b16 %v300
  %v1510 = vunpack.c.l.b16 %v301
  %v1511 = vunpack.c.h.b16 %v301
  %v1512 = vunpack.c.l.b16 %v302
  %v1513 = vunpack.c.h.b16 %v302
  %v1514 = vunpack.c.l.b16 %v303
  %v1515 = vunpack.c.h.b16 %v303
  %v1516 = vunpack.c.l.b16 %v304
  %v1517 = vunpack.c.h.b16 %v304
  %v1518 = vunpack.c.l.b16 %v305
  %v1519 = vunpack.c.h.b16 %v305
  %v1520 = vunpack.c.l.b16 %v306
  %v1521 = vunpack.c.h.b16 %v306
  %v1522 = vunpack.c.l.b16 %v307
  %v1523 = vunpack.c.h.b16 %v307
  %v1524 = vunpack.c.l.b16 %v308
  %v1525 = vunpack.c.h.b16 %v308
  %v1526 = vunpack.c.l.b16 %v309
  %v1527 = vunpack.c.h.b16 %v309
  %v1528 = vunpack.c.l.b16 %v310
  %v1529 = vunpack.c.h.b16 %v310
  %v1530 = vunpack.c.l.b16 %v311
  %v1531 = vunpack.c.h.b16 %v311
  %v1532 = vunpack.c.l.b16 %v312
  %v1533 = vunpack.c.h.b16 %v312
  %v1534 = vunpack.c.l.b16 %v313
  %v1535 = vunpack.c.h.b16 %v313
  %v1536 = vunpack.c.l.b16 %v314
  %v1537 = vunpack.c.h.b16 %v314
  %v1538 = vunpack.c.l.b16 %v315
  %v1539 = vunpack.c.h.b16 %v315
  %v1540 = vunpack.c.l.b16 %v316
  %v1541 = vunpack.c.h.b16 %v316
  %v1542 = vunpack.c.l.b16 %v317
  %v1543 = vunpack.c.h.b16 %v317
  %v1544 = vunpack.c.l.b16 %v318
  %v1545 = vunpack.c.h.b16 %v318
  %v1546 = vunpack.c.l.b16 %v319
  %v1547 = vunpack.c.h.b16 %v319
  %v1548 = vunpack.c.l.b16 %v320
  %v1549 = vunpack.c.h.b16 %v320
  %v1550 = vunpack.c.l.b16 %v321
  %v1551 = vunpack.c.h.b16 %v321
  %v1552 = vunpack.c.l.b16 %v322
  %v1553 = vunpack.c.h.b16 %v322
  %v1554 = vunpack.c.l.b16 %v323
  %v1555 = vunpack.c.h.b16 %v323
  %v1556 = vunpack.c.l.b16 %v324
  %v1557 = vunpack.c.h.b16 %v324
  %v1558 = vunpack.c.l.b16 %v325
  %v1559 = vunpack.c.h.b16 %v325
  %v1560 = vunpack.c.l.b16 %v326
  %v1561 = vunpack.c.h.b16 %v326
  %v1562 = vunpack.c.l.b16 %v327
  %v1563 = vunpack.c.h.b16 %v327
  %v1564 = vunpack.c.l.b16 %v328
  %v1565 = vunpack.c.h.b16 %v328
  %v1566 = vunpack.c.l.b16 %v329
  %v1567 = vunpack.c.h.b16 %v329
  %v1568 = vunpack.c.l.b16 %v330
  %v1569 = vunpack.c.h.b16 %v330
  %v1570 = vunpack.c.l.b16 %v331
  %v1571 = vunpack.c.h.b16 %v331
  %v1572 = vunpack.c.l.b16 %v332
  %v1573 = vunpack.c.h.b16 %v332
  %v1574 = vunpack.c.l.b16 %v333
  %v1575 = vunpack.c.h.b16 %v333
  %v1576 = vunpack.c.l.b16 %v334
  %v1577 = vunpack.c.h.b16 %v334
  %v1578 = vunpack.c.l.b16 %v335
  %v1579 = vunpack.c.h.b16 %v335
  %v1580 = vunpack.c.l.b16 %v336
  %v1581 = vunpack.c.h.b16 %v336
  %v1582 = vunpack.c.l.b16 %v337
  %v1583 = vunpack.c.h.b16 %v337
  %v1584 = vunpack.c.l.b16 %v338
  %v1585 = vunpack.c.h.b16 %v338
  %v1586 = vunpack.c.l.b16 %v339
  %v1587 = vunpack.c.h.b16 %v339
  %v1588 = vunpack.c.l.b16 %v340
  %v1589 = vunpack.c.h.b16 %v340
  %v1590 = vunpack.c.l.b16 %v341
  %v1591 = vunpack.c.h.b16 %v341
  %v1592 = vunpack.c.l.b16 %v342
  %v1593 = vunpack.c.h.b16 %v342
  %v1594 = vunpack.c.l.b16 %v343
  %v1595 = vunpack.c.h.b16 %v343
  %v1596 = vunpack.c.l.b16 %v344
  %v1597 = vunpack.c.h.b16 %v344
  %v1598 = vunpack.c.l.b16 %v345
  %v1599 = vunpack.c.h.b16 %v345
  %v1600 = vunpack.c.l.b16 %v346
  %v1601 = vunpack.c.h.b16 %v346
  %v1602 = vunpack.c.l.b16 %v347
  %v1603 = vunpack.c.h.b16 %v347
  %v1604 = vunpack.c.l.b16 %v348
  %v1605 = vunpack.c.h.b16 %v348
  %v1606 = vunpack.c.l.b16 %v349
  %v1607 = vunpack.c.h.b16 %v349
  %v1608 = vunpack.c.l.b16 %v350
  %v1609 = vunpack.c.h.b16 %v350
  %v1610 = vunpack.c.l.b16 %v351
  %v1611 = vunpack.c.h.b16 %v351
  %v1612 = vunpack.c.l.b16 %v352
  %v1613 = vunpack.c.h.b16 %v352
  %v1614 = vunpack.c.l.b16 %v353
  %v1615 = vunpack.c.h.b16 %v353
  %v1616 = vunpack.c.l.b16 %v354
  %v1617 = vunpack.c.h.b16 %v354
  %v1618 = vunpack.c.l.b16 %v355
  %v1619 = vunpack.c.h.b16 %v355
  %v1620 = vunpack.c.l.b16 %v356
  %v1621 = vunpack.c.h.b16 %v356
  %v1622 = vunpack.c.l.b16 %v357
  %v1623 = vunpack.c.h.b16 %v357
  %v1624 = vunpack.c.l.b16 %v358
  %v1625 = vunpack.c.h.b16 %v358
  %v1626 = vunpack.c.l.b16 %v359
  %v1627 = vunpack.c.h.b16 %v359
  %v1628 = vunpack.c.l.b16 %v360
  %v1629 = vunpack.c.h.b16 %v360
  %v1630 = vunpack.c.l.b16 %v361
  %v1631 = vunpack.c.h.b16 %v361
  %v1632 = vunpack.c.l.b16 %v362
  %v1633 = vunpack.c.h.b16 %v362
  %v1634 = vunpack.c.l.b16 %v363
  %v1635 = vunpack.c.h.b16 %v363
  %v1636 = vunpack.c.l.b16 %v364
  %v1637 = vunpack.c.h.b16 %v364
  %v1638 = vunpack.c.l.b16 %v365
  %v1639 = vunpack.c.h.b16 %v365
  %v1640 = vunpack.c.l.b16 %v366
  %v1641 = vunpack.c.h.b16 %v366
  %v1642 = vunpack.c.l.b16 %v367
  %v1643 = vunpack.c.h.b16 %v367
  %v1644 = vunpack.c.l.b16 %v368
  %v1645 = vunpack.c.h.b16 %v368
  %v1646 = vunpack.c.l.b16 %v369
  %v1647 = vunpack.c.h.b16 %v369
  %v1648 = vunpack.c.l.b16 %v370
  %v1649 = vunpack.c.h.b16 %v370
  %v1650 = vunpack.c.l.b16 %v371
  %v1651 = vunpack.c.h.b16 %v371
  %v1652 = vunpack.c.l.b16 %v372
  %v1653 = vunpack.c.h.b16 %v372
  %v1654 = vunpack.c.l.b16 %v373
  %v1655 = vunpack.c.h.b16 %v373
  %v1656 = vunpack.c.l.b16 %v374
  %v1657 = vunpack.c.h.b16 %v374
  %v1658 = vunpack.c.l.b16 %v375
  %v1659 = vunpack.c.h.b16 %v375
  %v1660 = vunpack.c.l.b16 %v376
  %v1661 = vunpack.c.h.b16 %v376
  %v1662 = vunpack.c.l.b16 %v377
  %v1663 = vunpack.c.h.b16 %v377
  %v1664 = vunpack.c.l.b16 %v378
  %v1665 = vunpack.c.h.b16 %v378
  %v1666 = vunpack.c.l.b16 %v379
  %v1667 = vunpack.c.h.b16 %v379
  %v1668 = vunpack.c.l.b16 %v380
  %v1669 = vunpack.c.h.b16 %v380
  %v1670 = vunpack.c.l.b16 %v381
  %v1671 = vunpack.c.h.b16 %v381
  %v1672 = vunpack.c.l.b16 %v382
  %v1673 = vunpack.c.h.b16 %v382
  %v1674 = vunpack.c.l.b16 %v383
  %v1675 = vunpack.c.h.b16 %v383
  %v1676 = vunpack.c.l.b16 %v384
  %v1677 = vunpack.c.h.b16 %v384
  %v1678 = vunpack.c.l.b16 %v385
  %v1679 = vunpack.c.h.b16 %v385
  %v1680 = vunpack.c.l.b16 %v386
  %v1681 = vunpack.c.h.b16 %v386
  %v1682 = vunpack.c.l.b16 %v387
  %v1683 = vunpack.c.h.b16 %v387
  %v1684 = vunpack.c.l.b16 %v388
  %v1685 = vunpack.c.h.b16 %v388
  %v1686 = vunpack.c.l.b16 %v389
  %v1687 = vunpack.c.h.b16 %v389
  %v1688 = vunpack.c.l.b16 %v390
  %v1689 = vunpack.c.h.b16 %v390
  %v1690 = vunpack.c.l.b16 %v391
  %v1691 = vunpack.c.h.b16 %v391
  %v1692 = vunpack.c.l.b16 %v392
  %v1693 = vunpack.c.h.b16 %v392
  %v1694 = vunpack.c.l.b16 %v393
  %v1695 = vunpack.c.h.b16 %v393
  %v1696 = vunpack.c.l.b16 %v394
  %v1697 = vunpack.c.h.b16 %v394
  %v1698 = vunpack.c.l.b16 %v395
  %v1699 = vunpack.c.h.b16 %v395
  %v1700 = vunpack.c.l.b16 %v396
  %v1701 = vunpack.c.h.b16 %v396
  %v1702 = vunpack.c.l.b16 %v397
  %v1703 = vunpack.c.h.b16 %v397
  %v1704 = vunpack.c.l.b16 %v398
  %v1705 = vunpack.c.h.b16 %v398
  %v1706 = vunpack.c.l.b16 %v399
  %v1707 = vunpack.c.h.b16 %v399
  %v1708 = vunpack.c.l.b16 %v400
  %v1709 = vunpack.c.h.b16 %v400
  %v1710 = vunpack.c.l.b16 %v401
  %v1711 = vunpack.c.h.b16 %v401
  %v1712 = vunpack.c.l.b16 %v402
  %v1713 = vunpack.c.h.b16 %v402
  %v1714 = vunpack.c.l.b16 %v403
  %v1715 = vunpack.c.h.b16 %v403
  %v1716 = vunpack.c.l.b16 %v404
  %v1717 = vunpack.c.h.b16 %v404
  %v1718 = vunpack.c.l.b16 %v405
  %v1719 = vunpack.c.h.b16 %v405
  %v1720 = vunpack.c.l.b16 %v406
  %v1721 = vunpack.c.h.b16 %v406
  %v1722 = vunpack.c.l.b16 %v407
  %v1723 = vunpack.c.h.b16 %v407
  %v1724 = vunpack.c.l.b16 %v408
  %v1725 = vunpack.c.h.b16 %v408
  %v1726 = vunpack.c.l.b16 %v409
  %v1727 = vunpack.c.h.b16 %v409
  %v1728 = vunpack.c.l.b16 %v410
  %v1729 = vunpack.c.h.b16 %v410
  %v1730 = vunpack.c.l.b16 %v411
  %v1731 = vunpack.c.h.b16 %v411
  %v1732 = vunpack.c.l.b16 %v412
  %v1733 = vunpack.c.h.b16 %v412
  %v1734 = vunpack.c.l.b16 %v413
  %v1735 = vunpack.c.h.b16 %v413
  %v1736 = vunpack.c.l.b16 %v414
  %v1737 = vunpack.c.h.b16 %v414
  %v1738 = vunpack.c.l.b16 %v415
  %v1739 = vunpack.c.h.b16 %v415
  %v1740 = vunpack.c.l.b16 %v416
  %v1741 = vunpack.c.h.b16 %v416
  %v1742 = vunpack.c.l.b16 %v417
  %v1743 = vunpack.c.h.b16 %v417
  %v1744 = vunpack.c.l.b16 %v418
  %v1745 = vunpack.c.h.b16 %v418
  %v1746 = vunpack.c.l.b16 %v419
  %v1747 = vunpack.c.h.b16 %v419
  %v1748 = vunpack.c.l.b16 %v420
  %v1749 = vunpack.c.h.b16 %v420
  %v1750 = vunpack.c.l.b16 %v421
  %v1751 = vunpack.c.h.b16 %v421
  %v1752 = vunpack.c.l.b16 %v422
  %v1753 = vunpack.c.h.b16 %v422
  %v1754 = vunpack.c.l.b16 %v423
  %v1755 = vunpack.c.h.b16 %v423
  %v1756 = vunpack.c.l.b16 %v424
  %v1757 = vunpack.c.h.b16 %v424
  %v1758 = vunpack.c.l.b16 %v425
  %v1759 = vunpack.c.h.b16 %v425
  %v1760 = vunpack.c.l.b16 %v426
  %v1761 = vunpack.c.h.b16 %v426
  %v1762 = vunpack.c.l.b16 %v427
  %v1763 = vunpack.c.h.b16 %v427
  %v1764 = vunpack.c.l.b16 %v428
  %v1765 = vunpack.c.h.b16 %v428
  %v1766 = vunpack.c.l.b16 %v429
  %v1767 = vunpack.c.h.b16 %v429
  %v1768 = vunpack.c.l.b16 %v430
  %v1769 = vunpack.c.h.b16 %v430
  %v1770 = vunpack.c.l.b16 %v431
  %v1771 = vunpack.c.h.b16 %v431
  %v1772 = vunpack.c.l.b16 %v432
  %v1773 = vunpack.c.h.b16 %v432
  %v1774 = vunpack.c.l.b16 %v433
  %v1775 = vunpack.c.h.b16 %v433
  %v1776 = vunpack.c.l.b16 %v434
  %v1777 = vunpack.c.h.b16 %v434
  %v1778 = vunpack.c.l.b16 %v435
  %v1779 = vunpack.c.h.b16 %v435
  %v1780 = vunpack.c.l.b16 %v436
  %v1781 = vunpack.c.h.b16 %v436
  %v1782 = vunpack.c.l.b16 %v437
  %v1783 = vunpack.c.h.b16 %v437
  %v1784 = vunpack.c.l.b16 %v438
  %v1785 = vunpack.c.h.b16 %v438
  %v1786 = vunpack.c.l.b16 %v439
  %v1787 = vunpack.c.h.b16 %v439
  %v1788 = vunpack.c.l.b16 %v440
  %v1789 = vunpack.c.h.b16 %v440
  %v1790 = vunpack.c.l.b16 %v441
  %v1791 = vunpack.c.h.b16 %v441
  %v1792 = vunpack.c.l.b16 %v442
  %v1793 = vunpack.c.h.b16 %v442
  %v1794 = vunpack.c.l.b16 %v443
  %v1795 = vunpack.c.h.b16 %v443
  %v1796 = vunpack.c.l.b16 %v444
  %v1797 = vunpack.c.h.b16 %v444
  %v1798 = vunpack.c.l.b16 %v445
  %v1799 = vunpack.c.h.b16 %v445
  %v1800 = vunpack.c.l.b16 %v446
  %v1801 = vunpack.c.h.b16 %v446
  %v1802 = vunpack.c.l.b16 %v447
  %v1803 = vunpack.c.h.b16 %v447
  %v1804 = vunpack.c.l.b16 %v448
  %v1805 = vunpack.c.h.b16 %v448
  %v1806 = vunpack.c.l.b16 %v449
  %v1807 = vunpack.c.h.b16 %v449
  %v1808 = vunpack.c.l.b16 %v450
  %v1809 = vunpack.c.h.b16 %v450
  %v1810 = vunpack.c.l.b16 %v451
  %v1811 = vunpack.c.h.b16 %v451
  %v1812 = vunpack.c.l.b16 %v452
  %v1813 = vunpack.c.h.b16 %v452
  %v1814 = vunpack.c.l.b16 %v453
  %v1815 = vunpack.c.h.b16 %v453
  %v1816 = vunpack.c.l.b16 %v454
  %v1817 = vunpack.c.h.b16 %v454
  %v1818 = vunpack.c.l.b16 %v455
  %v1819 = vunpack.c.h.b16 %v455
  %v1820 = vunpack.c.l.b16 %v456
  %v1821 = vunpack.c.h.b16 %v456
  %v1822 = vunpack.c.l.b16 %v457
  %v1823 = vunpack.c.h.b16 %v457
  %v1824 = vunpack.c.l.b16 %v458
  %v1825 = vunpack.c.h.b16 %v458
  %v1826 = vunpack.c.l.b16 %v459
  %v1827 = vunpack.c.h.b16 %v459
  %v1828 = vunpack.c.l.b16 %v460
  %v1829 = vunpack.c.h.b16 %v460
  %v1830 = vunpack.c.l.b16 %v461
  %v1831 = vunpack.c.h.b16 %v461
  %v1832 = vunpack.c.l.b16 %v462
  %v1833 = vunpack.c.h.b16 %v462
  %v1834 = vunpack.c.l.b16 %v463
  %v1835 = vunpack.c.h.b16 %v463
  %v1836 = vunpack.c.l.b16 %v464
  %v1837 = vunpack.c.h.b16 %v464
  %v1838 = vunpack.c.l.b16 %v465
  %v1839 = vunpack.c.h.b16 %v465
  %v1840 = vunpack.c.l.b16 %v466
  %v1841 = vunpack.c.h.b16 %v466
  %v1842 = vunpack.c.l.b16 %v467
  %v1843 = vunpack.c.h.b16 %v467
  %v1844 = vunpack.c.l.b16 %v468
  %v1845 = vunpack.c.h.b16 %v468
  %v1846 = vunpack.c.l.b16 %v469
  %v1847 = vunpack.c.h.b16 %v469
  %v1848 = vunpack.c.l.b16 %v470
  %v1849 = vunpack.c.h.b16 %v470
  %v1850 = vunpack.c.l.b16 %v471
  %v1851 = vunpack.c.h.b16 %v471
  %v1852 = vunpack.c.l.b16 %v472
  %v1853 = vunpack.c.h.b16 %v472
  %v1854 = vunpack.c.l.b16 %v473
  %v1855 = vunpack.c.h.b16 %v473
  %v1856 = vunpack.c.l.b16 %v474
  %v1857 = vunpack.c.h.b16 %v474
  %v1858 = vunpack.c.l.b16 %v475
  %v1859 = vunpack.c.h.b16 %v475
  %v1860 = vunpack.c.l.b16 %v476
  %v1861 = vunpack.c.h.b16 %v476
  %v1862 = vunpack.c.l.b16 %v477
  %v1863 = vunpack.c.h.b16 %v477
  %v1864 = vunpack.c.l.b16 %v478
  %v1865 = vunpack.c.h.b16 %v478
  %v1866 = vunpack.c.l.b16 %v479
  %v1867 = vunpack.c.h.b16 %v479
  %v1868 = vunpack.c.l.b16 %v480
  %v1869 = vunpack.c.h.b16 %v480
  %v1870 = vunpack.c.l.b16 %v481
  %v1871 = vunpack.c.h.b16 %v481
  %v1872 = vunpack.c.l.b16 %v482
  %v1873 = vunpack.c.h.b16 %v482
  %v1874 = vunpack.c.l.b16 %v483
  %v1875 = vunpack.c.h.b16 %v483
  %v1876 = vunpack.c.l.b16 %v484
  %v1877 = vunpack.c.h.b16 %v484
  %v1878 = vunpack.c.l.b16 %v485
  %v1879 = vunpack.c.h.b16 %v485
  %v1880 = vunpack.c.l.b16 %v486
  %v1881 = vunpack.c.h.b16 %v486
  %v1882 = vunpack.c.l.b16 %v487
  %v1883 = vunpack.c.h.b16 %v487
  %v1884 = vunpack.c.l.b16 %v488
  %v1885 = vunpack.c.h.b16 %v488
  %v1886 = vunpack.c.l.b16 %v489
  %v1887 = vunpack.c.h.b16 %v489
  %v1888 = vunpack.c.l.b16 %v490
  %v1889 = vunpack.c.h.b16 %v490
  %v1890 = vunpack.c.l.b16 %v491
  %v1891 = vunpack.c.h.b16 %v491
  %v1892 = vunpack.c.l.b16 %v492
  %v1893 = vunpack.c.h.b16 %v492
  %v1894 = vunpack.c.l.b16 %v493
  %v1895 = vunpack.c.h.b16 %v493
  %v1896 = vunpack.c.l.b16 %v494
  %v1897 = vunpack.c.h.b16 %v494
  %v1898 = vunpack.c.l.b16 %v495
  %v1899 = vunpack.c.h.b16 %v495
  %v1900 = vunpack.c.l.b16 %v496
  %v1901 = vunpack.c.h.b16 %v496
  %v1902 = vunpack.c.l.b16 %v497
  %v1903 = vunpack.c.h.b16 %v497
  %v1904 = vunpack.c.l.b16 %v498
  %v1905 = vunpack.c.h.b16 %v498
  %v1906 = vunpack.c.l.b16 %v499
  %v1907 = vunpack.c.h.b16 %v499
  %v1908 = vunpack.c.l.b16 %v500
  %v1909 = vunpack.c.h.b16 %v500
  %v1910 = vunpack.c.l.b16 %v501
  %v1911 = vunpack.c.h.b16 %v501
  %v1912 = vunpack.c.l.b16 %v502
  %v1913 = vunpack.c.h.b16 %v502
  %v1914 = vunpack.c.l.b16 %v503
  %v1915 = vunpack.c.h.b16 %v503
  %v1916 = vunpack.c.l.b16 %v504
  %v1917 = vunpack.c.h.b16 %v504
  %v1918 = vunpack.c.l.b16 %v505
  %v1919 = vunpack.c.h.b16 %v505
  %v1920 = vunpack.c.l.b16 %v506
  %v1921 = vunpack.c.h.b16 %v506
  %v1922 = vunpack.c.l.b16 %v507
  %v1923 = vunpack.c.h.b16 %v507
  %v1924 = vunpack.c.l.b16 %v508
  %v1925 = vunpack.c.h.b16 %v508
  %v1926 = vunpack.c.l.b16 %v509
  %v1927 = vunpack.c.h.b16 %v509
  %v1928 = vunpack.c.l.b16 %v510
  %v1929 = vunpack.c.h.b16 %v510
  %v1930 = vunpack.c.l.b16 %v511
  %v1931 = vunpack.c.h.b16 %v511
  %v1932 = vunpack.c.l.b16 %v512
  %v1933 = vunpack.c.h.b16 %v512
  %v1934 = vunpack.c.l.b16 %v513
  %v1935 = vunpack.c.h.b16 %v513
  %v1936 = vunpack.c.l.b16 %v514
  %v1937 = vunpack.c.h.b16 %v514
  %v1938 = vunpack.c.l.b16 %v515
  %v1939 = vunpack.c.h.b16 %v515
  %v1940 = vunpack.c.l.b16 %v516
  %v1941 = vunpack.c.h.b16 %v516
  %v1942 = vunpack.c.l.b16 %v517
  %v1943 = vunpack.c.h.b16 %v517
  %v1944 = vunpack.c.l.b16 %v518
  %v1945 = vunpack.c.h.b16 %v518
  %v1946 = vunpack.c.l.b16 %v519
  %v1947 = vunpack.c.h.b16 %v519
  %v1948 = vunpack.c.l.b16 %v520
  %v1949 = vunpack.c.h.b16 %v520
  %v1950 = vunpack.c.l.b16 %v521
  %v1951 = vunpack.c.h.b16 %v521
  %v1952 = vunpack.c.l.b16 %v522
  %v1953 = vunpack.c.h.b16 %v522
  %v1954 = vunpack.c.l.b16 %v523
  %v1955 = vunpack.c.h.b16 %v523
  %v1956 = vunpack.c.l.b16 %v524
  %v1957 = vunpack.c.h.b16 %v524
  %v1958 = vunpack.c.l.b16 %v525
  %v1959 = vunpack.c.h.b16 %v525
  %v1960 = vunpack.c.l.b16 %v526
  %v1961 = vunpack.c.h.b16 %v526
  %v1962 = vunpack.c.l.b16 %v527
  %v1963 = vunpack.c.h.b16 %v527
  %v1964 = vunpack.c.l.b16 %v528
  %v1965 = vunpack.c.h.b16 %v528
  %v1966 = vunpack.c.l.b16 %v529
  %v1967 = vunpack.c.h.b16 %v529
  %v1968 = vunpack.c.l.b16 %v530
  %v1969 = vunpack.c.h.b16 %v530
  %v1970 = vunpack.c.l.b16 %v531
  %v1971 = vunpack.c.h.b16 %v531
  %v1972 = vunpack.c.l.b16 %v532
  %v1973 = vunpack.c.h.b16 %v532
  %v1974 = vunpack.c.l.b16 %v533
  %v1975 = vunpack.c.h.b16 %v533
  %v1976 = vunpack.c.l.b16 %v534
  %v1977 = vunpack.c.h.b16 %v534
  %v1978 = vunpack.c.l.b16 %v535
  %v1979 = vunpack.c.h.b16 %v535
  %v1980 = vunpack.c.l.b16 %v536
  %v1981 = vunpack.c.h.b16 %v536
  %v1982 = vunpack.c.l.b16 %v537
  %v1983 = vunpack.c.h.b16 %v537
  %v1984 = vunpack.c.l.b16 %v538
  %v1985 = vunpack.c.h.b16 %v538
  %v1986 = vunpack.c.l.b16 %v539
  %v1987 = vunpack.c.h.b16 %v539
  %v1988 = vunpack.c.l.b16 %v540
  %v1989 = vunpack.c.h.b16 %v540
  %v1990 = vunpack.c.l.b16 %v541
  %v1991 = vunpack.c.h.b16 %v541
  %v1992 = vunpack.c.l.b16 %v542
  %v1993 = vunpack.c.h.b16 %v542
  %v1994 = vunpack.c.l.b16 %v543
  %v1995 = vunpack.c.h.b16 %v543
  %v1996 = vunpack.c.l.b16 %v544
  %v1997 = vunpack.c.h.b16 %v544
  %v1998 = vunpack.c.l.b16 %v545
  %v1999 = vunpack.c.h.b16 %v545
  %v2000 = vunpack.c.l.b16 %v546
  %v2001 = vunpack.c.h.b16 %v546
  %v2002 = vunpack.c.l.b16 %v547
  %v2003 = vunpack.c.h.b16 %v547
  %v2004 = vunpack.c.l.b16 %v548
  %v2005 = vunpack.c.h.b16 %v548
  %v2006 = vunpack.c.l.b16 %v549
  %v2007 = vunpack.c.h.b16 %v549
  %v2008 = vunpack.c.l.b16 %v550
  %v2009 = vunpack.c.h.b16 %v550
  %v2010 = vunpack.c.l.b16 %v551
  %v2011 = vunpack.c.h.b16 %v551
  %v2012 = vunpack.c.l.b16 %v552
  %v2013 = vunpack.c.h.b16 %v552
  %v2014 = vunpack.c.l.b16 %v553
  %v2015 = vunpack.c.h.b16 %v553
  %v2016 = vunpack.c.l.b16 %v554
  %v2017 = vunpack.c.h.b16 %v554
  %v2018 = vunpack.c.l.b16 %v555
  %v2019 = vunpack.c.h.b16 %v555
  %v2020 = vunpack.c.l.b16 %v556
  %v2021 = vunpack.c.h.b16 %v556
  %v2022 = vunpack.c.l.b16 %v557
  %v2023 = vunpack.c.h.b16 %v557
  %v2024 = vunpack.c.l.b16 %v558
  %v2025 = vunpack.c.h.b16 %v558
  %v2026 = vunpack.c.l.b16 %v559
  %v2027 = vunpack.c.h.b16 %v559
  %v2028 = vunpack.c.l.b16 %v560
  %v2029 = vunpack.c.h.b16 %v560
  %v2030 = vunpack.c.l.b16 %v561
  %v2031 = vunpack.c.h.b16 %v561
  %v2032 = vunpack.c.l.b16 %v562
  %v2033 = vunpack.c.h.b16 %v562
  %v2034 = vunpack.c.l.b16 %v563
  %v2035 = vunpack.c.h.b16 %v563
  %v2036 = vunpack.c.l.b16 %v564
  %v2037 = vunpack.c.h.b16 %v564
  %v2038 = vunpack.c.l.b16 %v565
  %v2039 = vunpack.c.h.b16 %v565
  %v2040 = vunpack.c.l.b16 %v566
  %v2041 = vunpack.c.h.b16 %v566
  %v2042 = vunpack.c.l.b16 %v567
  %v2043 = vunpack.c.h.b16 %v567
  %v2044 = vunpack.c.l.b16 %v568
  %v2045 = vunpack.c.h.b16 %v568
  %v2046 = vunpack.c.l.b16 %v569
  %v2047 = vunpack.c.h.b16 %v569
  %v2048 = vunpack.c.l.b16 %v570
  %v2049 = vunpack.c.h.b16 %v570
  %v2050 = vunpack.c.l.b16 %v571
  %v2051 = vunpack.c.h.b16 %v571
  %v2052 = vunpack.c.l.b16 %v572
  %v2053 = vunpack.c.h.b16 %v572
  %v2054 = vunpack.c.l.b16 %v573
  %v2055 = vunpack.c.h.b16 %v573
  %v2056 = vunpack.c.l.b16 %v574
  %v2057 = vunpack.c.h.b16 %v574
  %v2058 = vunpack.c.l.b16 %v575
  %v2059 = vunpack.c.h.b16 %v575
  %v2060 = vunpack.c.l.b16 %v576
  %v2061 = vunpack.c.h.b16 %v576
  %v2062 = vunpack.c.l.b16 %v577
  %v2063 = vunpack.c.h.b16 %v577
  %v2064 = vunpack.c.l.b16 %v578
  %v2065 = vunpack.c.h.b16 %v578
  %v2066 = vunpack.c.l.b16 %v579
  %v2067 = vunpack.c.h.b16 %v579
  %v2068 = vunpack.c.l.b16 %v580
  %v2069 = vunpack.c.h.b16 %v580
  %v2070 = vunpack.c.l.b16 %v581
  %v2071 = vunpack.c.h.b16 %v581
  %v2072 = vunpack.c.l.b16 %v582
  %v2073 = vunpack.c.h.b16 %v582
  %v2074 = vunpack.c.l.b16 %v583
  %v2075 = vunpack.c.h.b16 %v583
  %v2076 = vunpack.c.l.b16 %v584
  %v2077 = vunpack.c.h.b16 %v584
  %v2078 = vunpack.c.l.b16 %v585
  %v2079 = vunpack.c.h.b16 %v585
  %v2080 = vunpack.c.l.b16 %v586
  %v2081 = vunpack.c.h.b16 %v586
  %v2082 = vunpack.c.l.b16 %v587
  %v2083 = vunpack.c.h.b16 %v587
  %v2084 = vunpack.c.l.b16 %v588
  %v2085 = vunpack.c.h.b16 %v588
  %v2086 = vunpack.c.l.b16 %v589
  %v2087 = vunpack.c.h.b16 %v589
  %v2088 = vunpack.c.l.b16 %v590
  %v2089 = vunpack.c.h.b16 %v590
  %v2090 = vunpack.c.l.b16 %v591
  %v2091 = vunpack.c.h.b16 %v591
  %v2092 = vunpack.c.l.b16 %v592
  %v2093 = vunpack.c.h.b16 %v592
  %v2094 = vunpack.c.l.b16 %v593
  %v2095 = vunpack.c.h.b16 %v593
  %v2096 = vunpack.c.l.b16 %v594
  %v2097 = vunpack.c.h.b16 %v594
  %v2098 = vunpack.c.l.b16 %v595
  %v2099 = vunpack.c.h.b16 %v595
  %v2100 = vunpack.c.l.b16 %v596
  %v2101 = vunpack.c.h.b16 %v596
  %v2102 = vunpack.c.l.b16 %v597
  %v2103 = vunpack.c.h.b16 %v597
  %v2104 = vunpack.c.l.b16 %v598
  %v2105 = vunpack.c.h.b16 %v598
  %v2106 = vunpack.c.l.b16 %v599
  %v2107 = vunpack.c.h.b16 %v599
  %v2108 = vunpack.c.l.b16 %v600
  %v2109 = vunpack.c.h.b16 %v600
  %v2110 = vunpack.c.l.b16 %v601
  %v2111 = vunpack.c.h.b16 %v601
  %v2112 = vunpack.c.l.b16 %v602
  %v2113 = vunpack.c.h.b16 %v602
  %v2114 = vunpack.c.l.b16 %v603
  %v2115 = vunpack.c.h.b16 %v603
  %v2116 = vunpack.c.l.b16 %v604
  %v2117 = vunpack.c.h.b16 %v604
  %v2118 = vunpack.c.l.b16 %v605
  %v2119 = vunpack.c.h.b16 %v605
  %v2120 = vunpack.c.l.b16 %v606
  %v2121 = vunpack.c.h.b16 %v606
  %v2122 = vunpack.c.l.b16 %v607
  %v2123 = vunpack.c.h.b16 %v607
  %v2124 = vunpack.c.l.b16 %v608
  %v2125 = vunpack.c.h.b16 %v608
  %v2126 = vunpack.c.l.b16 %v609
  %v2127 = vunpack.c.h.b16 %v609
  %v2128 = vunpack.c.l.b16 %v610
  %v2129 = vunpack.c.h.b16 %v610
  %v2130 = vunpack.c.l.b16 %v611
  %v2131 = vunpack.c.h.b16 %v611
  %v2132 = vunpack.c.l.b16 %v612
  %v2133 = vunpack.c.h.b16 %v612
  %v2134 = vunpack.c.l.b16 %v613
  %v2135 = vunpack.c.h.b16 %v613
  %v2136 = vunpack.c.l.b16 %v614
  %v2137 = vunpack.c.h.b16 %v614
  %v2138 = vunpack.c.l.b16 %v615
  %v2139 = vunpack.c.h.b16 %v615
  %v2140 = vunpack.c.l.b16 %v616
  %v2141 = vunpack.c.h.b16 %v616
  %v2142 = vunpack.c.l.b16 %v617
  %v2143 = vunpack.c.h.b16 %v617
  %v2144 = vunpack.c.l.b16 %v618
  %v2145 = vunpack.c.h.b16 %v618
  %v2146 = vunpack.c.l.b16 %v619
  %v2147 = vunpack.c.h.b16 %v619
  %v2148 = vunpack.c.l.b16 %v620
  %v2149 = vunpack.c.h.b16 %v620
  %v2150 = vunpack.c.l.b16 %v621
  %v2151 = vunpack.c.h.b16 %v621
  %v2152 = vunpack.c.l.b16 %v622
  %v2153 = vunpack.c.h.b16 %v622
  %v2154 = vunpack.c.l.b16 %v623
  %v2155 = vunpack.c.h.b16 %v623
  %v2156 = vunpack.c.l.b16 %v624
  %v2157 = vunpack.c.h.b16 %v624
  %v2158 = vunpack.c.l.b16 %v625
  %v2159 = vunpack.c.h.b16 %v625
  %v2160 = vunpack.c.l.b16 %v626
  %v2161 = vunpack.c.h.b16 %v626
  %v2162 = vunpack.c.l.b16 %v627
  %v2163 = vunpack.c.h.b16 %v627
  %v2164 = vunpack.c.l.b16 %v628
  %v2165 = vunpack.c.h.b16 %v628
  %v2166 = vunpack.c.l.b16 %v629
  %v2167 = vunpack.c.h.b16 %v629
  %v2168 = vunpack.c.l.b16 %v630
  %v2169 = vunpack.c.h.b16 %v630
  %v2170 = vunpack.c.l.b16 %v631
  %v2171 = vunpack.c.h.b16 %v631
  %v2172 = vunpack.c.l.b16 %v632
  %v2173 = vunpack.c.h.b16 %v632
  %v2174 = vunpack.c.l.b16 %v633
  %v2175 = vunpack.c.h.b16 %v633
  %v2176 = vunpack.c.l.b16 %v634
  %v2177 = vunpack.c.h.b16 %v634
  %v2178 = vunpack.c.l.b16 %v635
  %v2179 = vunpack.c.h.b16 %v635
  %v2180 = vunpack.c.l.b16 %v636
  %v2181 = vunpack.c.h.b16 %v636
  %v2182 = vunpack.c.l.b16 %v637
  %v2183 = vunpack.c.h.b16 %v637
  %v2184 = vunpack.c.l.b16 %v638
  %v2185 = vunpack.c.h.b16 %v638
  %v2186 = vunpack.c.l.b16 %v639
  %v2187 = vunpack.c.h.b16 %v639
  %v2188 = vunpack.c.l.b16 %v640
  %v2189 = vunpack.c.h.b16 %v640
  %v2190 = vunpack.c.l.b16 %v641
  %v2191 = vunpack.c.h.b16 %v641
  %v2192 = vunpack.c.l.b16 %v642
  %v2193 = vunpack.c.h.b16 %v642
  %v2194 = vunpack.c.l.b16 %v643
  %v2195 = vunpack.c.h.b16 %v643
  %v2196 = vunpack.c.l.b16 %v644
  %v2197 = vunpack.c.h.b16 %v644
  %v2198 = vunpack.c.l.b16 %v645
  %v2199 = vunpack.c.h.b16 %v645
  %v2200 = vunpack.c.l.b16 %v646
  %v2201 = vunpack.c.h.b16 %v646
  %v2202 = vunpack.c.l.b16 %v647
  %v2203 = vunpack.c.h.b16 %v647
  %v2204 = vunpack.c.l.b16 %v648
  %v2205 = vunpack.c.h.b16 %v648
  %v2206 = vunpack.c.l.b16 %v649
  %v2207 = vunpack.c.h.b16 %v649
  %v2208 = vunpack.c.l.b16 %v650
  %v2209 = vunpack.c.h.b16 %v650
  %v2210 = vunpack.c.l.b16 %v651
  %v2211 = vunpack.c.h.b16 %v651
  %v2212 = vunpack.c.l.b16 %v652
  %v2213 = vunpack.c.h.b16 %v652
  %v2214 = vunpack.c.l.b16 %v653
  %v2215 = vunpack.c.h.b16 %v653
  %v2216 = vunpack.c.l.b16 %v654
  %v2217 = vunpack.c.h.b16 %v654
  %v2218 = vunpack.c.l.b16 %v655
  %v2219 = vunpack.c.h.b16 %v655
  %v2220 = vunpack.c.l.b16 %v656
  %v2221 = vunpack.c.h.b16 %v656
  %v2222 = vunpack.c.l.b16 %v657
  %v2223 = vunpack.c.h.b16 %v657
  %v2224 = vunpack.c.l.b16 %v658
  %v2225 = vunpack.c.h.b16 %v658
  %v2226 = vunpack.c.l.b16 %v659
  %v2227 = vunpack.c.h.b16 %v659
  %v2228 = vunpack.c.l.b16 %v660
  %v2229 = vunpack.c.h.b16 %v660
  %v2230 = vunpack.c.l.b16 %v661
  %v2231 = vunpack.c.h.b16 %v661
  %v2232 = vunpack.c.l.b16 %v662
  %v2233 = vunpack.c.h.b16 %v662
  %v2234 = vunpack.c.l.b16 %v663
  %v2235 = vunpack.c.h.b16 %v663
  %v2236 = vunpack.c.l.b16 %v664
  %v2237 = vunpack.c.h.b16 %v664
  %v2238 = vunpack.c.l.b16 %v665
  %v2239 = vunpack.c.h.b16 %v665
  %v2240 = vunpack.c.l.b16 %v666
  %v2241 = vunpack.c.h.b16 %v666
  %v2242 = vunpack.c.l.b16 %v667
  %v2243 = vunpack.c.h.b16 %v667
  %v2244 = vunpack.c.l.b16 %v668
  %v2245 = vunpack.c.h.b16 %v668
  %v2246 = vunpack.c.l.b16 %v669
  %v2247 = vunpack.c.h.b16 %v669
  %v2248 = vunpack.c.l.b16 %v670
  %v2249 = vunpack.c.h.b16 %v670
  %v2250 = vunpack.c.l.b16 %v671
  %v2251 = vunpack.c.h.b16 %v671
  %v2252 = vunpack.c.l.b16 %v672
  %v2253 = vunpack.c.h.b16 %v672
  %v2254 = vunpack.c.l.b16 %v673
  %v2255 = vunpack.c.h.b16 %v673
  %v2256 = vunpack.c.l.b16 %v674
  %v2257 = vunpack.c.h.b16 %v674
  %v2258 = vunpack.c.l.b16 %v675
  %v2259 = vunpack.c.h.b16 %v675
  %v2260 = vunpack.c.l.b16 %v676
  %v2261 = vunpack.c.h.b16 %v676
  %v2262 = vunpack.c.l.b16 %v677
  %v2263 = vunpack.c.h.b16 %v677
  %v2264 = vunpack.c.l.b16 %v678
  %v2265 = vunpack.c.h.b16 %v678
  %v2266 = vunpack.c.l.b16 %v679
  %v2267 = vunpack.c.h.b16 %v679
  %v2268 = vunpack.c.l.b16 %v680
  %v2269 = vunpack.c.h.b16 %v680
  %v2270 = vunpack.c.l.b16 %v681
  %v2271 = vunpack.c.h.b16 %v681
  %v2272 = vunpack.c.l.b16 %v682
  %v2273 = vunpack.c.h.b16 %v682
  %v2274 = vunpack.c.l.b16 %v683
  %v2275 = vunpack.c.h.b16 %v683
  %v2276 = vunpack.c.l.b16 %v684
  %v2277 = vunpack.c.h.b16 %v684
  %v2278 = vunpack.c.l.b16 %v685
  %v2279 = vunpack.c.h.b16 %v685
  %v2280 = vunpack.c.l.b16 %v686
  %v2281 = vunpack.c.h.b16 %v686
  %v2282 = vunpack.c.l.b16 %v687
  %v2283 = vunpack.c.h.b16 %v687
  %v2284 = vunpack.c.l.b16 %v688
  %v2285 = vunpack.c.h.b16 %v688
  %v2286 = vunpack.c.l.b16 %v689
  %v2287 = vunpack.c.h.b16 %v689
  %v2288 = vunpack.c.l.b16 %v690
  %v2289 = vunpack.c.h.b16 %v690
  %v2290 = vunpack.c.l.b16 %v691
  %v2291 = vunpack.c.h.b16 %v691
  %v2292 = vunpack.c.l.b16 %v692
  %v2293 = vunpack.c.h.b16 %v692
  %v2294 = vunpack.c.l.b16 %v693
  %v2295 = vunpack.c.h.b16 %v693
  %v2296 = vunpack.c.l.b16 %v694
  %v2297 = vunpack.c.h.b16 %v694
  %v2298 = vunpack.c.l.b16 %v695
  %v2299 = vunpack.c.h.b16 %v695
  %v2300 = vunpack.c.l.b16 %v696
  %v2301 = vunpack.c.h.b16 %v696
  %v2302 = vunpack.c.l.b16 %v697
  %v2303 = vunpack.c.h.b16 %v697
  %v2304 = vunpack.c.l.b16 %v698
  %v2305 = vunpack.c.h.b16 %v698
  %v2306 = vunpack.c.l.b16 %v699
  %v2307 = vunpack.c.h.b16 %v699
  %v2308 = vunpack.c.l.b16 %v700
  %v2309 = vunpack.c.h.b16 %v700
  %v2310 = vunpack.c.l.b16 %v701
  %v2311 = vunpack.c.h.b16 %v701
  %v2312 = vunpack.c.l.b16 %v702
  %v2313 = vunpack.c.h.b16 %v702
  %v2314 = vunpack.c.l.b16 %v703
  %v2315 = vunpack.c.h.b16 %v703
  %v2316 = vunpack.c.l.b16 %v704
  %v2317 = vunpack.c.h.b16 %v704
  %v2318 = vunpack.c.l.b16 %v705
  %v2319 = vunpack.c.h.b16 %v705
  %v2320 = vunpack.c.l.b16 %v706
  %v2321 = vunpack.c.h.b16 %v706
  %v2322 = vunpack.c.l.b16 %v707
  %v2323 = vunpack.c.h.b16 %v707
  %v2324 = vunpack.c.l.b16 %v708
  %v2325 = vunpack.c.h.b16 %v708
  %v2326 = vunpack.c.l.b16 %v709
  %v2327 = vunpack.c.h.b16 %v709
  %v2328 = vunpack.c.l.b16 %v710
  %v2329 = vunpack.c.h.b16 %v710
  %v2330 = vunpack.c.l.b16 %v711
  %v2331 = vunpack.c.h.b16 %v711
  %v2332 = vunpack.c.l.b16 %v712
  %v2333 = vunpack.c.h.b16 %v712
  %v2334 = vunpack.c.l.b16 %v713
  %v2335 = vunpack.c.h.b16 %v713
  %v2336 = vunpack.c.l.b16 %v714
  %v2337 = vunpack.c.h.b16 %v714
  %v2338 = vunpack.c.l.b16 %v715
  %v2339 = vunpack.c.h.b16 %v715
  %v2340 = vunpack.c.l.b16 %v716
  %v2341 = vunpack.c.h.b16 %v716
  %v2342 = vunpack.c.l.b16 %v717
  %v2343 = vunpack.c.h.b16 %v717
  %v2344 = vunpack.c.l.b16 %v718
  %v2345 = vunpack.c.h.b16 %v718
  %v2346 = vunpack.c.l.b16 %v719
  %v2347 = vunpack.c.h.b16 %v719
  %v2348 = vunpack.c.l.b16 %v720
  %v2349 = vunpack.c.h.b16 %v720
  %v2350 = vunpack.c.l.b16 %v721
  %v2351 = vunpack.c.h.b16 %v721
  %v2352 = vunpack.c.l.b16 %v722
  %v2353 = vunpack.c.h.b16 %v722
  %v2354 = vunpack.c.l.b16 %v723
  %v2355 = vunpack.c.h.b16 %v723
  %v2356 = vunpack.c.l.b16 %v724
  %v2357 = vunpack.c.h.b16 %v724
  %v2358 = vunpack.c.l.b16 %v725
  %v2359 = vunpack.c.h.b16 %v725
  %v2360 = vunpack.c.l.b16 %v726
  %v2361 = vunpack.c.h.b16 %v726
  %v2362 = vunpack.c.l.b16 %v727
  %v2363 = vunpack.c.h.b16 %v727
  %v2364 = vunpack.c.l.b16 %v728
  %v2365 = vunpack.c.h.b16 %v728
  %v2366 = vunpack.c.l.b16 %v729
  %v2367 = vunpack.c.h.b16 %v729
  %v2368 = vunpack.c.l.b16 %v730
  %v2369 = vunpack.c.h.b16 %v730
  %v2370 = vunpack.c.l.b16 %v731
  %v2371 = vunpack.c.h.b16 %v731
  %v2372 = vunpack.c.l.b16 %v732
  %v2373 = vunpack.c.h.b16 %v732
  %v2374 = vunpack.c.l.b16 %v733
  %v2375 = vunpack.c.h.b16 %v733
  %v2376 = vunpack.c.l.b16 %v734
  %v2377 = vunpack.c.h.b16 %v734
  %v2378 = vunpack.c.l.b16 %v735
  %v2379 = vunpack.c.h.b16 %v735
  %v2380 = vunpack.c.l.b16 %v736
  %v2381 = vunpack.c.h.b16 %v736
  %v2382 = vunpack.c.l.b16 %v737
  %v2383 = vunpack.c.h.b16 %v737
  %v2384 = vunpack.c.l.b16 %v738
  %v2385 = vunpack.c.h.b16 %v738
  %v2386 = vunpack.c.l.b16 %v739
  %v2387 = vunpack.c.h.b16 %v739
  %v2388 = vunpack.c.l.b16 %v740
  %v2389 = vunpack.c.h.b16 %v740
  %v2390 = vunpack.c.l.b16 %v741
  %v2391 = vunpack.c.h.b16 %v741
  %v2392 = vunpack.c.l.b16 %v742
  %v2393 = vunpack.c.h.b16 %v742
  %v2394 = vunpack.c.l.b16 %v743
  %v2395 = vunpack.c.h.b16 %v743
  %v2396 = vunpack.c.l.b16 %v744
  %v2397 = vunpack.c.h.b16 %v744
  %v2398 = vunpack.c.l.b16 %v745
  %v2399 = vunpack.c.h.b16 %v745
  %v2400 = vunpack.c.l.b16 %v746
  %v2401 = vunpack.c.h.b16 %v746
  %v2402 = vunpack.c.l.b16 %v747
  %v2403 = vunpack.c.h.b16 %v747
  %v2404 = vunpack.c.l.b16 %v748
  %v2405 = vunpack.c.h.b16 %v748
  %v2406 = vunpack.c.l.b16 %v749
  %v2407 = vunpack.c.h.b16 %v749
  %v2408 = vunpack.c.l.b16 %v750
  %v2409 = vunpack.c.h.b16 %v750
  %v2410 = vunpack.c.l.b16 %v751
  %v2411 = vunpack.c.h.b16 %v751
  %v2412 = vunpack.c.l.b16 %v752
  %v2413 = vunpack.c.h.b16 %v752
  %v2414 = vunpack.c.l.b16 %v753
  %v2415 = vunpack.c.h.b16 %v753
  %v2416 = vunpack.c.l.b16 %v754
  %v2417 = vunpack.c.h.b16 %v754
  %v2418 = vunpack.c.l.b16 %v755
  %v2419 = vunpack.c.h.b16 %v755
  %v2420 = vunpack.c.l.b16 %v756
  %v2421 = vunpack.c.h.b16 %v756
  %v2422 = vunpack.c.l.b16 %v757
  %v2423 = vunpack.c.h.b16 %v757
  %v2424 = vunpack.c.l.b16 %v758
  %v2425 = vunpack.c.h.b16 %v758
  %v2426 = vunpack.c.l.b16 %v759
  %v2427 = vunpack.c.h.b16 %v759
  %v2428 = vunpack.c.l.b16 %v760
  %v2429 = vunpack.c.h.b16 %v760
  %v2430 = vunpack.c.l.b16 %v761
  %v2431 = vunpack.c.h.b16 %v761
  %v2432 = vunpack.c.l.b16 %v762
  %v2433 = vunpack.c.h.b16 %v762
  %v2434 = vunpack.c.l.b16 %v763
  %v2435 = vunpack.c.h.b16 %v763
  %v2436 = vunpack.c.l.b16 %v764
  %v2437 = vunpack.c.h.b16 %v764
  %v2438 = vunpack.c.l.b16 %v765
  %v2439 = vunpack.c.h.b16 %v765
  %v2440 = vunpack.c.l.b16 %v766
  %v2441 = vunpack.c.h.b16 %v766
  %v2442 = vunpack.c.l.b16 %v767
  %v2443 = vunpack.c.h.b16 %v767
  %v2444 = vunpack.c.l.b16 %v768
  %v2445 = vunpack.c.h.b16 %v768
  %v2446 = vunpack.c.l.b16 %v769
  %v2447 = vunpack.c.h.b16 %v769
  %v2448 = vunpack.c.l.b16 %v770
  %v2449 = vunpack.c.h.b16 %v770
  %v2450 = vunpack.c.l.b16 %v771
  %v2451 = vunpack.c.h.b16 %v771
  %v2452 = vunpack.c.l.b16 %v772
  %v2453 = vunpack.c.h.b16 %v772
  %v2454 = vunpack.c.l.b16 %v773
  %v2455 = vunpack.c.h.b16 %v773
  %v2456 = vunpack.c.l.b16 %v774
  %v2457 = vunpack.c.h.b16 %v774
  %v2458 = vunpack.c.l.b16 %v775
  %v2459 = vunpack.c.h.b16 %v775
  %v2460 = vunpack.c.l.b16 %v776
  %v2461 = vunpack.c.h.b16 %v776
  %v2462 = vunpack.c.l.b16 %v777
  %v2463 = vunpack.c.h.b16 %v777
  %v2464 = vunpack.c.l.b16 %v778
  %v2465 = vunpack.c.h.b16 %v778
  %v2466 = vunpack.c.l.b16 %v779
  %v2467 = vunpack.c.h.b16 %v779
  %v2468 = vunpack.c.l.b16 %v780
  %v2469 = vunpack.c.h.b16 %v780
  %v2470 = vunpack.c.l.b16 %v781
  %v2471 = vunpack.c.h.b16 %v781
  %v2472 = vunpack.c.l.b16 %v782
  %v2473 = vunpack.c.h.b16 %v782
  %v2474 = vunpack.c.l.b16 %v783
  %v2475 = vunpack.c.h.b16 %v783
  %v2476 = vunpack.c.l.b16 %v784
  %v2477 = vunpack.c.h.b16 %v784
  %v2478 = vunpack.c.l.b16 %v785
  %v2479 = vunpack.c.h.b16 %v785
  %v2480 = vunpack.c.l.b16 %v786
  %v2481 = vunpack.c.h.b16 %v786
  %v2482 = vunpack.c.l.b16 %v787
  %v2483 = vunpack.c.h.b16 %v787
  %v2484 = vunpack.c.l.b16 %v788
  %v2485 = vunpack.c.h.b16 %v788
  %v2486 = vunpack.c.l.b16 %v789
  %v2487 = vunpack.c.h.b16 %v789
  %v2488 = vunpack.c.l.b16 %v790
  %v2489 = vunpack.c.h.b16 %v790
  %v2490 = vunpack.c.l.b16 %v791
  %v2491 = vunpack.c.h.b16 %v791
  %v2492 = vunpack.c.l.b16 %v792
  %v2493 = vunpack.c.h.b16 %v792
  %v2494 = vunpack.c.l.b16 %v793
  %v2495 = vunpack.c.h.b16 %v793
  %v2496 = vunpack.c.l.b16 %v794
  %v2497 = vunpack.c.h.b16 %v794
  %v2498 = vunpack.c.l.b16 %v795
  %v2499 = vunpack.c.h.b16 %v795
  %v2500 = vunpack.c.l.b16 %v796
  %v2501 = vunpack.c.h.b16 %v796
  %v2502 = vunpack.c.l.b16 %v797
  %v2503 = vunpack.c.h.b16 %v797
  %v2504 = vunpack.c.l.b16 %v798
  %v2505 = vunpack.c.h.b16 %v798
  %v2506 = vunpack.c.l.b16 %v799
  %v2507 = vunpack.c.h.b16 %v799
  %v2508 = vunpack.c.l.b16 %v800
  %v2509 = vunpack.c.h.b16 %v800
  %v2510 = vunpack.c.l.b16 %v801
  %v2511 = vunpack.c.h.b16 %v801
  %v2512 = vunpack.c.l.b16 %v802
  %v2513 = vunpack.c.h.b16 %v802
  %v2514 = vunpack.c.l.b16 %v803
  %v2515 = vunpack.c.h.b16 %v803
  %v2516 = vunpack.c.l.b16 %v804
  %v2517 = vunpack.c.h.b16 %v804
  %v2518 = vunpack.c.l.b16 %v805
  %v2519 = vunpack.c.h.b16 %v805
  %v2520 = vunpack.c.l.b16 %v806
  %v2521 = vunpack.c.h.b16 %v806
  %v2522 = vunpack.c.l.b16 %v807
  %v2523 = vunpack.c.h.b16 %v807
  %v2524 = vunpack.c.l.b16 %v808
  %v2525 = vunpack.c.h.b16 %v808
  %v2526 = vunpack.c.l.b16 %v809
  %v2527 = vunpack.c.h.b16 %v809
  %v2528 = vunpack.c.l.b16 %v810
  %v2529 = vunpack.c.h.b16 %v810
  %v2530 = vunpack.c.l.b16 %v811
  %v2531 = vunpack.c.h.b16 %v811
  %v2532 = vunpack.c.l.b16 %v812
  %v2533 = vunpack.c.h.b16 %v812
  %v2534 = vunpack.c.l.b16 %v813
  %v2535 = vunpack.c.h.b16 %v813
  %v2536 = vunpack.c.l.b16 %v814
  %v2537 = vunpack.c.h.b16 %v814
  %v2538 = vunpack.c.l.b16 %v815
  %v2539 = vunpack.c.h.b16 %v815
  %v2540 = vunpack.c.l.b16 %v816
  %v2541 = vunpack.c.h.b16 %v816
  %v2542 = vunpack.c.l.b16 %v817
  %v2543 = vunpack.c.h.b16 %v817
  %v2544 = vunpack.c.l.b16 %v818
  %v2545 = vunpack.c.h.b16 %v818
  %v2546 = vunpack.c.l.b16 %v819
  %v2547 = vunpack.c.h.b16 %v819
  %v2548 = vpack.c.b16 %v1420, %v1396
  %v2549 = vpack.c.b16 %v1421, %v1397
  %v2550 = vpack.c.b16 %v1422, %v1398
  %v2551 = vpack.c.b16 %v1423, %v1399
  %v2552 = vpack.c.b16 %v1424, %v1400
  %v2553 = vpack.c.b16 %v1425, %v1401
  %v2554 = vpack.c.b16 %v1426, %v1402
  %v2555 = vpack.c.b16 %v1427, %v1403
  %v2556 = vpack.c.b16 %v1428, %v1404
  %v2557 = vpack.c.b16 %v1429, %v1405
  %v2558 = vpack.c.b16 %v1430, %v1406
  %v2559 = vpack.c.b16 %v1431, %v1407
  %v2560 = vpack.c.b16 %v1432, %v1408
  %v2561 = vpack.c.b16 %v1433, %v1409
  %v2562 = vpack.c.b16 %v1434, %v1410
  %v2563 = vpack.c.b16 %v1435, %v1411
  %v2564 = vpack.c.b16 %v1436, %v1412
  %v2565 = vpack.c.b16 %v1437, %v1413
  %v2566 = vpack.c.b16 %v1438, %v1414
  %v2567 = vpack.c.b16 %v1439, %v1415
  %v2568 = vpack.c.b16 %v1440, %v1416
  %v2569 = vpack.c.b16 %v1441, %v1417
  %v2570 = vpack.c.b16 %v1442, %v1418
  %v2571 = vpack.c.b16 %v1443, %v1419
  %v2572 = vpack.c.b16 %v1468, %v1444
  %v2573 = vpack.c.b16 %v1469, %v1445
  %v2574 = vpack.c.b16 %v1470, %v1446
  %v2575 = vpack.c.b16 %v1471, %v1447
  %v2576 = vpack.c.b16 %v1472, %v1448
  %v2577 = vpack.c.b16 %v1473, %v1449
  %v2578 = vpack.c.b16 %v1474, %v1450
  %v2579 = vpack.c.b16 %v1475, %v1451
  %v2580 = vpack.c.b16 %v1476, %v1452
  %v2581 = vpack.c.b16 %v1477, %v1453
  %v2582 = vpack.c.b16 %v1478, %v1454
  %v2583 = vpack.c.b16 %v1479, %v1455
  %v2584 = vpack.c.b16 %v1480, %v1456
  %v2585 = vpack.c.b16 %v1481, %v1457
  %v2586 = vpack.c.b16 %v1482, %v1458
  %v2587 = vpack.c.b16 %v1483, %v1459
  %v2588 = vpack.c.b16 %v1484, %v1460
  %v2589 = vpack.c.b16 %v1485, %v1461
  %v2590 = vpack.c.b16 %v1486, %v1462
  %v2591 = vpack.c.b16 %v1487, %v1463
  %v2592 = vpack.c.b16 %v1488, %v1464
  %v2593 = vpack.c.b16 %v1489, %v1465
  %v2594 = vpack.c.b16 %v1490, %v1466
  %v2595 = vpack.c.b16 %v1491, %v1467
  %v2596 = vpack.c.b16 %v1516, %v1492
  %v2597 = vpack.c.b16 %v1517, %v1493
  %v2598 = vpack.c.b16 %v1518, %v1494
  %v2599 = vpack.c.b16 %v1519, %v1495
  %v2600 = vpack.c.b16 %v1520, %v1496
  %v2601 = vpack.c.b16 %v1521, %v1497
  %v2602 = vpack.c.b16 %v1522, %v1498
  %v2603 = vpack.c.b16 %v1523, %v1499
  %v2604 = vpack.c.b16 %v1524, %v1500
  %v2605 = vpack.c.b16 %v1525, %v1501
  %v2606 = vpack.c.b16 %v1526, %v1502
  %v2607 = vpack.c.b16 %v1527, %v1503
  %v2608 = vpack.c.b16 %v1528, %v1504
  %v2609 = vpack.c.b16 %v1529, %v1505
  %v2610 = vpack.c.b16 %v1530, %v1506
  %v2611 = vpack.c.b16 %v1531, %v1507
  %v2612 = vpack.c.b16 %v1532, %v1508
  %v2613 = vpack.c.b16 %v1533, %v1509
  %v2614 = vpack.c.b16 %v1534, %v1510
  %v2615 = vpack.c.b16 %v1535, %v1511
  %v2616 = vpack.c.b16 %v1536, %v1512
  %v2617 = vpack.c.b16 %v1537, %v1513
  %v2618 = vpack.c.b16 %v1538, %v1514
  %v2619 = vpack.c.b16 %v1539, %v1515
  %v2620 = vpack.c.b16 %v1564, %v1540
  %v2621 = vpack.c.b16 %v1565, %v1541
  %v2622 = vpack.c.b16 %v1566, %v1542
  %v2623 = vpack.c.b16 %v1567, %v1543
  %v2624 = vpack.c.b16 %v1568, %v1544
  %v2625 = vpack.c.b16 %v1569, %v1545
  %v2626 = vpack.c.b16 %v1570, %v1546
  %v2627 = vpack.c.b16 %v1571, %v1547
  %v2628 = vpack.c.b16 %v1572, %v1548
  %v2629 = vpack.c.b16 %v1573, %v1549
  %v2630 = vpack.c.b16 %v1574, %v1550
  %v2631 = vpack.c.b16 %v1575, %v1551
  %v2632 = vpack.c.b16 %v1576, %v1552
  %v2633 = vpack.c.b16 %v1577, %v1553
  %v2634 = vpack.c.b16 %v1578, %v1554
  %v2635 = vpack.c.b16 %v1579, %v1555
  %v2636 = vpack.c.b16 %v1580, %v1556
  %v2637 = vpack.c.b16 %v1581, %v1557
  %v2638 = vpack.c.b16 %v1582, %v1558
  %v2639 = vpack.c.b16 %v1583, %v1559
  %v2640 = vpack.c.b16 %v1584, %v1560
  %v2641 = vpack.c.b16 %v1585, %v1561
  %v2642 = vpack.c.b16 %v1586, %v1562
  %v2643 = vpack.c.b16 %v1587, %v1563
  %v2644 = vpack.c.b16 %v1612, %v1588
  %v2645 = vpack.c.b16 %v1613, %v1589
  %v2646 = vpack.c.b16 %v1614, %v1590
  %v2647 = vpack.c.b16 %v1615, %v1591
  %v2648 = vpack.c.b16 %v1616, %v1592
  %v2649 = vpack.c.b16 %v1617, %v1593
  %v2650 = vpack.c.b16 %v1618, %v1594
  %v2651 = vpack.c.b16 %v1619, %v1595
  %v2652 = vpack.c.b16 %v1620, %v1596
  %v2653 = vpack.c.b16 %v1621, %v1597
  %v2654 = vpack.c.b16 %v1622, %v1598
  %v2655 = vpack.c.b16 %v1623, %v1599
  %v2656 = vpack.c.b16 %v1624, %v1600
  %v2657 = vpack.c.b16 %v1625, %v1601
  %v2658 = vpack.c.b16 %v1626, %v1602
  %v2659 = vpack.c.b16 %v1627, %v1603
  %v2660 = vpack.c.b16 %v1628, %v1604
  %v2661 = vpack.c.b16 %v1629, %v1605
  %v2662 = vpack.c.b16 %v1630, %v1606
  %v2663 = vpack.c.b16 %v1631, %v1607
  %v2664 = vpack.c.b16 %v1632, %v1608
  %v2665 = vpack.c.b16 %v1633, %v1609
  %v2666 = vpack.c.b16 %v1634, %v1610
  %v2667 = vpack.c.b16 %v1635, %v1611
  %v2668 = vpack.c.b16 %v1660, %v1636
  %v2669 = vpack.c.b16 %v1661, %v1637
  %v2670 = vpack.c.b16 %v1662, %v1638
  %v2671 = vpack.c.b16 %v1663, %v1639
  %v2672 = vpack.c.b16 %v1664, %v1640
  %v2673 = vpack.c.b16 %v1665, %v1641
  %v2674 = vpack.c.b16 %v1666, %v1642
  %v2675 = vpack.c.b16 %v1667, %v1643
  %v2676 = vpack.c.b16 %v1668, %v1644
  %v2677 = vpack.c.b16 %v1669, %v1645
  %v2678 = vpack.c.b16 %v1670, %v1646
  %v2679 = vpack.c.b16 %v1671, %v1647
  %v2680 = vpack.c.b16 %v1672, %v1648
  %v2681 = vpack.c.b16 %v1673, %v1649
  %v2682 = vpack.c.b16 %v1674, %v1650
  %v2683 = vpack.c.b16 %v1675, %v1651
  %v2684 = vpack.c.b16 %v1676, %v1652
  %v2685 = vpack.c.b16 %v1677, %v1653
  %v2686 = vpack.c.b16 %v1678, %v1654
  %v2687 = vpack.c.b16 %v1679, %v1655
  %v2688 = vpack.c.b16 %v1680, %v1656
  %v2689 = vpack.c.b16 %v1681, %v1657
  %v2690 = vpack.c.b16 %v1682, %v1658
  %v2691 = vpack.c.b16 %v1683, %v1659
  %v2692 = vpack.c.b16 %v1708, %v1684
  %v2693 = vpack.c.b16 %v1709, %v1685
  %v2694 = vpack.c.b16 %v1710, %v1686
  %v2695 = vpack.c.b16 %v1711, %v1687
  %v2696 = vpack.c.b16 %v1712, %v1688
  %v2697 = vpack.c.b16 %v1713, %v1689
  %v2698 = vpack.c.b16 %v1714, %v1690
  %v2699 = vpack.c.b16 %v1715, %v1691
  %v2700 = vpack.c.b16 %v1716, %v1692
  %v2701 = vpack.c.b16 %v1717, %v1693
  %v2702 = vpack.c.b16 %v1718, %v1694
  %v2703 = vpack.c.b16 %v1719, %v1695
  %v2704 = vpack.c.b16 %v1720, %v1696
  %v2705 = vpack.c.b16 %v1721, %v1697
  %v2706 = vpack.c.b16 %v1722, %v1698
  %v2707 = vpack.c.b16 %v1723, %v1699
  %v2708 = vpack.c.b16 %v1724, %v1700
  %v2709 = vpack.c.b16 %v1725, %v1701
  %v2710 = vpack.c.b16 %v1726, %v1702
  %v2711 = vpack.c.b16 %v1727, %v1703
  %v2712 = vpack.c.b16 %v1728, %v1704
  %v2713 = vpack.c.b16 %v1729, %v1705
  %v2714 = vpack.c.b16 %v1730, %v1706
  %v2715 = vpack.c.b16 %v1731, %v1707
  %v2716 = vpack.c.b16 %v1756, %v1732
  %v2717 = vpack.c.b16 %v1757, %v1733
  %v2718 = vpack.c.b16 %v1758, %v1734
  %v2719 = vpack.c.b16 %v1759, %v1735
  %v2720 = vpack.c.b16 %v1760, %v1736
  %v2721 = vpack.c.b16 %v1761, %v1737
  %v2722 = vpack.c.b16 %v1762, %v1738
  %v2723 = vpack.c.b16 %v1763, %v1739
  %v2724 = vpack.c.b16 %v1764, %v1740
  %v2725 = vpack.c.b16 %v1765, %v1741
  %v2726 = vpack.c.b16 %v1766, %v1742
  %v2727 = vpack.c.b16 %v1767, %v1743
  %v2728 = vpack.c.b16 %v1768, %v1744
  %v2729 = vpack.c.b16 %v1769, %v1745
  %v2730 = vpack.c.b16 %v1770, %v1746
  %v2731 = vpack.c.b16 %v1771, %v1747
  %v2732 = vpack.c.b16 %v1772, %v1748
  %v2733 = vpack.c.b16 %v1773, %v1749
  %v2734 = vpack.c.b16 %v1774, %v1750
  %v2735 = vpack.c.b16 %v1775, %v1751
  %v2736 = vpack.c.b16 %v1776, %v1752
  %v2737 = vpack.c.b16 %v1777, %v1753
  %v2738 = vpack.c.b16 %v1778, %v1754
  %v2739 = vpack.c.b16 %v1779, %v1755
  %v2740 = vpack.c.b16 %v1804, %v1780
  %v2741 = vpack.c.b16 %v1805, %v1781
  %v2742 = vpack.c.b16 %v1806, %v1782
  %v2743 = vpack.c.b16 %v1807, %v1783
  %v2744 = vpack.c.b16 %v1808, %v1784
  %v2745 = vpack.c.b16 %v1809, %v1785
  %v2746 = vpack.c.b16 %v1810, %v1786
  %v2747 = vpack.c.b16 %v1811, %v1787
  %v2748 = vpack.c.b16 %v1812, %v1788
  %v2749 = vpack.c.b16 %v1813, %v1789
  %v2750 = vpack.c.b16 %v1814, %v1790
  %v2751 = vpack.c.b16 %v1815, %v1791
  %v2752 = vpack.c.b16 %v1816, %v1792
  %v2753 = vpack.c.b16 %v1817, %v1793
  %v2754 = vpack.c.b16 %v1818, %v1794
  %v2755 = vpack.c.b16 %v1819, %v1795
  %v2756 = vpack.c.b16 %v1820, %v1796
  %v2757 = vpack.c.b16 %v1821, %v1797
  %v2758 = vpack.c.b16 %v1822, %v1798
  %v2759 = vpack.c.b16 %v1823, %v1799
  %v2760 = vpack.c.b16 %v1824, %v1800
  %v2761 = vpack.c.b16 %v1825, %v1801
  %v2762 = vpack.c.b16 %v1826, %v1802
  %v2763 = vpack.c.b16 %v1827, %v1803
  %v2764 = vpack.c.b16 %v1852, %v1828
  %v2765 = vpack.c.b16 %v1853, %v1829
  %v2766 = vpack.c.b16 %v1854, %v1830
  %v2767 = vpack.c.b16 %v1855, %v1831
  %v2768 = vpack.c.b16 %v1856, %v1832
  %v2769 = vpack.c.b16 %v1857, %v1833
  %v2770 = vpack.c.b16 %v1858, %v1834
  %v2771 = vpack.c.b16 %v1859, %v1835
  %v2772 = vpack.c.b16 %v1860, %v1836
  %v2773 = vpack.c.b16 %v1861, %v1837
  %v2774 = vpack.c.b16 %v1862, %v1838
  %v2775 = vpack.c.b16 %v1863, %v1839
  %v2776 = vpack.c.b16 %v1864, %v1840
  %v2777 = vpack.c.b16 %v1865, %v1841
  %v2778 = vpack.c.b16 %v1866, %v1842
  %v2779 = vpack.c.b16 %v1867, %v1843
  %v2780 = vpack.c.b16 %v1868, %v1844
  %v2781 = vpack.c.b16 %v1869, %v1845
  %v2782 = vpack.c.b16 %v1870, %v1846
  %v2783 = vpack.c.b16 %v1871, %v1847
  %v2784 = vpack.c.b16 %v1872, %v1848
  %v2785 = vpack.c.b16 %v1873, %v1849
  %v2786 = vpack.c.b16 %v1874, %v1850
  %v2787 = vpack.c.b16 %v1875, %v1851
  %v2788 = vpack.c.b16 %v1900, %v1876
  %v2789 = vpack.c.b16 %v1901, %v1877
  %v2790 = vpack.c.b16 %v1902, %v1878
  %v2791 = vpack.c.b16 %v1903, %v1879
  %v2792 = vpack.c.b16 %v1904, %v1880
  %v2793 = vpack.c.b16 %v1905, %v1881
  %v2794 = vpack.c.b16 %v1906, %v1882
  %v2795 = vpack.c.b16 %v1907, %v1883
  %v2796 = vpack.c.b16 %v1908, %v1884
  %v2797 = vpack.c.b16 %v1909, %v1885
  %v2798 = vpack.c.b16 %v1910, %v1886
  %v2799 = vpack.c.b16 %v1911, %v1887
  %v2800 = vpack.c.b16 %v1912, %v1888
  %v2801 = vpack.c.b16 %v1913, %v1889
  %v2802 = vpack.c.b16 %v1914, %v1890
  %v2803 = vpack.c.b16 %v1915, %v1891
  %v2804 = vpack.c.b16 %v1916, %v1892
  %v2805 = vpack.c.b16 %v1917, %v1893
  %v2806 = vpack.c.b16 %v1918, %v1894
  %v2807 = vpack.c.b16 %v1919, %v1895
  %v2808 = vpack.c.b16 %v1920, %v1896
  %v2809 = vpack.c.b16 %v1921, %v1897
  %v2810 = vpack.c.b16 %v1922, %v1898
  %v2811 = vpack.c.b16 %v1923, %v1899
  %v2812 = vpack.c.b16 %v1948, %v1924
  %v2813 = vpack.c.b16 %v1949, %v1925
  %v2814 = vpack.c.b16 %v1950, %v1926
  %v2815 = vpack.c.b16 %v1951, %v1927
  %v2816 = vpack.c.b16 %v1952, %v1928
  %v2817 = vpack.c.b16 %v1953, %v1929
  %v2818 = vpack.c.b16 %v1954, %v1930
  %v2819 = vpack.c.b16 %v1955, %v1931
  %v2820 = vpack.c.b16 %v1956, %v1932
  %v2821 = vpack.c.b16 %v1957, %v1933
  %v2822 = vpack.c.b16 %v1958, %v1934
  %v2823 = vpack.c.b16 %v1959, %v1935
  %v2824 = vpack.c.b16 %v1960, %v1936
  %v2825 = vpack.c.b16 %v1961, %v1937
  %v2826 = vpack.c.b16 %v1962, %v1938
  %v2827 = vpack.c.b16 %v1963, %v1939
  %v2828 = vpack.c.b16 %v1964, %v1940
  %v2829 = vpack.c.b16 %v1965, %v1941
  %v2830 = vpack.c.b16 %v1966, %v1942
  %v2831 = vpack.c.b16 %v1967, %v1943
  %v2832 = vpack.c.b16 %v1968, %v1944
  %v2833 = vpack.c.b16 %v1969, %v1945
  %v2834 = vpack.c.b16 %v1970, %v1946
  %v2835 = vpack.c.b16 %v1971, %v1947
  %v2836 = vpack.c.b16 %v1996, %v1972
  %v2837 = vpack.c.b16 %v1997, %v1973
  %v2838 = vpack.c.b16 %v1998, %v1974
  %v2839 = vpack.c.b16 %v1999, %v1975
  %v2840 = vpack.c.b16 %v2000, %v1976
  %v2841 = vpack.c.b16 %v2001, %v1977
  %v2842 = vpack.c.b16 %v2002, %v1978
  %v2843 = vpack.c.b16 %v2003, %v1979
  %v2844 = vpack.c.b16 %v2004, %v1980
  %v2845 = vpack.c.b16 %v2005, %v1981
  %v2846 = vpack.c.b16 %v2006, %v1982
  %v2847 = vpack.c.b16 %v2007, %v1983
  %v2848 = vpack.c.b16 %v2008, %v1984
  %v2849 = vpack.c.b16 %v2009, %v1985
  %v2850 = vpack.c.b16 %v2010, %v1986
  %v2851 = vpack.c.b16 %v2011, %v1987
  %v2852 = vpack.c.b16 %v2012, %v1988
  %v2853 = vpack.c.b16 %v2013, %v1989
  %v2854 = vpack.c.b16 %v2014, %v1990
  %v2855 = vpack.c.b16 %v2015, %v1991
  %v2856 = vpack.c.b16 %v2016, %v1992
  %v2857 = vpack.c.b16 %v2017, %v1993
  %v2858 = vpack.c.b16 %v2018, %v1994
  %v2859 = vpack.c.b16 %v2019, %v1995
  %v2860 = vpack.c.b16 %v2044, %v2020
  %v2861 = vpack.c.b16 %v2045, %v2021
  %v2862 = vpack.c.b16 %v2046, %v2022
  %v2863 = vpack.c.b16 %v2047, %v2023
  %v2864 = vpack.c.b16 %v2048, %v2024
  %v2865 = vpack.c.b16 %v2049, %v2025
  %v2866 = vpack.c.b16 %v2050, %v2026
  %v2867 = vpack.c.b16 %v2051, %v2027
  %v2868 = vpack.c.b16 %v2052, %v2028
  %v2869 = vpack.c.b16 %v2053, %v2029
  %v2870 = vpack.c.b16 %v2054, %v2030
  %v2871 = vpack.c.b16 %v2055, %v2031
  %v2872 = vpack.c.b16 %v2056, %v2032
  %v2873 = vpack.c.b16 %v2057, %v2033
  %v2874 = vpack.c.b16 %v2058, %v2034
  %v2875 = vpack.c.b16 %v2059, %v2035
  %v2876 = vpack.c.b16 %v2060, %v2036
  %v2877 = vpack.c.b16 %v2061, %v2037
  %v2878 = vpack.c.b16 %v2062, %v2038
  %v2879 = vpack.c.b16 %v2063, %v2039
  %v2880 = vpack.c.b16 %v2064, %v2040
  %v2881 = vpack.c.b16 %v2065, %v2041
  %v2882 = vpack.c.b16 %v2066, %v2042
  %v2883 = vpack.c.b16 %v2067, %v2043
  %v2884 = vpack.c.b16 %v2092, %v2068
  %v2885 = vpack.c.b16 %v2093, %v2069
  %v2886 = vpack.c.b16 %v2094, %v2070
  %v2887 = vpack.c.b16 %v2095, %v2071
  %v2888 = vpack.c.b16 %v2096, %v2072
  %v2889 = vpack.c.b16 %v2097, %v2073
  %v2890 = vpack.c.b16 %v2098, %v2074
  %v2891 = vpack.c.b16 %v2099, %v2075
  %v2892 = vpack.c.b16 %v2100, %v2076
  %v2893 = vpack.c.b16 %v2101, %v2077
  %v2894 = vpack.c.b16 %v2102, %v2078
  %v2895 = vpack.c.b16 %v2103, %v2079
  %v2896 = vpack.c.b16 %v2104, %v2080
  %v2897 = vpack.c.b16 %v2105, %v2081
  %v2898 = vpack.c.b16 %v2106, %v2082
  %v2899 = vpack.c.b16 %v2107, %v2083
  %v2900 = vpack.c.b16 %v2108, %v2084
  %v2901 = vpack.c.b16 %v2109, %v2085
  %v2902 = vpack.c.b16 %v2110, %v2086
  %v2903 = vpack.c.b16 %v2111, %v2087
  %v2904 = vpack.c.b16 %v2112, %v2088
  %v2905 = vpack.c.b16 %v2113, %v2089
  %v2906 = vpack.c.b16 %v2114, %v2090
  %v2907 = vpack.c.b16 %v2115, %v2091
  %v2908 = vpack.c.b16 %v2140, %v2116
  %v2909 = vpack.c.b16 %v2141, %v2117
  %v2910 = vpack.c.b16 %v2142, %v2118
  %v2911 = vpack.c.b16 %v2143, %v2119
  %v2912 = vpack.c.b16 %v2144, %v2120
  %v2913 = vpack.c.b16 %v2145, %v2121
  %v2914 = vpack.c.b16 %v2146, %v2122
  %v2915 = vpack.c.b16 %v2147, %v2123
  %v2916 = vpack.c.b16 %v2148, %v2124
  %v2917 = vpack.c.b16 %v2149, %v2125
  %v2918 = vpack.c.b16 %v2150, %v2126
  %v2919 = vpack.c.b16 %v2151, %v2127
  %v2920 = vpack.c.b16 %v2152, %v2128
  %v2921 = vpack.c.b16 %v2153, %v2129
  %v2922 = vpack.c.b16 %v2154, %v2130
  %v2923 = vpack.c.b16 %v2155, %v2131
  %v2924 = vpack.c.b16 %v2156, %v2132
  %v2925 = vpack.c.b16 %v2157, %v2133
  %v2926 = vpack.c.b16 %v2158, %v2134
  %v2927 = vpack.c.b16 %v2159, %v2135
  %v2928 = vpack.c.b16 %v2160, %v2136
  %v2929 = vpack.c.b16 %v2161, %v2137
  %v2930 = vpack.c.b16 %v2162, %v2138
  %v2931 = vpack.c.b16 %v2163, %v2139
  %v2932 = vpack.c.b16 %v2188, %v2164
  %v2933 = vpack.c.b16 %v2189, %v2165
  %v2934 = vpack.c.b16 %v2190, %v2166
  %v2935 = vpack.c.b16 %v2191, %v2167
  %v2936 = vpack.c.b16 %v2192, %v2168
  %v2937 = vpack.c.b16 %v2193, %v2169
  %v2938 = vpack.c.b16 %v2194, %v2170
  %v2939 = vpack.c.b16 %v2195, %v2171
  %v2940 = vpack.c.b16 %v2196, %v2172
  %v2941 = vpack.c.b16 %v2197, %v2173
  %v2942 = vpack.c.b16 %v2198, %v2174
  %v2943 = vpack.c.b16 %v2199, %v2175
  %v2944 = vpack.c.b16 %v2200, %v2176
  %v2945 = vpack.c.b16 %v2201, %v2177
  %v2946 = vpack.c.b16 %v2202, %v2178
  %v2947 = vpack.c.b16 %v2203, %v2179
  %v2948 = vpack.c.b16 %v2204, %v2180
  %v2949 = vpack.c.b16 %v2205, %v2181
  %v2950 = vpack.c.b16 %v2206, %v2182
  %v2951 = vpack.c.b16 %v2207, %v2183
  %v2952 = vpack.c.b16 %v2208, %v2184
  %v2953 = vpack.c.b16 %v2209, %v2185
  %v2954 = vpack.c.b16 %v2210, %v2186
  %v2955 = vpack.c.b16 %v2211, %v2187
  %v2956 = vpack.c.b16 %v2236, %v2212
  %v2957 = vpack.c.b16 %v2237, %v2213
  %v2958 = vpack.c.b16 %v2238, %v2214
  %v2959 = vpack.c.b16 %v2239, %v2215
  %v2960 = vpack.c.b16 %v2240, %v2216
  %v2961 = vpack.c.b16 %v2241, %v2217
  %v2962 = vpack.c.b16 %v2242, %v2218
  %v2963 = vpack.c.b16 %v2243, %v2219
  %v2964 = vpack.c.b16 %v2244, %v2220
  %v2965 = vpack.c.b16 %v2245, %v2221
  %v2966 = vpack.c.b16 %v2246, %v2222
  %v2967 = vpack.c.b16 %v2247, %v2223
  %v2968 = vpack.c.b16 %v2248, %v2224
  %v2969 = vpack.c.b16 %v2249, %v2225
  %v2970 = vpack.c.b16 %v2250, %v2226
  %v2971 = vpack.c.b16 %v2251, %v2227
  %v2972 = vpack.c.b16 %v2252, %v2228
  %v2973 = vpack.c.b16 %v2253, %v2229
  %v2974 = vpack.c.b16 %v2254, %v2230
  %v2975 = vpack.c.b16 %v2255, %v2231
  %v2976 = vpack.c.b16 %v2256, %v2232
  %v2977 = vpack.c.b16 %v2257, %v2233
  %v2978 = vpack.c.b16 %v2258, %v2234
  %v2979 = vpack.c.b16 %v2259, %v2235
  %v2980 = vpack.c.b16 %v2284, %v2260
  %v2981 = vpack.c.b16 %v2285, %v2261
  %v2982 = vpack.c.b16 %v2286, %v2262
  %v2983 = vpack.c.b16 %v2287, %v2263
  %v2984 = vpack.c.b16 %v2288, %v2264
  %v2985 = vpack.c.b16 %v2289, %v2265
  %v2986 = vpack.c.b16 %v2290, %v2266
  %v2987 = vpack.c.b16 %v2291, %v2267
  %v2988 = vpack.c.b16 %v2292, %v2268
  %v2989 = vpack.c.b16 %v2293, %v2269
  %v2990 = vpack.c.b16 %v2294, %v2270
  %v2991 = vpack.c.b16 %v2295, %v2271
  %v2992 = vpack.c.b16 %v2296, %v2272
  %v2993 = vpack.c.b16 %v2297, %v2273
  %v2994 = vpack.c.b16 %v2298, %v2274
  %v2995 = vpack.c.b16 %v2299, %v2275
  %v2996 = vpack.c.b16 %v2300, %v2276
  %v2997 = vpack.c.b16 %v2301, %v2277
  %v2998 = vpack.c.b16 %v2302, %v2278
  %v2999 = vpack.c.b16 %v2303, %v2279
  %v3000 = vpack.c.b16 %v2304, %v2280
  %v3001 = vpack.c.b16 %v2305, %v2281
  %v3002 = vpack.c.b16 %v2306, %v2282
  %v3003 = vpack.c.b16 %v2307, %v2283
  %v3004 = vpack.c.b16 %v2332, %v2308
  %v3005 = vpack.c.b16 %v2333, %v2309
  %v3006 = vpack.c.b16 %v2334, %v2310
  %v3007 = vpack.c.b16 %v2335, %v2311
  %v3008 = vpack.c.b16 %v2336, %v2312
  %v3009 = vpack.c.b16 %v2337, %v2313
  %v3010 = vpack.c.b16 %v2338, %v2314
  %v3011 = vpack.c.b16 %v2339, %v2315
  %v3012 = vpack.c.b16 %v2340, %v2316
  %v3013 = vpack.c.b16 %v2341, %v2317
  %v3014 = vpack.c.b16 %v2342, %v2318
  %v3015 = vpack.c.b16 %v2343, %v2319
  %v3016 = vpack.c.b16 %v2344, %v2320
  %v3017 = vpack.c.b16 %v2345, %v2321
  %v3018 = vpack.c.b16 %v2346, %v2322
  %v3019 = vpack.c.b16 %v2347, %v2323
  %v3020 = vpack.c.b16 %v2348, %v2324
  %v3021 = vpack.c.b16 %v2349, %v2325
  %v3022 = vpack.c.b16 %v2350, %v2326
  %v3023 = vpack.c.b16 %v2351, %v2327
  %v3024 = vpack.c.b16 %v2352, %v2328
  %v3025 = vpack.c.b16 %v2353, %v2329
  %v3026 = vpack.c.b16 %v2354, %v2330
  %v3027 = vpack.c.b16 %v2355, %v2331
  %v3028 = vpack.c.b16 %v2380, %v2356
  %v3029 = vpack.c.b16 %v2381, %v2357
  %v3030 = vpack.c.b16 %v2382, %v2358
  %v3031 = vpack.c.b16 %v2383, %v2359
  %v3032 = vpack.c.b16 %v2384, %v2360
  %v3033 = vpack.c.b16 %v2385, %v2361
  %v3034 = vpack.c.b16 %v2386, %v2362
  %v3035 = vpack.c.b16 %v2387, %v2363
  %v3036 = vpack.c.b16 %v2388, %v2364
  %v3037 = vpack.c.b16 %v2389, %v2365
  %v3038 = vpack.c.b16 %v2390, %v2366
  %v3039 = vpack.c.b16 %v2391, %v2367
  %v3040 = vpack.c.b16 %v2392, %v2368
  %v3041 = vpack.c.b16 %v2393, %v2369
  %v3042 = vpack.c.b16 %v2394, %v2370
  %v3043 = vpack.c.b16 %v2395, %v2371
  %v3044 = vpack.c.b16 %v2396, %v2372
  %v3045 = vpack.c.b16 %v2397, %v2373
  %v3046 = vpack.c.b16 %v2398, %v2374
  %v3047 = vpack.c.b16 %v2399, %v2375
  %v3048 = vpack.c.b16 %v2400, %v2376
  %v3049 = vpack.c.b16 %v2401, %v2377
  %v3050 = vpack.c.b16 %v2402, %v2378
  %v3051 = vpack.c.b16 %v2403, %v2379
  %v3052 = vpack.c.b16 %v2428, %v2404
  %v3053 = vpack.c.b16 %v2429, %v2405
  %v3054 = vpack.c.b16 %v2430, %v2406
  %v3055 = vpack.c.b16 %v2431, %v2407
  %v3056 = vpack.c.b16 %v2432, %v2408
  %v3057 = vpack.c.b16 %v2433, %v2409
  %v3058 = vpack.c.b16 %v2434, %v2410
  %v3059 = vpack.c.b16 %v2435, %v2411
  %v3060 = vpack.c.b16 %v2436, %v2412
  %v3061 = vpack.c.b16 %v2437, %v2413
  %v3062 = vpack.c.b16 %v2438, %v2414
  %v3063 = vpack.c.b16 %v2439, %v2415
  %v3064 = vpack.c.b16 %v2440, %v2416
  %v3065 = vpack.c.b16 %v2441, %v2417
  %v3066 = vpack.c.b16 %v2442, %v2418
  %v3067 = vpack.c.b16 %v2443, %v2419
  %v3068 = vpack.c.b16 %v2444, %v2420
  %v3069 = vpack.c.b16 %v2445, %v2421
  %v3070 = vpack.c.b16 %v2446, %v2422
  %v3071 = vpack.c.b16 %v2447, %v2423
  %v3072 = vpack.c.b16 %v2448, %v2424
  %v3073 = vpack.c.b16 %v2449, %v2425
  %v3074 = vpack.c.b16 %v2450, %v2426
  %v3075 = vpack.c.b16 %v2451, %v2427
  %v3076 = vpack.c.b16 %v2476, %v2452
  %v3077 = vpack.c.b16 %v2477, %v2453
  %v3078 = vpack.c.b16 %v2478, %v2454
  %v3079 = vpack.c.b16 %v2479, %v2455
  %v3080 = vpack.c.b16 %v2480, %v2456
  %v3081 = vpack.c.b16 %v2481, %v2457
  %v3082 = vpack.c.b16 %v2482, %v2458
  %v3083 = vpack.c.b16 %v2483, %v2459
  %v3084 = vpack.c.b16 %v2484, %v2460
  %v3085 = vpack.c.b16 %v2485, %v2461
  %v3086 = vpack.c.b16 %v2486, %v2462
  %v3087 = vpack.c.b16 %v2487, %v2463
  %v3088 = vpack.c.b16 %v2488, %v2464
  %v3089 = vpack.c.b16 %v2489, %v2465
  %v3090 = vpack.c.b16 %v2490, %v2466
  %v3091 = vpack.c.b16 %v2491, %v2467
  %v3092 = vpack.c.b16 %v2492, %v2468
  %v3093 = vpack.c.b16 %v2493, %v2469
  %v3094 = vpack.c.b16 %v2494, %v2470
  %v3095 = vpack.c.b16 %v2495, %v2471
  %v3096 = vpack.c.b16 %v2496, %v2472
  %v3097 = vpack.c.b16 %v2497, %v2473
  %v3098 = vpack.c.b16 %v2498, %v2474
  %v3099 = vpack.c.b16 %v2499, %v2475
  %v3100 = vpack.c.b16 %v2524, %v2500
  %v3101 = vpack.c.b16 %v2525, %v2501
  %v3102 = vpack.c.b16 %v2526, %v2502
  %v3103 = vpack.c.b16 %v2527, %v2503
  %v3104 = vpack.c.b16 %v2528, %v2504
  %v3105 = vpack.c.b16 %v2529, %v2505
  %v3106 = vpack.c.b16 %v2530, %v2506
  %v3107 = vpack.c.b16 %v2531, %v2507
  %v3108 = vpack.c.b16 %v2532, %v2508
  %v3109 = vpack.c.b16 %v2533, %v2509
  %v3110 = vpack.c.b16 %v2534, %v2510
  %v3111 = vpack.c.b16 %v2535, %v2511
  %v3112 = vpack.c.b16 %v2536, %v2512
  %v3113 = vpack.c.b16 %v2537, %v2513
  %v3114 = vpack.c.b16 %v2538, %v2514
  %v3115 = vpack.c.b16 %v2539, %v2515
  %v3116 = vpack.c.b16 %v2540, %v2516
  %v3117 = vpack.c.b16 %v2541, %v2517
  %v3118 = vpack.c.b16 %v2542, %v2518
  %v3119 = vpack.c.b16 %v2543, %v2519
  %v3120 = vpack.c.b16 %v2544, %v2520
  %v3121 = vpack.c.b16 %v2545, %v2521
  %v3122 = vpack.c.b16 %v2546, %v2522
  %v3123 = vpack.c.b16 %v2547, %v2523
  %3700 = vmatpush.bf16.msra.mxu0 %v2716
  %3701 = vmatpush.bf16.msra.mxu0 %v2692
  %3702 = vmatpush.bf16.msra.mxu0 %v2668
  %3703 = vmatpush.bf16.msra.mxu0 %v2644
  %3704 = vmatpush.bf16.msra.mxu0 %v2620
  %3705 = vmatpush.bf16.msra.mxu0 %v2596
  %3706 = vmatpush.bf16.msra.mxu0 %v2572
  %3707 = vmatpush.bf16.msra.mxu0 %v2548
  %3708 = vmatmul.bf16.gmra.mxu0 %v241
  %v3709 = vpop.f32.mrf.mxu0
  %v3710 = vadd.f32 0.0, %v3709
  %v3711 = vpop.f32.mrf.mxu0
  %v3712 = vadd.f32 0.0, %v3711
  %3713 = vdwg.mxu0
  %3714 = vmatpush.bf16.msra.mxu0 %v2908
  %3715 = vmatpush.bf16.msra.mxu0 %v2884
  %3716 = vmatpush.bf16.msra.mxu0 %v2860
  %3717 = vmatpush.bf16.msra.mxu0 %v2836
  %3718 = vmatpush.bf16.msra.mxu0 %v2812
  %3719 = vmatpush.bf16.msra.mxu0 %v2788
  %3720 = vmatpush.bf16.msra.mxu0 %v2764
  %3721 = vmatpush.bf16.msra.mxu0 %v2740
  %3722 = vmatmul.bf16.gmra.mxu0 %v242
  %v3723 = vpop.f32.mrf.mxu0
  %v3724 = vadd.f32 %v3710, %v3723
  %v3725 = vpop.f32.mrf.mxu0
  %v3726 = vadd.f32 %v3712, %v3725
  %3727 = vdwg.mxu0
  %3728 = vmatpush.bf16.msra.mxu0 %v3100
  %3729 = vmatpush.bf16.msra.mxu0 %v3076
  %3730 = vmatpush.bf16.msra.mxu0 %v3052
  %3731 = vmatpush.bf16.msra.mxu0 %v3028
  %3732 = vmatpush.bf16.msra.mxu0 %v3004
  %3733 = vmatpush.bf16.msra.mxu0 %v2980
  %3734 = vmatpush.bf16.msra.mxu0 %v2956
  %3735 = vmatpush.bf16.msra.mxu0 %v2932
  %3736 = vmatmul.bf16.gmra.mxu0 %v243
  %v3737 = vpop.f32.mrf.mxu0
  %v3738 = vadd.f32 %v3724, %v3737
  %v3739 = vpop.f32.mrf.mxu0
  %v3740 = vadd.f32 %v3726, %v3739
  %3741 = vdwg.mxu0
  %3742 = vmatpush.bf16.msra.mxu0 %v2717
  %3743 = vmatpush.bf16.msra.mxu0 %v2693
  %3744 = vmatpush.bf16.msra.mxu0 %v2669
  %3745 = vmatpush.bf16.msra.mxu0 %v2645
  %3746 = vmatpush.bf16.msra.mxu0 %v2621
  %3747 = vmatpush.bf16.msra.mxu0 %v2597
  %3748 = vmatpush.bf16.msra.mxu0 %v2573
  %3749 = vmatpush.bf16.msra.mxu0 %v2549
  %3750 = vmatmul.bf16.gmra.mxu0 %v241
  %v3751 = vpop.f32.mrf.mxu0
  %v3752 = vadd.f32 0.0, %v3751
  %v3753 = vpop.f32.mrf.mxu0
  %v3754 = vadd.f32 0.0, %v3753
  %3755 = vdwg.mxu0
  %3756 = vmatpush.bf16.msra.mxu0 %v2909
  %3757 = vmatpush.bf16.msra.mxu0 %v2885
  %3758 = vmatpush.bf16.msra.mxu0 %v2861
  %3759 = vmatpush.bf16.msra.mxu0 %v2837
  %3760 = vmatpush.bf16.msra.mxu0 %v2813
  %3761 = vmatpush.bf16.msra.mxu0 %v2789
  %3762 = vmatpush.bf16.msra.mxu0 %v2765
  %3763 = vmatpush.bf16.msra.mxu0 %v2741
  %3764 = vmatmul.bf16.gmra.mxu0 %v242
  %v3765 = vpop.f32.mrf.mxu0
  %v3766 = vadd.f32 %v3752, %v3765
  %v3767 = vpop.f32.mrf.mxu0
  %v3768 = vadd.f32 %v3754, %v3767
  %3769 = vdwg.mxu0
  %3770 = vmatpush.bf16.msra.mxu0 %v3101
  %3771 = vmatpush.bf16.msra.mxu0 %v3077
  %3772 = vmatpush.bf16.msra.mxu0 %v3053
  %3773 = vmatpush.bf16.msra.mxu0 %v3029
  %3774 = vmatpush.bf16.msra.mxu0 %v3005
  %3775 = vmatpush.bf16.msra.mxu0 %v2981
  %3776 = vmatpush.bf16.msra.mxu0 %v2957
  %3777 = vmatpush.bf16.msra.mxu0 %v2933
  %3778 = vmatmul.bf16.gmra.mxu0 %v243
  %v3779 = vpop.f32.mrf.mxu0
  %v3780 = vadd.f32 %v3766, %v3779
  %v3781 = vpop.f32.mrf.mxu0
  %v3782 = vadd.f32 %v3768, %v3781
  %3783 = vdwg.mxu0
  %3784 = vmatpush.bf16.msra.mxu0 %v2718
  %3785 = vmatpush.bf16.msra.mxu0 %v2694
  %3786 = vmatpush.bf16.msra.mxu0 %v2670
  %3787 = vmatpush.bf16.msra.mxu0 %v2646
  %3788 = vmatpush.bf16.msra.mxu0 %v2622
  %3789 = vmatpush.bf16.msra.mxu0 %v2598
  %3790 = vmatpush.bf16.msra.mxu0 %v2574
  %3791 = vmatpush.bf16.msra.mxu0 %v2550
  %3792 = vmatmul.bf16.gmra.mxu0 %v241
  %v3793 = vpop.f32.mrf.mxu0
  %v3794 = vadd.f32 0.0, %v3793
  %v3795 = vpop.f32.mrf.mxu0
  %v3796 = vadd.f32 0.0, %v3795
  %3797 = vdwg.mxu0
  %3798 = vmatpush.bf16.msra.mxu0 %v2910
  %3799 = vmatpush.bf16.msra.mxu0 %v2886
  %3800 = vmatpush.bf16.msra.mxu0 %v2862
  %3801 = vmatpush.bf16.msra.mxu0 %v2838
  %3802 = vmatpush.bf16.msra.mxu0 %v2814
  %3803 = vmatpush.bf16.msra.mxu0 %v2790
  %3804 = vmatpush.bf16.msra.mxu0 %v2766
  %3805 = vmatpush.bf16.msra.mxu0 %v2742
  %3806 = vmatmul.bf16.gmra.mxu0 %v242
  %v3807 = vpop.f32.mrf.mxu0
  %v3808 = vadd.f32 %v3794, %v3807
  %v3809 = vpop.f32.mrf.mxu0
  %v3810 = vadd.f32 %v3796, %v3809
  %3811 = vdwg.mxu0
  %3812 = vmatpush.bf16.msra.mxu0 %v3102
  %3813 = vmatpush.bf16.msra.mxu0 %v3078
  %3814 = vmatpush.bf16.msra.mxu0 %v3054
  %3815 = vmatpush.bf16.msra.mxu0 %v3030
  %3816 = vmatpush.bf16.msra.mxu0 %v3006
  %3817 = vmatpush.bf16.msra.mxu0 %v2982
  %3818 = vmatpush.bf16.msra.mxu0 %v2958
  %3819 = vmatpush.bf16.msra.mxu0 %v2934
  %3820 = vmatmul.bf16.gmra.mxu0 %v243
  %v3821 = vpop.f32.mrf.mxu0
  %v3822 = vadd.f32 %v3808, %v3821
  %v3823 = vpop.f32.mrf.mxu0
  %v3824 = vadd.f32 %v3810, %v3823
  %3825 = vdwg.mxu0
  %3826 = vmatpush.bf16.msra.mxu0 %v2719
  %3827 = vmatpush.bf16.msra.mxu0 %v2695
  %3828 = vmatpush.bf16.msra.mxu0 %v2671
  %3829 = vmatpush.bf16.msra.mxu0 %v2647
  %3830 = vmatpush.bf16.msra.mxu0 %v2623
  %3831 = vmatpush.bf16.msra.mxu0 %v2599
  %3832 = vmatpush.bf16.msra.mxu0 %v2575
  %3833 = vmatpush.bf16.msra.mxu0 %v2551
  %3834 = vmatmul.bf16.gmra.mxu0 %v241
  %v3835 = vpop.f32.mrf.mxu0
  %v3836 = vadd.f32 0.0, %v3835
  %v3837 = vpop.f32.mrf.mxu0
  %v3838 = vadd.f32 0.0, %v3837
  %3839 = vdwg.mxu0
  %3840 = vmatpush.bf16.msra.mxu0 %v2911
  %3841 = vmatpush.bf16.msra.mxu0 %v2887
  %3842 = vmatpush.bf16.msra.mxu0 %v2863
  %3843 = vmatpush.bf16.msra.mxu0 %v2839
  %3844 = vmatpush.bf16.msra.mxu0 %v2815
  %3845 = vmatpush.bf16.msra.mxu0 %v2791
  %3846 = vmatpush.bf16.msra.mxu0 %v2767
  %3847 = vmatpush.bf16.msra.mxu0 %v2743
  %3848 = vmatmul.bf16.gmra.mxu0 %v242
  %v3849 = vpop.f32.mrf.mxu0
  %v3850 = vadd.f32 %v3836, %v3849
  %v3851 = vpop.f32.mrf.mxu0
  %v3852 = vadd.f32 %v3838, %v3851
  %3853 = vdwg.mxu0
  %3854 = vmatpush.bf16.msra.mxu0 %v3103
  %3855 = vmatpush.bf16.msra.mxu0 %v3079
  %3856 = vmatpush.bf16.msra.mxu0 %v3055
  %3857 = vmatpush.bf16.msra.mxu0 %v3031
  %3858 = vmatpush.bf16.msra.mxu0 %v3007
  %3859 = vmatpush.bf16.msra.mxu0 %v2983
  %3860 = vmatpush.bf16.msra.mxu0 %v2959
  %3861 = vmatpush.bf16.msra.mxu0 %v2935
  %3862 = vmatmul.bf16.gmra.mxu0 %v243
  %v3863 = vpop.f32.mrf.mxu0
  %v3864 = vadd.f32 %v3850, %v3863
  %v3865 = vpop.f32.mrf.mxu0
  %v3866 = vadd.f32 %v3852, %v3865
  %3867 = vdwg.mxu0
  %3868 = vmatpush.bf16.msra.mxu0 %v2720
  %3869 = vmatpush.bf16.msra.mxu0 %v2696
  %3870 = vmatpush.bf16.msra.mxu0 %v2672
  %3871 = vmatpush.bf16.msra.mxu0 %v2648
  %3872 = vmatpush.bf16.msra.mxu0 %v2624
  %3873 = vmatpush.bf16.msra.mxu0 %v2600
  %3874 = vmatpush.bf16.msra.mxu0 %v2576
  %3875 = vmatpush.bf16.msra.mxu0 %v2552
  %3876 = vmatmul.bf16.gmra.mxu0 %v241
  %v3877 = vpop.f32.mrf.mxu0
  %v3878 = vadd.f32 0.0, %v3877
  %v3879 = vpop.f32.mrf.mxu0
  %v3880 = vadd.f32 0.0, %v3879
  %3881 = vdwg.mxu0
  %3882 = vmatpush.bf16.msra.mxu0 %v2912
  %3883 = vmatpush.bf16.msra.mxu0 %v2888
  %3884 = vmatpush.bf16.msra.mxu0 %v2864
  %3885 = vmatpush.bf16.msra.mxu0 %v2840
  %3886 = vmatpush.bf16.msra.mxu0 %v2816
  %3887 = vmatpush.bf16.msra.mxu0 %v2792
  %3888 = vmatpush.bf16.msra.mxu0 %v2768
  %3889 = vmatpush.bf16.msra.mxu0 %v2744
  %3890 = vmatmul.bf16.gmra.mxu0 %v242
  %v3891 = vpop.f32.mrf.mxu0
  %v3892 = vadd.f32 %v3878, %v3891
  %v3893 = vpop.f32.mrf.mxu0
  %v3894 = vadd.f32 %v3880, %v3893
  %3895 = vdwg.mxu0
  %3896 = vmatpush.bf16.msra.mxu0 %v3104
  %3897 = vmatpush.bf16.msra.mxu0 %v3080
  %3898 = vmatpush.bf16.msra.mxu0 %v3056
  %3899 = vmatpush.bf16.msra.mxu0 %v3032
  %3900 = vmatpush.bf16.msra.mxu0 %v3008
  %3901 = vmatpush.bf16.msra.mxu0 %v2984
  %3902 = vmatpush.bf16.msra.mxu0 %v2960
  %3903 = vmatpush.bf16.msra.mxu0 %v2936
  %3904 = vmatmul.bf16.gmra.mxu0 %v243
  %v3905 = vpop.f32.mrf.mxu0
  %v3906 = vadd.f32 %v3892, %v3905
  %v3907 = vpop.f32.mrf.mxu0
  %v3908 = vadd.f32 %v3894, %v3907
  %3909 = vdwg.mxu0
  %3910 = vmatpush.bf16.msra.mxu0 %v2721
  %3911 = vmatpush.bf16.msra.mxu0 %v2697
  %3912 = vmatpush.bf16.msra.mxu0 %v2673
  %3913 = vmatpush.bf16.msra.mxu0 %v2649
  %3914 = vmatpush.bf16.msra.mxu0 %v2625
  %3915 = vmatpush.bf16.msra.mxu0 %v2601
  %3916 = vmatpush.bf16.msra.mxu0 %v2577
  %3917 = vmatpush.bf16.msra.mxu0 %v2553
  %3918 = vmatmul.bf16.gmra.mxu0 %v241
  %v3919 = vpop.f32.mrf.mxu0
  %v3920 = vadd.f32 0.0, %v3919
  %v3921 = vpop.f32.mrf.mxu0
  %v3922 = vadd.f32 0.0, %v3921
  %3923 = vdwg.mxu0
  %3924 = vmatpush.bf16.msra.mxu0 %v2913
  %3925 = vmatpush.bf16.msra.mxu0 %v2889
  %3926 = vmatpush.bf16.msra.mxu0 %v2865
  %3927 = vmatpush.bf16.msra.mxu0 %v2841
  %3928 = vmatpush.bf16.msra.mxu0 %v2817
  %3929 = vmatpush.bf16.msra.mxu0 %v2793
  %3930 = vmatpush.bf16.msra.mxu0 %v2769
  %3931 = vmatpush.bf16.msra.mxu0 %v2745
  %3932 = vmatmul.bf16.gmra.mxu0 %v242
  %v3933 = vpop.f32.mrf.mxu0
  %v3934 = vadd.f32 %v3920, %v3933
  %v3935 = vpop.f32.mrf.mxu0
  %v3936 = vadd.f32 %v3922, %v3935
  %3937 = vdwg.mxu0
  %3938 = vmatpush.bf16.msra.mxu0 %v3105
  %3939 = vmatpush.bf16.msra.mxu0 %v3081
  %3940 = vmatpush.bf16.msra.mxu0 %v3057
  %3941 = vmatpush.bf16.msra.mxu0 %v3033
  %3942 = vmatpush.bf16.msra.mxu0 %v3009
  %3943 = vmatpush.bf16.msra.mxu0 %v2985
  %3944 = vmatpush.bf16.msra.mxu0 %v2961
  %3945 = vmatpush.bf16.msra.mxu0 %v2937
  %3946 = vmatmul.bf16.gmra.mxu0 %v243
  %v3947 = vpop.f32.mrf.mxu0
  %v3948 = vadd.f32 %v3934, %v3947
  %v3949 = vpop.f32.mrf.mxu0
  %v3950 = vadd.f32 %v3936, %v3949
  %3951 = vdwg.mxu0
  %3952 = vmatpush.bf16.msra.mxu0 %v2722
  %3953 = vmatpush.bf16.msra.mxu0 %v2698
  %3954 = vmatpush.bf16.msra.mxu0 %v2674
  %3955 = vmatpush.bf16.msra.mxu0 %v2650
  %3956 = vmatpush.bf16.msra.mxu0 %v2626
  %3957 = vmatpush.bf16.msra.mxu0 %v2602
  %3958 = vmatpush.bf16.msra.mxu0 %v2578
  %3959 = vmatpush.bf16.msra.mxu0 %v2554
  %3960 = vmatmul.bf16.gmra.mxu0 %v241
  %v3961 = vpop.f32.mrf.mxu0
  %v3962 = vadd.f32 0.0, %v3961
  %v3963 = vpop.f32.mrf.mxu0
  %v3964 = vadd.f32 0.0, %v3963
  %3965 = vdwg.mxu0
  %3966 = vmatpush.bf16.msra.mxu0 %v2914
  %3967 = vmatpush.bf16.msra.mxu0 %v2890
  %3968 = vmatpush.bf16.msra.mxu0 %v2866
  %3969 = vmatpush.bf16.msra.mxu0 %v2842
  %3970 = vmatpush.bf16.msra.mxu0 %v2818
  %3971 = vmatpush.bf16.msra.mxu0 %v2794
  %3972 = vmatpush.bf16.msra.mxu0 %v2770
  %3973 = vmatpush.bf16.msra.mxu0 %v2746
  %3974 = vmatmul.bf16.gmra.mxu0 %v242
  %v3975 = vpop.f32.mrf.mxu0
  %v3976 = vadd.f32 %v3962, %v3975
  %v3977 = vpop.f32.mrf.mxu0
  %v3978 = vadd.f32 %v3964, %v3977
  %3979 = vdwg.mxu0
  %3980 = vmatpush.bf16.msra.mxu0 %v3106
  %3981 = vmatpush.bf16.msra.mxu0 %v3082
  %3982 = vmatpush.bf16.msra.mxu0 %v3058
  %3983 = vmatpush.bf16.msra.mxu0 %v3034
  %3984 = vmatpush.bf16.msra.mxu0 %v3010
  %3985 = vmatpush.bf16.msra.mxu0 %v2986
  %3986 = vmatpush.bf16.msra.mxu0 %v2962
  %3987 = vmatpush.bf16.msra.mxu0 %v2938
  %3988 = vmatmul.bf16.gmra.mxu0 %v243
  %v3989 = vpop.f32.mrf.mxu0
  %v3990 = vadd.f32 %v3976, %v3989
  %v3991 = vpop.f32.mrf.mxu0
  %v3992 = vadd.f32 %v3978, %v3991
  %3993 = vdwg.mxu0
  %3994 = vmatpush.bf16.msra.mxu0 %v2723
  %3995 = vmatpush.bf16.msra.mxu0 %v2699
  %3996 = vmatpush.bf16.msra.mxu0 %v2675
  %3997 = vmatpush.bf16.msra.mxu0 %v2651
  %3998 = vmatpush.bf16.msra.mxu0 %v2627
  %3999 = vmatpush.bf16.msra.mxu0 %v2603
  %4000 = vmatpush.bf16.msra.mxu0 %v2579
  %4001 = vmatpush.bf16.msra.mxu0 %v2555
  %4002 = vmatmul.bf16.gmra.mxu0 %v241
  %v4003 = vpop.f32.mrf.mxu0
  %v4004 = vadd.f32 0.0, %v4003
  %v4005 = vpop.f32.mrf.mxu0
  %v4006 = vadd.f32 0.0, %v4005
  %4007 = vdwg.mxu0
  %4008 = vmatpush.bf16.msra.mxu0 %v2915
  %4009 = vmatpush.bf16.msra.mxu0 %v2891
  %4010 = vmatpush.bf16.msra.mxu0 %v2867
  %4011 = vmatpush.bf16.msra.mxu0 %v2843
  %4012 = vmatpush.bf16.msra.mxu0 %v2819
  %4013 = vmatpush.bf16.msra.mxu0 %v2795
  %4014 = vmatpush.bf16.msra.mxu0 %v2771
  %4015 = vmatpush.bf16.msra.mxu0 %v2747
  %4016 = vmatmul.bf16.gmra.mxu0 %v242
  %v4017 = vpop.f32.mrf.mxu0
  %v4018 = vadd.f32 %v4004, %v4017
  %v4019 = vpop.f32.mrf.mxu0
  %v4020 = vadd.f32 %v4006, %v4019
  %4021 = vdwg.mxu0
  %4022 = vmatpush.bf16.msra.mxu0 %v3107
  %4023 = vmatpush.bf16.msra.mxu0 %v3083
  %4024 = vmatpush.bf16.msra.mxu0 %v3059
  %4025 = vmatpush.bf16.msra.mxu0 %v3035
  %4026 = vmatpush.bf16.msra.mxu0 %v3011
  %4027 = vmatpush.bf16.msra.mxu0 %v2987
  %4028 = vmatpush.bf16.msra.mxu0 %v2963
  %4029 = vmatpush.bf16.msra.mxu0 %v2939
  %4030 = vmatmul.bf16.gmra.mxu0 %v243
  %v4031 = vpop.f32.mrf.mxu0
  %v4032 = vadd.f32 %v4018, %v4031
  %v4033 = vpop.f32.mrf.mxu0
  %v4034 = vadd.f32 %v4020, %v4033
  %4035 = vdwg.mxu0
  %4036 = vmatpush.bf16.msra.mxu0 %v2724
  %4037 = vmatpush.bf16.msra.mxu0 %v2700
  %4038 = vmatpush.bf16.msra.mxu0 %v2676
  %4039 = vmatpush.bf16.msra.mxu0 %v2652
  %4040 = vmatpush.bf16.msra.mxu0 %v2628
  %4041 = vmatpush.bf16.msra.mxu0 %v2604
  %4042 = vmatpush.bf16.msra.mxu0 %v2580
  %4043 = vmatpush.bf16.msra.mxu0 %v2556
  %4044 = vmatmul.bf16.gmra.mxu0 %v241
  %v4045 = vpop.f32.mrf.mxu0
  %v4046 = vadd.f32 0.0, %v4045
  %v4047 = vpop.f32.mrf.mxu0
  %v4048 = vadd.f32 0.0, %v4047
  %4049 = vdwg.mxu0
  %4050 = vmatpush.bf16.msra.mxu0 %v2916
  %4051 = vmatpush.bf16.msra.mxu0 %v2892
  %4052 = vmatpush.bf16.msra.mxu0 %v2868
  %4053 = vmatpush.bf16.msra.mxu0 %v2844
  %4054 = vmatpush.bf16.msra.mxu0 %v2820
  %4055 = vmatpush.bf16.msra.mxu0 %v2796
  %4056 = vmatpush.bf16.msra.mxu0 %v2772
  %4057 = vmatpush.bf16.msra.mxu0 %v2748
  %4058 = vmatmul.bf16.gmra.mxu0 %v242
  %v4059 = vpop.f32.mrf.mxu0
  %v4060 = vadd.f32 %v4046, %v4059
  %v4061 = vpop.f32.mrf.mxu0
  %v4062 = vadd.f32 %v4048, %v4061
  %4063 = vdwg.mxu0
  %4064 = vmatpush.bf16.msra.mxu0 %v3108
  %4065 = vmatpush.bf16.msra.mxu0 %v3084
  %4066 = vmatpush.bf16.msra.mxu0 %v3060
  %4067 = vmatpush.bf16.msra.mxu0 %v3036
  %4068 = vmatpush.bf16.msra.mxu0 %v3012
  %4069 = vmatpush.bf16.msra.mxu0 %v2988
  %4070 = vmatpush.bf16.msra.mxu0 %v2964
  %4071 = vmatpush.bf16.msra.mxu0 %v2940
  %4072 = vmatmul.bf16.gmra.mxu0 %v243
  %v4073 = vpop.f32.mrf.mxu0
  %v4074 = vadd.f32 %v4060, %v4073
  %v4075 = vpop.f32.mrf.mxu0
  %v4076 = vadd.f32 %v4062, %v4075
  %4077 = vdwg.mxu0
  %4078 = vmatpush.bf16.msra.mxu0 %v2725
  %4079 = vmatpush.bf16.msra.mxu0 %v2701
  %4080 = vmatpush.bf16.msra.mxu0 %v2677
  %4081 = vmatpush.bf16.msra.mxu0 %v2653
  %4082 = vmatpush.bf16.msra.mxu0 %v2629
  %4083 = vmatpush.bf16.msra.mxu0 %v2605
  %4084 = vmatpush.bf16.msra.mxu0 %v2581
  %4085 = vmatpush.bf16.msra.mxu0 %v2557
  %4086 = vmatmul.bf16.gmra.mxu0 %v241
  %v4087 = vpop.f32.mrf.mxu0
  %v4088 = vadd.f32 0.0, %v4087
  %v4089 = vpop.f32.mrf.mxu0
  %v4090 = vadd.f32 0.0, %v4089
  %4091 = vdwg.mxu0
  %4092 = vmatpush.bf16.msra.mxu0 %v2917
  %4093 = vmatpush.bf16.msra.mxu0 %v2893
  %4094 = vmatpush.bf16.msra.mxu0 %v2869
  %4095 = vmatpush.bf16.msra.mxu0 %v2845
  %4096 = vmatpush.bf16.msra.mxu0 %v2821
  %4097 = vmatpush.bf16.msra.mxu0 %v2797
  %4098 = vmatpush.bf16.msra.mxu0 %v2773
  %4099 = vmatpush.bf16.msra.mxu0 %v2749
  %4100 = vmatmul.bf16.gmra.mxu0 %v242
  %v4101 = vpop.f32.mrf.mxu0
  %v4102 = vadd.f32 %v4088, %v4101
  %v4103 = vpop.f32.mrf.mxu0
  %v4104 = vadd.f32 %v4090, %v4103
  %4105 = vdwg.mxu0
  %4106 = vmatpush.bf16.msra.mxu0 %v3109
  %4107 = vmatpush.bf16.msra.mxu0 %v3085
  %4108 = vmatpush.bf16.msra.mxu0 %v3061
  %4109 = vmatpush.bf16.msra.mxu0 %v3037
  %4110 = vmatpush.bf16.msra.mxu0 %v3013
  %4111 = vmatpush.bf16.msra.mxu0 %v2989
  %4112 = vmatpush.bf16.msra.mxu0 %v2965
  %4113 = vmatpush.bf16.msra.mxu0 %v2941
  %4114 = vmatmul.bf16.gmra.mxu0 %v243
  %v4115 = vpop.f32.mrf.mxu0
  %v4116 = vadd.f32 %v4102, %v4115
  %v4117 = vpop.f32.mrf.mxu0
  %v4118 = vadd.f32 %v4104, %v4117
  %4119 = vdwg.mxu0
  %4120 = vmatpush.bf16.msra.mxu0 %v2726
  %4121 = vmatpush.bf16.msra.mxu0 %v2702
  %4122 = vmatpush.bf16.msra.mxu0 %v2678
  %4123 = vmatpush.bf16.msra.mxu0 %v2654
  %4124 = vmatpush.bf16.msra.mxu0 %v2630
  %4125 = vmatpush.bf16.msra.mxu0 %v2606
  %4126 = vmatpush.bf16.msra.mxu0 %v2582
  %4127 = vmatpush.bf16.msra.mxu0 %v2558
  %4128 = vmatmul.bf16.gmra.mxu0 %v241
  %v4129 = vpop.f32.mrf.mxu0
  %v4130 = vadd.f32 0.0, %v4129
  %v4131 = vpop.f32.mrf.mxu0
  %v4132 = vadd.f32 0.0, %v4131
  %4133 = vdwg.mxu0
  %4134 = vmatpush.bf16.msra.mxu0 %v2918
  %4135 = vmatpush.bf16.msra.mxu0 %v2894
  %4136 = vmatpush.bf16.msra.mxu0 %v2870
  %4137 = vmatpush.bf16.msra.mxu0 %v2846
  %4138 = vmatpush.bf16.msra.mxu0 %v2822
  %4139 = vmatpush.bf16.msra.mxu0 %v2798
  %4140 = vmatpush.bf16.msra.mxu0 %v2774
  %4141 = vmatpush.bf16.msra.mxu0 %v2750
  %4142 = vmatmul.bf16.gmra.mxu0 %v242
  %v4143 = vpop.f32.mrf.mxu0
  %v4144 = vadd.f32 %v4130, %v4143
  %v4145 = vpop.f32.mrf.mxu0
  %v4146 = vadd.f32 %v4132, %v4145
  %4147 = vdwg.mxu0
  %4148 = vmatpush.bf16.msra.mxu0 %v3110
  %4149 = vmatpush.bf16.msra.mxu0 %v3086
  %4150 = vmatpush.bf16.msra.mxu0 %v3062
  %4151 = vmatpush.bf16.msra.mxu0 %v3038
  %4152 = vmatpush.bf16.msra.mxu0 %v3014
  %4153 = vmatpush.bf16.msra.mxu0 %v2990
  %4154 = vmatpush.bf16.msra.mxu0 %v2966
  %4155 = vmatpush.bf16.msra.mxu0 %v2942
  %4156 = vmatmul.bf16.gmra.mxu0 %v243
  %v4157 = vpop.f32.mrf.mxu0
  %v4158 = vadd.f32 %v4144, %v4157
  %v4159 = vpop.f32.mrf.mxu0
  %v4160 = vadd.f32 %v4146, %v4159
  %4161 = vdwg.mxu0
  %4162 = vmatpush.bf16.msra.mxu0 %v2727
  %4163 = vmatpush.bf16.msra.mxu0 %v2703
  %4164 = vmatpush.bf16.msra.mxu0 %v2679
  %4165 = vmatpush.bf16.msra.mxu0 %v2655
  %4166 = vmatpush.bf16.msra.mxu0 %v2631
  %4167 = vmatpush.bf16.msra.mxu0 %v2607
  %4168 = vmatpush.bf16.msra.mxu0 %v2583
  %4169 = vmatpush.bf16.msra.mxu0 %v2559
  %4170 = vmatmul.bf16.gmra.mxu0 %v241
  %v4171 = vpop.f32.mrf.mxu0
  %v4172 = vadd.f32 0.0, %v4171
  %v4173 = vpop.f32.mrf.mxu0
  %v4174 = vadd.f32 0.0, %v4173
  %4175 = vdwg.mxu0
  %4176 = vmatpush.bf16.msra.mxu0 %v2919
  %4177 = vmatpush.bf16.msra.mxu0 %v2895
  %4178 = vmatpush.bf16.msra.mxu0 %v2871
  %4179 = vmatpush.bf16.msra.mxu0 %v2847
  %4180 = vmatpush.bf16.msra.mxu0 %v2823
  %4181 = vmatpush.bf16.msra.mxu0 %v2799
  %4182 = vmatpush.bf16.msra.mxu0 %v2775
  %4183 = vmatpush.bf16.msra.mxu0 %v2751
  %4184 = vmatmul.bf16.gmra.mxu0 %v242
  %v4185 = vpop.f32.mrf.mxu0
  %v4186 = vadd.f32 %v4172, %v4185
  %v4187 = vpop.f32.mrf.mxu0
  %v4188 = vadd.f32 %v4174, %v4187
  %4189 = vdwg.mxu0
  %4190 = vmatpush.bf16.msra.mxu0 %v3111
  %4191 = vmatpush.bf16.msra.mxu0 %v3087
  %4192 = vmatpush.bf16.msra.mxu0 %v3063
  %4193 = vmatpush.bf16.msra.mxu0 %v3039
  %4194 = vmatpush.bf16.msra.mxu0 %v3015
  %4195 = vmatpush.bf16.msra.mxu0 %v2991
  %4196 = vmatpush.bf16.msra.mxu0 %v2967
  %4197 = vmatpush.bf16.msra.mxu0 %v2943
  %4198 = vmatmul.bf16.gmra.mxu0 %v243
  %v4199 = vpop.f32.mrf.mxu0
  %v4200 = vadd.f32 %v4186, %v4199
  %v4201 = vpop.f32.mrf.mxu0
  %v4202 = vadd.f32 %v4188, %v4201
  %4203 = vdwg.mxu0
  %4204 = vmatpush.bf16.msra.mxu0 %v2728
  %4205 = vmatpush.bf16.msra.mxu0 %v2704
  %4206 = vmatpush.bf16.msra.mxu0 %v2680
  %4207 = vmatpush.bf16.msra.mxu0 %v2656
  %4208 = vmatpush.bf16.msra.mxu0 %v2632
  %4209 = vmatpush.bf16.msra.mxu0 %v2608
  %4210 = vmatpush.bf16.msra.mxu0 %v2584
  %4211 = vmatpush.bf16.msra.mxu0 %v2560
  %4212 = vmatmul.bf16.gmra.mxu0 %v241
  %v4213 = vpop.f32.mrf.mxu0
  %v4214 = vadd.f32 0.0, %v4213
  %v4215 = vpop.f32.mrf.mxu0
  %v4216 = vadd.f32 0.0, %v4215
  %4217 = vdwg.mxu0
  %4218 = vmatpush.bf16.msra.mxu0 %v2920
  %4219 = vmatpush.bf16.msra.mxu0 %v2896
  %4220 = vmatpush.bf16.msra.mxu0 %v2872
  %4221 = vmatpush.bf16.msra.mxu0 %v2848
  %4222 = vmatpush.bf16.msra.mxu0 %v2824
  %4223 = vmatpush.bf16.msra.mxu0 %v2800
  %4224 = vmatpush.bf16.msra.mxu0 %v2776
  %4225 = vmatpush.bf16.msra.mxu0 %v2752
  %4226 = vmatmul.bf16.gmra.mxu0 %v242
  %v4227 = vpop.f32.mrf.mxu0
  %v4228 = vadd.f32 %v4214, %v4227
  %v4229 = vpop.f32.mrf.mxu0
  %v4230 = vadd.f32 %v4216, %v4229
  %4231 = vdwg.mxu0
  %4232 = vmatpush.bf16.msra.mxu0 %v3112
  %4233 = vmatpush.bf16.msra.mxu0 %v3088
  %4234 = vmatpush.bf16.msra.mxu0 %v3064
  %4235 = vmatpush.bf16.msra.mxu0 %v3040
  %4236 = vmatpush.bf16.msra.mxu0 %v3016
  %4237 = vmatpush.bf16.msra.mxu0 %v2992
  %4238 = vmatpush.bf16.msra.mxu0 %v2968
  %4239 = vmatpush.bf16.msra.mxu0 %v2944
  %4240 = vmatmul.bf16.gmra.mxu0 %v243
  %v4241 = vpop.f32.mrf.mxu0
  %v4242 = vadd.f32 %v4228, %v4241
  %v4243 = vpop.f32.mrf.mxu0
  %v4244 = vadd.f32 %v4230, %v4243
  %4245 = vdwg.mxu0
  %4246 = vmatpush.bf16.msra.mxu0 %v2729
  %4247 = vmatpush.bf16.msra.mxu0 %v2705
  %4248 = vmatpush.bf16.msra.mxu0 %v2681
  %4249 = vmatpush.bf16.msra.mxu0 %v2657
  %4250 = vmatpush.bf16.msra.mxu0 %v2633
  %4251 = vmatpush.bf16.msra.mxu0 %v2609
  %4252 = vmatpush.bf16.msra.mxu0 %v2585
  %4253 = vmatpush.bf16.msra.mxu0 %v2561
  %4254 = vmatmul.bf16.gmra.mxu0 %v241
  %v4255 = vpop.f32.mrf.mxu0
  %v4256 = vadd.f32 0.0, %v4255
  %v4257 = vpop.f32.mrf.mxu0
  %v4258 = vadd.f32 0.0, %v4257
  %4259 = vdwg.mxu0
  %4260 = vmatpush.bf16.msra.mxu0 %v2921
  %4261 = vmatpush.bf16.msra.mxu0 %v2897
  %4262 = vmatpush.bf16.msra.mxu0 %v2873
  %4263 = vmatpush.bf16.msra.mxu0 %v2849
  %4264 = vmatpush.bf16.msra.mxu0 %v2825
  %4265 = vmatpush.bf16.msra.mxu0 %v2801
  %4266 = vmatpush.bf16.msra.mxu0 %v2777
  %4267 = vmatpush.bf16.msra.mxu0 %v2753
  %4268 = vmatmul.bf16.gmra.mxu0 %v242
  %v4269 = vpop.f32.mrf.mxu0
  %v4270 = vadd.f32 %v4256, %v4269
  %v4271 = vpop.f32.mrf.mxu0
  %v4272 = vadd.f32 %v4258, %v4271
  %4273 = vdwg.mxu0
  %4274 = vmatpush.bf16.msra.mxu0 %v3113
  %4275 = vmatpush.bf16.msra.mxu0 %v3089
  %4276 = vmatpush.bf16.msra.mxu0 %v3065
  %4277 = vmatpush.bf16.msra.mxu0 %v3041
  %4278 = vmatpush.bf16.msra.mxu0 %v3017
  %4279 = vmatpush.bf16.msra.mxu0 %v2993
  %4280 = vmatpush.bf16.msra.mxu0 %v2969
  %4281 = vmatpush.bf16.msra.mxu0 %v2945
  %4282 = vmatmul.bf16.gmra.mxu0 %v243
  %v4283 = vpop.f32.mrf.mxu0
  %v4284 = vadd.f32 %v4270, %v4283
  %v4285 = vpop.f32.mrf.mxu0
  %v4286 = vadd.f32 %v4272, %v4285
  %4287 = vdwg.mxu0
  %4288 = vmatpush.bf16.msra.mxu0 %v2730
  %4289 = vmatpush.bf16.msra.mxu0 %v2706
  %4290 = vmatpush.bf16.msra.mxu0 %v2682
  %4291 = vmatpush.bf16.msra.mxu0 %v2658
  %4292 = vmatpush.bf16.msra.mxu0 %v2634
  %4293 = vmatpush.bf16.msra.mxu0 %v2610
  %4294 = vmatpush.bf16.msra.mxu0 %v2586
  %4295 = vmatpush.bf16.msra.mxu0 %v2562
  %4296 = vmatmul.bf16.gmra.mxu0 %v241
  %v4297 = vpop.f32.mrf.mxu0
  %v4298 = vadd.f32 0.0, %v4297
  %v4299 = vpop.f32.mrf.mxu0
  %v4300 = vadd.f32 0.0, %v4299
  %4301 = vdwg.mxu0
  %4302 = vmatpush.bf16.msra.mxu0 %v2922
  %4303 = vmatpush.bf16.msra.mxu0 %v2898
  %4304 = vmatpush.bf16.msra.mxu0 %v2874
  %4305 = vmatpush.bf16.msra.mxu0 %v2850
  %4306 = vmatpush.bf16.msra.mxu0 %v2826
  %4307 = vmatpush.bf16.msra.mxu0 %v2802
  %4308 = vmatpush.bf16.msra.mxu0 %v2778
  %4309 = vmatpush.bf16.msra.mxu0 %v2754
  %4310 = vmatmul.bf16.gmra.mxu0 %v242
  %v4311 = vpop.f32.mrf.mxu0
  %v4312 = vadd.f32 %v4298, %v4311
  %v4313 = vpop.f32.mrf.mxu0
  %v4314 = vadd.f32 %v4300, %v4313
  %4315 = vdwg.mxu0
  %4316 = vmatpush.bf16.msra.mxu0 %v3114
  %4317 = vmatpush.bf16.msra.mxu0 %v3090
  %4318 = vmatpush.bf16.msra.mxu0 %v3066
  %4319 = vmatpush.bf16.msra.mxu0 %v3042
  %4320 = vmatpush.bf16.msra.mxu0 %v3018
  %4321 = vmatpush.bf16.msra.mxu0 %v2994
  %4322 = vmatpush.bf16.msra.mxu0 %v2970
  %4323 = vmatpush.bf16.msra.mxu0 %v2946
  %4324 = vmatmul.bf16.gmra.mxu0 %v243
  %v4325 = vpop.f32.mrf.mxu0
  %v4326 = vadd.f32 %v4312, %v4325
  %v4327 = vpop.f32.mrf.mxu0
  %v4328 = vadd.f32 %v4314, %v4327
  %4329 = vdwg.mxu0
  %4330 = vmatpush.bf16.msra.mxu0 %v2731
  %4331 = vmatpush.bf16.msra.mxu0 %v2707
  %4332 = vmatpush.bf16.msra.mxu0 %v2683
  %4333 = vmatpush.bf16.msra.mxu0 %v2659
  %4334 = vmatpush.bf16.msra.mxu0 %v2635
  %4335 = vmatpush.bf16.msra.mxu0 %v2611
  %4336 = vmatpush.bf16.msra.mxu0 %v2587
  %4337 = vmatpush.bf16.msra.mxu0 %v2563
  %4338 = vmatmul.bf16.gmra.mxu0 %v241
  %v4339 = vpop.f32.mrf.mxu0
  %v4340 = vadd.f32 0.0, %v4339
  %v4341 = vpop.f32.mrf.mxu0
  %v4342 = vadd.f32 0.0, %v4341
  %4343 = vdwg.mxu0
  %4344 = vmatpush.bf16.msra.mxu0 %v2923
  %4345 = vmatpush.bf16.msra.mxu0 %v2899
  %4346 = vmatpush.bf16.msra.mxu0 %v2875
  %4347 = vmatpush.bf16.msra.mxu0 %v2851
  %4348 = vmatpush.bf16.msra.mxu0 %v2827
  %4349 = vmatpush.bf16.msra.mxu0 %v2803
  %4350 = vmatpush.bf16.msra.mxu0 %v2779
  %4351 = vmatpush.bf16.msra.mxu0 %v2755
  %4352 = vmatmul.bf16.gmra.mxu0 %v242
  %v4353 = vpop.f32.mrf.mxu0
  %v4354 = vadd.f32 %v4340, %v4353
  %v4355 = vpop.f32.mrf.mxu0
  %v4356 = vadd.f32 %v4342, %v4355
  %4357 = vdwg.mxu0
  %4358 = vmatpush.bf16.msra.mxu0 %v3115
  %4359 = vmatpush.bf16.msra.mxu0 %v3091
  %4360 = vmatpush.bf16.msra.mxu0 %v3067
  %4361 = vmatpush.bf16.msra.mxu0 %v3043
  %4362 = vmatpush.bf16.msra.mxu0 %v3019
  %4363 = vmatpush.bf16.msra.mxu0 %v2995
  %4364 = vmatpush.bf16.msra.mxu0 %v2971
  %4365 = vmatpush.bf16.msra.mxu0 %v2947
  %4366 = vmatmul.bf16.gmra.mxu0 %v243
  %v4367 = vpop.f32.mrf.mxu0
  %v4368 = vadd.f32 %v4354, %v4367
  %v4369 = vpop.f32.mrf.mxu0
  %v4370 = vadd.f32 %v4356, %v4369
  %4371 = vdwg.mxu0
  %4372 = vmatpush.bf16.msra.mxu0 %v2732
  %4373 = vmatpush.bf16.msra.mxu0 %v2708
  %4374 = vmatpush.bf16.msra.mxu0 %v2684
  %4375 = vmatpush.bf16.msra.mxu0 %v2660
  %4376 = vmatpush.bf16.msra.mxu0 %v2636
  %4377 = vmatpush.bf16.msra.mxu0 %v2612
  %4378 = vmatpush.bf16.msra.mxu0 %v2588
  %4379 = vmatpush.bf16.msra.mxu0 %v2564
  %4380 = vmatmul.bf16.gmra.mxu0 %v241
  %v4381 = vpop.f32.mrf.mxu0
  %v4382 = vadd.f32 0.0, %v4381
  %v4383 = vpop.f32.mrf.mxu0
  %v4384 = vadd.f32 0.0, %v4383
  %4385 = vdwg.mxu0
  %4386 = vmatpush.bf16.msra.mxu0 %v2924
  %4387 = vmatpush.bf16.msra.mxu0 %v2900
  %4388 = vmatpush.bf16.msra.mxu0 %v2876
  %4389 = vmatpush.bf16.msra.mxu0 %v2852
  %4390 = vmatpush.bf16.msra.mxu0 %v2828
  %4391 = vmatpush.bf16.msra.mxu0 %v2804
  %4392 = vmatpush.bf16.msra.mxu0 %v2780
  %4393 = vmatpush.bf16.msra.mxu0 %v2756
  %4394 = vmatmul.bf16.gmra.mxu0 %v242
  %v4395 = vpop.f32.mrf.mxu0
  %v4396 = vadd.f32 %v4382, %v4395
  %v4397 = vpop.f32.mrf.mxu0
  %v4398 = vadd.f32 %v4384, %v4397
  %4399 = vdwg.mxu0
  %4400 = vmatpush.bf16.msra.mxu0 %v3116
  %4401 = vmatpush.bf16.msra.mxu0 %v3092
  %4402 = vmatpush.bf16.msra.mxu0 %v3068
  %4403 = vmatpush.bf16.msra.mxu0 %v3044
  %4404 = vmatpush.bf16.msra.mxu0 %v3020
  %4405 = vmatpush.bf16.msra.mxu0 %v2996
  %4406 = vmatpush.bf16.msra.mxu0 %v2972
  %4407 = vmatpush.bf16.msra.mxu0 %v2948
  %4408 = vmatmul.bf16.gmra.mxu0 %v243
  %v4409 = vpop.f32.mrf.mxu0
  %v4410 = vadd.f32 %v4396, %v4409
  %v4411 = vpop.f32.mrf.mxu0
  %v4412 = vadd.f32 %v4398, %v4411
  %4413 = vdwg.mxu0
  %4414 = vmatpush.bf16.msra.mxu0 %v2733
  %4415 = vmatpush.bf16.msra.mxu0 %v2709
  %4416 = vmatpush.bf16.msra.mxu0 %v2685
  %4417 = vmatpush.bf16.msra.mxu0 %v2661
  %4418 = vmatpush.bf16.msra.mxu0 %v2637
  %4419 = vmatpush.bf16.msra.mxu0 %v2613
  %4420 = vmatpush.bf16.msra.mxu0 %v2589
  %4421 = vmatpush.bf16.msra.mxu0 %v2565
  %4422 = vmatmul.bf16.gmra.mxu0 %v241
  %v4423 = vpop.f32.mrf.mxu0
  %v4424 = vadd.f32 0.0, %v4423
  %v4425 = vpop.f32.mrf.mxu0
  %v4426 = vadd.f32 0.0, %v4425
  %4427 = vdwg.mxu0
  %4428 = vmatpush.bf16.msra.mxu0 %v2925
  %4429 = vmatpush.bf16.msra.mxu0 %v2901
  %4430 = vmatpush.bf16.msra.mxu0 %v2877
  %4431 = vmatpush.bf16.msra.mxu0 %v2853
  %4432 = vmatpush.bf16.msra.mxu0 %v2829
  %4433 = vmatpush.bf16.msra.mxu0 %v2805
  %4434 = vmatpush.bf16.msra.mxu0 %v2781
  %4435 = vmatpush.bf16.msra.mxu0 %v2757
  %4436 = vmatmul.bf16.gmra.mxu0 %v242
  %v4437 = vpop.f32.mrf.mxu0
  %v4438 = vadd.f32 %v4424, %v4437
  %v4439 = vpop.f32.mrf.mxu0
  %v4440 = vadd.f32 %v4426, %v4439
  %4441 = vdwg.mxu0
  %4442 = vmatpush.bf16.msra.mxu0 %v3117
  %4443 = vmatpush.bf16.msra.mxu0 %v3093
  %4444 = vmatpush.bf16.msra.mxu0 %v3069
  %4445 = vmatpush.bf16.msra.mxu0 %v3045
  %4446 = vmatpush.bf16.msra.mxu0 %v3021
  %4447 = vmatpush.bf16.msra.mxu0 %v2997
  %4448 = vmatpush.bf16.msra.mxu0 %v2973
  %4449 = vmatpush.bf16.msra.mxu0 %v2949
  %4450 = vmatmul.bf16.gmra.mxu0 %v243
  %v4451 = vpop.f32.mrf.mxu0
  %v4452 = vadd.f32 %v4438, %v4451
  %v4453 = vpop.f32.mrf.mxu0
  %v4454 = vadd.f32 %v4440, %v4453
  %4455 = vdwg.mxu0
  %4456 = vmatpush.bf16.msra.mxu0 %v2734
  %4457 = vmatpush.bf16.msra.mxu0 %v2710
  %4458 = vmatpush.bf16.msra.mxu0 %v2686
  %4459 = vmatpush.bf16.msra.mxu0 %v2662
  %4460 = vmatpush.bf16.msra.mxu0 %v2638
  %4461 = vmatpush.bf16.msra.mxu0 %v2614
  %4462 = vmatpush.bf16.msra.mxu0 %v2590
  %4463 = vmatpush.bf16.msra.mxu0 %v2566
  %4464 = vmatmul.bf16.gmra.mxu0 %v241
  %v4465 = vpop.f32.mrf.mxu0
  %v4466 = vadd.f32 0.0, %v4465
  %v4467 = vpop.f32.mrf.mxu0
  %v4468 = vadd.f32 0.0, %v4467
  %4469 = vdwg.mxu0
  %4470 = vmatpush.bf16.msra.mxu0 %v2926
  %4471 = vmatpush.bf16.msra.mxu0 %v2902
  %4472 = vmatpush.bf16.msra.mxu0 %v2878
  %4473 = vmatpush.bf16.msra.mxu0 %v2854
  %4474 = vmatpush.bf16.msra.mxu0 %v2830
  %4475 = vmatpush.bf16.msra.mxu0 %v2806
  %4476 = vmatpush.bf16.msra.mxu0 %v2782
  %4477 = vmatpush.bf16.msra.mxu0 %v2758
  %4478 = vmatmul.bf16.gmra.mxu0 %v242
  %v4479 = vpop.f32.mrf.mxu0
  %v4480 = vadd.f32 %v4466, %v4479
  %v4481 = vpop.f32.mrf.mxu0
  %v4482 = vadd.f32 %v4468, %v4481
  %4483 = vdwg.mxu0
  %4484 = vmatpush.bf16.msra.mxu0 %v3118
  %4485 = vmatpush.bf16.msra.mxu0 %v3094
  %4486 = vmatpush.bf16.msra.mxu0 %v3070
  %4487 = vmatpush.bf16.msra.mxu0 %v3046
  %4488 = vmatpush.bf16.msra.mxu0 %v3022
  %4489 = vmatpush.bf16.msra.mxu0 %v2998
  %4490 = vmatpush.bf16.msra.mxu0 %v2974
  %4491 = vmatpush.bf16.msra.mxu0 %v2950
  %4492 = vmatmul.bf16.gmra.mxu0 %v243
  %v4493 = vpop.f32.mrf.mxu0
  %v4494 = vadd.f32 %v4480, %v4493
  %v4495 = vpop.f32.mrf.mxu0
  %v4496 = vadd.f32 %v4482, %v4495
  %4497 = vdwg.mxu0
  %4498 = vmatpush.bf16.msra.mxu0 %v2735
  %4499 = vmatpush.bf16.msra.mxu0 %v2711
  %4500 = vmatpush.bf16.msra.mxu0 %v2687
  %4501 = vmatpush.bf16.msra.mxu0 %v2663
  %4502 = vmatpush.bf16.msra.mxu0 %v2639
  %4503 = vmatpush.bf16.msra.mxu0 %v2615
  %4504 = vmatpush.bf16.msra.mxu0 %v2591
  %4505 = vmatpush.bf16.msra.mxu0 %v2567
  %4506 = vmatmul.bf16.gmra.mxu0 %v241
  %v4507 = vpop.f32.mrf.mxu0
  %v4508 = vadd.f32 0.0, %v4507
  %v4509 = vpop.f32.mrf.mxu0
  %v4510 = vadd.f32 0.0, %v4509
  %4511 = vdwg.mxu0
  %4512 = vmatpush.bf16.msra.mxu0 %v2927
  %4513 = vmatpush.bf16.msra.mxu0 %v2903
  %4514 = vmatpush.bf16.msra.mxu0 %v2879
  %4515 = vmatpush.bf16.msra.mxu0 %v2855
  %4516 = vmatpush.bf16.msra.mxu0 %v2831
  %4517 = vmatpush.bf16.msra.mxu0 %v2807
  %4518 = vmatpush.bf16.msra.mxu0 %v2783
  %4519 = vmatpush.bf16.msra.mxu0 %v2759
  %4520 = vmatmul.bf16.gmra.mxu0 %v242
  %v4521 = vpop.f32.mrf.mxu0
  %v4522 = vadd.f32 %v4508, %v4521
  %v4523 = vpop.f32.mrf.mxu0
  %v4524 = vadd.f32 %v4510, %v4523
  %4525 = vdwg.mxu0
  %4526 = vmatpush.bf16.msra.mxu0 %v3119
  %4527 = vmatpush.bf16.msra.mxu0 %v3095
  %4528 = vmatpush.bf16.msra.mxu0 %v3071
  %4529 = vmatpush.bf16.msra.mxu0 %v3047
  %4530 = vmatpush.bf16.msra.mxu0 %v3023
  %4531 = vmatpush.bf16.msra.mxu0 %v2999
  %4532 = vmatpush.bf16.msra.mxu0 %v2975
  %4533 = vmatpush.bf16.msra.mxu0 %v2951
  %4534 = vmatmul.bf16.gmra.mxu0 %v243
  %v4535 = vpop.f32.mrf.mxu0
  %v4536 = vadd.f32 %v4522, %v4535
  %v4537 = vpop.f32.mrf.mxu0
  %v4538 = vadd.f32 %v4524, %v4537
  %4539 = vdwg.mxu0
  %4540 = vmatpush.bf16.msra.mxu0 %v2736
  %4541 = vmatpush.bf16.msra.mxu0 %v2712
  %4542 = vmatpush.bf16.msra.mxu0 %v2688
  %4543 = vmatpush.bf16.msra.mxu0 %v2664
  %4544 = vmatpush.bf16.msra.mxu0 %v2640
  %4545 = vmatpush.bf16.msra.mxu0 %v2616
  %4546 = vmatpush.bf16.msra.mxu0 %v2592
  %4547 = vmatpush.bf16.msra.mxu0 %v2568
  %4548 = vmatmul.bf16.gmra.mxu0 %v241
  %v4549 = vpop.f32.mrf.mxu0
  %v4550 = vadd.f32 0.0, %v4549
  %v4551 = vpop.f32.mrf.mxu0
  %v4552 = vadd.f32 0.0, %v4551
  %4553 = vdwg.mxu0
  %4554 = vmatpush.bf16.msra.mxu0 %v2928
  %4555 = vmatpush.bf16.msra.mxu0 %v2904
  %4556 = vmatpush.bf16.msra.mxu0 %v2880
  %4557 = vmatpush.bf16.msra.mxu0 %v2856
  %4558 = vmatpush.bf16.msra.mxu0 %v2832
  %4559 = vmatpush.bf16.msra.mxu0 %v2808
  %4560 = vmatpush.bf16.msra.mxu0 %v2784
  %4561 = vmatpush.bf16.msra.mxu0 %v2760
  %4562 = vmatmul.bf16.gmra.mxu0 %v242
  %v4563 = vpop.f32.mrf.mxu0
  %v4564 = vadd.f32 %v4550, %v4563
  %v4565 = vpop.f32.mrf.mxu0
  %v4566 = vadd.f32 %v4552, %v4565
  %4567 = vdwg.mxu0
  %4568 = vmatpush.bf16.msra.mxu0 %v3120
  %4569 = vmatpush.bf16.msra.mxu0 %v3096
  %4570 = vmatpush.bf16.msra.mxu0 %v3072
  %4571 = vmatpush.bf16.msra.mxu0 %v3048
  %4572 = vmatpush.bf16.msra.mxu0 %v3024
  %4573 = vmatpush.bf16.msra.mxu0 %v3000
  %4574 = vmatpush.bf16.msra.mxu0 %v2976
  %4575 = vmatpush.bf16.msra.mxu0 %v2952
  %4576 = vmatmul.bf16.gmra.mxu0 %v243
  %v4577 = vpop.f32.mrf.mxu0
  %v4578 = vadd.f32 %v4564, %v4577
  %v4579 = vpop.f32.mrf.mxu0
  %v4580 = vadd.f32 %v4566, %v4579
  %4581 = vdwg.mxu0
  %4582 = vmatpush.bf16.msra.mxu0 %v2737
  %4583 = vmatpush.bf16.msra.mxu0 %v2713
  %4584 = vmatpush.bf16.msra.mxu0 %v2689
  %4585 = vmatpush.bf16.msra.mxu0 %v2665
  %4586 = vmatpush.bf16.msra.mxu0 %v2641
  %4587 = vmatpush.bf16.msra.mxu0 %v2617
  %4588 = vmatpush.bf16.msra.mxu0 %v2593
  %4589 = vmatpush.bf16.msra.mxu0 %v2569
  %4590 = vmatmul.bf16.gmra.mxu0 %v241
  %v4591 = vpop.f32.mrf.mxu0
  %v4592 = vadd.f32 0.0, %v4591
  %v4593 = vpop.f32.mrf.mxu0
  %v4594 = vadd.f32 0.0, %v4593
  %4595 = vdwg.mxu0
  %4596 = vmatpush.bf16.msra.mxu0 %v2929
  %4597 = vmatpush.bf16.msra.mxu0 %v2905
  %4598 = vmatpush.bf16.msra.mxu0 %v2881
  %4599 = vmatpush.bf16.msra.mxu0 %v2857
  %4600 = vmatpush.bf16.msra.mxu0 %v2833
  %4601 = vmatpush.bf16.msra.mxu0 %v2809
  %4602 = vmatpush.bf16.msra.mxu0 %v2785
  %4603 = vmatpush.bf16.msra.mxu0 %v2761
  %4604 = vmatmul.bf16.gmra.mxu0 %v242
  %v4605 = vpop.f32.mrf.mxu0
  %v4606 = vadd.f32 %v4592, %v4605
  %v4607 = vpop.f32.mrf.mxu0
  %v4608 = vadd.f32 %v4594, %v4607
  %4609 = vdwg.mxu0
  %4610 = vmatpush.bf16.msra.mxu0 %v3121
  %4611 = vmatpush.bf16.msra.mxu0 %v3097
  %4612 = vmatpush.bf16.msra.mxu0 %v3073
  %4613 = vmatpush.bf16.msra.mxu0 %v3049
  %4614 = vmatpush.bf16.msra.mxu0 %v3025
  %4615 = vmatpush.bf16.msra.mxu0 %v3001
  %4616 = vmatpush.bf16.msra.mxu0 %v2977
  %4617 = vmatpush.bf16.msra.mxu0 %v2953
  %4618 = vmatmul.bf16.gmra.mxu0 %v243
  %v4619 = vpop.f32.mrf.mxu0
  %v4620 = vadd.f32 %v4606, %v4619
  %v4621 = vpop.f32.mrf.mxu0
  %v4622 = vadd.f32 %v4608, %v4621
  %4623 = vdwg.mxu0
  %4624 = vmatpush.bf16.msra.mxu0 %v2738
  %4625 = vmatpush.bf16.msra.mxu0 %v2714
  %4626 = vmatpush.bf16.msra.mxu0 %v2690
  %4627 = vmatpush.bf16.msra.mxu0 %v2666
  %4628 = vmatpush.bf16.msra.mxu0 %v2642
  %4629 = vmatpush.bf16.msra.mxu0 %v2618
  %4630 = vmatpush.bf16.msra.mxu0 %v2594
  %4631 = vmatpush.bf16.msra.mxu0 %v2570
  %4632 = vmatmul.bf16.gmra.mxu0 %v241
  %v4633 = vpop.f32.mrf.mxu0
  %v4634 = vadd.f32 0.0, %v4633
  %v4635 = vpop.f32.mrf.mxu0
  %v4636 = vadd.f32 0.0, %v4635
  %4637 = vdwg.mxu0
  %4638 = vmatpush.bf16.msra.mxu0 %v2930
  %4639 = vmatpush.bf16.msra.mxu0 %v2906
  %4640 = vmatpush.bf16.msra.mxu0 %v2882
  %4641 = vmatpush.bf16.msra.mxu0 %v2858
  %4642 = vmatpush.bf16.msra.mxu0 %v2834
  %4643 = vmatpush.bf16.msra.mxu0 %v2810
  %4644 = vmatpush.bf16.msra.mxu0 %v2786
  %4645 = vmatpush.bf16.msra.mxu0 %v2762
  %4646 = vmatmul.bf16.gmra.mxu0 %v242
  %v4647 = vpop.f32.mrf.mxu0
  %v4648 = vadd.f32 %v4634, %v4647
  %v4649 = vpop.f32.mrf.mxu0
  %v4650 = vadd.f32 %v4636, %v4649
  %4651 = vdwg.mxu0
  %4652 = vmatpush.bf16.msra.mxu0 %v3122
  %4653 = vmatpush.bf16.msra.mxu0 %v3098
  %4654 = vmatpush.bf16.msra.mxu0 %v3074
  %4655 = vmatpush.bf16.msra.mxu0 %v3050
  %4656 = vmatpush.bf16.msra.mxu0 %v3026
  %4657 = vmatpush.bf16.msra.mxu0 %v3002
  %4658 = vmatpush.bf16.msra.mxu0 %v2978
  %4659 = vmatpush.bf16.msra.mxu0 %v2954
  %4660 = vmatmul.bf16.gmra.mxu0 %v243
  %v4661 = vpop.f32.mrf.mxu0
  %v4662 = vadd.f32 %v4648, %v4661
  %v4663 = vpop.f32.mrf.mxu0
  %v4664 = vadd.f32 %v4650, %v4663
  %4665 = vdwg.mxu0
  %4666 = vmatpush.bf16.msra.mxu0 %v2739
  %4667 = vmatpush.bf16.msra.mxu0 %v2715
  %4668 = vmatpush.bf16.msra.mxu0 %v2691
  %4669 = vmatpush.bf16.msra.mxu0 %v2667
  %4670 = vmatpush.bf16.msra.mxu0 %v2643
  %4671 = vmatpush.bf16.msra.mxu0 %v2619
  %4672 = vmatpush.bf16.msra.mxu0 %v2595
  %4673 = vmatpush.bf16.msra.mxu0 %v2571
  %4674 = vmatmul.bf16.gmra.mxu0 %v241
  %v4675 = vpop.f32.mrf.mxu0
  %v4676 = vadd.f32 0.0, %v4675
  %v4677 = vpop.f32.mrf.mxu0
  %v4678 = vadd.f32 0.0, %v4677
  %4679 = vdwg.mxu0
  %4680 = vmatpush.bf16.msra.mxu0 %v2931
  %4681 = vmatpush.bf16.msra.mxu0 %v2907
  %4682 = vmatpush.bf16.msra.mxu0 %v2883
  %4683 = vmatpush.bf16.msra.mxu0 %v2859
  %4684 = vmatpush.bf16.msra.mxu0 %v2835
  %4685 = vmatpush.bf16.msra.mxu0 %v2811
  %4686 = vmatpush.bf16.msra.mxu0 %v2787
  %4687 = vmatpush.bf16.msra.mxu0 %v2763
  %4688 = vmatmul.bf16.gmra.mxu0 %v242
  %v4689 = vpop.f32.mrf.mxu0
  %v4690 = vadd.f32 %v4676, %v4689
  %v4691 = vpop.f32.mrf.mxu0
  %v4692 = vadd.f32 %v4678, %v4691
  %4693 = vdwg.mxu0
  %4694 = vmatpush.bf16.msra.mxu0 %v3123
  %4695 = vmatpush.bf16.msra.mxu0 %v3099
  %4696 = vmatpush.bf16.msra.mxu0 %v3075
  %4697 = vmatpush.bf16.msra.mxu0 %v3051
  %4698 = vmatpush.bf16.msra.mxu0 %v3027
  %4699 = vmatpush.bf16.msra.mxu0 %v3003
  %4700 = vmatpush.bf16.msra.mxu0 %v2979
  %4701 = vmatpush.bf16.msra.mxu0 %v2955
  %4702 = vmatmul.bf16.gmra.mxu0 %v243
  %v4703 = vpop.f32.mrf.mxu0
  %v4704 = vadd.f32 %v4690, %v4703
  %v4705 = vpop.f32.mrf.mxu0
  %v4706 = vadd.f32 %v4692, %v4705
  %4707 = vdwg.mxu0
  %v4708 = vld [vmem:[%s4] sm:$0xff]
  %v4709 = vld [vmem:[%s4 + $0x8] sm:$0xff]
  %v4710 = vld [vmem:[%s4 + $0x10] sm:$0xff]
  %v4714 = vperm.slane %v4708, 0
  %v4715 = vperm.slane %v4708, 1
  %v4716 = vperm.slane %v4708, 2
  %v4717 = vperm.slane %v4708, 3
  %v4718 = vperm.slane %v4708, 4
  %v4719 = vperm.slane %v4708, 5
  %v4720 = vperm.slane %v4708, 6
  %v4721 = vperm.slane %v4708, 7
  %v4722 = vperm.slane %v4709, 0
  %v4723 = vperm.slane %v4709, 1
  %v4724 = vperm.slane %v4709, 2
  %v4725 = vperm.slane %v4709, 3
  %v4726 = vperm.slane %v4709, 4
  %v4727 = vperm.slane %v4709, 5
  %v4728 = vperm.slane %v4709, 6
  %v4729 = vperm.slane %v4709, 7
  %v4730 = vperm.slane %v4710, 0
  %v4731 = vperm.slane %v4710, 1
  %v4732 = vperm.slane %v4710, 2
  %v4733 = vperm.slane %v4710, 3
  %v4734 = vperm.slane %v4710, 4
  %v4735 = vperm.slane %v4710, 5
  %v4736 = vperm.slane %v4710, 6
  %v4737 = vperm.slane %v4710, 7
  %v4762 = vmul.f32 %v3738, %v4714
  %v4763 = vmul.f32 %v3780, %v4715
  %v4764 = vmul.f32 %v3822, %v4716
  %v4765 = vmul.f32 %v3864, %v4717
  %v4766 = vmul.f32 %v3906, %v4718
  %v4767 = vmul.f32 %v3948, %v4719
  %v4768 = vmul.f32 %v3990, %v4720
  %v4769 = vmul.f32 %v4032, %v4721
  %v4770 = vmul.f32 %v4074, %v4722
  %v4771 = vmul.f32 %v4116, %v4723
  %v4772 = vmul.f32 %v4158, %v4724
  %v4773 = vmul.f32 %v4200, %v4725
  %v4774 = vmul.f32 %v4242, %v4726
  %v4775 = vmul.f32 %v4284, %v4727
  %v4776 = vmul.f32 %v4326, %v4728
  %v4777 = vmul.f32 %v4368, %v4729
  %v4778 = vmul.f32 %v4410, %v4730
  %v4779 = vmul.f32 %v4452, %v4731
  %v4780 = vmul.f32 %v4494, %v4732
  %v4781 = vmul.f32 %v4536, %v4733
  %v4782 = vmul.f32 %v4578, %v4734
  %v4783 = vmul.f32 %v4620, %v4735
  %v4784 = vmul.f32 %v4662, %v4736
  %v4785 = vmul.f32 %v4704, %v4737
  %v4786 = vmul.f32 %v3740, %v4714
  %v4787 = vmul.f32 %v3782, %v4715
  %v4788 = vmul.f32 %v3824, %v4716
  %v4789 = vmul.f32 %v3866, %v4717
  %v4790 = vmul.f32 %v3908, %v4718
  %v4791 = vmul.f32 %v3950, %v4719
  %v4792 = vmul.f32 %v3992, %v4720
  %v4793 = vmul.f32 %v4034, %v4721
  %v4794 = vmul.f32 %v4076, %v4722
  %v4795 = vmul.f32 %v4118, %v4723
  %v4796 = vmul.f32 %v4160, %v4724
  %v4797 = vmul.f32 %v4202, %v4725
  %v4798 = vmul.f32 %v4244, %v4726
  %v4799 = vmul.f32 %v4286, %v4727
  %v4800 = vmul.f32 %v4328, %v4728
  %v4801 = vmul.f32 %v4370, %v4729
  %v4802 = vmul.f32 %v4412, %v4730
  %v4803 = vmul.f32 %v4454, %v4731
  %v4804 = vmul.f32 %v4496, %v4732
  %v4805 = vmul.f32 %v4538, %v4733
  %v4806 = vmul.f32 %v4580, %v4734
  %v4807 = vmul.f32 %v4622, %v4735
  %v4808 = vmul.f32 %v4664, %v4736
  %v4809 = vmul.f32 %v4706, %v4737
  %v4810 = vld [vmem:[%s5] sm:$0xff]
  %v4811 = vld [vmem:[%s5 + $0x8] sm:$0xff]
  %v4812 = vld [vmem:[%s5 + $0x10] sm:$0xff]
  %v4816 = vperm.slane %v4810, 0
  %v4817 = vperm.slane %v4810, 1
  %v4818 = vperm.slane %v4810, 2
  %v4819 = vperm.slane %v4810, 3
  %v4820 = vperm.slane %v4810, 4
  %v4821 = vperm.slane %v4810, 5
  %v4822 = vperm.slane %v4810, 6
  %v4823 = vperm.slane %v4810, 7
  %v4824 = vperm.slane %v4811, 0
  %v4825 = vperm.slane %v4811, 1
  %v4826 = vperm.slane %v4811, 2
  %v4827 = vperm.slane %v4811, 3
  %v4828 = vperm.slane %v4811, 4
  %v4829 = vperm.slane %v4811, 5
  %v4830 = vperm.slane %v4811, 6
  %v4831 = vperm.slane %v4811, 7
  %v4832 = vperm.slane %v4812, 0
  %v4833 = vperm.slane %v4812, 1
  %v4834 = vperm.slane %v4812, 2
  %v4835 = vperm.slane %v4812, 3
  %v4836 = vperm.slane %v4812, 4
  %v4837 = vperm.slane %v4812, 5
  %v4838 = vperm.slane %v4812, 6
  %v4839 = vperm.slane %v4812, 7
  %v4864 = vadd.f32 %v4762, %v4816
  %v4865 = vadd.f32 %v4763, %v4817
  %v4866 = vadd.f32 %v4764, %v4818
  %v4867 = vadd.f32 %v4765, %v4819
  %v4868 = vadd.f32 %v4766, %v4820
  %v4869 = vadd.f32 %v4767, %v4821
  %v4870 = vadd.f32 %v4768, %v4822
  %v4871 = vadd.f32 %v4769, %v4823
  %v4872 = vadd.f32 %v4770, %v4824
  %v4873 = vadd.f32 %v4771, %v4825
  %v4874 = vadd.f32 %v4772, %v4826
  %v4875 = vadd.f32 %v4773, %v4827
  %v4876 = vadd.f32 %v4774, %v4828
  %v4877 = vadd.f32 %v4775, %v4829
  %v4878 = vadd.f32 %v4776, %v4830
  %v4879 = vadd.f32 %v4777, %v4831
  %v4880 = vadd.f32 %v4778, %v4832
  %v4881 = vadd.f32 %v4779, %v4833
  %v4882 = vadd.f32 %v4780, %v4834
  %v4883 = vadd.f32 %v4781, %v4835
  %v4884 = vadd.f32 %v4782, %v4836
  %v4885 = vadd.f32 %v4783, %v4837
  %v4886 = vadd.f32 %v4784, %v4838
  %v4887 = vadd.f32 %v4785, %v4839
  %v4888 = vadd.f32 %v4786, %v4816
  %v4889 = vadd.f32 %v4787, %v4817
  %v4890 = vadd.f32 %v4788, %v4818
  %v4891 = vadd.f32 %v4789, %v4819
  %v4892 = vadd.f32 %v4790, %v4820
  %v4893 = vadd.f32 %v4791, %v4821
  %v4894 = vadd.f32 %v4792, %v4822
  %v4895 = vadd.f32 %v4793, %v4823
  %v4896 = vadd.f32 %v4794, %v4824
  %v4897 = vadd.f32 %v4795, %v4825
  %v4898 = vadd.f32 %v4796, %v4826
  %v4899 = vadd.f32 %v4797, %v4827
  %v4900 = vadd.f32 %v4798, %v4828
  %v4901 = vadd.f32 %v4799, %v4829
  %v4902 = vadd.f32 %v4800, %v4830
  %v4903 = vadd.f32 %v4801, %v4831
  %v4904 = vadd.f32 %v4802, %v4832
  %v4905 = vadd.f32 %v4803, %v4833
  %v4906 = vadd.f32 %v4804, %v4834
  %v4907 = vadd.f32 %v4805, %v4835
  %v4908 = vadd.f32 %v4806, %v4836
  %v4909 = vadd.f32 %v4807, %v4837
  %v4910 = vadd.f32 %v4808, %v4838
  %v4911 = vadd.f32 %v4809, %v4839
  %v4912 = vmax.f32 %v4864, 0.0
  %v4913 = vmax.f32 %v4865, 0.0
  %v4914 = vmax.f32 %v4866, 0.0
  %v4915 = vmax.f32 %v4867, 0.0
  %v4916 = vmax.f32 %v4868, 0.0
  %v4917 = vmax.f32 %v4869, 0.0
  %v4918 = vmax.f32 %v4870, 0.0
  %v4919 = vmax.f32 %v4871, 0.0
  %v4920 = vmax.f32 %v4872, 0.0
  %v4921 = vmax.f32 %v4873, 0.0
  %v4922 = vmax.f32 %v4874, 0.0
  %v4923 = vmax.f32 %v4875, 0.0
  %v4924 = vmax.f32 %v4876, 0.0
  %v4925 = vmax.f32 %v4877, 0.0
  %v4926 = vmax.f32 %v4878, 0.0
  %v4927 = vmax.f32 %v4879, 0.0
  %v4928 = vmax.f32 %v4880, 0.0
  %v4929 = vmax.f32 %v4881, 0.0
  %v4930 = vmax.f32 %v4882, 0.0
  %v4931 = vmax.f32 %v4883, 0.0
  %v4932 = vmax.f32 %v4884, 0.0
  %v4933 = vmax.f32 %v4885, 0.0
  %v4934 = vmax.f32 %v4886, 0.0
  %v4935 = vmax.f32 %v4887, 0.0
  %v4936 = vmax.f32 %v4888, 0.0
  %v4937 = vmax.f32 %v4889, 0.0
  %v4938 = vmax.f32 %v4890, 0.0
  %v4939 = vmax.f32 %v4891, 0.0
  %v4940 = vmax.f32 %v4892, 0.0
  %v4941 = vmax.f32 %v4893, 0.0
  %v4942 = vmax.f32 %v4894, 0.0
  %v4943 = vmax.f32 %v4895, 0.0
  %v4944 = vmax.f32 %v4896, 0.0
  %v4945 = vmax.f32 %v4897, 0.0
  %v4946 = vmax.f32 %v4898, 0.0
  %v4947 = vmax.f32 %v4899, 0.0
  %v4948 = vmax.f32 %v4900, 0.0
  %v4949 = vmax.f32 %v4901, 0.0
  %v4950 = vmax.f32 %v4902, 0.0
  %v4951 = vmax.f32 %v4903, 0.0
  %v4952 = vmax.f32 %v4904, 0.0
  %v4953 = vmax.f32 %v4905, 0.0
  %v4954 = vmax.f32 %v4906, 0.0
  %v4955 = vmax.f32 %v4907, 0.0
  %v4956 = vmax.f32 %v4908, 0.0
  %v4957 = vmax.f32 %v4909, 0.0
  %v4958 = vmax.f32 %v4910, 0.0
  %v4959 = vmax.f32 %v4911, 0.0
  %v4960 = vpack.c.bf16 %v4913, %v4912
  %v4961 = vpack.c.bf16 %v4915, %v4914
  %v4962 = vpack.c.bf16 %v4917, %v4916
  %v4963 = vpack.c.bf16 %v4919, %v4918
  %v4964 = vpack.c.bf16 %v4921, %v4920
  %v4965 = vpack.c.bf16 %v4923, %v4922
  %v4966 = vpack.c.bf16 %v4925, %v4924
  %v4967 = vpack.c.bf16 %v4927, %v4926
  %v4968 = vpack.c.bf16 %v4929, %v4928
  %v4969 = vpack.c.bf16 %v4931, %v4930
  %v4970 = vpack.c.bf16 %v4933, %v4932
  %v4971 = vpack.c.bf16 %v4935, %v4934
  %v4972 = vpack.c.bf16 %v4937, %v4936
  %v4973 = vpack.c.bf16 %v4939, %v4938
  %v4974 = vpack.c.bf16 %v4941, %v4940
  %v4975 = vpack.c.bf16 %v4943, %v4942
  %v4976 = vpack.c.bf16 %v4945, %v4944
  %v4977 = vpack.c.bf16 %v4947, %v4946
  %v4978 = vpack.c.bf16 %v4949, %v4948
  %v4979 = vpack.c.bf16 %v4951, %v4950
  %v4980 = vpack.c.bf16 %v4953, %v4952
  %v4981 = vpack.c.bf16 %v4955, %v4954
  %v4982 = vpack.c.bf16 %v4957, %v4956
  %v4983 = vpack.c.bf16 %v4959, %v4958
  %4984 = vst [vmem:[%s6] sm:$0xff] %v4960
  %4985 = vst [vmem:[%s6 + $0x8] sm:$0xff] %v4961
  %4986 = vst [vmem:[%s6 + $0x10] sm:$0xff] %v4962
  %4987 = vst [vmem:[%s6 + $0x18] sm:$0xff] %v4963
  %4988 = vst [vmem:[%s6 + $0x20] sm:$0xff] %v4964
  %4989 = vst [vmem:[%s6 + $0x28] sm:$0xff] %v4965
  %4990 = vst [vmem:[%s6 + $0x30] sm:$0xff] %v4966
  %4991 = vst [vmem:[%s6 + $0x38] sm:$0xff] %v4967
  %4992 = vst [vmem:[%s6 + $0x40] sm:$0xff] %v4968
  %4993 = vst [vmem:[%s6 + $0x48] sm:$0xff] %v4969
  %4994 = vst [vmem:[%s6 + $0x50] sm:$0xff] %v4970
  %4995 = vst [vmem:[%s6 + $0x58] sm:$0xff] %v4971
  %4996 = vst [vmem:[%s6 + $0x60] sm:$0xff] %v4972
  %4997 = vst [vmem:[%s6 + $0x68] sm:$0xff] %v4973
  %4998 = vst [vmem:[%s6 + $0x70] sm:$0xff] %v4974
  %4999 = vst [vmem:[%s6 + $0x78] sm:$0xff] %v4975
  %5000 = vst [vmem:[%s6 + $0x80] sm:$0xff] %v4976
  %5001 = vst [vmem:[%s6 + $0x88] sm:$0xff] %v4977
  %5002 = vst [vmem:[%s6 + $0x90] sm:$0xff] %v4978
  %5003 = vst [vmem:[%s6 + $0x98] sm:$0xff] %v4979
  %5004 = vst [vmem:[%s6 + $0xa0] sm:$0xff] %v4980
  %5005 = vst [vmem:[%s6 + $0xa8] sm:$0xff] %v4981
  %5006 = vst [vmem:[%s6 + $0xb0] sm:$0xff] %v4982
  %5007 = vst [vmem:[%s6 + $0xb8] sm:$0xff] %v4983
  // Predicated region
  $region26: #{generator_forward.5} parent=0 // pred_check
    _
  $region27: #{generator_forward.5} parent=0 // pred_check_branch
    %5009 = sbr.rel (0) target = $region29
  $region28: #{generator_forward.5} parent=0 // pred_region
    _
  $region29: #{generator_forward.5} parent=0 // pred_fallthru
    _
  // Predicated region
  $region30: #{generator_forward.5} parent=0 // pred_check
    _
  $region31: #{generator_forward.5} parent=0 // pred_check_branch
    %5011 = sbr.rel (0) target = $region33
  $region32: #{generator_forward.5} parent=0 // pred_region
    _
  $region33: #{generator_forward.5} parent=0 // pred_fallthru
    _

// kernel: generator_forward.6
$region0: #{generator_forward.6}
  #allocation0 [shape = 'u32[]', space=smem, size = 0x4, offset = 0x4, fixed_abs, tag = 'smem constant byte address 0x4 - core index']
  #allocation1 [shape = 'u32[72,128]{1,0:T(1,128)}', space=vmem, size = 0x9000, scoped, tag = 'internal scratch']
  %s0 = inlined_call_operand.vmem [shape: bf16[56,768], index: 0, kind: input, shape index: {}]
  %s1 = inlined_call_operand.vmem [shape: bf16[768,384], index: 1, kind: input, shape index: {}]
  %s2 = inlined_call_operand.vmem [shape: f32[1,384], index: 2, kind: input, shape index: {}]
  %s3 = inlined_call_operand.vmem [shape: f32[1,384], index: 3, kind: input, shape index: {}]
  %s4 = inlined_call_operand.vmem [shape: bf16[56,384], index: 4, kind: output, shape index: {}]
  %s5 = sld [smem:[#allocation0]]
  $region26: #{generator_forward.6} parent=0
    _
  %s7 = ssub.s32 1, %s5
  %s8 = scalar_select 0, %s7, %s5
  // Predicated region
  $region2: #{generator_forward.6} parent=0 // pred_check
    _
  $region3: #{generator_forward.6} parent=0 // pred_check_branch
    %10 = sbr.rel (0) target = $region5
  $region4: #{generator_forward.6} parent=0 // pred_region
    _
  $region5: #{generator_forward.6} parent=0 // pred_fallthru
    _
  // Predicated region
  $region6: #{generator_forward.6} parent=0 // pred_check
    _
  $region7: #{generator_forward.6} parent=0 // pred_check_branch
    %12 = sbr.rel (0) target = $region9
  $region8: #{generator_forward.6} parent=0 // pred_region
    _
  $region9: #{generator_forward.6} parent=0 // pred_fallthru
    _
  // Predicated region
  $region10: #{generator_forward.6} parent=0 // pred_check
    _
  $region11: #{generator_forward.6} parent=0 // pred_check_branch
    %14 = sbr.rel (0) target = $region13
  $region12: #{generator_forward.6} parent=0 // pred_region
    _
  $region13: #{generator_forward.6} parent=0 // pred_fallthru
    _
  // Predicated region
  $region14: #{generator_forward.6} parent=0 // pred_check
    _
  $region15: #{generator_forward.6} parent=0 // pred_check_branch
    %16 = sbr.rel (0) target = $region17
  $region16: #{generator_forward.6} parent=0 // pred_region
    _
  $region17: #{generator_forward.6} parent=0 // pred_fallthru
    _
  %v17 = vld [vmem:[%s0] sm:$0xff]
  %v18 = vld [vmem:[%s0 + $0x8] sm:$0xff]
  %v19 = vld [vmem:[%s0 + $0x10] sm:$0xff]
  %v20 = vld [vmem:[%s0 + $0x18] sm:$0xff]
  %v21 = vld [vmem:[%s0 + $0x20] sm:$0xff]
  %v22 = vld [vmem:[%s0 + $0x28] sm:$0xff]
  %v23 = vld [vmem:[%s0 + $0x30] sm:$0xff]
  %v24 = vld [vmem:[%s0 + $0x38] sm:$0xff]
  %v25 = vld [vmem:[%s0 + $0x40] sm:$0xff]
  %v26 = vld [vmem:[%s0 + $0x48] sm:$0xff]
  %v27 = vld [vmem:[%s0 + $0x50] sm:$0xff]
  %v28 = vld [vmem:[%s0 + $0x58] sm:$0xff]
  %v29 = vld [vmem:[%s0 + $0x60] sm:$0xff]
  %v30 = vld [vmem:[%s0 + $0x68] sm:$0xff]
  %v31 = vld [vmem:[%s0 + $0x70] sm:$0xff]
  %v32 = vld [vmem:[%s0 + $0x78] sm:$0xff]
  %v33 = vld [vmem:[%s0 + $0x80] sm:$0xff]
  %v34 = vld [vmem:[%s0 + $0x88] sm:$0xff]
  %v35 = vld [vmem:[%s0 + $0x90] sm:$0xff]
  %v36 = vld [vmem:[%s0 + $0x98] sm:$0xff]
  %v37 = vld [vmem:[%s0 + $0xa0] sm:$0xff]
  %v38 = vld [vmem:[%s1] sm:$0xff]
  %v39 = vld [vmem:[%s1 + $0x8] sm:$0xf]
  %v40 = vld [vmem:[%s1 + $0xc] sm:$0xff]
  %v41 = vld [vmem:[%s1 + $0x14] sm:$0xf]
  %v42 = vld [vmem:[%s1 + $0x18] sm:$0xff]
  %v43 = vld [vmem:[%s1 + $0x20] sm:$0xf]
  %v44 = vld [vmem:[%s1 + $0x24] sm:$0xff]
  %v45 = vld [vmem:[%s1 + $0x2c] sm:$0xf]
  %v46 = vld [vmem:[%s1 + $0x30] sm:$0xff]
  %v47 = vld [vmem:[%s1 + $0x38] sm:$0xf]
  %v48 = vld [vmem:[%s1 + $0x3c] sm:$0xff]
  %v49 = vld [vmem:[%s1 + $0x44] sm:$0xf]
  %v50 = vld [vmem:[%s1 + $0x48] sm:$0xff]
  %v51 = vld [vmem:[%s1 + $0x50] sm:$0xf]
  %v52 = vld [vmem:[%s1 + $0x54] sm:$0xff]
  %v53 = vld [vmem:[%s1 + $0x5c] sm:$0xf]
  %v54 = vld [vmem:[%s1 + $0x60] sm:$0xff]
  %v55 = vld [vmem:[%s1 + $0x68] sm:$0xf]
  %v56 = vld [vmem:[%s1 + $0x6c] sm:$0xff]
  %v57 = vld [vmem:[%s1 + $0x74] sm:$0xf]
  %v58 = vld [vmem:[%s1 + $0x78] sm:$0xff]
  %v59 = vld [vmem:[%s1 + $0x80] sm:$0xf]
  %v60 = vld [vmem:[%s1 + $0x84] sm:$0xff]
  %v61 = vld [vmem:[%s1 + $0x8c] sm:$0xf]
  %v62 = vld [vmem:[%s1 + $0x90] sm:$0xff]
  %v63 = vld [vmem:[%s1 + $0x98] sm:$0xf]
  %v64 = vld [vmem:[%s1 + $0x9c] sm:$0xff]
  %v65 = vld [vmem:[%s1 + $0xa4] sm:$0xf]
  %v66 = vld [vmem:[%s1 + $0xa8] sm:$0xff]
  %v67 = vld [vmem:[%s1 + $0xb0] sm:$0xf]
  %v68 = vld [vmem:[%s1 + $0xb4] sm:$0xff]
  %v69 = vld [vmem:[%s1 + $0xbc] sm:$0xf]
  %v70 = vld [vmem:[%s1 + $0xc0] sm:$0xff]
  %v71 = vld [vmem:[%s1 + $0xc8] sm:$0xf]
  %v72 = vld [vmem:[%s1 + $0xcc] sm:$0xff]
  %v73 = vld [vmem:[%s1 + $0xd4] sm:$0xf]
  %v74 = vld [vmem:[%s1 + $0xd8] sm:$0xff]
  %v75 = vld [vmem:[%s1 + $0xe0] sm:$0xf]
  %v76 = vld [vmem:[%s1 + $0xe4] sm:$0xff]
  %v77 = vld [vmem:[%s1 + $0xec] sm:$0xf]
  %v78 = vld [vmem:[%s1 + $0xf0] sm:$0xff]
  %v79 = vld [vmem:[%s1 + $0xf8] sm:$0xf]
  %v80 = vld [vmem:[%s1 + $0xfc] sm:$0xff]
  %v81 = vld [vmem:[%s1 + $0x104] sm:$0xf]
  %v82 = vld [vmem:[%s1 + $0x108] sm:$0xff]
  %v83 = vld [vmem:[%s1 + $0x110] sm:$0xf]
  %v84 = vld [vmem:[%s1 + $0x114] sm:$0xff]
  %v85 = vld [vmem:[%s1 + $0x11c] sm:$0xf]
  %v86 = vld [vmem:[%s1 + $0x120] sm:$0xff]
  %v87 = vld [vmem:[%s1 + $0x128] sm:$0xf]
  %v88 = vld [vmem:[%s1 + $0x12c] sm:$0xff]
  %v89 = vld [vmem:[%s1 + $0x134] sm:$0xf]
  %v90 = vld [vmem:[%s1 + $0x138] sm:$0xff]
  %v91 = vld [vmem:[%s1 + $0x140] sm:$0xf]
  %v92 = vld [vmem:[%s1 + $0x144] sm:$0xff]
  %v93 = vld [vmem:[%s1 + $0x14c] sm:$0xf]
  %v94 = vld [vmem:[%s1 + $0x150] sm:$0xff]
  %v95 = vld [vmem:[%s1 + $0x158] sm:$0xf]
  %v96 = vld [vmem:[%s1 + $0x15c] sm:$0xff]
  %v97 = vld [vmem:[%s1 + $0x164] sm:$0xf]
  %v98 = vld [vmem:[%s1 + $0x168] sm:$0xff]
  %v99 = vld [vmem:[%s1 + $0x170] sm:$0xf]
  %v100 = vld [vmem:[%s1 + $0x174] sm:$0xff]
  %v101 = vld [vmem:[%s1 + $0x17c] sm:$0xf]
  %v102 = vld [vmem:[%s1 + $0x180] sm:$0xff]
  %v103 = vld [vmem:[%s1 + $0x188] sm:$0xf]
  %v104 = vld [vmem:[%s1 + $0x18c] sm:$0xff]
  %v105 = vld [vmem:[%s1 + $0x194] sm:$0xf]
  %v106 = vld [vmem:[%s1 + $0x198] sm:$0xff]
  %v107 = vld [vmem:[%s1 + $0x1a0] sm:$0xf]
  %v108 = vld [vmem:[%s1 + $0x1a4] sm:$0xff]
  %v109 = vld [vmem:[%s1 + $0x1ac] sm:$0xf]
  %v110 = vld [vmem:[%s1 + $0x1b0] sm:$0xff]
  %v111 = vld [vmem:[%s1 + $0x1b8] sm:$0xf]
  %v112 = vld [vmem:[%s1 + $0x1bc] sm:$0xff]
  %v113 = vld [vmem:[%s1 + $0x1c4] sm:$0xf]
  %v114 = vld [vmem:[%s1 + $0x1c8] sm:$0xff]
  %v115 = vld [vmem:[%s1 + $0x1d0] sm:$0xf]
  %v116 = vld [vmem:[%s1 + $0x1d4] sm:$0xff]
  %v117 = vld [vmem:[%s1 + $0x1dc] sm:$0xf]
  %v118 = vld [vmem:[%s1 + $0x1e0] sm:$0xff]
  %v119 = vld [vmem:[%s1 + $0x1e8] sm:$0xf]
  %v120 = vld [vmem:[%s1 + $0x1ec] sm:$0xff]
  %v121 = vld [vmem:[%s1 + $0x1f4] sm:$0xf]
  %v122 = vld [vmem:[%s1 + $0x1f8] sm:$0xff]
  %v123 = vld [vmem:[%s1 + $0x200] sm:$0xf]
  %v124 = vld [vmem:[%s1 + $0x204] sm:$0xff]
  %v125 = vld [vmem:[%s1 + $0x20c] sm:$0xf]
  %v126 = vld [vmem:[%s1 + $0x210] sm:$0xff]
  %v127 = vld [vmem:[%s1 + $0x218] sm:$0xf]
  %v128 = vld [vmem:[%s1 + $0x21c] sm:$0xff]
  %v129 = vld [vmem:[%s1 + $0x224] sm:$0xf]
  %v130 = vld [vmem:[%s1 + $0x228] sm:$0xff]
  %v131 = vld [vmem:[%s1 + $0x230] sm:$0xf]
  %v132 = vld [vmem:[%s1 + $0x234] sm:$0xff]
  %v133 = vld [vmem:[%s1 + $0x23c] sm:$0xf]
  %v134 = vld [vmem:[%s1 + $0x240] sm:$0xff]
  %v135 = vld [vmem:[%s1 + $0x248] sm:$0xf]
  %v136 = vld [vmem:[%s1 + $0x24c] sm:$0xff]
  %v137 = vld [vmem:[%s1 + $0x254] sm:$0xf]
  %v138 = vld [vmem:[%s1 + $0x258] sm:$0xff]
  %v139 = vld [vmem:[%s1 + $0x260] sm:$0xf]
  %v140 = vld [vmem:[%s1 + $0x264] sm:$0xff]
  %v141 = vld [vmem:[%s1 + $0x26c] sm:$0xf]
  %v142 = vld [vmem:[%s1 + $0x270] sm:$0xff]
  %v143 = vld [vmem:[%s1 + $0x278] sm:$0xf]
  %v144 = vld [vmem:[%s1 + $0x27c] sm:$0xff]
  %v145 = vld [vmem:[%s1 + $0x284] sm:$0xf]
  %v146 = vld [vmem:[%s1 + $0x288] sm:$0xff]
  %v147 = vld [vmem:[%s1 + $0x290] sm:$0xf]
  %v148 = vld [vmem:[%s1 + $0x294] sm:$0xff]
  %v149 = vld [vmem:[%s1 + $0x29c] sm:$0xf]
  %v150 = vld [vmem:[%s1 + $0x2a0] sm:$0xff]
  %v151 = vld [vmem:[%s1 + $0x2a8] sm:$0xf]
  %v152 = vld [vmem:[%s1 + $0x2ac] sm:$0xff]
  %v153 = vld [vmem:[%s1 + $0x2b4] sm:$0xf]
  %v154 = vld [vmem:[%s1 + $0x2b8] sm:$0xff]
  %v155 = vld [vmem:[%s1 + $0x2c0] sm:$0xf]
  %v156 = vld [vmem:[%s1 + $0x2c4] sm:$0xff]
  %v157 = vld [vmem:[%s1 + $0x2cc] sm:$0xf]
  %v158 = vld [vmem:[%s1 + $0x2d0] sm:$0xff]
  %v159 = vld [vmem:[%s1 + $0x2d8] sm:$0xf]
  %v160 = vld [vmem:[%s1 + $0x2dc] sm:$0xff]
  %v161 = vld [vmem:[%s1 + $0x2e4] sm:$0xf]
  %v162 = vld [vmem:[%s1 + $0x2e8] sm:$0xff]
  %v163 = vld [vmem:[%s1 + $0x2f0] sm:$0xf]
  %v164 = vld [vmem:[%s1 + $0x2f4] sm:$0xff]
  %v165 = vld [vmem:[%s1 + $0x2fc] sm:$0xf]
  %v166 = vld [vmem:[%s1 + $0x300] sm:$0xff]
  %v167 = vld [vmem:[%s1 + $0x308] sm:$0xf]
  %v168 = vld [vmem:[%s1 + $0x30c] sm:$0xff]
  %v169 = vld [vmem:[%s1 + $0x314] sm:$0xf]
  %v170 = vld [vmem:[%s1 + $0x318] sm:$0xff]
  %v171 = vld [vmem:[%s1 + $0x320] sm:$0xf]
  %v172 = vld [vmem:[%s1 + $0x324] sm:$0xff]
  %v173 = vld [vmem:[%s1 + $0x32c] sm:$0xf]
  %v174 = vld [vmem:[%s1 + $0x330] sm:$0xff]
  %v175 = vld [vmem:[%s1 + $0x338] sm:$0xf]
  %v176 = vld [vmem:[%s1 + $0x33c] sm:$0xff]
  %v177 = vld [vmem:[%s1 + $0x344] sm:$0xf]
  %v178 = vld [vmem:[%s1 + $0x348] sm:$0xff]
  %v179 = vld [vmem:[%s1 + $0x350] sm:$0xf]
  %v180 = vld [vmem:[%s1 + $0x354] sm:$0xff]
  %v181 = vld [vmem:[%s1 + $0x35c] sm:$0xf]
  %v182 = vld [vmem:[%s1 + $0x360] sm:$0xff]
  %v183 = vld [vmem:[%s1 + $0x368] sm:$0xf]
  %v184 = vld [vmem:[%s1 + $0x36c] sm:$0xff]
  %v185 = vld [vmem:[%s1 + $0x374] sm:$0xf]
  %v186 = vld [vmem:[%s1 + $0x378] sm:$0xff]
  %v187 = vld [vmem:[%s1 + $0x380] sm:$0xf]
  %v188 = vld [vmem:[%s1 + $0x384] sm:$0xff]
  %v189 = vld [vmem:[%s1 + $0x38c] sm:$0xf]
  %v190 = vld [vmem:[%s1 + $0x390] sm:$0xff]
  %v191 = vld [vmem:[%s1 + $0x398] sm:$0xf]
  %v192 = vld [vmem:[%s1 + $0x39c] sm:$0xff]
  %v193 = vld [vmem:[%s1 + $0x3a4] sm:$0xf]
  %v194 = vld [vmem:[%s1 + $0x3a8] sm:$0xff]
  %v195 = vld [vmem:[%s1 + $0x3b0] sm:$0xf]
  %v196 = vld [vmem:[%s1 + $0x3b4] sm:$0xff]
  %v197 = vld [vmem:[%s1 + $0x3bc] sm:$0xf]
  %v198 = vld [vmem:[%s1 + $0x3c0] sm:$0xff]
  %v199 = vld [vmem:[%s1 + $0x3c8] sm:$0xf]
  %v200 = vld [vmem:[%s1 + $0x3cc] sm:$0xff]
  %v201 = vld [vmem:[%s1 + $0x3d4] sm:$0xf]
  %v202 = vld [vmem:[%s1 + $0x3d8] sm:$0xff]
  %v203 = vld [vmem:[%s1 + $0x3e0] sm:$0xf]
  %v204 = vld [vmem:[%s1 + $0x3e4] sm:$0xff]
  %v205 = vld [vmem:[%s1 + $0x3ec] sm:$0xf]
  %v206 = vld [vmem:[%s1 + $0x3f0] sm:$0xff]
  %v207 = vld [vmem:[%s1 + $0x3f8] sm:$0xf]
  %v208 = vld [vmem:[%s1 + $0x3fc] sm:$0xff]
  %v209 = vld [vmem:[%s1 + $0x404] sm:$0xf]
  %v210 = vld [vmem:[%s1 + $0x408] sm:$0xff]
  %v211 = vld [vmem:[%s1 + $0x410] sm:$0xf]
  %v212 = vld [vmem:[%s1 + $0x414] sm:$0xff]
  %v213 = vld [vmem:[%s1 + $0x41c] sm:$0xf]
  %v214 = vld [vmem:[%s1 + $0x420] sm:$0xff]
  %v215 = vld [vmem:[%s1 + $0x428] sm:$0xf]
  %v216 = vld [vmem:[%s1 + $0x42c] sm:$0xff]
  %v217 = vld [vmem:[%s1 + $0x434] sm:$0xf]
  %v218 = vld [vmem:[%s1 + $0x438] sm:$0xff]
  %v219 = vld [vmem:[%s1 + $0x440] sm:$0xf]
  %v220 = vld [vmem:[%s1 + $0x444] sm:$0xff]
  %v221 = vld [vmem:[%s1 + $0x44c] sm:$0xf]
  %v222 = vld [vmem:[%s1 + $0x450] sm:$0xff]
  %v223 = vld [vmem:[%s1 + $0x458] sm:$0xf]
  %v224 = vld [vmem:[%s1 + $0x45c] sm:$0xff]
  %v225 = vld [vmem:[%s1 + $0x464] sm:$0xf]
  %v226 = vld [vmem:[%s1 + $0x468] sm:$0xff]
  %v227 = vld [vmem:[%s1 + $0x470] sm:$0xf]
  %v228 = vld [vmem:[%s1 + $0x474] sm:$0xff]
  %v229 = vld [vmem:[%s1 + $0x47c] sm:$0xf]
  %v251 = vunpack.c.l.b16 %v17
  %v252 = vunpack.c.h.b16 %v17
  %v253 = vunpack.c.l.b16 %v18
  %v254 = vunpack.c.h.b16 %v18
  %v255 = vunpack.c.l.b16 %v19
  %v256 = vunpack.c.h.b16 %v19
  %v257 = vunpack.c.l.b16 %v20
  %v258 = vunpack.c.h.b16 %v20
  %v259 = vunpack.c.l.b16 %v21
  %v260 = vunpack.c.h.b16 %v21
  %v261 = vunpack.c.l.b16 %v22
  %v262 = vunpack.c.h.b16 %v22
  %v263 = vunpack.c.l.b16 %v23
  %v264 = vunpack.c.h.b16 %v23
  %v265 = vunpack.c.l.b16 %v24
  %v266 = vunpack.c.h.b16 %v24
  %v267 = vunpack.c.l.b16 %v25
  %v268 = vunpack.c.h.b16 %v25
  %v269 = vunpack.c.l.b16 %v26
  %v270 = vunpack.c.h.b16 %v26
  %v271 = vunpack.c.l.b16 %v27
  %v272 = vunpack.c.h.b16 %v27
  %v273 = vunpack.c.l.b16 %v28
  %v274 = vunpack.c.h.b16 %v28
  %v275 = vunpack.c.l.b16 %v29
  %v276 = vunpack.c.h.b16 %v29
  %v277 = vunpack.c.l.b16 %v30
  %v278 = vunpack.c.h.b16 %v30
  %v279 = vunpack.c.l.b16 %v31
  %v280 = vunpack.c.h.b16 %v31
  %v281 = vunpack.c.l.b16 %v32
  %v282 = vunpack.c.h.b16 %v32
  %v283 = vunpack.c.l.b16 %v33
  %v284 = vunpack.c.h.b16 %v33
  %v285 = vunpack.c.l.b16 %v34
  %v286 = vunpack.c.h.b16 %v34
  %v287 = vunpack.c.l.b16 %v35
  %v288 = vunpack.c.h.b16 %v35
  %v289 = vunpack.c.l.b16 %v36
  %v290 = vunpack.c.h.b16 %v36
  %v291 = vunpack.c.l.b16 %v37
  %v292 = vunpack.c.h.b16 %v37
  %v293 = vpack.c.b16 %v257, %v251
  %v294 = vpack.c.b16 %v258, %v252
  %v295 = vpack.c.b16 %v259, %v253
  %v296 = vpack.c.b16 %v260, %v254
  %v297 = vpack.c.b16 %v261, %v255
  %v298 = vpack.c.b16 %v262, %v256
  %v299 = vpack.c.b16 %v269, %v263
  %v300 = vpack.c.b16 %v270, %v264
  %v301 = vpack.c.b16 %v271, %v265
  %v302 = vpack.c.b16 %v272, %v266
  %v303 = vpack.c.b16 %v273, %v267
  %v304 = vpack.c.b16 %v274, %v268
  %v305 = vpack.c.b16 %v281, %v275
  %v306 = vpack.c.b16 %v282, %v276
  %v307 = vpack.c.b16 %v283, %v277
  %v308 = vpack.c.b16 %v284, %v278
  %v309 = vpack.c.b16 %v285, %v279
  %v310 = vpack.c.b16 %v286, %v280
  %v311 = vpack.c.b16 %v287, %v287
  %v312 = vpack.c.b16 %v288, %v288
  %v313 = vpack.c.b16 %v289, %v289
  %v314 = vpack.c.b16 %v290, %v290
  %v315 = vpack.c.b16 %v291, %v291
  %v316 = vpack.c.b16 %v292, %v292
  %v533 = vunpack.c.l.b16 %v38
  %v534 = vunpack.c.h.b16 %v38
  %v535 = vunpack.c.l.b16 %v39
  %v536 = vunpack.c.l.b16 %v40
  %v537 = vunpack.c.h.b16 %v40
  %v538 = vunpack.c.l.b16 %v41
  %v539 = vunpack.c.l.b16 %v42
  %v540 = vunpack.c.h.b16 %v42
  %v541 = vunpack.c.l.b16 %v43
  %v542 = vunpack.c.l.b16 %v44
  %v543 = vunpack.c.h.b16 %v44
  %v544 = vunpack.c.l.b16 %v45
  %v545 = vunpack.c.l.b16 %v46
  %v546 = vunpack.c.h.b16 %v46
  %v547 = vunpack.c.l.b16 %v47
  %v548 = vunpack.c.l.b16 %v48
  %v549 = vunpack.c.h.b16 %v48
  %v550 = vunpack.c.l.b16 %v49
  %v551 = vunpack.c.l.b16 %v50
  %v552 = vunpack.c.h.b16 %v50
  %v553 = vunpack.c.l.b16 %v51
  %v554 = vunpack.c.l.b16 %v52
  %v555 = vunpack.c.h.b16 %v52
  %v556 = vunpack.c.l.b16 %v53
  %v557 = vunpack.c.l.b16 %v54
  %v558 = vunpack.c.h.b16 %v54
  %v559 = vunpack.c.l.b16 %v55
  %v560 = vunpack.c.l.b16 %v56
  %v561 = vunpack.c.h.b16 %v56
  %v562 = vunpack.c.l.b16 %v57
  %v563 = vunpack.c.l.b16 %v58
  %v564 = vunpack.c.h.b16 %v58
  %v565 = vunpack.c.l.b16 %v59
  %v566 = vunpack.c.l.b16 %v60
  %v567 = vunpack.c.h.b16 %v60
  %v568 = vunpack.c.l.b16 %v61
  %v569 = vunpack.c.l.b16 %v62
  %v570 = vunpack.c.h.b16 %v62
  %v571 = vunpack.c.l.b16 %v63
  %v572 = vunpack.c.l.b16 %v64
  %v573 = vunpack.c.h.b16 %v64
  %v574 = vunpack.c.l.b16 %v65
  %v575 = vunpack.c.l.b16 %v66
  %v576 = vunpack.c.h.b16 %v66
  %v577 = vunpack.c.l.b16 %v67
  %v578 = vunpack.c.l.b16 %v68
  %v579 = vunpack.c.h.b16 %v68
  %v580 = vunpack.c.l.b16 %v69
  %v581 = vunpack.c.l.b16 %v70
  %v582 = vunpack.c.h.b16 %v70
  %v583 = vunpack.c.l.b16 %v71
  %v584 = vunpack.c.l.b16 %v72
  %v585 = vunpack.c.h.b16 %v72
  %v586 = vunpack.c.l.b16 %v73
  %v587 = vunpack.c.l.b16 %v74
  %v588 = vunpack.c.h.b16 %v74
  %v589 = vunpack.c.l.b16 %v75
  %v590 = vunpack.c.l.b16 %v76
  %v591 = vunpack.c.h.b16 %v76
  %v592 = vunpack.c.l.b16 %v77
  %v593 = vunpack.c.l.b16 %v78
  %v594 = vunpack.c.h.b16 %v78
  %v595 = vunpack.c.l.b16 %v79
  %v596 = vunpack.c.l.b16 %v80
  %v597 = vunpack.c.h.b16 %v80
  %v598 = vunpack.c.l.b16 %v81
  %v599 = vunpack.c.l.b16 %v82
  %v600 = vunpack.c.h.b16 %v82
  %v601 = vunpack.c.l.b16 %v83
  %v602 = vunpack.c.l.b16 %v84
  %v603 = vunpack.c.h.b16 %v84
  %v604 = vunpack.c.l.b16 %v85
  %v605 = vunpack.c.l.b16 %v86
  %v606 = vunpack.c.h.b16 %v86
  %v607 = vunpack.c.l.b16 %v87
  %v608 = vunpack.c.l.b16 %v88
  %v609 = vunpack.c.h.b16 %v88
  %v610 = vunpack.c.l.b16 %v89
  %v611 = vunpack.c.l.b16 %v90
  %v612 = vunpack.c.h.b16 %v90
  %v613 = vunpack.c.l.b16 %v91
  %v614 = vunpack.c.l.b16 %v92
  %v615 = vunpack.c.h.b16 %v92
  %v616 = vunpack.c.l.b16 %v93
  %v617 = vunpack.c.l.b16 %v94
  %v618 = vunpack.c.h.b16 %v94
  %v619 = vunpack.c.l.b16 %v95
  %v620 = vunpack.c.l.b16 %v96
  %v621 = vunpack.c.h.b16 %v96
  %v622 = vunpack.c.l.b16 %v97
  %v623 = vunpack.c.l.b16 %v98
  %v624 = vunpack.c.h.b16 %v98
  %v625 = vunpack.c.l.b16 %v99
  %v626 = vunpack.c.l.b16 %v100
  %v627 = vunpack.c.h.b16 %v100
  %v628 = vunpack.c.l.b16 %v101
  %v629 = vunpack.c.l.b16 %v102
  %v630 = vunpack.c.h.b16 %v102
  %v631 = vunpack.c.l.b16 %v103
  %v632 = vunpack.c.l.b16 %v104
  %v633 = vunpack.c.h.b16 %v104
  %v634 = vunpack.c.l.b16 %v105
  %v635 = vunpack.c.l.b16 %v106
  %v636 = vunpack.c.h.b16 %v106
  %v637 = vunpack.c.l.b16 %v107
  %v638 = vunpack.c.l.b16 %v108
  %v639 = vunpack.c.h.b16 %v108
  %v640 = vunpack.c.l.b16 %v109
  %v641 = vunpack.c.l.b16 %v110
  %v642 = vunpack.c.h.b16 %v110
  %v643 = vunpack.c.l.b16 %v111
  %v644 = vunpack.c.l.b16 %v112
  %v645 = vunpack.c.h.b16 %v112
  %v646 = vunpack.c.l.b16 %v113
  %v647 = vunpack.c.l.b16 %v114
  %v648 = vunpack.c.h.b16 %v114
  %v649 = vunpack.c.l.b16 %v115
  %v650 = vunpack.c.l.b16 %v116
  %v651 = vunpack.c.h.b16 %v116
  %v652 = vunpack.c.l.b16 %v117
  %v653 = vunpack.c.l.b16 %v118
  %v654 = vunpack.c.h.b16 %v118
  %v655 = vunpack.c.l.b16 %v119
  %v656 = vunpack.c.l.b16 %v120
  %v657 = vunpack.c.h.b16 %v120
  %v658 = vunpack.c.l.b16 %v121
  %v659 = vunpack.c.l.b16 %v122
  %v660 = vunpack.c.h.b16 %v122
  %v661 = vunpack.c.l.b16 %v123
  %v662 = vunpack.c.l.b16 %v124
  %v663 = vunpack.c.h.b16 %v124
  %v664 = vunpack.c.l.b16 %v125
  %v665 = vunpack.c.l.b16 %v126
  %v666 = vunpack.c.h.b16 %v126
  %v667 = vunpack.c.l.b16 %v127
  %v668 = vunpack.c.l.b16 %v128
  %v669 = vunpack.c.h.b16 %v128
  %v670 = vunpack.c.l.b16 %v129
  %v671 = vunpack.c.l.b16 %v130
  %v672 = vunpack.c.h.b16 %v130
  %v673 = vunpack.c.l.b16 %v131
  %v674 = vunpack.c.l.b16 %v132
  %v675 = vunpack.c.h.b16 %v132
  %v676 = vunpack.c.l.b16 %v133
  %v677 = vunpack.c.l.b16 %v134
  %v678 = vunpack.c.h.b16 %v134
  %v679 = vunpack.c.l.b16 %v135
  %v680 = vunpack.c.l.b16 %v136
  %v681 = vunpack.c.h.b16 %v136
  %v682 = vunpack.c.l.b16 %v137
  %v683 = vunpack.c.l.b16 %v138
  %v684 = vunpack.c.h.b16 %v138
  %v685 = vunpack.c.l.b16 %v139
  %v686 = vunpack.c.l.b16 %v140
  %v687 = vunpack.c.h.b16 %v140
  %v688 = vunpack.c.l.b16 %v141
  %v689 = vunpack.c.l.b16 %v142
  %v690 = vunpack.c.h.b16 %v142
  %v691 = vunpack.c.l.b16 %v143
  %v692 = vunpack.c.l.b16 %v144
  %v693 = vunpack.c.h.b16 %v144
  %v694 = vunpack.c.l.b16 %v145
  %v695 = vunpack.c.l.b16 %v146
  %v696 = vunpack.c.h.b16 %v146
  %v697 = vunpack.c.l.b16 %v147
  %v698 = vunpack.c.l.b16 %v148
  %v699 = vunpack.c.h.b16 %v148
  %v700 = vunpack.c.l.b16 %v149
  %v701 = vunpack.c.l.b16 %v150
  %v702 = vunpack.c.h.b16 %v150
  %v703 = vunpack.c.l.b16 %v151
  %v704 = vunpack.c.l.b16 %v152
  %v705 = vunpack.c.h.b16 %v152
  %v706 = vunpack.c.l.b16 %v153
  %v707 = vunpack.c.l.b16 %v154
  %v708 = vunpack.c.h.b16 %v154
  %v709 = vunpack.c.l.b16 %v155
  %v710 = vunpack.c.l.b16 %v156
  %v711 = vunpack.c.h.b16 %v156
  %v712 = vunpack.c.l.b16 %v157
  %v713 = vunpack.c.l.b16 %v158
  %v714 = vunpack.c.h.b16 %v158
  %v715 = vunpack.c.l.b16 %v159
  %v716 = vunpack.c.l.b16 %v160
  %v717 = vunpack.c.h.b16 %v160
  %v718 = vunpack.c.l.b16 %v161
  %v719 = vunpack.c.l.b16 %v162
  %v720 = vunpack.c.h.b16 %v162
  %v721 = vunpack.c.l.b16 %v163
  %v722 = vunpack.c.l.b16 %v164
  %v723 = vunpack.c.h.b16 %v164
  %v724 = vunpack.c.l.b16 %v165
  %v725 = vunpack.c.l.b16 %v166
  %v726 = vunpack.c.h.b16 %v166
  %v727 = vunpack.c.l.b16 %v167
  %v728 = vunpack.c.l.b16 %v168
  %v729 = vunpack.c.h.b16 %v168
  %v730 = vunpack.c.l.b16 %v169
  %v731 = vunpack.c.l.b16 %v170
  %v732 = vunpack.c.h.b16 %v170
  %v733 = vunpack.c.l.b16 %v171
  %v734 = vunpack.c.l.b16 %v172
  %v735 = vunpack.c.h.b16 %v172
  %v736 = vunpack.c.l.b16 %v173
  %v737 = vunpack.c.l.b16 %v174
  %v738 = vunpack.c.h.b16 %v174
  %v739 = vunpack.c.l.b16 %v175
  %v740 = vunpack.c.l.b16 %v176
  %v741 = vunpack.c.h.b16 %v176
  %v742 = vunpack.c.l.b16 %v177
  %v743 = vunpack.c.l.b16 %v178
  %v744 = vunpack.c.h.b16 %v178
  %v745 = vunpack.c.l.b16 %v179
  %v746 = vunpack.c.l.b16 %v180
  %v747 = vunpack.c.h.b16 %v180
  %v748 = vunpack.c.l.b16 %v181
  %v749 = vunpack.c.l.b16 %v182
  %v750 = vunpack.c.h.b16 %v182
  %v751 = vunpack.c.l.b16 %v183
  %v752 = vunpack.c.l.b16 %v184
  %v753 = vunpack.c.h.b16 %v184
  %v754 = vunpack.c.l.b16 %v185
  %v755 = vunpack.c.l.b16 %v186
  %v756 = vunpack.c.h.b16 %v186
  %v757 = vunpack.c.l.b16 %v187
  %v758 = vunpack.c.l.b16 %v188
  %v759 = vunpack.c.h.b16 %v188
  %v760 = vunpack.c.l.b16 %v189
  %v761 = vunpack.c.l.b16 %v190
  %v762 = vunpack.c.h.b16 %v190
  %v763 = vunpack.c.l.b16 %v191
  %v764 = vunpack.c.l.b16 %v192
  %v765 = vunpack.c.h.b16 %v192
  %v766 = vunpack.c.l.b16 %v193
  %v767 = vunpack.c.l.b16 %v194
  %v768 = vunpack.c.h.b16 %v194
  %v769 = vunpack.c.l.b16 %v195
  %v770 = vunpack.c.l.b16 %v196
  %v771 = vunpack.c.h.b16 %v196
  %v772 = vunpack.c.l.b16 %v197
  %v773 = vunpack.c.l.b16 %v198
  %v774 = vunpack.c.h.b16 %v198
  %v775 = vunpack.c.l.b16 %v199
  %v776 = vunpack.c.l.b16 %v200
  %v777 = vunpack.c.h.b16 %v200
  %v778 = vunpack.c.l.b16 %v201
  %v779 = vunpack.c.l.b16 %v202
  %v780 = vunpack.c.h.b16 %v202
  %v781 = vunpack.c.l.b16 %v203
  %v782 = vunpack.c.l.b16 %v204
  %v783 = vunpack.c.h.b16 %v204
  %v784 = vunpack.c.l.b16 %v205
  %v785 = vunpack.c.l.b16 %v206
  %v786 = vunpack.c.h.b16 %v206
  %v787 = vunpack.c.l.b16 %v207
  %v788 = vunpack.c.l.b16 %v208
  %v789 = vunpack.c.h.b16 %v208
  %v790 = vunpack.c.l.b16 %v209
  %v791 = vunpack.c.l.b16 %v210
  %v792 = vunpack.c.h.b16 %v210
  %v793 = vunpack.c.l.b16 %v211
  %v794 = vunpack.c.l.b16 %v212
  %v795 = vunpack.c.h.b16 %v212
  %v796 = vunpack.c.l.b16 %v213
  %v797 = vunpack.c.l.b16 %v214
  %v798 = vunpack.c.h.b16 %v214
  %v799 = vunpack.c.l.b16 %v215
  %v800 = vunpack.c.l.b16 %v216
  %v801 = vunpack.c.h.b16 %v216
  %v802 = vunpack.c.l.b16 %v217
  %v803 = vunpack.c.l.b16 %v218
  %v804 = vunpack.c.h.b16 %v218
  %v805 = vunpack.c.l.b16 %v219
  %v806 = vunpack.c.l.b16 %v220
  %v807 = vunpack.c.h.b16 %v220
  %v808 = vunpack.c.l.b16 %v221
  %v809 = vunpack.c.l.b16 %v222
  %v810 = vunpack.c.h.b16 %v222
  %v811 = vunpack.c.l.b16 %v223
  %v812 = vunpack.c.l.b16 %v224
  %v813 = vunpack.c.h.b16 %v224
  %v814 = vunpack.c.l.b16 %v225
  %v815 = vunpack.c.l.b16 %v226
  %v816 = vunpack.c.h.b16 %v226
  %v817 = vunpack.c.l.b16 %v227
  %v818 = vunpack.c.l.b16 %v228
  %v819 = vunpack.c.h.b16 %v228
  %v820 = vunpack.c.l.b16 %v229
  %v821 = vpack.c.b16 %v536, %v533
  %v822 = vpack.c.b16 %v537, %v534
  %v823 = vpack.c.b16 %v538, %v535
  %v824 = vpack.c.b16 %v542, %v539
  %v825 = vpack.c.b16 %v543, %v540
  %v826 = vpack.c.b16 %v544, %v541
  %v827 = vpack.c.b16 %v548, %v545
  %v828 = vpack.c.b16 %v549, %v546
  %v829 = vpack.c.b16 %v550, %v547
  %v830 = vpack.c.b16 %v554, %v551
  %v831 = vpack.c.b16 %v555, %v552
  %v832 = vpack.c.b16 %v556, %v553
  %v833 = vpack.c.b16 %v560, %v557
  %v834 = vpack.c.b16 %v561, %v558
  %v835 = vpack.c.b16 %v562, %v559
  %v836 = vpack.c.b16 %v566, %v563
  %v837 = vpack.c.b16 %v567, %v564
  %v838 = vpack.c.b16 %v568, %v565
  %v839 = vpack.c.b16 %v572, %v569
  %v840 = vpack.c.b16 %v573, %v570
  %v841 = vpack.c.b16 %v574, %v571
  %v842 = vpack.c.b16 %v578, %v575
  %v843 = vpack.c.b16 %v579, %v576
  %v844 = vpack.c.b16 %v580, %v577
  %v845 = vpack.c.b16 %v584, %v581
  %v846 = vpack.c.b16 %v585, %v582
  %v847 = vpack.c.b16 %v586, %v583
  %v848 = vpack.c.b16 %v590, %v587
  %v849 = vpack.c.b16 %v591, %v588
  %v850 = vpack.c.b16 %v592, %v589
  %v851 = vpack.c.b16 %v596, %v593
  %v852 = vpack.c.b16 %v597, %v594
  %v853 = vpack.c.b16 %v598, %v595
  %v854 = vpack.c.b16 %v602, %v599
  %v855 = vpack.c.b16 %v603, %v600
  %v856 = vpack.c.b16 %v604, %v601
  %v857 = vpack.c.b16 %v608, %v605
  %v858 = vpack.c.b16 %v609, %v606
  %v859 = vpack.c.b16 %v610, %v607
  %v860 = vpack.c.b16 %v614, %v611
  %v861 = vpack.c.b16 %v615, %v612
  %v862 = vpack.c.b16 %v616, %v613
  %v863 = vpack.c.b16 %v620, %v617
  %v864 = vpack.c.b16 %v621, %v618
  %v865 = vpack.c.b16 %v622, %v619
  %v866 = vpack.c.b16 %v626, %v623
  %v867 = vpack.c.b16 %v627, %v624
  %v868 = vpack.c.b16 %v628, %v625
  %v869 = vpack.c.b16 %v632, %v629
  %v870 = vpack.c.b16 %v633, %v630
  %v871 = vpack.c.b16 %v634, %v631
  %v872 = vpack.c.b16 %v638, %v635
  %v873 = vpack.c.b16 %v639, %v636
  %v874 = vpack.c.b16 %v640, %v637
  %v875 = vpack.c.b16 %v644, %v641
  %v876 = vpack.c.b16 %v645, %v642
  %v877 = vpack.c.b16 %v646, %v643
  %v878 = vpack.c.b16 %v650, %v647
  %v879 = vpack.c.b16 %v651, %v648
  %v880 = vpack.c.b16 %v652, %v649
  %v881 = vpack.c.b16 %v656, %v653
  %v882 = vpack.c.b16 %v657, %v654
  %v883 = vpack.c.b16 %v658, %v655
  %v884 = vpack.c.b16 %v662, %v659
  %v885 = vpack.c.b16 %v663, %v660
  %v886 = vpack.c.b16 %v664, %v661
  %v887 = vpack.c.b16 %v668, %v665
  %v888 = vpack.c.b16 %v669, %v666
  %v889 = vpack.c.b16 %v670, %v667
  %v890 = vpack.c.b16 %v674, %v671
  %v891 = vpack.c.b16 %v675, %v672
  %v892 = vpack.c.b16 %v676, %v673
  %v893 = vpack.c.b16 %v680, %v677
  %v894 = vpack.c.b16 %v681, %v678
  %v895 = vpack.c.b16 %v682, %v679
  %v896 = vpack.c.b16 %v686, %v683
  %v897 = vpack.c.b16 %v687, %v684
  %v898 = vpack.c.b16 %v688, %v685
  %v899 = vpack.c.b16 %v692, %v689
  %v900 = vpack.c.b16 %v693, %v690
  %v901 = vpack.c.b16 %v694, %v691
  %v902 = vpack.c.b16 %v698, %v695
  %v903 = vpack.c.b16 %v699, %v696
  %v904 = vpack.c.b16 %v700, %v697
  %v905 = vpack.c.b16 %v704, %v701
  %v906 = vpack.c.b16 %v705, %v702
  %v907 = vpack.c.b16 %v706, %v703
  %v908 = vpack.c.b16 %v710, %v707
  %v909 = vpack.c.b16 %v711, %v708
  %v910 = vpack.c.b16 %v712, %v709
  %v911 = vpack.c.b16 %v716, %v713
  %v912 = vpack.c.b16 %v717, %v714
  %v913 = vpack.c.b16 %v718, %v715
  %v914 = vpack.c.b16 %v722, %v719
  %v915 = vpack.c.b16 %v723, %v720
  %v916 = vpack.c.b16 %v724, %v721
  %v917 = vpack.c.b16 %v728, %v725
  %v918 = vpack.c.b16 %v729, %v726
  %v919 = vpack.c.b16 %v730, %v727
  %v920 = vpack.c.b16 %v734, %v731
  %v921 = vpack.c.b16 %v735, %v732
  %v922 = vpack.c.b16 %v736, %v733
  %v923 = vpack.c.b16 %v740, %v737
  %v924 = vpack.c.b16 %v741, %v738
  %v925 = vpack.c.b16 %v742, %v739
  %v926 = vpack.c.b16 %v746, %v743
  %v927 = vpack.c.b16 %v747, %v744
  %v928 = vpack.c.b16 %v748, %v745
  %v929 = vpack.c.b16 %v752, %v749
  %v930 = vpack.c.b16 %v753, %v750
  %v931 = vpack.c.b16 %v754, %v751
  %v932 = vpack.c.b16 %v758, %v755
  %v933 = vpack.c.b16 %v759, %v756
  %v934 = vpack.c.b16 %v760, %v757
  %v935 = vpack.c.b16 %v764, %v761
  %v936 = vpack.c.b16 %v765, %v762
  %v937 = vpack.c.b16 %v766, %v763
  %v938 = vpack.c.b16 %v770, %v767
  %v939 = vpack.c.b16 %v771, %v768
  %v940 = vpack.c.b16 %v772, %v769
  %v941 = vpack.c.b16 %v776, %v773
  %v942 = vpack.c.b16 %v777, %v774
  %v943 = vpack.c.b16 %v778, %v775
  %v944 = vpack.c.b16 %v782, %v779
  %v945 = vpack.c.b16 %v783, %v780
  %v946 = vpack.c.b16 %v784, %v781
  %v947 = vpack.c.b16 %v788, %v785
  %v948 = vpack.c.b16 %v789, %v786
  %v949 = vpack.c.b16 %v790, %v787
  %v950 = vpack.c.b16 %v794, %v791
  %v951 = vpack.c.b16 %v795, %v792
  %v952 = vpack.c.b16 %v796, %v793
  %v953 = vpack.c.b16 %v800, %v797
  %v954 = vpack.c.b16 %v801, %v798
  %v955 = vpack.c.b16 %v802, %v799
  %v956 = vpack.c.b16 %v806, %v803
  %v957 = vpack.c.b16 %v807, %v804
  %v958 = vpack.c.b16 %v808, %v805
  %v959 = vpack.c.b16 %v812, %v809
  %v960 = vpack.c.b16 %v813, %v810
  %v961 = vpack.c.b16 %v814, %v811
  %v962 = vpack.c.b16 %v818, %v815
  %v963 = vpack.c.b16 %v819, %v816
  %v964 = vpack.c.b16 %v820, %v817
  %1109 = vmatpush.bf16.msra.mxu0 %v842
  %1110 = vmatpush.bf16.msra.mxu0 %v839
  %1111 = vmatpush.bf16.msra.mxu0 %v836
  %1112 = vmatpush.bf16.msra.mxu0 %v833
  %1113 = vmatpush.bf16.msra.mxu0 %v830
  %1114 = vmatpush.bf16.msra.mxu0 %v827
  %1115 = vmatpush.bf16.msra.mxu0 %v824
  %1116 = vmatpush.bf16.msra.mxu0 %v821
  %1117 = vmatmul.bf16.gmra.mxu0 %v293
  %v1118 = vpop.f32.mrf.mxu0
  %v1119 = vadd.f32 0.0, %v1118
  %v1120 = vpop.f32.mrf.mxu0
  %v1121 = vadd.f32 0.0, %v1120
  %1122 = vmatmul.bf16.gmra.mxu0 %v299
  %v1123 = vpop.f32.mrf.mxu0
  %v1124 = vadd.f32 0.0, %v1123
  %v1125 = vpop.f32.mrf.mxu0
  %v1126 = vadd.f32 0.0, %v1125
  %1127 = vmatmul.bf16.gmra.mxu0 %v305
  %v1128 = vpop.f32.mrf.mxu0
  %v1129 = vadd.f32 0.0, %v1128
  %v1130 = vpop.f32.mrf.mxu0
  %v1131 = vadd.f32 0.0, %v1130
  %1132 = vmatmul.bf16.gmra.mxu0 %v311
  %v1133 = vpop.f32.mrf.mxu0
  %v1134 = vadd.f32 0.0, %v1133
  %v1135 = vpop.f32.mrf.mxu0
  %1136 = vdwg.mxu0
  %1137 = vmatpush.bf16.msra.mxu0 %v866
  %1138 = vmatpush.bf16.msra.mxu0 %v863
  %1139 = vmatpush.bf16.msra.mxu0 %v860
  %1140 = vmatpush.bf16.msra.mxu0 %v857
  %1141 = vmatpush.bf16.msra.mxu0 %v854
  %1142 = vmatpush.bf16.msra.mxu0 %v851
  %1143 = vmatpush.bf16.msra.mxu0 %v848
  %1144 = vmatpush.bf16.msra.mxu0 %v845
  %1145 = vmatmul.bf16.gmra.mxu0 %v294
  %v1146 = vpop.f32.mrf.mxu0
  %v1147 = vadd.f32 %v1119, %v1146
  %v1148 = vpop.f32.mrf.mxu0
  %v1149 = vadd.f32 %v1121, %v1148
  %1150 = vmatmul.bf16.gmra.mxu0 %v300
  %v1151 = vpop.f32.mrf.mxu0
  %v1152 = vadd.f32 %v1124, %v1151
  %v1153 = vpop.f32.mrf.mxu0
  %v1154 = vadd.f32 %v1126, %v1153
  %1155 = vmatmul.bf16.gmra.mxu0 %v306
  %v1156 = vpop.f32.mrf.mxu0
  %v1157 = vadd.f32 %v1129, %v1156
  %v1158 = vpop.f32.mrf.mxu0
  %v1159 = vadd.f32 %v1131, %v1158
  %1160 = vmatmul.bf16.gmra.mxu0 %v312
  %v1161 = vpop.f32.mrf.mxu0
  %v1162 = vadd.f32 %v1134, %v1161
  %v1163 = vpop.f32.mrf.mxu0
  %1164 = vdwg.mxu0
  %1165 = vmatpush.bf16.msra.mxu0 %v890
  %1166 = vmatpush.bf16.msra.mxu0 %v887
  %1167 = vmatpush.bf16.msra.mxu0 %v884
  %1168 = vmatpush.bf16.msra.mxu0 %v881
  %1169 = vmatpush.bf16.msra.mxu0 %v878
  %1170 = vmatpush.bf16.msra.mxu0 %v875
  %1171 = vmatpush.bf16.msra.mxu0 %v872
  %1172 = vmatpush.bf16.msra.mxu0 %v869
  %1173 = vmatmul.bf16.gmra.mxu0 %v295
  %v1174 = vpop.f32.mrf.mxu0
  %v1175 = vadd.f32 %v1147, %v1174
  %v1176 = vpop.f32.mrf.mxu0
  %v1177 = vadd.f32 %v1149, %v1176
  %1178 = vmatmul.bf16.gmra.mxu0 %v301
  %v1179 = vpop.f32.mrf.mxu0
  %v1180 = vadd.f32 %v1152, %v1179
  %v1181 = vpop.f32.mrf.mxu0
  %v1182 = vadd.f32 %v1154, %v1181
  %1183 = vmatmul.bf16.gmra.mxu0 %v307
  %v1184 = vpop.f32.mrf.mxu0
  %v1185 = vadd.f32 %v1157, %v1184
  %v1186 = vpop.f32.mrf.mxu0
  %v1187 = vadd.f32 %v1159, %v1186
  %1188 = vmatmul.bf16.gmra.mxu0 %v313
  %v1189 = vpop.f32.mrf.mxu0
  %v1190 = vadd.f32 %v1162, %v1189
  %v1191 = vpop.f32.mrf.mxu0
  %1192 = vdwg.mxu0
  %1193 = vmatpush.bf16.msra.mxu0 %v914
  %1194 = vmatpush.bf16.msra.mxu0 %v911
  %1195 = vmatpush.bf16.msra.mxu0 %v908
  %1196 = vmatpush.bf16.msra.mxu0 %v905
  %1197 = vmatpush.bf16.msra.mxu0 %v902
  %1198 = vmatpush.bf16.msra.mxu0 %v899
  %1199 = vmatpush.bf16.msra.mxu0 %v896
  %1200 = vmatpush.bf16.msra.mxu0 %v893
  %1201 = vmatmul.bf16.gmra.mxu0 %v296
  %v1202 = vpop.f32.mrf.mxu0
  %v1203 = vadd.f32 %v1175, %v1202
  %v1204 = vpop.f32.mrf.mxu0
  %v1205 = vadd.f32 %v1177, %v1204
  %1206 = vmatmul.bf16.gmra.mxu0 %v302
  %v1207 = vpop.f32.mrf.mxu0
  %v1208 = vadd.f32 %v1180, %v1207
  %v1209 = vpop.f32.mrf.mxu0
  %v1210 = vadd.f32 %v1182, %v1209
  %1211 = vmatmul.bf16.gmra.mxu0 %v308
  %v1212 = vpop.f32.mrf.mxu0
  %v1213 = vadd.f32 %v1185, %v1212
  %v1214 = vpop.f32.mrf.mxu0
  %v1215 = vadd.f32 %v1187, %v1214
  %1216 = vmatmul.bf16.gmra.mxu0 %v314
  %v1217 = vpop.f32.mrf.mxu0
  %v1218 = vadd.f32 %v1190, %v1217
  %v1219 = vpop.f32.mrf.mxu0
  %1220 = vdwg.mxu0
  %1221 = vmatpush.bf16.msra.mxu0 %v938
  %1222 = vmatpush.bf16.msra.mxu0 %v935
  %1223 = vmatpush.bf16.msra.mxu0 %v932
  %1224 = vmatpush.bf16.msra.mxu0 %v929
  %1225 = vmatpush.bf16.msra.mxu0 %v926
  %1226 = vmatpush.bf16.msra.mxu0 %v923
  %1227 = vmatpush.bf16.msra.mxu0 %v920
  %1228 = vmatpush.bf16.msra.mxu0 %v917
  %1229 = vmatmul.bf16.gmra.mxu0 %v297
  %v1230 = vpop.f32.mrf.mxu0
  %v1231 = vadd.f32 %v1203, %v1230
  %v1232 = vpop.f32.mrf.mxu0
  %v1233 = vadd.f32 %v1205, %v1232
  %1234 = vmatmul.bf16.gmra.mxu0 %v303
  %v1235 = vpop.f32.mrf.mxu0
  %v1236 = vadd.f32 %v1208, %v1235
  %v1237 = vpop.f32.mrf.mxu0
  %v1238 = vadd.f32 %v1210, %v1237
  %1239 = vmatmul.bf16.gmra.mxu0 %v309
  %v1240 = vpop.f32.mrf.mxu0
  %v1241 = vadd.f32 %v1213, %v1240
  %v1242 = vpop.f32.mrf.mxu0
  %v1243 = vadd.f32 %v1215, %v1242
  %1244 = vmatmul.bf16.gmra.mxu0 %v315
  %v1245 = vpop.f32.mrf.mxu0
  %v1246 = vadd.f32 %v1218, %v1245
  %v1247 = vpop.f32.mrf.mxu0
  %1248 = vdwg.mxu0
  %1249 = vmatpush.bf16.msra.mxu0 %v962
  %1250 = vmatpush.bf16.msra.mxu0 %v959
  %1251 = vmatpush.bf16.msra.mxu0 %v956
  %1252 = vmatpush.bf16.msra.mxu0 %v953
  %1253 = vmatpush.bf16.msra.mxu0 %v950
  %1254 = vmatpush.bf16.msra.mxu0 %v947
  %1255 = vmatpush.bf16.msra.mxu0 %v944
  %1256 = vmatpush.bf16.msra.mxu0 %v941
  %1257 = vmatmul.bf16.gmra.mxu0 %v298
  %v1258 = vpop.f32.mrf.mxu0
  %v1259 = vadd.f32 %v1231, %v1258
  %v1260 = vpop.f32.mrf.mxu0
  %v1261 = vadd.f32 %v1233, %v1260
  %1262 = vmatmul.bf16.gmra.mxu0 %v304
  %v1263 = vpop.f32.mrf.mxu0
  %v1264 = vadd.f32 %v1236, %v1263
  %v1265 = vpop.f32.mrf.mxu0
  %v1266 = vadd.f32 %v1238, %v1265
  %1267 = vmatmul.bf16.gmra.mxu0 %v310
  %v1268 = vpop.f32.mrf.mxu0
  %v1269 = vadd.f32 %v1241, %v1268
  %v1270 = vpop.f32.mrf.mxu0
  %v1271 = vadd.f32 %v1243, %v1270
  %1272 = vmatmul.bf16.gmra.mxu0 %v316
  %v1273 = vpop.f32.mrf.mxu0
  %v1274 = vadd.f32 %v1246, %v1273
  %v1275 = vpop.f32.mrf.mxu0
  %1276 = vdwg.mxu0
  %1277 = vmatpush.bf16.msra.mxu0 %v843
  %1278 = vmatpush.bf16.msra.mxu0 %v840
  %1279 = vmatpush.bf16.msra.mxu0 %v837
  %1280 = vmatpush.bf16.msra.mxu0 %v834
  %1281 = vmatpush.bf16.msra.mxu0 %v831
  %1282 = vmatpush.bf16.msra.mxu0 %v828
  %1283 = vmatpush.bf16.msra.mxu0 %v825
  %1284 = vmatpush.bf16.msra.mxu0 %v822
  %1285 = vmatmul.bf16.gmra.mxu0 %v293
  %v1286 = vpop.f32.mrf.mxu0
  %v1287 = vadd.f32 0.0, %v1286
  %v1288 = vpop.f32.mrf.mxu0
  %v1289 = vadd.f32 0.0, %v1288
  %1290 = vmatmul.bf16.gmra.mxu0 %v299
  %v1291 = vpop.f32.mrf.mxu0
  %v1292 = vadd.f32 0.0, %v1291
  %v1293 = vpop.f32.mrf.mxu0
  %v1294 = vadd.f32 0.0, %v1293
  %1295 = vmatmul.bf16.gmra.mxu0 %v305
  %v1296 = vpop.f32.mrf.mxu0
  %v1297 = vadd.f32 0.0, %v1296
  %v1298 = vpop.f32.mrf.mxu0
  %v1299 = vadd.f32 0.0, %v1298
  %1300 = vmatmul.bf16.gmra.mxu0 %v311
  %v1301 = vpop.f32.mrf.mxu0
  %v1302 = vadd.f32 0.0, %v1301
  %v1303 = vpop.f32.mrf.mxu0
  %1304 = vdwg.mxu0
  %1305 = vmatpush.bf16.msra.mxu0 %v867
  %1306 = vmatpush.bf16.msra.mxu0 %v864
  %1307 = vmatpush.bf16.msra.mxu0 %v861
  %1308 = vmatpush.bf16.msra.mxu0 %v858
  %1309 = vmatpush.bf16.msra.mxu0 %v855
  %1310 = vmatpush.bf16.msra.mxu0 %v852
  %1311 = vmatpush.bf16.msra.mxu0 %v849
  %1312 = vmatpush.bf16.msra.mxu0 %v846
  %1313 = vmatmul.bf16.gmra.mxu0 %v294
  %v1314 = vpop.f32.mrf.mxu0
  %v1315 = vadd.f32 %v1287, %v1314
  %v1316 = vpop.f32.mrf.mxu0
  %v1317 = vadd.f32 %v1289, %v1316
  %1318 = vmatmul.bf16.gmra.mxu0 %v300
  %v1319 = vpop.f32.mrf.mxu0
  %v1320 = vadd.f32 %v1292, %v1319
  %v1321 = vpop.f32.mrf.mxu0
  %v1322 = vadd.f32 %v1294, %v1321
  %1323 = vmatmul.bf16.gmra.mxu0 %v306
  %v1324 = vpop.f32.mrf.mxu0
  %v1325 = vadd.f32 %v1297, %v1324
  %v1326 = vpop.f32.mrf.mxu0
  %v1327 = vadd.f32 %v1299, %v1326
  %1328 = vmatmul.bf16.gmra.mxu0 %v312
  %v1329 = vpop.f32.mrf.mxu0
  %v1330 = vadd.f32 %v1302, %v1329
  %v1331 = vpop.f32.mrf.mxu0
  %1332 = vdwg.mxu0
  %1333 = vmatpush.bf16.msra.mxu0 %v891
  %1334 = vmatpush.bf16.msra.mxu0 %v888
  %1335 = vmatpush.bf16.msra.mxu0 %v885
  %1336 = vmatpush.bf16.msra.mxu0 %v882
  %1337 = vmatpush.bf16.msra.mxu0 %v879
  %1338 = vmatpush.bf16.msra.mxu0 %v876
  %1339 = vmatpush.bf16.msra.mxu0 %v873
  %1340 = vmatpush.bf16.msra.mxu0 %v870
  %1341 = vmatmul.bf16.gmra.mxu0 %v295
  %v1342 = vpop.f32.mrf.mxu0
  %v1343 = vadd.f32 %v1315, %v1342
  %v1344 = vpop.f32.mrf.mxu0
  %v1345 = vadd.f32 %v1317, %v1344
  %1346 = vmatmul.bf16.gmra.mxu0 %v301
  %v1347 = vpop.f32.mrf.mxu0
  %v1348 = vadd.f32 %v1320, %v1347
  %v1349 = vpop.f32.mrf.mxu0
  %v1350 = vadd.f32 %v1322, %v1349
  %1351 = vmatmul.bf16.gmra.mxu0 %v307
  %v1352 = vpop.f32.mrf.mxu0
  %v1353 = vadd.f32 %v1325, %v1352
  %v1354 = vpop.f32.mrf.mxu0
  %v1355 = vadd.f32 %v1327, %v1354
  %1356 = vmatmul.bf16.gmra.mxu0 %v313
  %v1357 = vpop.f32.mrf.mxu0
  %v1358 = vadd.f32 %v1330, %v1357
  %v1359 = vpop.f32.mrf.mxu0
  %1360 = vdwg.mxu0
  %1361 = vmatpush.bf16.msra.mxu0 %v915
  %1362 = vmatpush.bf16.msra.mxu0 %v912
  %1363 = vmatpush.bf16.msra.mxu0 %v909
  %1364 = vmatpush.bf16.msra.mxu0 %v906
  %1365 = vmatpush.bf16.msra.mxu0 %v903
  %1366 = vmatpush.bf16.msra.mxu0 %v900
  %1367 = vmatpush.bf16.msra.mxu0 %v897
  %1368 = vmatpush.bf16.msra.mxu0 %v894
  %1369 = vmatmul.bf16.gmra.mxu0 %v296
  %v1370 = vpop.f32.mrf.mxu0
  %v1371 = vadd.f32 %v1343, %v1370
  %v1372 = vpop.f32.mrf.mxu0
  %v1373 = vadd.f32 %v1345, %v1372
  %1374 = vmatmul.bf16.gmra.mxu0 %v302
  %v1375 = vpop.f32.mrf.mxu0
  %v1376 = vadd.f32 %v1348, %v1375
  %v1377 = vpop.f32.mrf.mxu0
  %v1378 = vadd.f32 %v1350, %v1377
  %1379 = vmatmul.bf16.gmra.mxu0 %v308
  %v1380 = vpop.f32.mrf.mxu0
  %v1381 = vadd.f32 %v1353, %v1380
  %v1382 = vpop.f32.mrf.mxu0
  %v1383 = vadd.f32 %v1355, %v1382
  %1384 = vmatmul.bf16.gmra.mxu0 %v314
  %v1385 = vpop.f32.mrf.mxu0
  %v1386 = vadd.f32 %v1358, %v1385
  %v1387 = vpop.f32.mrf.mxu0
  %1388 = vdwg.mxu0
  %1389 = vmatpush.bf16.msra.mxu0 %v939
  %1390 = vmatpush.bf16.msra.mxu0 %v936
  %1391 = vmatpush.bf16.msra.mxu0 %v933
  %1392 = vmatpush.bf16.msra.mxu0 %v930
  %1393 = vmatpush.bf16.msra.mxu0 %v927
  %1394 = vmatpush.bf16.msra.mxu0 %v924
  %1395 = vmatpush.bf16.msra.mxu0 %v921
  %1396 = vmatpush.bf16.msra.mxu0 %v918
  %1397 = vmatmul.bf16.gmra.mxu0 %v297
  %v1398 = vpop.f32.mrf.mxu0
  %v1399 = vadd.f32 %v1371, %v1398
  %v1400 = vpop.f32.mrf.mxu0
  %v1401 = vadd.f32 %v1373, %v1400
  %1402 = vmatmul.bf16.gmra.mxu0 %v303
  %v1403 = vpop.f32.mrf.mxu0
  %v1404 = vadd.f32 %v1376, %v1403
  %v1405 = vpop.f32.mrf.mxu0
  %v1406 = vadd.f32 %v1378, %v1405
  %1407 = vmatmul.bf16.gmra.mxu0 %v309
  %v1408 = vpop.f32.mrf.mxu0
  %v1409 = vadd.f32 %v1381, %v1408
  %v1410 = vpop.f32.mrf.mxu0
  %v1411 = vadd.f32 %v1383, %v1410
  %1412 = vmatmul.bf16.gmra.mxu0 %v315
  %v1413 = vpop.f32.mrf.mxu0
  %v1414 = vadd.f32 %v1386, %v1413
  %v1415 = vpop.f32.mrf.mxu0
  %1416 = vdwg.mxu0
  %1417 = vmatpush.bf16.msra.mxu0 %v963
  %1418 = vmatpush.bf16.msra.mxu0 %v960
  %1419 = vmatpush.bf16.msra.mxu0 %v957
  %1420 = vmatpush.bf16.msra.mxu0 %v954
  %1421 = vmatpush.bf16.msra.mxu0 %v951
  %1422 = vmatpush.bf16.msra.mxu0 %v948
  %1423 = vmatpush.bf16.msra.mxu0 %v945
  %1424 = vmatpush.bf16.msra.mxu0 %v942
  %1425 = vmatmul.bf16.gmra.mxu0 %v298
  %v1426 = vpop.f32.mrf.mxu0
  %v1427 = vadd.f32 %v1399, %v1426
  %v1428 = vpop.f32.mrf.mxu0
  %v1429 = vadd.f32 %v1401, %v1428
  %1430 = vmatmul.bf16.gmra.mxu0 %v304
  %v1431 = vpop.f32.mrf.mxu0
  %v1432 = vadd.f32 %v1404, %v1431
  %v1433 = vpop.f32.mrf.mxu0
  %v1434 = vadd.f32 %v1406, %v1433
  %1435 = vmatmul.bf16.gmra.mxu0 %v310
  %v1436 = vpop.f32.mrf.mxu0
  %v1437 = vadd.f32 %v1409, %v1436
  %v1438 = vpop.f32.mrf.mxu0
  %v1439 = vadd.f32 %v1411, %v1438
  %1440 = vmatmul.bf16.gmra.mxu0 %v316
  %v1441 = vpop.f32.mrf.mxu0
  %v1442 = vadd.f32 %v1414, %v1441
  %v1443 = vpop.f32.mrf.mxu0
  %1444 = vdwg.mxu0
  %1445 = vmatpush.bf16.msra.mxu0 %v844
  %1446 = vmatpush.bf16.msra.mxu0 %v841
  %1447 = vmatpush.bf16.msra.mxu0 %v838
  %1448 = vmatpush.bf16.msra.mxu0 %v835
  %1449 = vmatpush.bf16.msra.mxu0 %v832
  %1450 = vmatpush.bf16.msra.mxu0 %v829
  %1451 = vmatpush.bf16.msra.mxu0 %v826
  %1452 = vmatpush.bf16.msra.mxu0 %v823
  %1453 = vmatmul.bf16.gmra.mxu0 %v293
  %v1454 = vpop.f32.mrf.mxu0
  %v1455 = vadd.f32 0.0, %v1454
  %v1456 = vpop.f32.mrf.mxu0
  %v1457 = vadd.f32 0.0, %v1456
  %1458 = vmatmul.bf16.gmra.mxu0 %v299
  %v1459 = vpop.f32.mrf.mxu0
  %v1460 = vadd.f32 0.0, %v1459
  %v1461 = vpop.f32.mrf.mxu0
  %v1462 = vadd.f32 0.0, %v1461
  %1463 = vmatmul.bf16.gmra.mxu0 %v305
  %v1464 = vpop.f32.mrf.mxu0
  %v1465 = vadd.f32 0.0, %v1464
  %v1466 = vpop.f32.mrf.mxu0
  %v1467 = vadd.f32 0.0, %v1466
  %1468 = vmatmul.bf16.gmra.mxu0 %v311
  %v1469 = vpop.f32.mrf.mxu0
  %v1470 = vadd.f32 0.0, %v1469
  %v1471 = vpop.f32.mrf.mxu0
  %1472 = vdwg.mxu0
  %1473 = vmatpush.bf16.msra.mxu0 %v868
  %1474 = vmatpush.bf16.msra.mxu0 %v865
  %1475 = vmatpush.bf16.msra.mxu0 %v862
  %1476 = vmatpush.bf16.msra.mxu0 %v859
  %1477 = vmatpush.bf16.msra.mxu0 %v856
  %1478 = vmatpush.bf16.msra.mxu0 %v853
  %1479 = vmatpush.bf16.msra.mxu0 %v850
  %1480 = vmatpush.bf16.msra.mxu0 %v847
  %1481 = vmatmul.bf16.gmra.mxu0 %v294
  %v1482 = vpop.f32.mrf.mxu0
  %v1483 = vadd.f32 %v1455, %v1482
  %v1484 = vpop.f32.mrf.mxu0
  %v1485 = vadd.f32 %v1457, %v1484
  %1486 = vmatmul.bf16.gmra.mxu0 %v300
  %v1487 = vpop.f32.mrf.mxu0
  %v1488 = vadd.f32 %v1460, %v1487
  %v1489 = vpop.f32.mrf.mxu0
  %v1490 = vadd.f32 %v1462, %v1489
  %1491 = vmatmul.bf16.gmra.mxu0 %v306
  %v1492 = vpop.f32.mrf.mxu0
  %v1493 = vadd.f32 %v1465, %v1492
  %v1494 = vpop.f32.mrf.mxu0
  %v1495 = vadd.f32 %v1467, %v1494
  %1496 = vmatmul.bf16.gmra.mxu0 %v312
  %v1497 = vpop.f32.mrf.mxu0
  %v1498 = vadd.f32 %v1470, %v1497
  %v1499 = vpop.f32.mrf.mxu0
  %1500 = vdwg.mxu0
  %1501 = vmatpush.bf16.msra.mxu0 %v892
  %1502 = vmatpush.bf16.msra.mxu0 %v889
  %1503 = vmatpush.bf16.msra.mxu0 %v886
  %1504 = vmatpush.bf16.msra.mxu0 %v883
  %1505 = vmatpush.bf16.msra.mxu0 %v880
  %1506 = vmatpush.bf16.msra.mxu0 %v877
  %1507 = vmatpush.bf16.msra.mxu0 %v874
  %1508 = vmatpush.bf16.msra.mxu0 %v871
  %1509 = vmatmul.bf16.gmra.mxu0 %v295
  %v1510 = vpop.f32.mrf.mxu0
  %v1511 = vadd.f32 %v1483, %v1510
  %v1512 = vpop.f32.mrf.mxu0
  %v1513 = vadd.f32 %v1485, %v1512
  %1514 = vmatmul.bf16.gmra.mxu0 %v301
  %v1515 = vpop.f32.mrf.mxu0
  %v1516 = vadd.f32 %v1488, %v1515
  %v1517 = vpop.f32.mrf.mxu0
  %v1518 = vadd.f32 %v1490, %v1517
  %1519 = vmatmul.bf16.gmra.mxu0 %v307
  %v1520 = vpop.f32.mrf.mxu0
  %v1521 = vadd.f32 %v1493, %v1520
  %v1522 = vpop.f32.mrf.mxu0
  %v1523 = vadd.f32 %v1495, %v1522
  %1524 = vmatmul.bf16.gmra.mxu0 %v313
  %v1525 = vpop.f32.mrf.mxu0
  %v1526 = vadd.f32 %v1498, %v1525
  %v1527 = vpop.f32.mrf.mxu0
  %1528 = vdwg.mxu0
  %1529 = vmatpush.bf16.msra.mxu0 %v916
  %1530 = vmatpush.bf16.msra.mxu0 %v913
  %1531 = vmatpush.bf16.msra.mxu0 %v910
  %1532 = vmatpush.bf16.msra.mxu0 %v907
  %1533 = vmatpush.bf16.msra.mxu0 %v904
  %1534 = vmatpush.bf16.msra.mxu0 %v901
  %1535 = vmatpush.bf16.msra.mxu0 %v898
  %1536 = vmatpush.bf16.msra.mxu0 %v895
  %1537 = vmatmul.bf16.gmra.mxu0 %v296
  %v1538 = vpop.f32.mrf.mxu0
  %v1539 = vadd.f32 %v1511, %v1538
  %v1540 = vpop.f32.mrf.mxu0
  %v1541 = vadd.f32 %v1513, %v1540
  %1542 = vmatmul.bf16.gmra.mxu0 %v302
  %v1543 = vpop.f32.mrf.mxu0
  %v1544 = vadd.f32 %v1516, %v1543
  %v1545 = vpop.f32.mrf.mxu0
  %v1546 = vadd.f32 %v1518, %v1545
  %1547 = vmatmul.bf16.gmra.mxu0 %v308
  %v1548 = vpop.f32.mrf.mxu0
  %v1549 = vadd.f32 %v1521, %v1548
  %v1550 = vpop.f32.mrf.mxu0
  %v1551 = vadd.f32 %v1523, %v1550
  %1552 = vmatmul.bf16.gmra.mxu0 %v314
  %v1553 = vpop.f32.mrf.mxu0
  %v1554 = vadd.f32 %v1526, %v1553
  %v1555 = vpop.f32.mrf.mxu0
  %1556 = vdwg.mxu0
  %1557 = vmatpush.bf16.msra.mxu0 %v940
  %1558 = vmatpush.bf16.msra.mxu0 %v937
  %1559 = vmatpush.bf16.msra.mxu0 %v934
  %1560 = vmatpush.bf16.msra.mxu0 %v931
  %1561 = vmatpush.bf16.msra.mxu0 %v928
  %1562 = vmatpush.bf16.msra.mxu0 %v925
  %1563 = vmatpush.bf16.msra.mxu0 %v922
  %1564 = vmatpush.bf16.msra.mxu0 %v919
  %1565 = vmatmul.bf16.gmra.mxu0 %v297
  %v1566 = vpop.f32.mrf.mxu0
  %v1567 = vadd.f32 %v1539, %v1566
  %v1568 = vpop.f32.mrf.mxu0
  %v1569 = vadd.f32 %v1541, %v1568
  %1570 = vmatmul.bf16.gmra.mxu0 %v303
  %v1571 = vpop.f32.mrf.mxu0
  %v1572 = vadd.f32 %v1544, %v1571
  %v1573 = vpop.f32.mrf.mxu0
  %v1574 = vadd.f32 %v1546, %v1573
  %1575 = vmatmul.bf16.gmra.mxu0 %v309
  %v1576 = vpop.f32.mrf.mxu0
  %v1577 = vadd.f32 %v1549, %v1576
  %v1578 = vpop.f32.mrf.mxu0
  %v1579 = vadd.f32 %v1551, %v1578
  %1580 = vmatmul.bf16.gmra.mxu0 %v315
  %v1581 = vpop.f32.mrf.mxu0
  %v1582 = vadd.f32 %v1554, %v1581
  %v1583 = vpop.f32.mrf.mxu0
  %1584 = vdwg.mxu0
  %1585 = vmatpush.bf16.msra.mxu0 %v964
  %1586 = vmatpush.bf16.msra.mxu0 %v961
  %1587 = vmatpush.bf16.msra.mxu0 %v958
  %1588 = vmatpush.bf16.msra.mxu0 %v955
  %1589 = vmatpush.bf16.msra.mxu0 %v952
  %1590 = vmatpush.bf16.msra.mxu0 %v949
  %1591 = vmatpush.bf16.msra.mxu0 %v946
  %1592 = vmatpush.bf16.msra.mxu0 %v943
  %1593 = vmatmul.bf16.gmra.mxu0 %v298
  %v1594 = vpop.f32.mrf.mxu0
  %v1595 = vadd.f32 %v1567, %v1594
  %v1596 = vpop.f32.mrf.mxu0
  %v1597 = vadd.f32 %v1569, %v1596
  %1598 = vmatmul.bf16.gmra.mxu0 %v304
  %v1599 = vpop.f32.mrf.mxu0
  %v1600 = vadd.f32 %v1572, %v1599
  %v1601 = vpop.f32.mrf.mxu0
  %v1602 = vadd.f32 %v1574, %v1601
  %1603 = vmatmul.bf16.gmra.mxu0 %v310
  %v1604 = vpop.f32.mrf.mxu0
  %v1605 = vadd.f32 %v1577, %v1604
  %v1606 = vpop.f32.mrf.mxu0
  %v1607 = vadd.f32 %v1579, %v1606
  %1608 = vmatmul.bf16.gmra.mxu0 %v316
  %v1609 = vpop.f32.mrf.mxu0
  %v1610 = vadd.f32 %v1582, %v1609
  %v1611 = vpop.f32.mrf.mxu0
  %1612 = vdwg.mxu0
  %v1613 = vld [vmem:[%s2] sm:$0x7]
  %v1615 = vperm.slane %v1613, 0
  %v1616 = vperm.slane %v1613, 1
  %v1617 = vperm.slane %v1613, 2
  %v1621 = vmul.f32 %v1259, %v1615
  %v1622 = vmul.f32 %v1427, %v1616
  %v1623 = vmul.f32 %v1595, %v1617
  %v1624 = vmul.f32 %v1261, %v1615
  %v1625 = vmul.f32 %v1429, %v1616
  %v1626 = vmul.f32 %v1597, %v1617
  %v1627 = vmul.f32 %v1264, %v1615
  %v1628 = vmul.f32 %v1432, %v1616
  %v1629 = vmul.f32 %v1600, %v1617
  %v1630 = vmul.f32 %v1266, %v1615
  %v1631 = vmul.f32 %v1434, %v1616
  %v1632 = vmul.f32 %v1602, %v1617
  %v1633 = vmul.f32 %v1269, %v1615
  %v1634 = vmul.f32 %v1437, %v1616
  %v1635 = vmul.f32 %v1605, %v1617
  %v1636 = vmul.f32 %v1271, %v1615
  %v1637 = vmul.f32 %v1439, %v1616
  %v1638 = vmul.f32 %v1607, %v1617
  %v1639 = vmul.f32 %v1274, %v1615
  %v1640 = vmul.f32 %v1442, %v1616
  %v1641 = vmul.f32 %v1610, %v1617
  %v1642 = vld [vmem:[%s3] sm:$0x7]
  %v1644 = vperm.slane %v1642, 0
  %v1645 = vperm.slane %v1642, 1
  %v1646 = vperm.slane %v1642, 2
  %v1650 = vadd.f32 %v1621, %v1644
  %v1651 = vadd.f32 %v1622, %v1645
  %v1652 = vadd.f32 %v1623, %v1646
  %v1653 = vadd.f32 %v1624, %v1644
  %v1654 = vadd.f32 %v1625, %v1645
  %v1655 = vadd.f32 %v1626, %v1646
  %v1656 = vadd.f32 %v1627, %v1644
  %v1657 = vadd.f32 %v1628, %v1645
  %v1658 = vadd.f32 %v1629, %v1646
  %v1659 = vadd.f32 %v1630, %v1644
  %v1660 = vadd.f32 %v1631, %v1645
  %v1661 = vadd.f32 %v1632, %v1646
  %v1662 = vadd.f32 %v1633, %v1644
  %v1663 = vadd.f32 %v1634, %v1645
  %v1664 = vadd.f32 %v1635, %v1646
  %v1665 = vadd.f32 %v1636, %v1644
  %v1666 = vadd.f32 %v1637, %v1645
  %v1667 = vadd.f32 %v1638, %v1646
  %v1668 = vadd.f32 %v1639, %v1644
  %v1669 = vadd.f32 %v1640, %v1645
  %v1670 = vadd.f32 %v1641, %v1646
  %v1671 = vmax.f32 %v1650, 0.0
  %v1672 = vmax.f32 %v1651, 0.0
  %v1673 = vmax.f32 %v1652, 0.0
  %v1674 = vmax.f32 %v1653, 0.0
  %v1675 = vmax.f32 %v1654, 0.0
  %v1676 = vmax.f32 %v1655, 0.0
  %v1677 = vmax.f32 %v1656, 0.0
  %v1678 = vmax.f32 %v1657, 0.0
  %v1679 = vmax.f32 %v1658, 0.0
  %v1680 = vmax.f32 %v1659, 0.0
  %v1681 = vmax.f32 %v1660, 0.0
  %v1682 = vmax.f32 %v1661, 0.0
  %v1683 = vmax.f32 %v1662, 0.0
  %v1684 = vmax.f32 %v1663, 0.0
  %v1685 = vmax.f32 %v1664, 0.0
  %v1686 = vmax.f32 %v1665, 0.0
  %v1687 = vmax.f32 %v1666, 0.0
  %v1688 = vmax.f32 %v1667, 0.0
  %v1689 = vmax.f32 %v1668, 0.0
  %v1690 = vmax.f32 %v1669, 0.0
  %v1691 = vmax.f32 %v1670, 0.0
  %v1692 = vpack.c.bf16 %v1672, %v1671
  %v1693 = vpack.c.bf16 %v1673, %v1673
  %v1694 = vpack.c.bf16 %v1675, %v1674
  %v1695 = vpack.c.bf16 %v1676, %v1676
  %v1696 = vpack.c.bf16 %v1678, %v1677
  %v1697 = vpack.c.bf16 %v1679, %v1679
  %v1698 = vpack.c.bf16 %v1681, %v1680
  %v1699 = vpack.c.bf16 %v1682, %v1682
  %v1700 = vpack.c.bf16 %v1684, %v1683
  %v1701 = vpack.c.bf16 %v1685, %v1685
  %v1702 = vpack.c.bf16 %v1687, %v1686
  %v1703 = vpack.c.bf16 %v1688, %v1688
  %v1704 = vpack.c.bf16 %v1690, %v1689
  %v1705 = vpack.c.bf16 %v1691, %v1691
  %1706 = vst [vmem:[%s4] sm:$0xff] %v1692
  %1707 = vst [vmem:[%s4 + $0x8] sm:$0xf] %v1693
  %1708 = vst [vmem:[%s4 + $0xc] sm:$0xff] %v1694
  %1709 = vst [vmem:[%s4 + $0x14] sm:$0xf] %v1695
  %1710 = vst [vmem:[%s4 + $0x18] sm:$0xff] %v1696
  %1711 = vst [vmem:[%s4 + $0x20] sm:$0xf] %v1697
  %1712 = vst [vmem:[%s4 + $0x24] sm:$0xff] %v1698
  %1713 = vst [vmem:[%s4 + $0x2c] sm:$0xf] %v1699
  %1714 = vst [vmem:[%s4 + $0x30] sm:$0xff] %v1700
  %1715 = vst [vmem:[%s4 + $0x38] sm:$0xf] %v1701
  %1716 = vst [vmem:[%s4 + $0x3c] sm:$0xff] %v1702
  %1717 = vst [vmem:[%s4 + $0x44] sm:$0xf] %v1703
  %1718 = vst [vmem:[%s4 + $0x48] sm:$0xff] %v1704
  %1719 = vst [vmem:[%s4 + $0x50] sm:$0xf] %v1705
  // Predicated region
  $region18: #{generator_forward.6} parent=0 // pred_check
    _
  $region19: #{generator_forward.6} parent=0 // pred_check_branch
    %1721 = sbr.rel (0) target = $region21
  $region20: #{generator_forward.6} parent=0 // pred_region
    _
  $region21: #{generator_forward.6} parent=0 // pred_fallthru
    _
  // Predicated region
  $region22: #{generator_forward.6} parent=0 // pred_check
    _
  $region23: #{generator_forward.6} parent=0 // pred_check_branch
    %1723 = sbr.rel (0) target = $region25
  $region24: #{generator_forward.6} parent=0 // pred_region
    _
  $region25: #{generator_forward.6} parent=0 // pred_fallthru
    _

// kernel: generator_forward.7
$region0: #{generator_forward.7}
  #allocation0 [shape = 'u32[]', space=smem, size = 0x4, offset = 0x4, fixed_abs, tag = 'smem constant byte address 0x4 - core index']
  #allocation1 [shape = 'u32[72,128]{1,0:T(1,128)}', space=vmem, size = 0x9000, scoped, tag = 'internal scratch']
  %s0 = inlined_call_operand.vmem [shape: bf16[168,384], index: 0, kind: input, shape index: {}]
  %s1 = inlined_call_operand.vmem [shape: bf16[384,256], index: 1, kind: input, shape index: {}]
  %s2 = inlined_call_operand.vmem [shape: f32[1,256], index: 2, kind: input, shape index: {}]
  %s3 = inlined_call_operand.vmem [shape: f32[1,256], index: 3, kind: input, shape index: {}]
  %s4 = inlined_call_operand.vmem [shape: bf16[168,256], index: 4, kind: output, shape index: {}]
  %s5 = sld [smem:[#allocation0]]
  $region26: #{generator_forward.7} parent=0
    _
  %s7 = ssub.s32 1, %s5
  %s8 = scalar_select 0, %s7, %s5
  // Predicated region
  $region2: #{generator_forward.7} parent=0 // pred_check
    _
  $region3: #{generator_forward.7} parent=0 // pred_check_branch
    %10 = sbr.rel (0) target = $region5
  $region4: #{generator_forward.7} parent=0 // pred_region
    _
  $region5: #{generator_forward.7} parent=0 // pred_fallthru
    _
  // Predicated region
  $region6: #{generator_forward.7} parent=0 // pred_check
    _
  $region7: #{generator_forward.7} parent=0 // pred_check_branch
    %12 = sbr.rel (0) target = $region9
  $region8: #{generator_forward.7} parent=0 // pred_region
    _
  $region9: #{generator_forward.7} parent=0 // pred_fallthru
    _
  // Predicated region
  $region10: #{generator_forward.7} parent=0 // pred_check
    _
  $region11: #{generator_forward.7} parent=0 // pred_check_branch
    %14 = sbr.rel (0) target = $region13
  $region12: #{generator_forward.7} parent=0 // pred_region
    _
  $region13: #{generator_forward.7} parent=0 // pred_fallthru
    _
  // Predicated region
  $region14: #{generator_forward.7} parent=0 // pred_check
    _
  $region15: #{generator_forward.7} parent=0 // pred_check_branch
    %16 = sbr.rel (0) target = $region17
  $region16: #{generator_forward.7} parent=0 // pred_region
    _
  $region17: #{generator_forward.7} parent=0 // pred_fallthru
    _
  %v17 = vld [vmem:[%s0] sm:$0xff]
  %v18 = vld [vmem:[%s0 + $0x8] sm:$0xf]
  %v19 = vld [vmem:[%s0 + $0xc] sm:$0xff]
  %v20 = vld [vmem:[%s0 + $0x14] sm:$0xf]
  %v21 = vld [vmem:[%s0 + $0x18] sm:$0xff]
  %v22 = vld [vmem:[%s0 + $0x20] sm:$0xf]
  %v23 = vld [vmem:[%s0 + $0x24] sm:$0xff]
  %v24 = vld [vmem:[%s0 + $0x2c] sm:$0xf]
  %v25 = vld [vmem:[%s0 + $0x30] sm:$0xff]
  %v26 = vld [vmem:[%s0 + $0x38] sm:$0xf]
  %v27 = vld [vmem:[%s0 + $0x3c] sm:$0xff]
  %v28 = vld [vmem:[%s0 + $0x44] sm:$0xf]
  %v29 = vld [vmem:[%s0 + $0x48] sm:$0xff]
  %v30 = vld [vmem:[%s0 + $0x50] sm:$0xf]
  %v31 = vld [vmem:[%s0 + $0x54] sm:$0xff]
  %v32 = vld [vmem:[%s0 + $0x5c] sm:$0xf]
  %v33 = vld [vmem:[%s0 + $0x60] sm:$0xff]
  %v34 = vld [vmem:[%s0 + $0x68] sm:$0xf]
  %v35 = vld [vmem:[%s0 + $0x6c] sm:$0xff]
  %v36 = vld [vmem:[%s0 + $0x74] sm:$0xf]
  %v37 = vld [vmem:[%s0 + $0x78] sm:$0xff]
  %v38 = vld [vmem:[%s0 + $0x80] sm:$0xf]
  %v39 = vld [vmem:[%s0 + $0x84] sm:$0xff]
  %v40 = vld [vmem:[%s0 + $0x8c] sm:$0xf]
  %v41 = vld [vmem:[%s0 + $0x90] sm:$0xff]
  %v42 = vld [vmem:[%s0 + $0x98] sm:$0xf]
  %v43 = vld [vmem:[%s0 + $0x9c] sm:$0xff]
  %v44 = vld [vmem:[%s0 + $0xa4] sm:$0xf]
  %v45 = vld [vmem:[%s0 + $0xa8] sm:$0xff]
  %v46 = vld [vmem:[%s0 + $0xb0] sm:$0xf]
  %v47 = vld [vmem:[%s0 + $0xb4] sm:$0xff]
  %v48 = vld [vmem:[%s0 + $0xbc] sm:$0xf]
  %v49 = vld [vmem:[%s0 + $0xc0] sm:$0xff]
  %v50 = vld [vmem:[%s0 + $0xc8] sm:$0xf]
  %v51 = vld [vmem:[%s0 + $0xcc] sm:$0xff]
  %v52 = vld [vmem:[%s0 + $0xd4] sm:$0xf]
  %v53 = vld [vmem:[%s0 + $0xd8] sm:$0xff]
  %v54 = vld [vmem:[%s0 + $0xe0] sm:$0xf]
  %v55 = vld [vmem:[%s0 + $0xe4] sm:$0xff]
  %v56 = vld [vmem:[%s0 + $0xec] sm:$0xf]
  %v57 = vld [vmem:[%s0 + $0xf0] sm:$0xff]
  %v58 = vld [vmem:[%s0 + $0xf8] sm:$0xf]
  %v59 = vld [vmem:[%s1] sm:$0xff]
  %v60 = vld [vmem:[%s1 + $0x8] sm:$0xff]
  %v61 = vld [vmem:[%s1 + $0x10] sm:$0xff]
  %v62 = vld [vmem:[%s1 + $0x18] sm:$0xff]
  %v63 = vld [vmem:[%s1 + $0x20] sm:$0xff]
  %v64 = vld [vmem:[%s1 + $0x28] sm:$0xff]
  %v65 = vld [vmem:[%s1 + $0x30] sm:$0xff]
  %v66 = vld [vmem:[%s1 + $0x38] sm:$0xff]
  %v67 = vld [vmem:[%s1 + $0x40] sm:$0xff]
  %v68 = vld [vmem:[%s1 + $0x48] sm:$0xff]
  %v69 = vld [vmem:[%s1 + $0x50] sm:$0xff]
  %v70 = vld [vmem:[%s1 + $0x58] sm:$0xff]
  %v71 = vld [vmem:[%s1 + $0x60] sm:$0xff]
  %v72 = vld [vmem:[%s1 + $0x68] sm:$0xff]
  %v73 = vld [vmem:[%s1 + $0x70] sm:$0xff]
  %v74 = vld [vmem:[%s1 + $0x78] sm:$0xff]
  %v75 = vld [vmem:[%s1 + $0x80] sm:$0xff]
  %v76 = vld [vmem:[%s1 + $0x88] sm:$0xff]
  %v77 = vld [vmem:[%s1 + $0x90] sm:$0xff]
  %v78 = vld [vmem:[%s1 + $0x98] sm:$0xff]
  %v79 = vld [vmem:[%s1 + $0xa0] sm:$0xff]
  %v80 = vld [vmem:[%s1 + $0xa8] sm:$0xff]
  %v81 = vld [vmem:[%s1 + $0xb0] sm:$0xff]
  %v82 = vld [vmem:[%s1 + $0xb8] sm:$0xff]
  %v83 = vld [vmem:[%s1 + $0xc0] sm:$0xff]
  %v84 = vld [vmem:[%s1 + $0xc8] sm:$0xff]
  %v85 = vld [vmem:[%s1 + $0xd0] sm:$0xff]
  %v86 = vld [vmem:[%s1 + $0xd8] sm:$0xff]
  %v87 = vld [vmem:[%s1 + $0xe0] sm:$0xff]
  %v88 = vld [vmem:[%s1 + $0xe8] sm:$0xff]
  %v89 = vld [vmem:[%s1 + $0xf0] sm:$0xff]
  %v90 = vld [vmem:[%s1 + $0xf8] sm:$0xff]
  %v91 = vld [vmem:[%s1 + $0x100] sm:$0xff]
  %v92 = vld [vmem:[%s1 + $0x108] sm:$0xff]
  %v93 = vld [vmem:[%s1 + $0x110] sm:$0xff]
  %v94 = vld [vmem:[%s1 + $0x118] sm:$0xff]
  %v95 = vld [vmem:[%s1 + $0x120] sm:$0xff]
  %v96 = vld [vmem:[%s1 + $0x128] sm:$0xff]
  %v97 = vld [vmem:[%s1 + $0x130] sm:$0xff]
  %v98 = vld [vmem:[%s1 + $0x138] sm:$0xff]
  %v99 = vld [vmem:[%s1 + $0x140] sm:$0xff]
  %v100 = vld [vmem:[%s1 + $0x148] sm:$0xff]
  %v101 = vld [vmem:[%s1 + $0x150] sm:$0xff]
  %v102 = vld [vmem:[%s1 + $0x158] sm:$0xff]
  %v103 = vld [vmem:[%s1 + $0x160] sm:$0xff]
  %v104 = vld [vmem:[%s1 + $0x168] sm:$0xff]
  %v105 = vld [vmem:[%s1 + $0x170] sm:$0xff]
  %v106 = vld [vmem:[%s1 + $0x178] sm:$0xff]
  %v149 = vunpack.c.l.b16 %v17
  %v150 = vunpack.c.h.b16 %v17
  %v151 = vunpack.c.l.b16 %v18
  %v152 = vunpack.c.l.b16 %v19
  %v153 = vunpack.c.h.b16 %v19
  %v154 = vunpack.c.l.b16 %v20
  %v155 = vunpack.c.l.b16 %v21
  %v156 = vunpack.c.h.b16 %v21
  %v157 = vunpack.c.l.b16 %v22
  %v158 = vunpack.c.l.b16 %v23
  %v159 = vunpack.c.h.b16 %v23
  %v160 = vunpack.c.l.b16 %v24
  %v161 = vunpack.c.l.b16 %v25
  %v162 = vunpack.c.h.b16 %v25
  %v163 = vunpack.c.l.b16 %v26
  %v164 = vunpack.c.l.b16 %v27
  %v165 = vunpack.c.h.b16 %v27
  %v166 = vunpack.c.l.b16 %v28
  %v167 = vunpack.c.l.b16 %v29
  %v168 = vunpack.c.h.b16 %v29
  %v169 = vunpack.c.l.b16 %v30
  %v170 = vunpack.c.l.b16 %v31
  %v171 = vunpack.c.h.b16 %v31
  %v172 = vunpack.c.l.b16 %v32
  %v173 = vunpack.c.l.b16 %v33
  %v174 = vunpack.c.h.b16 %v33
  %v175 = vunpack.c.l.b16 %v34
  %v176 = vunpack.c.l.b16 %v35
  %v177 = vunpack.c.h.b16 %v35
  %v178 = vunpack.c.l.b16 %v36
  %v179 = vunpack.c.l.b16 %v37
  %v180 = vunpack.c.h.b16 %v37
  %v181 = vunpack.c.l.b16 %v38
  %v182 = vunpack.c.l.b16 %v39
  %v183 = vunpack.c.h.b16 %v39
  %v184 = vunpack.c.l.b16 %v40
  %v185 = vunpack.c.l.b16 %v41
  %v186 = vunpack.c.h.b16 %v41
  %v187 = vunpack.c.l.b16 %v42
  %v188 = vunpack.c.l.b16 %v43
  %v189 = vunpack.c.h.b16 %v43
  %v190 = vunpack.c.l.b16 %v44
  %v191 = vunpack.c.l.b16 %v45
  %v192 = vunpack.c.h.b16 %v45
  %v193 = vunpack.c.l.b16 %v46
  %v194 = vunpack.c.l.b16 %v47
  %v195 = vunpack.c.h.b16 %v47
  %v196 = vunpack.c.l.b16 %v48
  %v197 = vunpack.c.l.b16 %v49
  %v198 = vunpack.c.h.b16 %v49
  %v199 = vunpack.c.l.b16 %v50
  %v200 = vunpack.c.l.b16 %v51
  %v201 = vunpack.c.h.b16 %v51
  %v202 = vunpack.c.l.b16 %v52
  %v203 = vunpack.c.l.b16 %v53
  %v204 = vunpack.c.h.b16 %v53
  %v205 = vunpack.c.l.b16 %v54
  %v206 = vunpack.c.l.b16 %v55
  %v207 = vunpack.c.h.b16 %v55
  %v208 = vunpack.c.l.b16 %v56
  %v209 = vunpack.c.l.b16 %v57
  %v210 = vunpack.c.h.b16 %v57
  %v211 = vunpack.c.l.b16 %v58
  %v212 = vpack.c.b16 %v152, %v149
  %v213 = vpack.c.b16 %v153, %v150
  %v214 = vpack.c.b16 %v154, %v151
  %v215 = vpack.c.b16 %v158, %v155
  %v216 = vpack.c.b16 %v159, %v156
  %v217 = vpack.c.b16 %v160, %v157
  %v218 = vpack.c.b16 %v164, %v161
  %v219 = vpack.c.b16 %v165, %v162
  %v220 = vpack.c.b16 %v166, %v163
  %v221 = vpack.c.b16 %v170, %v167
  %v222 = vpack.c.b16 %v171, %v168
  %v223 = vpack.c.b16 %v172, %v169
  %v224 = vpack.c.b16 %v176, %v173
  %v225 = vpack.c.b16 %v177, %v174
  %v226 = vpack.c.b16 %v178, %v175
  %v227 = vpack.c.b16 %v182, %v179
  %v228 = vpack.c.b16 %v183, %v180
  %v229 = vpack.c.b16 %v184, %v181
  %v230 = vpack.c.b16 %v188, %v185
  %v231 = vpack.c.b16 %v189, %v186
  %v232 = vpack.c.b16 %v190, %v187
  %v233 = vpack.c.b16 %v194, %v191
  %v234 = vpack.c.b16 %v195, %v192
  %v235 = vpack.c.b16 %v196, %v193
  %v236 = vpack.c.b16 %v200, %v197
  %v237 = vpack.c.b16 %v201, %v198
  %v238 = vpack.c.b16 %v202, %v199
  %v239 = vpack.c.b16 %v206, %v203
  %v240 = vpack.c.b16 %v207, %v204
  %v241 = vpack.c.b16 %v208, %v205
  %v242 = vpack.c.b16 %v209, %v209
  %v243 = vpack.c.b16 %v210, %v210
  %v244 = vpack.c.b16 %v211, %v211
  %v326 = vunpack.c.l.b16 %v59
  %v327 = vunpack.c.h.b16 %v59
  %v328 = vunpack.c.l.b16 %v60
  %v329 = vunpack.c.h.b16 %v60
  %v330 = vunpack.c.l.b16 %v61
  %v331 = vunpack.c.h.b16 %v61
  %v332 = vunpack.c.l.b16 %v62
  %v333 = vunpack.c.h.b16 %v62
  %v334 = vunpack.c.l.b16 %v63
  %v335 = vunpack.c.h.b16 %v63
  %v336 = vunpack.c.l.b16 %v64
  %v337 = vunpack.c.h.b16 %v64
  %v338 = vunpack.c.l.b16 %v65
  %v339 = vunpack.c.h.b16 %v65
  %v340 = vunpack.c.l.b16 %v66
  %v341 = vunpack.c.h.b16 %v66
  %v342 = vunpack.c.l.b16 %v67
  %v343 = vunpack.c.h.b16 %v67
  %v344 = vunpack.c.l.b16 %v68
  %v345 = vunpack.c.h.b16 %v68
  %v346 = vunpack.c.l.b16 %v69
  %v347 = vunpack.c.h.b16 %v69
  %v348 = vunpack.c.l.b16 %v70
  %v349 = vunpack.c.h.b16 %v70
  %v350 = vunpack.c.l.b16 %v71
  %v351 = vunpack.c.h.b16 %v71
  %v352 = vunpack.c.l.b16 %v72
  %v353 = vunpack.c.h.b16 %v72
  %v354 = vunpack.c.l.b16 %v73
  %v355 = vunpack.c.h.b16 %v73
  %v356 = vunpack.c.l.b16 %v74
  %v357 = vunpack.c.h.b16 %v74
  %v358 = vunpack.c.l.b16 %v75
  %v359 = vunpack.c.h.b16 %v75
  %v360 = vunpack.c.l.b16 %v76
  %v361 = vunpack.c.h.b16 %v76
  %v362 = vunpack.c.l.b16 %v77
  %v363 = vunpack.c.h.b16 %v77
  %v364 = vunpack.c.l.b16 %v78
  %v365 = vunpack.c.h.b16 %v78
  %v366 = vunpack.c.l.b16 %v79
  %v367 = vunpack.c.h.b16 %v79
  %v368 = vunpack.c.l.b16 %v80
  %v369 = vunpack.c.h.b16 %v80
  %v370 = vunpack.c.l.b16 %v81
  %v371 = vunpack.c.h.b16 %v81
  %v372 = vunpack.c.l.b16 %v82
  %v373 = vunpack.c.h.b16 %v82
  %v374 = vunpack.c.l.b16 %v83
  %v375 = vunpack.c.h.b16 %v83
  %v376 = vunpack.c.l.b16 %v84
  %v377 = vunpack.c.h.b16 %v84
  %v378 = vunpack.c.l.b16 %v85
  %v379 = vunpack.c.h.b16 %v85
  %v380 = vunpack.c.l.b16 %v86
  %v381 = vunpack.c.h.b16 %v86
  %v382 = vunpack.c.l.b16 %v87
  %v383 = vunpack.c.h.b16 %v87
  %v384 = vunpack.c.l.b16 %v88
  %v385 = vunpack.c.h.b16 %v88
  %v386 = vunpack.c.l.b16 %v89
  %v387 = vunpack.c.h.b16 %v89
  %v388 = vunpack.c.l.b16 %v90
  %v389 = vunpack.c.h.b16 %v90
  %v390 = vunpack.c.l.b16 %v91
  %v391 = vunpack.c.h.b16 %v91
  %v392 = vunpack.c.l.b16 %v92
  %v393 = vunpack.c.h.b16 %v92
  %v394 = vunpack.c.l.b16 %v93
  %v395 = vunpack.c.h.b16 %v93
  %v396 = vunpack.c.l.b16 %v94
  %v397 = vunpack.c.h.b16 %v94
  %v398 = vunpack.c.l.b16 %v95
  %v399 = vunpack.c.h.b16 %v95
  %v400 = vunpack.c.l.b16 %v96
  %v401 = vunpack.c.h.b16 %v96
  %v402 = vunpack.c.l.b16 %v97
  %v403 = vunpack.c.h.b16 %v97
  %v404 = vunpack.c.l.b16 %v98
  %v405 = vunpack.c.h.b16 %v98
  %v406 = vunpack.c.l.b16 %v99
  %v407 = vunpack.c.h.b16 %v99
  %v408 = vunpack.c.l.b16 %v100
  %v409 = vunpack.c.h.b16 %v100
  %v410 = vunpack.c.l.b16 %v101
  %v411 = vunpack.c.h.b16 %v101
  %v412 = vunpack.c.l.b16 %v102
  %v413 = vunpack.c.h.b16 %v102
  %v414 = vunpack.c.l.b16 %v103
  %v415 = vunpack.c.h.b16 %v103
  %v416 = vunpack.c.l.b16 %v104
  %v417 = vunpack.c.h.b16 %v104
  %v418 = vunpack.c.l.b16 %v105
  %v419 = vunpack.c.h.b16 %v105
  %v420 = vunpack.c.l.b16 %v106
  %v421 = vunpack.c.h.b16 %v106
  %v422 = vpack.c.b16 %v328, %v326
  %v423 = vpack.c.b16 %v329, %v327
  %v424 = vpack.c.b16 %v332, %v330
  %v425 = vpack.c.b16 %v333, %v331
  %v426 = vpack.c.b16 %v336, %v334
  %v427 = vpack.c.b16 %v337, %v335
  %v428 = vpack.c.b16 %v340, %v338
  %v429 = vpack.c.b16 %v341, %v339
  %v430 = vpack.c.b16 %v344, %v342
  %v431 = vpack.c.b16 %v345, %v343
  %v432 = vpack.c.b16 %v348, %v346
  %v433 = vpack.c.b16 %v349, %v347
  %v434 = vpack.c.b16 %v352, %v350
  %v435 = vpack.c.b16 %v353, %v351
  %v436 = vpack.c.b16 %v356, %v354
  %v437 = vpack.c.b16 %v357, %v355
  %v438 = vpack.c.b16 %v360, %v358
  %v439 = vpack.c.b16 %v361, %v359
  %v440 = vpack.c.b16 %v364, %v362
  %v441 = vpack.c.b16 %v365, %v363
  %v442 = vpack.c.b16 %v368, %v366
  %v443 = vpack.c.b16 %v369, %v367
  %v444 = vpack.c.b16 %v372, %v370
  %v445 = vpack.c.b16 %v373, %v371
  %v446 = vpack.c.b16 %v376, %v374
  %v447 = vpack.c.b16 %v377, %v375
  %v448 = vpack.c.b16 %v380, %v378
  %v449 = vpack.c.b16 %v381, %v379
  %v450 = vpack.c.b16 %v384, %v382
  %v451 = vpack.c.b16 %v385, %v383
  %v452 = vpack.c.b16 %v388, %v386
  %v453 = vpack.c.b16 %v389, %v387
  %v454 = vpack.c.b16 %v392, %v390
  %v455 = vpack.c.b16 %v393, %v391
  %v456 = vpack.c.b16 %v396, %v394
  %v457 = vpack.c.b16 %v397, %v395
  %v458 = vpack.c.b16 %v400, %v398
  %v459 = vpack.c.b16 %v401, %v399
  %v460 = vpack.c.b16 %v404, %v402
  %v461 = vpack.c.b16 %v405, %v403
  %v462 = vpack.c.b16 %v408, %v406
  %v463 = vpack.c.b16 %v409, %v407
  %v464 = vpack.c.b16 %v412, %v410
  %v465 = vpack.c.b16 %v413, %v411
  %v466 = vpack.c.b16 %v416, %v414
  %v467 = vpack.c.b16 %v417, %v415
  %v468 = vpack.c.b16 %v420, %v418
  %v469 = vpack.c.b16 %v421, %v419
  %518 = vmatpush.bf16.msra.mxu0 %v436
  %519 = vmatpush.bf16.msra.mxu0 %v434
  %520 = vmatpush.bf16.msra.mxu0 %v432
  %521 = vmatpush.bf16.msra.mxu0 %v430
  %522 = vmatpush.bf16.msra.mxu0 %v428
  %523 = vmatpush.bf16.msra.mxu0 %v426
  %524 = vmatpush.bf16.msra.mxu0 %v424
  %525 = vmatpush.bf16.msra.mxu0 %v422
  %526 = vmatmul.bf16.gmra.mxu0 %v212
  %v527 = vpop.f32.mrf.mxu0
  %v528 = vadd.f32 0.0, %v527
  %v529 = vpop.f32.mrf.mxu0
  %v530 = vadd.f32 0.0, %v529
  %531 = vmatmul.bf16.gmra.mxu0 %v215
  %v532 = vpop.f32.mrf.mxu0
  %v533 = vadd.f32 0.0, %v532
  %v534 = vpop.f32.mrf.mxu0
  %v535 = vadd.f32 0.0, %v534
  %536 = vmatmul.bf16.gmra.mxu0 %v218
  %v537 = vpop.f32.mrf.mxu0
  %v538 = vadd.f32 0.0, %v537
  %v539 = vpop.f32.mrf.mxu0
  %v540 = vadd.f32 0.0, %v539
  %541 = vmatmul.bf16.gmra.mxu0 %v221
  %v542 = vpop.f32.mrf.mxu0
  %v543 = vadd.f32 0.0, %v542
  %v544 = vpop.f32.mrf.mxu0
  %v545 = vadd.f32 0.0, %v544
  %546 = vmatmul.bf16.gmra.mxu0 %v224
  %v547 = vpop.f32.mrf.mxu0
  %v548 = vadd.f32 0.0, %v547
  %v549 = vpop.f32.mrf.mxu0
  %v550 = vadd.f32 0.0, %v549
  %551 = vmatmul.bf16.gmra.mxu0 %v227
  %v552 = vpop.f32.mrf.mxu0
  %v553 = vadd.f32 0.0, %v552
  %v554 = vpop.f32.mrf.mxu0
  %v555 = vadd.f32 0.0, %v554
  %556 = vmatmul.bf16.gmra.mxu0 %v230
  %v557 = vpop.f32.mrf.mxu0
  %v558 = vadd.f32 0.0, %v557
  %v559 = vpop.f32.mrf.mxu0
  %v560 = vadd.f32 0.0, %v559
  %561 = vmatmul.bf16.gmra.mxu0 %v233
  %v562 = vpop.f32.mrf.mxu0
  %v563 = vadd.f32 0.0, %v562
  %v564 = vpop.f32.mrf.mxu0
  %v565 = vadd.f32 0.0, %v564
  %566 = vmatmul.bf16.gmra.mxu0 %v236
  %v567 = vpop.f32.mrf.mxu0
  %v568 = vadd.f32 0.0, %v567
  %v569 = vpop.f32.mrf.mxu0
  %v570 = vadd.f32 0.0, %v569
  %571 = vmatmul.bf16.gmra.mxu0 %v239
  %v572 = vpop.f32.mrf.mxu0
  %v573 = vadd.f32 0.0, %v572
  %v574 = vpop.f32.mrf.mxu0
  %v575 = vadd.f32 0.0, %v574
  %576 = vmatmul.bf16.gmra.mxu0 %v242
  %v577 = vpop.f32.mrf.mxu0
  %v578 = vadd.f32 0.0, %v577
  %v579 = vpop.f32.mrf.mxu0
  %580 = vdwg.mxu0
  %581 = vmatpush.bf16.msra.mxu0 %v452
  %582 = vmatpush.bf16.msra.mxu0 %v450
  %583 = vmatpush.bf16.msra.mxu0 %v448
  %584 = vmatpush.bf16.msra.mxu0 %v446
  %585 = vmatpush.bf16.msra.mxu0 %v444
  %586 = vmatpush.bf16.msra.mxu0 %v442
  %587 = vmatpush.bf16.msra.mxu0 %v440
  %588 = vmatpush.bf16.msra.mxu0 %v438
  %589 = vmatmul.bf16.gmra.mxu0 %v213
  %v590 = vpop.f32.mrf.mxu0
  %v591 = vadd.f32 %v528, %v590
  %v592 = vpop.f32.mrf.mxu0
  %v593 = vadd.f32 %v530, %v592
  %594 = vmatmul.bf16.gmra.mxu0 %v216
  %v595 = vpop.f32.mrf.mxu0
  %v596 = vadd.f32 %v533, %v595
  %v597 = vpop.f32.mrf.mxu0
  %v598 = vadd.f32 %v535, %v597
  %599 = vmatmul.bf16.gmra.mxu0 %v219
  %v600 = vpop.f32.mrf.mxu0
  %v601 = vadd.f32 %v538, %v600
  %v602 = vpop.f32.mrf.mxu0
  %v603 = vadd.f32 %v540, %v602
  %604 = vmatmul.bf16.gmra.mxu0 %v222
  %v605 = vpop.f32.mrf.mxu0
  %v606 = vadd.f32 %v543, %v605
  %v607 = vpop.f32.mrf.mxu0
  %v608 = vadd.f32 %v545, %v607
  %609 = vmatmul.bf16.gmra.mxu0 %v225
  %v610 = vpop.f32.mrf.mxu0
  %v611 = vadd.f32 %v548, %v610
  %v612 = vpop.f32.mrf.mxu0
  %v613 = vadd.f32 %v550, %v612
  %614 = vmatmul.bf16.gmra.mxu0 %v228
  %v615 = vpop.f32.mrf.mxu0
  %v616 = vadd.f32 %v553, %v615
  %v617 = vpop.f32.mrf.mxu0
  %v618 = vadd.f32 %v555, %v617
  %619 = vmatmul.bf16.gmra.mxu0 %v231
  %v620 = vpop.f32.mrf.mxu0
  %v621 = vadd.f32 %v558, %v620
  %v622 = vpop.f32.mrf.mxu0
  %v623 = vadd.f32 %v560, %v622
  %624 = vmatmul.bf16.gmra.mxu0 %v234
  %v625 = vpop.f32.mrf.mxu0
  %v626 = vadd.f32 %v563, %v625
  %v627 = vpop.f32.mrf.mxu0
  %v628 = vadd.f32 %v565, %v627
  %629 = vmatmul.bf16.gmra.mxu0 %v237
  %v630 = vpop.f32.mrf.mxu0
  %v631 = vadd.f32 %v568, %v630
  %v632 = vpop.f32.mrf.mxu0
  %v633 = vadd.f32 %v570, %v632
  %634 = vmatmul.bf16.gmra.mxu0 %v240
  %v635 = vpop.f32.mrf.mxu0
  %v636 = vadd.f32 %v573, %v635
  %v637 = vpop.f32.mrf.mxu0
  %v638 = vadd.f32 %v575, %v637
  %639 = vmatmul.bf16.gmra.mxu0 %v243
  %v640 = vpop.f32.mrf.mxu0
  %v641 = vadd.f32 %v578, %v640
  %v642 = vpop.f32.mrf.mxu0
  %643 = vdwg.mxu0
  %644 = vmatpush.bf16.msra.mxu0 %v468
  %645 = vmatpush.bf16.msra.mxu0 %v466
  %646 = vmatpush.bf16.msra.mxu0 %v464
  %647 = vmatpush.bf16.msra.mxu0 %v462
  %648 = vmatpush.bf16.msra.mxu0 %v460
  %649 = vmatpush.bf16.msra.mxu0 %v458
  %650 = vmatpush.bf16.msra.mxu0 %v456
  %651 = vmatpush.bf16.msra.mxu0 %v454
  %652 = vmatmul.bf16.gmra.mxu0 %v214
  %v653 = vpop.f32.mrf.mxu0
  %v654 = vadd.f32 %v591, %v653
  %v655 = vpop.f32.mrf.mxu0
  %v656 = vadd.f32 %v593, %v655
  %657 = vmatmul.bf16.gmra.mxu0 %v217
  %v658 = vpop.f32.mrf.mxu0
  %v659 = vadd.f32 %v596, %v658
  %v660 = vpop.f32.mrf.mxu0
  %v661 = vadd.f32 %v598, %v660
  %662 = vmatmul.bf16.gmra.mxu0 %v220
  %v663 = vpop.f32.mrf.mxu0
  %v664 = vadd.f32 %v601, %v663
  %v665 = vpop.f32.mrf.mxu0
  %v666 = vadd.f32 %v603, %v665
  %667 = vmatmul.bf16.gmra.mxu0 %v223
  %v668 = vpop.f32.mrf.mxu0
  %v669 = vadd.f32 %v606, %v668
  %v670 = vpop.f32.mrf.mxu0
  %v671 = vadd.f32 %v608, %v670
  %672 = vmatmul.bf16.gmra.mxu0 %v226
  %v673 = vpop.f32.mrf.mxu0
  %v674 = vadd.f32 %v611, %v673
  %v675 = vpop.f32.mrf.mxu0
  %v676 = vadd.f32 %v613, %v675
  %677 = vmatmul.bf16.gmra.mxu0 %v229
  %v678 = vpop.f32.mrf.mxu0
  %v679 = vadd.f32 %v616, %v678
  %v680 = vpop.f32.mrf.mxu0
  %v681 = vadd.f32 %v618, %v680
  %682 = vmatmul.bf16.gmra.mxu0 %v232
  %v683 = vpop.f32.mrf.mxu0
  %v684 = vadd.f32 %v621, %v683
  %v685 = vpop.f32.mrf.mxu0
  %v686 = vadd.f32 %v623, %v685
  %687 = vmatmul.bf16.gmra.mxu0 %v235
  %v688 = vpop.f32.mrf.mxu0
  %v689 = vadd.f32 %v626, %v688
  %v690 = vpop.f32.mrf.mxu0
  %v691 = vadd.f32 %v628, %v690
  %692 = vmatmul.bf16.gmra.mxu0 %v238
  %v693 = vpop.f32.mrf.mxu0
  %v694 = vadd.f32 %v631, %v693
  %v695 = vpop.f32.mrf.mxu0
  %v696 = vadd.f32 %v633, %v695
  %697 = vmatmul.bf16.gmra.mxu0 %v241
  %v698 = vpop.f32.mrf.mxu0
  %v699 = vadd.f32 %v636, %v698
  %v700 = vpop.f32.mrf.mxu0
  %v701 = vadd.f32 %v638, %v700
  %702 = vmatmul.bf16.gmra.mxu0 %v244
  %v703 = vpop.f32.mrf.mxu0
  %v704 = vadd.f32 %v641, %v703
  %v705 = vpop.f32.mrf.mxu0
  %706 = vdwg.mxu0
  %707 = vmatpush.bf16.msra.mxu0 %v437
  %708 = vmatpush.bf16.msra.mxu0 %v435
  %709 = vmatpush.bf16.msra.mxu0 %v433
  %710 = vmatpush.bf16.msra.mxu0 %v431
  %711 = vmatpush.bf16.msra.mxu0 %v429
  %712 = vmatpush.bf16.msra.mxu0 %v427
  %713 = vmatpush.bf16.msra.mxu0 %v425
  %714 = vmatpush.bf16.msra.mxu0 %v423
  %715 = vmatmul.bf16.gmra.mxu0 %v212
  %v716 = vpop.f32.mrf.mxu0
  %v717 = vadd.f32 0.0, %v716
  %v718 = vpop.f32.mrf.mxu0
  %v719 = vadd.f32 0.0, %v718
  %720 = vmatmul.bf16.gmra.mxu0 %v215
  %v721 = vpop.f32.mrf.mxu0
  %v722 = vadd.f32 0.0, %v721
  %v723 = vpop.f32.mrf.mxu0
  %v724 = vadd.f32 0.0, %v723
  %725 = vmatmul.bf16.gmra.mxu0 %v218
  %v726 = vpop.f32.mrf.mxu0
  %v727 = vadd.f32 0.0, %v726
  %v728 = vpop.f32.mrf.mxu0
  %v729 = vadd.f32 0.0, %v728
  %730 = vmatmul.bf16.gmra.mxu0 %v221
  %v731 = vpop.f32.mrf.mxu0
  %v732 = vadd.f32 0.0, %v731
  %v733 = vpop.f32.mrf.mxu0
  %v734 = vadd.f32 0.0, %v733
  %735 = vmatmul.bf16.gmra.mxu0 %v224
  %v736 = vpop.f32.mrf.mxu0
  %v737 = vadd.f32 0.0, %v736
  %v738 = vpop.f32.mrf.mxu0
  %v739 = vadd.f32 0.0, %v738
  %740 = vmatmul.bf16.gmra.mxu0 %v227
  %v741 = vpop.f32.mrf.mxu0
  %v742 = vadd.f32 0.0, %v741
  %v743 = vpop.f32.mrf.mxu0
  %v744 = vadd.f32 0.0, %v743
  %745 = vmatmul.bf16.gmra.mxu0 %v230
  %v746 = vpop.f32.mrf.mxu0
  %v747 = vadd.f32 0.0, %v746
  %v748 = vpop.f32.mrf.mxu0
  %v749 = vadd.f32 0.0, %v748
  %750 = vmatmul.bf16.gmra.mxu0 %v233
  %v751 = vpop.f32.mrf.mxu0
  %v752 = vadd.f32 0.0, %v751
  %v753 = vpop.f32.mrf.mxu0
  %v754 = vadd.f32 0.0, %v753
  %755 = vmatmul.bf16.gmra.mxu0 %v236
  %v756 = vpop.f32.mrf.mxu0
  %v757 = vadd.f32 0.0, %v756
  %v758 = vpop.f32.mrf.mxu0
  %v759 = vadd.f32 0.0, %v758
  %760 = vmatmul.bf16.gmra.mxu0 %v239
  %v761 = vpop.f32.mrf.mxu0
  %v762 = vadd.f32 0.0, %v761
  %v763 = vpop.f32.mrf.mxu0
  %v764 = vadd.f32 0.0, %v763
  %765 = vmatmul.bf16.gmra.mxu0 %v242
  %v766 = vpop.f32.mrf.mxu0
  %v767 = vadd.f32 0.0, %v766
  %v768 = vpop.f32.mrf.mxu0
  %769 = vdwg.mxu0
  %770 = vmatpush.bf16.msra.mxu0 %v453
  %771 = vmatpush.bf16.msra.mxu0 %v451
  %772 = vmatpush.bf16.msra.mxu0 %v449
  %773 = vmatpush.bf16.msra.mxu0 %v447
  %774 = vmatpush.bf16.msra.mxu0 %v445
  %775 = vmatpush.bf16.msra.mxu0 %v443
  %776 = vmatpush.bf16.msra.mxu0 %v441
  %777 = vmatpush.bf16.msra.mxu0 %v439
  %778 = vmatmul.bf16.gmra.mxu0 %v213
  %v779 = vpop.f32.mrf.mxu0
  %v780 = vadd.f32 %v717, %v779
  %v781 = vpop.f32.mrf.mxu0
  %v782 = vadd.f32 %v719, %v781
  %783 = vmatmul.bf16.gmra.mxu0 %v216
  %v784 = vpop.f32.mrf.mxu0
  %v785 = vadd.f32 %v722, %v784
  %v786 = vpop.f32.mrf.mxu0
  %v787 = vadd.f32 %v724, %v786
  %788 = vmatmul.bf16.gmra.mxu0 %v219
  %v789 = vpop.f32.mrf.mxu0
  %v790 = vadd.f32 %v727, %v789
  %v791 = vpop.f32.mrf.mxu0
  %v792 = vadd.f32 %v729, %v791
  %793 = vmatmul.bf16.gmra.mxu0 %v222
  %v794 = vpop.f32.mrf.mxu0
  %v795 = vadd.f32 %v732, %v794
  %v796 = vpop.f32.mrf.mxu0
  %v797 = vadd.f32 %v734, %v796
  %798 = vmatmul.bf16.gmra.mxu0 %v225
  %v799 = vpop.f32.mrf.mxu0
  %v800 = vadd.f32 %v737, %v799
  %v801 = vpop.f32.mrf.mxu0
  %v802 = vadd.f32 %v739, %v801
  %803 = vmatmul.bf16.gmra.mxu0 %v228
  %v804 = vpop.f32.mrf.mxu0
  %v805 = vadd.f32 %v742, %v804
  %v806 = vpop.f32.mrf.mxu0
  %v807 = vadd.f32 %v744, %v806
  %808 = vmatmul.bf16.gmra.mxu0 %v231
  %v809 = vpop.f32.mrf.mxu0
  %v810 = vadd.f32 %v747, %v809
  %v811 = vpop.f32.mrf.mxu0
  %v812 = vadd.f32 %v749, %v811
  %813 = vmatmul.bf16.gmra.mxu0 %v234
  %v814 = vpop.f32.mrf.mxu0
  %v815 = vadd.f32 %v752, %v814
  %v816 = vpop.f32.mrf.mxu0
  %v817 = vadd.f32 %v754, %v816
  %818 = vmatmul.bf16.gmra.mxu0 %v237
  %v819 = vpop.f32.mrf.mxu0
  %v820 = vadd.f32 %v757, %v819
  %v821 = vpop.f32.mrf.mxu0
  %v822 = vadd.f32 %v759, %v821
  %823 = vmatmul.bf16.gmra.mxu0 %v240
  %v824 = vpop.f32.mrf.mxu0
  %v825 = vadd.f32 %v762, %v824
  %v826 = vpop.f32.mrf.mxu0
  %v827 = vadd.f32 %v764, %v826
  %828 = vmatmul.bf16.gmra.mxu0 %v243
  %v829 = vpop.f32.mrf.mxu0
  %v830 = vadd.f32 %v767, %v829
  %v831 = vpop.f32.mrf.mxu0
  %832 = vdwg.mxu0
  %833 = vmatpush.bf16.msra.mxu0 %v469
  %834 = vmatpush.bf16.msra.mxu0 %v467
  %835 = vmatpush.bf16.msra.mxu0 %v465
  %836 = vmatpush.bf16.msra.mxu0 %v463
  %837 = vmatpush.bf16.msra.mxu0 %v461
  %838 = vmatpush.bf16.msra.mxu0 %v459
  %839 = vmatpush.bf16.msra.mxu0 %v457
  %840 = vmatpush.bf16.msra.mxu0 %v455
  %841 = vmatmul.bf16.gmra.mxu0 %v214
  %v842 = vpop.f32.mrf.mxu0
  %v843 = vadd.f32 %v780, %v842
  %v844 = vpop.f32.mrf.mxu0
  %v845 = vadd.f32 %v782, %v844
  %846 = vmatmul.bf16.gmra.mxu0 %v217
  %v847 = vpop.f32.mrf.mxu0
  %v848 = vadd.f32 %v785, %v847
  %v849 = vpop.f32.mrf.mxu0
  %v850 = vadd.f32 %v787, %v849
  %851 = vmatmul.bf16.gmra.mxu0 %v220
  %v852 = vpop.f32.mrf.mxu0
  %v853 = vadd.f32 %v790, %v852
  %v854 = vpop.f32.mrf.mxu0
  %v855 = vadd.f32 %v792, %v854
  %856 = vmatmul.bf16.gmra.mxu0 %v223
  %v857 = vpop.f32.mrf.mxu0
  %v858 = vadd.f32 %v795, %v857
  %v859 = vpop.f32.mrf.mxu0
  %v860 = vadd.f32 %v797, %v859
  %861 = vmatmul.bf16.gmra.mxu0 %v226
  %v862 = vpop.f32.mrf.mxu0
  %v863 = vadd.f32 %v800, %v862
  %v864 = vpop.f32.mrf.mxu0
  %v865 = vadd.f32 %v802, %v864
  %866 = vmatmul.bf16.gmra.mxu0 %v229
  %v867 = vpop.f32.mrf.mxu0
  %v868 = vadd.f32 %v805, %v867
  %v869 = vpop.f32.mrf.mxu0
  %v870 = vadd.f32 %v807, %v869
  %871 = vmatmul.bf16.gmra.mxu0 %v232
  %v872 = vpop.f32.mrf.mxu0
  %v873 = vadd.f32 %v810, %v872
  %v874 = vpop.f32.mrf.mxu0
  %v875 = vadd.f32 %v812, %v874
  %876 = vmatmul.bf16.gmra.mxu0 %v235
  %v877 = vpop.f32.mrf.mxu0
  %v878 = vadd.f32 %v815, %v877
  %v879 = vpop.f32.mrf.mxu0
  %v880 = vadd.f32 %v817, %v879
  %881 = vmatmul.bf16.gmra.mxu0 %v238
  %v882 = vpop.f32.mrf.mxu0
  %v883 = vadd.f32 %v820, %v882
  %v884 = vpop.f32.mrf.mxu0
  %v885 = vadd.f32 %v822, %v884
  %886 = vmatmul.bf16.gmra.mxu0 %v241
  %v887 = vpop.f32.mrf.mxu0
  %v888 = vadd.f32 %v825, %v887
  %v889 = vpop.f32.mrf.mxu0
  %v890 = vadd.f32 %v827, %v889
  %891 = vmatmul.bf16.gmra.mxu0 %v244
  %v892 = vpop.f32.mrf.mxu0
  %v893 = vadd.f32 %v830, %v892
  %v894 = vpop.f32.mrf.mxu0
  %895 = vdwg.mxu0
  %v896 = vld [vmem:[%s2] sm:$0x3]
  %v898 = vperm.slane %v896, 0
  %v899 = vperm.slane %v896, 1
  %v902 = vmul.f32 %v654, %v898
  %v903 = vmul.f32 %v843, %v899
  %v904 = vmul.f32 %v656, %v898
  %v905 = vmul.f32 %v845, %v899
  %v906 = vmul.f32 %v659, %v898
  %v907 = vmul.f32 %v848, %v899
  %v908 = vmul.f32 %v661, %v898
  %v909 = vmul.f32 %v850, %v899
  %v910 = vmul.f32 %v664, %v898
  %v911 = vmul.f32 %v853, %v899
  %v912 = vmul.f32 %v666, %v898
  %v913 = vmul.f32 %v855, %v899
  %v914 = vmul.f32 %v669, %v898
  %v915 = vmul.f32 %v858, %v899
  %v916 = vmul.f32 %v671, %v898
  %v917 = vmul.f32 %v860, %v899
  %v918 = vmul.f32 %v674, %v898
  %v919 = vmul.f32 %v863, %v899
  %v920 = vmul.f32 %v676, %v898
  %v921 = vmul.f32 %v865, %v899
  %v922 = vmul.f32 %v679, %v898
  %v923 = vmul.f32 %v868, %v899
  %v924 = vmul.f32 %v681, %v898
  %v925 = vmul.f32 %v870, %v899
  %v926 = vmul.f32 %v684, %v898
  %v927 = vmul.f32 %v873, %v899
  %v928 = vmul.f32 %v686, %v898
  %v929 = vmul.f32 %v875, %v899
  %v930 = vmul.f32 %v689, %v898
  %v931 = vmul.f32 %v878, %v899
  %v932 = vmul.f32 %v691, %v898
  %v933 = vmul.f32 %v880, %v899
  %v934 = vmul.f32 %v694, %v898
  %v935 = vmul.f32 %v883, %v899
  %v936 = vmul.f32 %v696, %v898
  %v937 = vmul.f32 %v885, %v899
  %v938 = vmul.f32 %v699, %v898
  %v939 = vmul.f32 %v888, %v899
  %v940 = vmul.f32 %v701, %v898
  %v941 = vmul.f32 %v890, %v899
  %v942 = vmul.f32 %v704, %v898
  %v943 = vmul.f32 %v893, %v899
  %v944 = vld [vmem:[%s3] sm:$0x3]
  %v946 = vperm.slane %v944, 0
  %v947 = vperm.slane %v944, 1
  %v950 = vadd.f32 %v902, %v946
  %v951 = vadd.f32 %v903, %v947
  %v952 = vadd.f32 %v904, %v946
  %v953 = vadd.f32 %v905, %v947
  %v954 = vadd.f32 %v906, %v946
  %v955 = vadd.f32 %v907, %v947
  %v956 = vadd.f32 %v908, %v946
  %v957 = vadd.f32 %v909, %v947
  %v958 = vadd.f32 %v910, %v946
  %v959 = vadd.f32 %v911, %v947
  %v960 = vadd.f32 %v912, %v946
  %v961 = vadd.f32 %v913, %v947
  %v962 = vadd.f32 %v914, %v946
  %v963 = vadd.f32 %v915, %v947
  %v964 = vadd.f32 %v916, %v946
  %v965 = vadd.f32 %v917, %v947
  %v966 = vadd.f32 %v918, %v946
  %v967 = vadd.f32 %v919, %v947
  %v968 = vadd.f32 %v920, %v946
  %v969 = vadd.f32 %v921, %v947
  %v970 = vadd.f32 %v922, %v946
  %v971 = vadd.f32 %v923, %v947
  %v972 = vadd.f32 %v924, %v946
  %v973 = vadd.f32 %v925, %v947
  %v974 = vadd.f32 %v926, %v946
  %v975 = vadd.f32 %v927, %v947
  %v976 = vadd.f32 %v928, %v946
  %v977 = vadd.f32 %v929, %v947
  %v978 = vadd.f32 %v930, %v946
  %v979 = vadd.f32 %v931, %v947
  %v980 = vadd.f32 %v932, %v946
  %v981 = vadd.f32 %v933, %v947
  %v982 = vadd.f32 %v934, %v946
  %v983 = vadd.f32 %v935, %v947
  %v984 = vadd.f32 %v936, %v946
  %v985 = vadd.f32 %v937, %v947
  %v986 = vadd.f32 %v938, %v946
  %v987 = vadd.f32 %v939, %v947
  %v988 = vadd.f32 %v940, %v946
  %v989 = vadd.f32 %v941, %v947
  %v990 = vadd.f32 %v942, %v946
  %v991 = vadd.f32 %v943, %v947
  %v992 = vmax.f32 %v950, 0.0
  %v993 = vmax.f32 %v951, 0.0
  %v994 = vmax.f32 %v952, 0.0
  %v995 = vmax.f32 %v953, 0.0
  %v996 = vmax.f32 %v954, 0.0
  %v997 = vmax.f32 %v955, 0.0
  %v998 = vmax.f32 %v956, 0.0
  %v999 = vmax.f32 %v957, 0.0
  %v1000 = vmax.f32 %v958, 0.0
  %v1001 = vmax.f32 %v959, 0.0
  %v1002 = vmax.f32 %v960, 0.0
  %v1003 = vmax.f32 %v961, 0.0
  %v1004 = vmax.f32 %v962, 0.0
  %v1005 = vmax.f32 %v963, 0.0
  %v1006 = vmax.f32 %v964, 0.0
  %v1007 = vmax.f32 %v965, 0.0
  %v1008 = vmax.f32 %v966, 0.0
  %v1009 = vmax.f32 %v967, 0.0
  %v1010 = vmax.f32 %v968, 0.0
  %v1011 = vmax.f32 %v969, 0.0
  %v1012 = vmax.f32 %v970, 0.0
  %v1013 = vmax.f32 %v971, 0.0
  %v1014 = vmax.f32 %v972, 0.0
  %v1015 = vmax.f32 %v973, 0.0
  %v1016 = vmax.f32 %v974, 0.0
  %v1017 = vmax.f32 %v975, 0.0
  %v1018 = vmax.f32 %v976, 0.0
  %v1019 = vmax.f32 %v977, 0.0
  %v1020 = vmax.f32 %v978, 0.0
  %v1021 = vmax.f32 %v979, 0.0
  %v1022 = vmax.f32 %v980, 0.0
  %v1023 = vmax.f32 %v981, 0.0
  %v1024 = vmax.f32 %v982, 0.0
  %v1025 = vmax.f32 %v983, 0.0
  %v1026 = vmax.f32 %v984, 0.0
  %v1027 = vmax.f32 %v985, 0.0
  %v1028 = vmax.f32 %v986, 0.0
  %v1029 = vmax.f32 %v987, 0.0
  %v1030 = vmax.f32 %v988, 0.0
  %v1031 = vmax.f32 %v989, 0.0
  %v1032 = vmax.f32 %v990, 0.0
  %v1033 = vmax.f32 %v991, 0.0
  %v1034 = vpack.c.bf16 %v993, %v992
  %v1035 = vpack.c.bf16 %v995, %v994
  %v1036 = vpack.c.bf16 %v997, %v996
  %v1037 = vpack.c.bf16 %v999, %v998
  %v1038 = vpack.c.bf16 %v1001, %v1000
  %v1039 = vpack.c.bf16 %v1003, %v1002
  %v1040 = vpack.c.bf16 %v1005, %v1004
  %v1041 = vpack.c.bf16 %v1007, %v1006
  %v1042 = vpack.c.bf16 %v1009, %v1008
  %v1043 = vpack.c.bf16 %v1011, %v1010
  %v1044 = vpack.c.bf16 %v1013, %v1012
  %v1045 = vpack.c.bf16 %v1015, %v1014
  %v1046 = vpack.c.bf16 %v1017, %v1016
  %v1047 = vpack.c.bf16 %v1019, %v1018
  %v1048 = vpack.c.bf16 %v1021, %v1020
  %v1049 = vpack.c.bf16 %v1023, %v1022
  %v1050 = vpack.c.bf16 %v1025, %v1024
  %v1051 = vpack.c.bf16 %v1027, %v1026
  %v1052 = vpack.c.bf16 %v1029, %v1028
  %v1053 = vpack.c.bf16 %v1031, %v1030
  %v1054 = vpack.c.bf16 %v1033, %v1032
  %1055 = vst [vmem:[%s4] sm:$0xff] %v1034
  %1056 = vst [vmem:[%s4 + $0x8] sm:$0xff] %v1035
  %1057 = vst [vmem:[%s4 + $0x10] sm:$0xff] %v1036
  %1058 = vst [vmem:[%s4 + $0x18] sm:$0xff] %v1037
  %1059 = vst [vmem:[%s4 + $0x20] sm:$0xff] %v1038
  %1060 = vst [vmem:[%s4 + $0x28] sm:$0xff] %v1039
  %1061 = vst [vmem:[%s4 + $0x30] sm:$0xff] %v1040
  %1062 = vst [vmem:[%s4 + $0x38] sm:$0xff] %v1041
  %1063 = vst [vmem:[%s4 + $0x40] sm:$0xff] %v1042
  %1064 = vst [vmem:[%s4 + $0x48] sm:$0xff] %v1043
  %1065 = vst [vmem:[%s4 + $0x50] sm:$0xff] %v1044
  %1066 = vst [vmem:[%s4 + $0x58] sm:$0xff] %v1045
  %1067 = vst [vmem:[%s4 + $0x60] sm:$0xff] %v1046
  %1068 = vst [vmem:[%s4 + $0x68] sm:$0xff] %v1047
  %1069 = vst [vmem:[%s4 + $0x70] sm:$0xff] %v1048
  %1070 = vst [vmem:[%s4 + $0x78] sm:$0xff] %v1049
  %1071 = vst [vmem:[%s4 + $0x80] sm:$0xff] %v1050
  %1072 = vst [vmem:[%s4 + $0x88] sm:$0xff] %v1051
  %1073 = vst [vmem:[%s4 + $0x90] sm:$0xff] %v1052
  %1074 = vst [vmem:[%s4 + $0x98] sm:$0xff] %v1053
  %1075 = vst [vmem:[%s4 + $0xa0] sm:$0xff] %v1054
  // Predicated region
  $region18: #{generator_forward.7} parent=0 // pred_check
    _
  $region19: #{generator_forward.7} parent=0 // pred_check_branch
    %1077 = sbr.rel (0) target = $region21
  $region20: #{generator_forward.7} parent=0 // pred_region
    _
  $region21: #{generator_forward.7} parent=0 // pred_fallthru
    _
  // Predicated region
  $region22: #{generator_forward.7} parent=0 // pred_check
    _
  $region23: #{generator_forward.7} parent=0 // pred_check_branch
    %1079 = sbr.rel (0) target = $region25
  $region24: #{generator_forward.7} parent=0 // pred_region
    _
  $region25: #{generator_forward.7} parent=0 // pred_fallthru
    _

// kernel: generator_forward.8
$region0: #{generator_forward.8}
  #allocation0 [shape = 'u32[]', space=smem, size = 0x4, offset = 0x4, fixed_abs, tag = 'smem constant byte address 0x4 - core index']
  #allocation1 [shape = 'u32[72,128]{1,0:T(1,128)}', space=vmem, size = 0x9000, scoped, tag = 'internal scratch']
  %s0 = inlined_call_operand.vmem [shape: bf16[584,256], index: 0, kind: input, shape index: {}]
  %s1 = inlined_call_operand.vmem [shape: bf16[256,128], index: 1, kind: input, shape index: {}]
  %s2 = inlined_call_operand.vmem [shape: f32[1,128], index: 2, kind: input, shape index: {}]
  %s3 = inlined_call_operand.vmem [shape: f32[1,128], index: 3, kind: input, shape index: {}]
  %s4 = inlined_call_operand.vmem [shape: bf16[584,128], index: 4, kind: output, shape index: {}]
  %s5 = sld [smem:[#allocation0]]
  $region26: #{generator_forward.8} parent=0
    _
  %s7 = ssub.s32 1, %s5
  %s8 = scalar_select 0, %s7, %s5
  // Predicated region
  $region2: #{generator_forward.8} parent=0 // pred_check
    _
  $region3: #{generator_forward.8} parent=0 // pred_check_branch
    %10 = sbr.rel (0) target = $region5
  $region4: #{generator_forward.8} parent=0 // pred_region
    _
  $region5: #{generator_forward.8} parent=0 // pred_fallthru
    _
  // Predicated region
  $region6: #{generator_forward.8} parent=0 // pred_check
    _
  $region7: #{generator_forward.8} parent=0 // pred_check_branch
    %12 = sbr.rel (0) target = $region9
  $region8: #{generator_forward.8} parent=0 // pred_region
    _
  $region9: #{generator_forward.8} parent=0 // pred_fallthru
    _
  // Predicated region
  $region10: #{generator_forward.8} parent=0 // pred_check
    _
  $region11: #{generator_forward.8} parent=0 // pred_check_branch
    %14 = sbr.rel (0) target = $region13
  $region12: #{generator_forward.8} parent=0 // pred_region
    _
  $region13: #{generator_forward.8} parent=0 // pred_fallthru
    _
  // Predicated region
  $region14: #{generator_forward.8} parent=0 // pred_check
    _
  $region15: #{generator_forward.8} parent=0 // pred_check_branch
    %16 = sbr.rel (0) target = $region17
  $region16: #{generator_forward.8} parent=0 // pred_region
    _
  $region17: #{generator_forward.8} parent=0 // pred_fallthru
    _
  %v17 = vld [vmem:[%s0] sm:$0xff]
  %v18 = vld [vmem:[%s0 + $0x8] sm:$0xff]
  %v19 = vld [vmem:[%s0 + $0x10] sm:$0xff]
  %v20 = vld [vmem:[%s0 + $0x18] sm:$0xff]
  %v21 = vld [vmem:[%s0 + $0x20] sm:$0xff]
  %v22 = vld [vmem:[%s0 + $0x28] sm:$0xff]
  %v23 = vld [vmem:[%s0 + $0x30] sm:$0xff]
  %v24 = vld [vmem:[%s0 + $0x38] sm:$0xff]
  %v25 = vld [vmem:[%s0 + $0x40] sm:$0xff]
  %v26 = vld [vmem:[%s0 + $0x48] sm:$0xff]
  %v27 = vld [vmem:[%s0 + $0x50] sm:$0xff]
  %v28 = vld [vmem:[%s0 + $0x58] sm:$0xff]
  %v29 = vld [vmem:[%s0 + $0x60] sm:$0xff]
  %v30 = vld [vmem:[%s0 + $0x68] sm:$0xff]
  %v31 = vld [vmem:[%s0 + $0x70] sm:$0xff]
  %v32 = vld [vmem:[%s0 + $0x78] sm:$0xff]
  %v33 = vld [vmem:[%s0 + $0x80] sm:$0xff]
  %v34 = vld [vmem:[%s0 + $0x88] sm:$0xff]
  %v35 = vld [vmem:[%s0 + $0x90] sm:$0xff]
  %v36 = vld [vmem:[%s0 + $0x98] sm:$0xff]
  %v37 = vld [vmem:[%s0 + $0xa0] sm:$0xff]
  %v38 = vld [vmem:[%s0 + $0xa8] sm:$0xff]
  %v39 = vld [vmem:[%s0 + $0xb0] sm:$0xff]
  %v40 = vld [vmem:[%s0 + $0xb8] sm:$0xff]
  %v41 = vld [vmem:[%s0 + $0xc0] sm:$0xff]
  %v42 = vld [vmem:[%s0 + $0xc8] sm:$0xff]
  %v43 = vld [vmem:[%s0 + $0xd0] sm:$0xff]
  %v44 = vld [vmem:[%s0 + $0xd8] sm:$0xff]
  %v45 = vld [vmem:[%s0 + $0xe0] sm:$0xff]
  %v46 = vld [vmem:[%s0 + $0xe8] sm:$0xff]
  %v47 = vld [vmem:[%s0 + $0xf0] sm:$0xff]
  %v48 = vld [vmem:[%s0 + $0xf8] sm:$0xff]
  %v49 = vld [vmem:[%s0 + $0x100] sm:$0xff]
  %v50 = vld [vmem:[%s0 + $0x108] sm:$0xff]
  %v51 = vld [vmem:[%s0 + $0x110] sm:$0xff]
  %v52 = vld [vmem:[%s0 + $0x118] sm:$0xff]
  %v53 = vld [vmem:[%s0 + $0x120] sm:$0xff]
  %v54 = vld [vmem:[%s0 + $0x128] sm:$0xff]
  %v55 = vld [vmem:[%s0 + $0x130] sm:$0xff]
  %v56 = vld [vmem:[%s0 + $0x138] sm:$0xff]
  %v57 = vld [vmem:[%s0 + $0x140] sm:$0xff]
  %v58 = vld [vmem:[%s0 + $0x148] sm:$0xff]
  %v59 = vld [vmem:[%s0 + $0x150] sm:$0xff]
  %v60 = vld [vmem:[%s0 + $0x158] sm:$0xff]
  %v61 = vld [vmem:[%s0 + $0x160] sm:$0xff]
  %v62 = vld [vmem:[%s0 + $0x168] sm:$0xff]
  %v63 = vld [vmem:[%s0 + $0x170] sm:$0xff]
  %v64 = vld [vmem:[%s0 + $0x178] sm:$0xff]
  %v65 = vld [vmem:[%s0 + $0x180] sm:$0xff]
  %v66 = vld [vmem:[%s0 + $0x188] sm:$0xff]
  %v67 = vld [vmem:[%s0 + $0x190] sm:$0xff]
  %v68 = vld [vmem:[%s0 + $0x198] sm:$0xff]
  %v69 = vld [vmem:[%s0 + $0x1a0] sm:$0xff]
  %v70 = vld [vmem:[%s0 + $0x1a8] sm:$0xff]
  %v71 = vld [vmem:[%s0 + $0x1b0] sm:$0xff]
  %v72 = vld [vmem:[%s0 + $0x1b8] sm:$0xff]
  %v73 = vld [vmem:[%s0 + $0x1c0] sm:$0xff]
  %v74 = vld [vmem:[%s0 + $0x1c8] sm:$0xff]
  %v75 = vld [vmem:[%s0 + $0x1d0] sm:$0xff]
  %v76 = vld [vmem:[%s0 + $0x1d8] sm:$0xff]
  %v77 = vld [vmem:[%s0 + $0x1e0] sm:$0xff]
  %v78 = vld [vmem:[%s0 + $0x1e8] sm:$0xff]
  %v79 = vld [vmem:[%s0 + $0x1f0] sm:$0xff]
  %v80 = vld [vmem:[%s0 + $0x1f8] sm:$0xff]
  %v81 = vld [vmem:[%s0 + $0x200] sm:$0xff]
  %v82 = vld [vmem:[%s0 + $0x208] sm:$0xff]
  %v83 = vld [vmem:[%s0 + $0x210] sm:$0xff]
  %v84 = vld [vmem:[%s0 + $0x218] sm:$0xff]
  %v85 = vld [vmem:[%s0 + $0x220] sm:$0xff]
  %v86 = vld [vmem:[%s0 + $0x228] sm:$0xff]
  %v87 = vld [vmem:[%s0 + $0x230] sm:$0xff]
  %v88 = vld [vmem:[%s0 + $0x238] sm:$0xff]
  %v89 = vld [vmem:[%s0 + $0x240] sm:$0xff]
  %v90 = vld [vmem:[%s1] sm:$0xf]
  %v91 = vld [vmem:[%s1 + $0x4] sm:$0xf]
  %v92 = vld [vmem:[%s1 + $0x8] sm:$0xf]
  %v93 = vld [vmem:[%s1 + $0xc] sm:$0xf]
  %v94 = vld [vmem:[%s1 + $0x10] sm:$0xf]
  %v95 = vld [vmem:[%s1 + $0x14] sm:$0xf]
  %v96 = vld [vmem:[%s1 + $0x18] sm:$0xf]
  %v97 = vld [vmem:[%s1 + $0x1c] sm:$0xf]
  %v98 = vld [vmem:[%s1 + $0x20] sm:$0xf]
  %v99 = vld [vmem:[%s1 + $0x24] sm:$0xf]
  %v100 = vld [vmem:[%s1 + $0x28] sm:$0xf]
  %v101 = vld [vmem:[%s1 + $0x2c] sm:$0xf]
  %v102 = vld [vmem:[%s1 + $0x30] sm:$0xf]
  %v103 = vld [vmem:[%s1 + $0x34] sm:$0xf]
  %v104 = vld [vmem:[%s1 + $0x38] sm:$0xf]
  %v105 = vld [vmem:[%s1 + $0x3c] sm:$0xf]
  %v106 = vld [vmem:[%s1 + $0x40] sm:$0xf]
  %v107 = vld [vmem:[%s1 + $0x44] sm:$0xf]
  %v108 = vld [vmem:[%s1 + $0x48] sm:$0xf]
  %v109 = vld [vmem:[%s1 + $0x4c] sm:$0xf]
  %v110 = vld [vmem:[%s1 + $0x50] sm:$0xf]
  %v111 = vld [vmem:[%s1 + $0x54] sm:$0xf]
  %v112 = vld [vmem:[%s1 + $0x58] sm:$0xf]
  %v113 = vld [vmem:[%s1 + $0x5c] sm:$0xf]
  %v114 = vld [vmem:[%s1 + $0x60] sm:$0xf]
  %v115 = vld [vmem:[%s1 + $0x64] sm:$0xf]
  %v116 = vld [vmem:[%s1 + $0x68] sm:$0xf]
  %v117 = vld [vmem:[%s1 + $0x6c] sm:$0xf]
  %v118 = vld [vmem:[%s1 + $0x70] sm:$0xf]
  %v119 = vld [vmem:[%s1 + $0x74] sm:$0xf]
  %v120 = vld [vmem:[%s1 + $0x78] sm:$0xf]
  %v121 = vld [vmem:[%s1 + $0x7c] sm:$0xf]
  %v195 = vunpack.c.l.b16 %v17
  %v196 = vunpack.c.h.b16 %v17
  %v197 = vunpack.c.l.b16 %v18
  %v198 = vunpack.c.h.b16 %v18
  %v199 = vunpack.c.l.b16 %v19
  %v200 = vunpack.c.h.b16 %v19
  %v201 = vunpack.c.l.b16 %v20
  %v202 = vunpack.c.h.b16 %v20
  %v203 = vunpack.c.l.b16 %v21
  %v204 = vunpack.c.h.b16 %v21
  %v205 = vunpack.c.l.b16 %v22
  %v206 = vunpack.c.h.b16 %v22
  %v207 = vunpack.c.l.b16 %v23
  %v208 = vunpack.c.h.b16 %v23
  %v209 = vunpack.c.l.b16 %v24
  %v210 = vunpack.c.h.b16 %v24
  %v211 = vunpack.c.l.b16 %v25
  %v212 = vunpack.c.h.b16 %v25
  %v213 = vunpack.c.l.b16 %v26
  %v214 = vunpack.c.h.b16 %v26
  %v215 = vunpack.c.l.b16 %v27
  %v216 = vunpack.c.h.b16 %v27
  %v217 = vunpack.c.l.b16 %v28
  %v218 = vunpack.c.h.b16 %v28
  %v219 = vunpack.c.l.b16 %v29
  %v220 = vunpack.c.h.b16 %v29
  %v221 = vunpack.c.l.b16 %v30
  %v222 = vunpack.c.h.b16 %v30
  %v223 = vunpack.c.l.b16 %v31
  %v224 = vunpack.c.h.b16 %v31
  %v225 = vunpack.c.l.b16 %v32
  %v226 = vunpack.c.h.b16 %v32
  %v227 = vunpack.c.l.b16 %v33
  %v228 = vunpack.c.h.b16 %v33
  %v229 = vunpack.c.l.b16 %v34
  %v230 = vunpack.c.h.b16 %v34
  %v231 = vunpack.c.l.b16 %v35
  %v232 = vunpack.c.h.b16 %v35
  %v233 = vunpack.c.l.b16 %v36
  %v234 = vunpack.c.h.b16 %v36
  %v235 = vunpack.c.l.b16 %v37
  %v236 = vunpack.c.h.b16 %v37
  %v237 = vunpack.c.l.b16 %v38
  %v238 = vunpack.c.h.b16 %v38
  %v239 = vunpack.c.l.b16 %v39
  %v240 = vunpack.c.h.b16 %v39
  %v241 = vunpack.c.l.b16 %v40
  %v242 = vunpack.c.h.b16 %v40
  %v243 = vunpack.c.l.b16 %v41
  %v244 = vunpack.c.h.b16 %v41
  %v245 = vunpack.c.l.b16 %v42
  %v246 = vunpack.c.h.b16 %v42
  %v247 = vunpack.c.l.b16 %v43
  %v248 = vunpack.c.h.b16 %v43
  %v249 = vunpack.c.l.b16 %v44
  %v250 = vunpack.c.h.b16 %v44
  %v251 = vunpack.c.l.b16 %v45
  %v252 = vunpack.c.h.b16 %v45
  %v253 = vunpack.c.l.b16 %v46
  %v254 = vunpack.c.h.b16 %v46
  %v255 = vunpack.c.l.b16 %v47
  %v256 = vunpack.c.h.b16 %v47
  %v257 = vunpack.c.l.b16 %v48
  %v258 = vunpack.c.h.b16 %v48
  %v259 = vunpack.c.l.b16 %v49
  %v260 = vunpack.c.h.b16 %v49
  %v261 = vunpack.c.l.b16 %v50
  %v262 = vunpack.c.h.b16 %v50
  %v263 = vunpack.c.l.b16 %v51
  %v264 = vunpack.c.h.b16 %v51
  %v265 = vunpack.c.l.b16 %v52
  %v266 = vunpack.c.h.b16 %v52
  %v267 = vunpack.c.l.b16 %v53
  %v268 = vunpack.c.h.b16 %v53
  %v269 = vunpack.c.l.b16 %v54
  %v270 = vunpack.c.h.b16 %v54
  %v271 = vunpack.c.l.b16 %v55
  %v272 = vunpack.c.h.b16 %v55
  %v273 = vunpack.c.l.b16 %v56
  %v274 = vunpack.c.h.b16 %v56
  %v275 = vunpack.c.l.b16 %v57
  %v276 = vunpack.c.h.b16 %v57
  %v277 = vunpack.c.l.b16 %v58
  %v278 = vunpack.c.h.b16 %v58
  %v279 = vunpack.c.l.b16 %v59
  %v280 = vunpack.c.h.b16 %v59
  %v281 = vunpack.c.l.b16 %v60
  %v282 = vunpack.c.h.b16 %v60
  %v283 = vunpack.c.l.b16 %v61
  %v284 = vunpack.c.h.b16 %v61
  %v285 = vunpack.c.l.b16 %v62
  %v286 = vunpack.c.h.b16 %v62
  %v287 = vunpack.c.l.b16 %v63
  %v288 = vunpack.c.h.b16 %v63
  %v289 = vunpack.c.l.b16 %v64
  %v290 = vunpack.c.h.b16 %v64
  %v291 = vunpack.c.l.b16 %v65
  %v292 = vunpack.c.h.b16 %v65
  %v293 = vunpack.c.l.b16 %v66
  %v294 = vunpack.c.h.b16 %v66
  %v295 = vunpack.c.l.b16 %v67
  %v296 = vunpack.c.h.b16 %v67
  %v297 = vunpack.c.l.b16 %v68
  %v298 = vunpack.c.h.b16 %v68
  %v299 = vunpack.c.l.b16 %v69
  %v300 = vunpack.c.h.b16 %v69
  %v301 = vunpack.c.l.b16 %v70
  %v302 = vunpack.c.h.b16 %v70
  %v303 = vunpack.c.l.b16 %v71
  %v304 = vunpack.c.h.b16 %v71
  %v305 = vunpack.c.l.b16 %v72
  %v306 = vunpack.c.h.b16 %v72
  %v307 = vunpack.c.l.b16 %v73
  %v308 = vunpack.c.h.b16 %v73
  %v309 = vunpack.c.l.b16 %v74
  %v310 = vunpack.c.h.b16 %v74
  %v311 = vunpack.c.l.b16 %v75
  %v312 = vunpack.c.h.b16 %v75
  %v313 = vunpack.c.l.b16 %v76
  %v314 = vunpack.c.h.b16 %v76
  %v315 = vunpack.c.l.b16 %v77
  %v316 = vunpack.c.h.b16 %v77
  %v317 = vunpack.c.l.b16 %v78
  %v318 = vunpack.c.h.b16 %v78
  %v319 = vunpack.c.l.b16 %v79
  %v320 = vunpack.c.h.b16 %v79
  %v321 = vunpack.c.l.b16 %v80
  %v322 = vunpack.c.h.b16 %v80
  %v323 = vunpack.c.l.b16 %v81
  %v324 = vunpack.c.h.b16 %v81
  %v325 = vunpack.c.l.b16 %v82
  %v326 = vunpack.c.h.b16 %v82
  %v327 = vunpack.c.l.b16 %v83
  %v328 = vunpack.c.h.b16 %v83
  %v329 = vunpack.c.l.b16 %v84
  %v330 = vunpack.c.h.b16 %v84
  %v331 = vunpack.c.l.b16 %v85
  %v332 = vunpack.c.h.b16 %v85
  %v333 = vunpack.c.l.b16 %v86
  %v334 = vunpack.c.h.b16 %v86
  %v335 = vunpack.c.l.b16 %v87
  %v336 = vunpack.c.h.b16 %v87
  %v337 = vunpack.c.l.b16 %v88
  %v338 = vunpack.c.h.b16 %v88
  %v339 = vunpack.c.l.b16 %v89
  %v340 = vunpack.c.h.b16 %v89
  %v341 = vpack.c.b16 %v197, %v195
  %v342 = vpack.c.b16 %v198, %v196
  %v343 = vpack.c.b16 %v201, %v199
  %v344 = vpack.c.b16 %v202, %v200
  %v345 = vpack.c.b16 %v205, %v203
  %v346 = vpack.c.b16 %v206, %v204
  %v347 = vpack.c.b16 %v209, %v207
  %v348 = vpack.c.b16 %v210, %v208
  %v349 = vpack.c.b16 %v213, %v211
  %v350 = vpack.c.b16 %v214, %v212
  %v351 = vpack.c.b16 %v217, %v215
  %v352 = vpack.c.b16 %v218, %v216
  %v353 = vpack.c.b16 %v221, %v219
  %v354 = vpack.c.b16 %v222, %v220
  %v355 = vpack.c.b16 %v225, %v223
  %v356 = vpack.c.b16 %v226, %v224
  %v357 = vpack.c.b16 %v229, %v227
  %v358 = vpack.c.b16 %v230, %v228
  %v359 = vpack.c.b16 %v233, %v231
  %v360 = vpack.c.b16 %v234, %v232
  %v361 = vpack.c.b16 %v237, %v235
  %v362 = vpack.c.b16 %v238, %v236
  %v363 = vpack.c.b16 %v241, %v239
  %v364 = vpack.c.b16 %v242, %v240
  %v365 = vpack.c.b16 %v245, %v243
  %v366 = vpack.c.b16 %v246, %v244
  %v367 = vpack.c.b16 %v249, %v247
  %v368 = vpack.c.b16 %v250, %v248
  %v369 = vpack.c.b16 %v253, %v251
  %v370 = vpack.c.b16 %v254, %v252
  %v371 = vpack.c.b16 %v257, %v255
  %v372 = vpack.c.b16 %v258, %v256
  %v373 = vpack.c.b16 %v261, %v259
  %v374 = vpack.c.b16 %v262, %v260
  %v375 = vpack.c.b16 %v265, %v263
  %v376 = vpack.c.b16 %v266, %v264
  %v377 = vpack.c.b16 %v269, %v267
  %v378 = vpack.c.b16 %v270, %v268
  %v379 = vpack.c.b16 %v273, %v271
  %v380 = vpack.c.b16 %v274, %v272
  %v381 = vpack.c.b16 %v277, %v275
  %v382 = vpack.c.b16 %v278, %v276
  %v383 = vpack.c.b16 %v281, %v279
  %v384 = vpack.c.b16 %v282, %v280
  %v385 = vpack.c.b16 %v285, %v283
  %v386 = vpack.c.b16 %v286, %v284
  %v387 = vpack.c.b16 %v289, %v287
  %v388 = vpack.c.b16 %v290, %v288
  %v389 = vpack.c.b16 %v293, %v291
  %v390 = vpack.c.b16 %v294, %v292
  %v391 = vpack.c.b16 %v297, %v295
  %v392 = vpack.c.b16 %v298, %v296
  %v393 = vpack.c.b16 %v301, %v299
  %v394 = vpack.c.b16 %v302, %v300
  %v395 = vpack.c.b16 %v305, %v303
  %v396 = vpack.c.b16 %v306, %v304
  %v397 = vpack.c.b16 %v309, %v307
  %v398 = vpack.c.b16 %v310, %v308
  %v399 = vpack.c.b16 %v313, %v311
  %v400 = vpack.c.b16 %v314, %v312
  %v401 = vpack.c.b16 %v317, %v315
  %v402 = vpack.c.b16 %v318, %v316
  %v403 = vpack.c.b16 %v321, %v319
  %v404 = vpack.c.b16 %v322, %v320
  %v405 = vpack.c.b16 %v325, %v323
  %v406 = vpack.c.b16 %v326, %v324
  %v407 = vpack.c.b16 %v329, %v327
  %v408 = vpack.c.b16 %v330, %v328
  %v409 = vpack.c.b16 %v333, %v331
  %v410 = vpack.c.b16 %v334, %v332
  %v411 = vpack.c.b16 %v337, %v335
  %v412 = vpack.c.b16 %v338, %v336
  %v413 = vpack.c.b16 %v339, %v339
  %v414 = vpack.c.b16 %v340, %v340
  %v521 = vunpack.c.l.b16 %v90
  %v522 = vunpack.c.l.b16 %v91
  %v523 = vunpack.c.l.b16 %v92
  %v524 = vunpack.c.l.b16 %v93
  %v525 = vunpack.c.l.b16 %v94
  %v526 = vunpack.c.l.b16 %v95
  %v527 = vunpack.c.l.b16 %v96
  %v528 = vunpack.c.l.b16 %v97
  %v529 = vunpack.c.l.b16 %v98
  %v530 = vunpack.c.l.b16 %v99
  %v531 = vunpack.c.l.b16 %v100
  %v532 = vunpack.c.l.b16 %v101
  %v533 = vunpack.c.l.b16 %v102
  %v534 = vunpack.c.l.b16 %v103
  %v535 = vunpack.c.l.b16 %v104
  %v536 = vunpack.c.l.b16 %v105
  %v537 = vunpack.c.l.b16 %v106
  %v538 = vunpack.c.l.b16 %v107
  %v539 = vunpack.c.l.b16 %v108
  %v540 = vunpack.c.l.b16 %v109
  %v541 = vunpack.c.l.b16 %v110
  %v542 = vunpack.c.l.b16 %v111
  %v543 = vunpack.c.l.b16 %v112
  %v544 = vunpack.c.l.b16 %v113
  %v545 = vunpack.c.l.b16 %v114
  %v546 = vunpack.c.l.b16 %v115
  %v547 = vunpack.c.l.b16 %v116
  %v548 = vunpack.c.l.b16 %v117
  %v549 = vunpack.c.l.b16 %v118
  %v550 = vunpack.c.l.b16 %v119
  %v551 = vunpack.c.l.b16 %v120
  %v552 = vunpack.c.l.b16 %v121
  %v553 = vpack.c.b16 %v522, %v521
  %v554 = vpack.c.b16 %v524, %v523
  %v555 = vpack.c.b16 %v526, %v525
  %v556 = vpack.c.b16 %v528, %v527
  %v557 = vpack.c.b16 %v530, %v529
  %v558 = vpack.c.b16 %v532, %v531
  %v559 = vpack.c.b16 %v534, %v533
  %v560 = vpack.c.b16 %v536, %v535
  %v561 = vpack.c.b16 %v538, %v537
  %v562 = vpack.c.b16 %v540, %v539
  %v563 = vpack.c.b16 %v542, %v541
  %v564 = vpack.c.b16 %v544, %v543
  %v565 = vpack.c.b16 %v546, %v545
  %v566 = vpack.c.b16 %v548, %v547
  %v567 = vpack.c.b16 %v550, %v549
  %v568 = vpack.c.b16 %v552, %v551
  %585 = vmatpush.bf16.msra.mxu0 %v560
  %586 = vmatpush.bf16.msra.mxu0 %v559
  %587 = vmatpush.bf16.msra.mxu0 %v558
  %588 = vmatpush.bf16.msra.mxu0 %v557
  %589 = vmatpush.bf16.msra.mxu0 %v556
  %590 = vmatpush.bf16.msra.mxu0 %v555
  %591 = vmatpush.bf16.msra.mxu0 %v554
  %592 = vmatpush.bf16.msra.mxu0 %v553
  %593 = vmatmul.bf16.gmra.mxu0 %v341
  %v594 = vpop.f32.mrf.mxu0
  %v595 = vadd.f32 0.0, %v594
  %v596 = vpop.f32.mrf.mxu0
  %v597 = vadd.f32 0.0, %v596
  %598 = vmatmul.bf16.gmra.mxu0 %v343
  %v599 = vpop.f32.mrf.mxu0
  %v600 = vadd.f32 0.0, %v599
  %v601 = vpop.f32.mrf.mxu0
  %v602 = vadd.f32 0.0, %v601
  %603 = vmatmul.bf16.gmra.mxu0 %v345
  %v604 = vpop.f32.mrf.mxu0
  %v605 = vadd.f32 0.0, %v604
  %v606 = vpop.f32.mrf.mxu0
  %v607 = vadd.f32 0.0, %v606
  %608 = vmatmul.bf16.gmra.mxu0 %v347
  %v609 = vpop.f32.mrf.mxu0
  %v610 = vadd.f32 0.0, %v609
  %v611 = vpop.f32.mrf.mxu0
  %v612 = vadd.f32 0.0, %v611
  %613 = vmatmul.bf16.gmra.mxu0 %v349
  %v614 = vpop.f32.mrf.mxu0
  %v615 = vadd.f32 0.0, %v614
  %v616 = vpop.f32.mrf.mxu0
  %v617 = vadd.f32 0.0, %v616
  %618 = vmatmul.bf16.gmra.mxu0 %v351
  %v619 = vpop.f32.mrf.mxu0
  %v620 = vadd.f32 0.0, %v619
  %v621 = vpop.f32.mrf.mxu0
  %v622 = vadd.f32 0.0, %v621
  %623 = vmatmul.bf16.gmra.mxu0 %v353
  %v624 = vpop.f32.mrf.mxu0
  %v625 = vadd.f32 0.0, %v624
  %v626 = vpop.f32.mrf.mxu0
  %v627 = vadd.f32 0.0, %v626
  %628 = vmatmul.bf16.gmra.mxu0 %v355
  %v629 = vpop.f32.mrf.mxu0
  %v630 = vadd.f32 0.0, %v629
  %v631 = vpop.f32.mrf.mxu0
  %v632 = vadd.f32 0.0, %v631
  %633 = vmatmul.bf16.gmra.mxu0 %v357
  %v634 = vpop.f32.mrf.mxu0
  %v635 = vadd.f32 0.0, %v634
  %v636 = vpop.f32.mrf.mxu0
  %v637 = vadd.f32 0.0, %v636
  %638 = vmatmul.bf16.gmra.mxu0 %v359
  %v639 = vpop.f32.mrf.mxu0
  %v640 = vadd.f32 0.0, %v639
  %v641 = vpop.f32.mrf.mxu0
  %v642 = vadd.f32 0.0, %v641
  %643 = vmatmul.bf16.gmra.mxu0 %v361
  %v644 = vpop.f32.mrf.mxu0
  %v645 = vadd.f32 0.0, %v644
  %v646 = vpop.f32.mrf.mxu0
  %v647 = vadd.f32 0.0, %v646
  %648 = vmatmul.bf16.gmra.mxu0 %v363
  %v649 = vpop.f32.mrf.mxu0
  %v650 = vadd.f32 0.0, %v649
  %v651 = vpop.f32.mrf.mxu0
  %v652 = vadd.f32 0.0, %v651
  %653 = vmatmul.bf16.gmra.mxu0 %v365
  %v654 = vpop.f32.mrf.mxu0
  %v655 = vadd.f32 0.0, %v654
  %v656 = vpop.f32.mrf.mxu0
  %v657 = vadd.f32 0.0, %v656
  %658 = vmatmul.bf16.gmra.mxu0 %v367
  %v659 = vpop.f32.mrf.mxu0
  %v660 = vadd.f32 0.0, %v659
  %v661 = vpop.f32.mrf.mxu0
  %v662 = vadd.f32 0.0, %v661
  %663 = vmatmul.bf16.gmra.mxu0 %v369
  %v664 = vpop.f32.mrf.mxu0
  %v665 = vadd.f32 0.0, %v664
  %v666 = vpop.f32.mrf.mxu0
  %v667 = vadd.f32 0.0, %v666
  %668 = vmatmul.bf16.gmra.mxu0 %v371
  %v669 = vpop.f32.mrf.mxu0
  %v670 = vadd.f32 0.0, %v669
  %v671 = vpop.f32.mrf.mxu0
  %v672 = vadd.f32 0.0, %v671
  %673 = vmatmul.bf16.gmra.mxu0 %v373
  %v674 = vpop.f32.mrf.mxu0
  %v675 = vadd.f32 0.0, %v674
  %v676 = vpop.f32.mrf.mxu0
  %v677 = vadd.f32 0.0, %v676
  %678 = vmatmul.bf16.gmra.mxu0 %v375
  %v679 = vpop.f32.mrf.mxu0
  %v680 = vadd.f32 0.0, %v679
  %v681 = vpop.f32.mrf.mxu0
  %v682 = vadd.f32 0.0, %v681
  %683 = vmatmul.bf16.gmra.mxu0 %v377
  %v684 = vpop.f32.mrf.mxu0
  %v685 = vadd.f32 0.0, %v684
  %v686 = vpop.f32.mrf.mxu0
  %v687 = vadd.f32 0.0, %v686
  %688 = vmatmul.bf16.gmra.mxu0 %v379
  %v689 = vpop.f32.mrf.mxu0
  %v690 = vadd.f32 0.0, %v689
  %v691 = vpop.f32.mrf.mxu0
  %v692 = vadd.f32 0.0, %v691
  %693 = vmatmul.bf16.gmra.mxu0 %v381
  %v694 = vpop.f32.mrf.mxu0
  %v695 = vadd.f32 0.0, %v694
  %v696 = vpop.f32.mrf.mxu0
  %v697 = vadd.f32 0.0, %v696
  %698 = vmatmul.bf16.gmra.mxu0 %v383
  %v699 = vpop.f32.mrf.mxu0
  %v700 = vadd.f32 0.0, %v699
  %v701 = vpop.f32.mrf.mxu0
  %v702 = vadd.f32 0.0, %v701
  %703 = vmatmul.bf16.gmra.mxu0 %v385
  %v704 = vpop.f32.mrf.mxu0
  %v705 = vadd.f32 0.0, %v704
  %v706 = vpop.f32.mrf.mxu0
  %v707 = vadd.f32 0.0, %v706
  %708 = vmatmul.bf16.gmra.mxu0 %v387
  %v709 = vpop.f32.mrf.mxu0
  %v710 = vadd.f32 0.0, %v709
  %v711 = vpop.f32.mrf.mxu0
  %v712 = vadd.f32 0.0, %v711
  %713 = vmatmul.bf16.gmra.mxu0 %v389
  %v714 = vpop.f32.mrf.mxu0
  %v715 = vadd.f32 0.0, %v714
  %v716 = vpop.f32.mrf.mxu0
  %v717 = vadd.f32 0.0, %v716
  %718 = vmatmul.bf16.gmra.mxu0 %v391
  %v719 = vpop.f32.mrf.mxu0
  %v720 = vadd.f32 0.0, %v719
  %v721 = vpop.f32.mrf.mxu0
  %v722 = vadd.f32 0.0, %v721
  %723 = vmatmul.bf16.gmra.mxu0 %v393
  %v724 = vpop.f32.mrf.mxu0
  %v725 = vadd.f32 0.0, %v724
  %v726 = vpop.f32.mrf.mxu0
  %v727 = vadd.f32 0.0, %v726
  %728 = vmatmul.bf16.gmra.mxu0 %v395
  %v729 = vpop.f32.mrf.mxu0
  %v730 = vadd.f32 0.0, %v729
  %v731 = vpop.f32.mrf.mxu0
  %v732 = vadd.f32 0.0, %v731
  %733 = vmatmul.bf16.gmra.mxu0 %v397
  %v734 = vpop.f32.mrf.mxu0
  %v735 = vadd.f32 0.0, %v734
  %v736 = vpop.f32.mrf.mxu0
  %v737 = vadd.f32 0.0, %v736
  %738 = vmatmul.bf16.gmra.mxu0 %v399
  %v739 = vpop.f32.mrf.mxu0
  %v740 = vadd.f32 0.0, %v739
  %v741 = vpop.f32.mrf.mxu0
  %v742 = vadd.f32 0.0, %v741
  %743 = vmatmul.bf16.gmra.mxu0 %v401
  %v744 = vpop.f32.mrf.mxu0
  %v745 = vadd.f32 0.0, %v744
  %v746 = vpop.f32.mrf.mxu0
  %v747 = vadd.f32 0.0, %v746
  %748 = vmatmul.bf16.gmra.mxu0 %v403
  %v749 = vpop.f32.mrf.mxu0
  %v750 = vadd.f32 0.0, %v749
  %v751 = vpop.f32.mrf.mxu0
  %v752 = vadd.f32 0.0, %v751
  %753 = vmatmul.bf16.gmra.mxu0 %v405
  %v754 = vpop.f32.mrf.mxu0
  %v755 = vadd.f32 0.0, %v754
  %v756 = vpop.f32.mrf.mxu0
  %v757 = vadd.f32 0.0, %v756
  %758 = vmatmul.bf16.gmra.mxu0 %v407
  %v759 = vpop.f32.mrf.mxu0
  %v760 = vadd.f32 0.0, %v759
  %v761 = vpop.f32.mrf.mxu0
  %v762 = vadd.f32 0.0, %v761
  %763 = vmatmul.bf16.gmra.mxu0 %v409
  %v764 = vpop.f32.mrf.mxu0
  %v765 = vadd.f32 0.0, %v764
  %v766 = vpop.f32.mrf.mxu0
  %v767 = vadd.f32 0.0, %v766
  %768 = vmatmul.bf16.gmra.mxu0 %v411
  %v769 = vpop.f32.mrf.mxu0
  %v770 = vadd.f32 0.0, %v769
  %v771 = vpop.f32.mrf.mxu0
  %v772 = vadd.f32 0.0, %v771
  %773 = vmatmul.bf16.gmra.mxu0 %v413
  %v774 = vpop.f32.mrf.mxu0
  %v775 = vadd.f32 0.0, %v774
  %v776 = vpop.f32.mrf.mxu0
  %777 = vdwg.mxu0
  %778 = vmatpush.bf16.msra.mxu0 %v568
  %779 = vmatpush.bf16.msra.mxu0 %v567
  %780 = vmatpush.bf16.msra.mxu0 %v566
  %781 = vmatpush.bf16.msra.mxu0 %v565
  %782 = vmatpush.bf16.msra.mxu0 %v564
  %783 = vmatpush.bf16.msra.mxu0 %v563
  %784 = vmatpush.bf16.msra.mxu0 %v562
  %785 = vmatpush.bf16.msra.mxu0 %v561
  %786 = vmatmul.bf16.gmra.mxu0 %v342
  %v787 = vpop.f32.mrf.mxu0
  %v788 = vadd.f32 %v595, %v787
  %v789 = vpop.f32.mrf.mxu0
  %v790 = vadd.f32 %v597, %v789
  %791 = vmatmul.bf16.gmra.mxu0 %v344
  %v792 = vpop.f32.mrf.mxu0
  %v793 = vadd.f32 %v600, %v792
  %v794 = vpop.f32.mrf.mxu0
  %v795 = vadd.f32 %v602, %v794
  %796 = vmatmul.bf16.gmra.mxu0 %v346
  %v797 = vpop.f32.mrf.mxu0
  %v798 = vadd.f32 %v605, %v797
  %v799 = vpop.f32.mrf.mxu0
  %v800 = vadd.f32 %v607, %v799
  %801 = vmatmul.bf16.gmra.mxu0 %v348
  %v802 = vpop.f32.mrf.mxu0
  %v803 = vadd.f32 %v610, %v802
  %v804 = vpop.f32.mrf.mxu0
  %v805 = vadd.f32 %v612, %v804
  %806 = vmatmul.bf16.gmra.mxu0 %v350
  %v807 = vpop.f32.mrf.mxu0
  %v808 = vadd.f32 %v615, %v807
  %v809 = vpop.f32.mrf.mxu0
  %v810 = vadd.f32 %v617, %v809
  %811 = vmatmul.bf16.gmra.mxu0 %v352
  %v812 = vpop.f32.mrf.mxu0
  %v813 = vadd.f32 %v620, %v812
  %v814 = vpop.f32.mrf.mxu0
  %v815 = vadd.f32 %v622, %v814
  %816 = vmatmul.bf16.gmra.mxu0 %v354
  %v817 = vpop.f32.mrf.mxu0
  %v818 = vadd.f32 %v625, %v817
  %v819 = vpop.f32.mrf.mxu0
  %v820 = vadd.f32 %v627, %v819
  %821 = vmatmul.bf16.gmra.mxu0 %v356
  %v822 = vpop.f32.mrf.mxu0
  %v823 = vadd.f32 %v630, %v822
  %v824 = vpop.f32.mrf.mxu0
  %v825 = vadd.f32 %v632, %v824
  %826 = vmatmul.bf16.gmra.mxu0 %v358
  %v827 = vpop.f32.mrf.mxu0
  %v828 = vadd.f32 %v635, %v827
  %v829 = vpop.f32.mrf.mxu0
  %v830 = vadd.f32 %v637, %v829
  %831 = vmatmul.bf16.gmra.mxu0 %v360
  %v832 = vpop.f32.mrf.mxu0
  %v833 = vadd.f32 %v640, %v832
  %v834 = vpop.f32.mrf.mxu0
  %v835 = vadd.f32 %v642, %v834
  %836 = vmatmul.bf16.gmra.mxu0 %v362
  %v837 = vpop.f32.mrf.mxu0
  %v838 = vadd.f32 %v645, %v837
  %v839 = vpop.f32.mrf.mxu0
  %v840 = vadd.f32 %v647, %v839
  %841 = vmatmul.bf16.gmra.mxu0 %v364
  %v842 = vpop.f32.mrf.mxu0
  %v843 = vadd.f32 %v650, %v842
  %v844 = vpop.f32.mrf.mxu0
  %v845 = vadd.f32 %v652, %v844
  %846 = vmatmul.bf16.gmra.mxu0 %v366
  %v847 = vpop.f32.mrf.mxu0
  %v848 = vadd.f32 %v655, %v847
  %v849 = vpop.f32.mrf.mxu0
  %v850 = vadd.f32 %v657, %v849
  %851 = vmatmul.bf16.gmra.mxu0 %v368
  %v852 = vpop.f32.mrf.mxu0
  %v853 = vadd.f32 %v660, %v852
  %v854 = vpop.f32.mrf.mxu0
  %v855 = vadd.f32 %v662, %v854
  %856 = vmatmul.bf16.gmra.mxu0 %v370
  %v857 = vpop.f32.mrf.mxu0
  %v858 = vadd.f32 %v665, %v857
  %v859 = vpop.f32.mrf.mxu0
  %v860 = vadd.f32 %v667, %v859
  %861 = vmatmul.bf16.gmra.mxu0 %v372
  %v862 = vpop.f32.mrf.mxu0
  %v863 = vadd.f32 %v670, %v862
  %v864 = vpop.f32.mrf.mxu0
  %v865 = vadd.f32 %v672, %v864
  %866 = vmatmul.bf16.gmra.mxu0 %v374
  %v867 = vpop.f32.mrf.mxu0
  %v868 = vadd.f32 %v675, %v867
  %v869 = vpop.f32.mrf.mxu0
  %v870 = vadd.f32 %v677, %v869
  %871 = vmatmul.bf16.gmra.mxu0 %v376
  %v872 = vpop.f32.mrf.mxu0
  %v873 = vadd.f32 %v680, %v872
  %v874 = vpop.f32.mrf.mxu0
  %v875 = vadd.f32 %v682, %v874
  %876 = vmatmul.bf16.gmra.mxu0 %v378
  %v877 = vpop.f32.mrf.mxu0
  %v878 = vadd.f32 %v685, %v877
  %v879 = vpop.f32.mrf.mxu0
  %v880 = vadd.f32 %v687, %v879
  %881 = vmatmul.bf16.gmra.mxu0 %v380
  %v882 = vpop.f32.mrf.mxu0
  %v883 = vadd.f32 %v690, %v882
  %v884 = vpop.f32.mrf.mxu0
  %v885 = vadd.f32 %v692, %v884
  %886 = vmatmul.bf16.gmra.mxu0 %v382
  %v887 = vpop.f32.mrf.mxu0
  %v888 = vadd.f32 %v695, %v887
  %v889 = vpop.f32.mrf.mxu0
  %v890 = vadd.f32 %v697, %v889
  %891 = vmatmul.bf16.gmra.mxu0 %v384
  %v892 = vpop.f32.mrf.mxu0
  %v893 = vadd.f32 %v700, %v892
  %v894 = vpop.f32.mrf.mxu0
  %v895 = vadd.f32 %v702, %v894
  %896 = vmatmul.bf16.gmra.mxu0 %v386
  %v897 = vpop.f32.mrf.mxu0
  %v898 = vadd.f32 %v705, %v897
  %v899 = vpop.f32.mrf.mxu0
  %v900 = vadd.f32 %v707, %v899
  %901 = vmatmul.bf16.gmra.mxu0 %v388
  %v902 = vpop.f32.mrf.mxu0
  %v903 = vadd.f32 %v710, %v902
  %v904 = vpop.f32.mrf.mxu0
  %v905 = vadd.f32 %v712, %v904
  %906 = vmatmul.bf16.gmra.mxu0 %v390
  %v907 = vpop.f32.mrf.mxu0
  %v908 = vadd.f32 %v715, %v907
  %v909 = vpop.f32.mrf.mxu0
  %v910 = vadd.f32 %v717, %v909
  %911 = vmatmul.bf16.gmra.mxu0 %v392
  %v912 = vpop.f32.mrf.mxu0
  %v913 = vadd.f32 %v720, %v912
  %v914 = vpop.f32.mrf.mxu0
  %v915 = vadd.f32 %v722, %v914
  %916 = vmatmul.bf16.gmra.mxu0 %v394
  %v917 = vpop.f32.mrf.mxu0
  %v918 = vadd.f32 %v725, %v917
  %v919 = vpop.f32.mrf.mxu0
  %v920 = vadd.f32 %v727, %v919
  %921 = vmatmul.bf16.gmra.mxu0 %v396
  %v922 = vpop.f32.mrf.mxu0
  %v923 = vadd.f32 %v730, %v922
  %v924 = vpop.f32.mrf.mxu0
  %v925 = vadd.f32 %v732, %v924
  %926 = vmatmul.bf16.gmra.mxu0 %v398
  %v927 = vpop.f32.mrf.mxu0
  %v928 = vadd.f32 %v735, %v927
  %v929 = vpop.f32.mrf.mxu0
  %v930 = vadd.f32 %v737, %v929
  %931 = vmatmul.bf16.gmra.mxu0 %v400
  %v932 = vpop.f32.mrf.mxu0
  %v933 = vadd.f32 %v740, %v932
  %v934 = vpop.f32.mrf.mxu0
  %v935 = vadd.f32 %v742, %v934
  %936 = vmatmul.bf16.gmra.mxu0 %v402
  %v937 = vpop.f32.mrf.mxu0
  %v938 = vadd.f32 %v745, %v937
  %v939 = vpop.f32.mrf.mxu0
  %v940 = vadd.f32 %v747, %v939
  %941 = vmatmul.bf16.gmra.mxu0 %v404
  %v942 = vpop.f32.mrf.mxu0
  %v943 = vadd.f32 %v750, %v942
  %v944 = vpop.f32.mrf.mxu0
  %v945 = vadd.f32 %v752, %v944
  %946 = vmatmul.bf16.gmra.mxu0 %v406
  %v947 = vpop.f32.mrf.mxu0
  %v948 = vadd.f32 %v755, %v947
  %v949 = vpop.f32.mrf.mxu0
  %v950 = vadd.f32 %v757, %v949
  %951 = vmatmul.bf16.gmra.mxu0 %v408
  %v952 = vpop.f32.mrf.mxu0
  %v953 = vadd.f32 %v760, %v952
  %v954 = vpop.f32.mrf.mxu0
  %v955 = vadd.f32 %v762, %v954
  %956 = vmatmul.bf16.gmra.mxu0 %v410
  %v957 = vpop.f32.mrf.mxu0
  %v958 = vadd.f32 %v765, %v957
  %v959 = vpop.f32.mrf.mxu0
  %v960 = vadd.f32 %v767, %v959
  %961 = vmatmul.bf16.gmra.mxu0 %v412
  %v962 = vpop.f32.mrf.mxu0
  %v963 = vadd.f32 %v770, %v962
  %v964 = vpop.f32.mrf.mxu0
  %v965 = vadd.f32 %v772, %v964
  %966 = vmatmul.bf16.gmra.mxu0 %v414
  %v967 = vpop.f32.mrf.mxu0
  %v968 = vadd.f32 %v775, %v967
  %v969 = vpop.f32.mrf.mxu0
  %970 = vdwg.mxu0
  %v971 = vld [vmem:[%s2] sm:$0x1]
  %v973 = vperm.slane %v971, 0
  %v975 = vmul.f32 %v788, %v973
  %v976 = vmul.f32 %v790, %v973
  %v977 = vmul.f32 %v793, %v973
  %v978 = vmul.f32 %v795, %v973
  %v979 = vmul.f32 %v798, %v973
  %v980 = vmul.f32 %v800, %v973
  %v981 = vmul.f32 %v803, %v973
  %v982 = vmul.f32 %v805, %v973
  %v983 = vmul.f32 %v808, %v973
  %v984 = vmul.f32 %v810, %v973
  %v985 = vmul.f32 %v813, %v973
  %v986 = vmul.f32 %v815, %v973
  %v987 = vmul.f32 %v818, %v973
  %v988 = vmul.f32 %v820, %v973
  %v989 = vmul.f32 %v823, %v973
  %v990 = vmul.f32 %v825, %v973
  %v991 = vmul.f32 %v828, %v973
  %v992 = vmul.f32 %v830, %v973
  %v993 = vmul.f32 %v833, %v973
  %v994 = vmul.f32 %v835, %v973
  %v995 = vmul.f32 %v838, %v973
  %v996 = vmul.f32 %v840, %v973
  %v997 = vmul.f32 %v843, %v973
  %v998 = vmul.f32 %v845, %v973
  %v999 = vmul.f32 %v848, %v973
  %v1000 = vmul.f32 %v850, %v973
  %v1001 = vmul.f32 %v853, %v973
  %v1002 = vmul.f32 %v855, %v973
  %v1003 = vmul.f32 %v858, %v973
  %v1004 = vmul.f32 %v860, %v973
  %v1005 = vmul.f32 %v863, %v973
  %v1006 = vmul.f32 %v865, %v973
  %v1007 = vmul.f32 %v868, %v973
  %v1008 = vmul.f32 %v870, %v973
  %v1009 = vmul.f32 %v873, %v973
  %v1010 = vmul.f32 %v875, %v973
  %v1011 = vmul.f32 %v878, %v973
  %v1012 = vmul.f32 %v880, %v973
  %v1013 = vmul.f32 %v883, %v973
  %v1014 = vmul.f32 %v885, %v973
  %v1015 = vmul.f32 %v888, %v973
  %v1016 = vmul.f32 %v890, %v973
  %v1017 = vmul.f32 %v893, %v973
  %v1018 = vmul.f32 %v895, %v973
  %v1019 = vmul.f32 %v898, %v973
  %v1020 = vmul.f32 %v900, %v973
  %v1021 = vmul.f32 %v903, %v973
  %v1022 = vmul.f32 %v905, %v973
  %v1023 = vmul.f32 %v908, %v973
  %v1024 = vmul.f32 %v910, %v973
  %v1025 = vmul.f32 %v913, %v973
  %v1026 = vmul.f32 %v915, %v973
  %v1027 = vmul.f32 %v918, %v973
  %v1028 = vmul.f32 %v920, %v973
  %v1029 = vmul.f32 %v923, %v973
  %v1030 = vmul.f32 %v925, %v973
  %v1031 = vmul.f32 %v928, %v973
  %v1032 = vmul.f32 %v930, %v973
  %v1033 = vmul.f32 %v933, %v973
  %v1034 = vmul.f32 %v935, %v973
  %v1035 = vmul.f32 %v938, %v973
  %v1036 = vmul.f32 %v940, %v973
  %v1037 = vmul.f32 %v943, %v973
  %v1038 = vmul.f32 %v945, %v973
  %v1039 = vmul.f32 %v948, %v973
  %v1040 = vmul.f32 %v950, %v973
  %v1041 = vmul.f32 %v953, %v973
  %v1042 = vmul.f32 %v955, %v973
  %v1043 = vmul.f32 %v958, %v973
  %v1044 = vmul.f32 %v960, %v973
  %v1045 = vmul.f32 %v963, %v973
  %v1046 = vmul.f32 %v965, %v973
  %v1047 = vmul.f32 %v968, %v973
  %v1048 = vld [vmem:[%s3] sm:$0x1]
  %v1050 = vperm.slane %v1048, 0
  %v1052 = vadd.f32 %v975, %v1050
  %v1053 = vadd.f32 %v976, %v1050
  %v1054 = vadd.f32 %v977, %v1050
  %v1055 = vadd.f32 %v978, %v1050
  %v1056 = vadd.f32 %v979, %v1050
  %v1057 = vadd.f32 %v980, %v1050
  %v1058 = vadd.f32 %v981, %v1050
  %v1059 = vadd.f32 %v982, %v1050
  %v1060 = vadd.f32 %v983, %v1050
  %v1061 = vadd.f32 %v984, %v1050
  %v1062 = vadd.f32 %v985, %v1050
  %v1063 = vadd.f32 %v986, %v1050
  %v1064 = vadd.f32 %v987, %v1050
  %v1065 = vadd.f32 %v988, %v1050
  %v1066 = vadd.f32 %v989, %v1050
  %v1067 = vadd.f32 %v990, %v1050
  %v1068 = vadd.f32 %v991, %v1050
  %v1069 = vadd.f32 %v992, %v1050
  %v1070 = vadd.f32 %v993, %v1050
  %v1071 = vadd.f32 %v994, %v1050
  %v1072 = vadd.f32 %v995, %v1050
  %v1073 = vadd.f32 %v996, %v1050
  %v1074 = vadd.f32 %v997, %v1050
  %v1075 = vadd.f32 %v998, %v1050
  %v1076 = vadd.f32 %v999, %v1050
  %v1077 = vadd.f32 %v1000, %v1050
  %v1078 = vadd.f32 %v1001, %v1050
  %v1079 = vadd.f32 %v1002, %v1050
  %v1080 = vadd.f32 %v1003, %v1050
  %v1081 = vadd.f32 %v1004, %v1050
  %v1082 = vadd.f32 %v1005, %v1050
  %v1083 = vadd.f32 %v1006, %v1050
  %v1084 = vadd.f32 %v1007, %v1050
  %v1085 = vadd.f32 %v1008, %v1050
  %v1086 = vadd.f32 %v1009, %v1050
  %v1087 = vadd.f32 %v1010, %v1050
  %v1088 = vadd.f32 %v1011, %v1050
  %v1089 = vadd.f32 %v1012, %v1050
  %v1090 = vadd.f32 %v1013, %v1050
  %v1091 = vadd.f32 %v1014, %v1050
  %v1092 = vadd.f32 %v1015, %v1050
  %v1093 = vadd.f32 %v1016, %v1050
  %v1094 = vadd.f32 %v1017, %v1050
  %v1095 = vadd.f32 %v1018, %v1050
  %v1096 = vadd.f32 %v1019, %v1050
  %v1097 = vadd.f32 %v1020, %v1050
  %v1098 = vadd.f32 %v1021, %v1050
  %v1099 = vadd.f32 %v1022, %v1050
  %v1100 = vadd.f32 %v1023, %v1050
  %v1101 = vadd.f32 %v1024, %v1050
  %v1102 = vadd.f32 %v1025, %v1050
  %v1103 = vadd.f32 %v1026, %v1050
  %v1104 = vadd.f32 %v1027, %v1050
  %v1105 = vadd.f32 %v1028, %v1050
  %v1106 = vadd.f32 %v1029, %v1050
  %v1107 = vadd.f32 %v1030, %v1050
  %v1108 = vadd.f32 %v1031, %v1050
  %v1109 = vadd.f32 %v1032, %v1050
  %v1110 = vadd.f32 %v1033, %v1050
  %v1111 = vadd.f32 %v1034, %v1050
  %v1112 = vadd.f32 %v1035, %v1050
  %v1113 = vadd.f32 %v1036, %v1050
  %v1114 = vadd.f32 %v1037, %v1050
  %v1115 = vadd.f32 %v1038, %v1050
  %v1116 = vadd.f32 %v1039, %v1050
  %v1117 = vadd.f32 %v1040, %v1050
  %v1118 = vadd.f32 %v1041, %v1050
  %v1119 = vadd.f32 %v1042, %v1050
  %v1120 = vadd.f32 %v1043, %v1050
  %v1121 = vadd.f32 %v1044, %v1050
  %v1122 = vadd.f32 %v1045, %v1050
  %v1123 = vadd.f32 %v1046, %v1050
  %v1124 = vadd.f32 %v1047, %v1050
  %v1125 = vmax.f32 %v1052, 0.0
  %v1126 = vmax.f32 %v1053, 0.0
  %v1127 = vmax.f32 %v1054, 0.0
  %v1128 = vmax.f32 %v1055, 0.0
  %v1129 = vmax.f32 %v1056, 0.0
  %v1130 = vmax.f32 %v1057, 0.0
  %v1131 = vmax.f32 %v1058, 0.0
  %v1132 = vmax.f32 %v1059, 0.0
  %v1133 = vmax.f32 %v1060, 0.0
  %v1134 = vmax.f32 %v1061, 0.0
  %v1135 = vmax.f32 %v1062, 0.0
  %v1136 = vmax.f32 %v1063, 0.0
  %v1137 = vmax.f32 %v1064, 0.0
  %v1138 = vmax.f32 %v1065, 0.0
  %v1139 = vmax.f32 %v1066, 0.0
  %v1140 = vmax.f32 %v1067, 0.0
  %v1141 = vmax.f32 %v1068, 0.0
  %v1142 = vmax.f32 %v1069, 0.0
  %v1143 = vmax.f32 %v1070, 0.0
  %v1144 = vmax.f32 %v1071, 0.0
  %v1145 = vmax.f32 %v1072, 0.0
  %v1146 = vmax.f32 %v1073, 0.0
  %v1147 = vmax.f32 %v1074, 0.0
  %v1148 = vmax.f32 %v1075, 0.0
  %v1149 = vmax.f32 %v1076, 0.0
  %v1150 = vmax.f32 %v1077, 0.0
  %v1151 = vmax.f32 %v1078, 0.0
  %v1152 = vmax.f32 %v1079, 0.0
  %v1153 = vmax.f32 %v1080, 0.0
  %v1154 = vmax.f32 %v1081, 0.0
  %v1155 = vmax.f32 %v1082, 0.0
  %v1156 = vmax.f32 %v1083, 0.0
  %v1157 = vmax.f32 %v1084, 0.0
  %v1158 = vmax.f32 %v1085, 0.0
  %v1159 = vmax.f32 %v1086, 0.0
  %v1160 = vmax.f32 %v1087, 0.0
  %v1161 = vmax.f32 %v1088, 0.0
  %v1162 = vmax.f32 %v1089, 0.0
  %v1163 = vmax.f32 %v1090, 0.0
  %v1164 = vmax.f32 %v1091, 0.0
  %v1165 = vmax.f32 %v1092, 0.0
  %v1166 = vmax.f32 %v1093, 0.0
  %v1167 = vmax.f32 %v1094, 0.0
  %v1168 = vmax.f32 %v1095, 0.0
  %v1169 = vmax.f32 %v1096, 0.0
  %v1170 = vmax.f32 %v1097, 0.0
  %v1171 = vmax.f32 %v1098, 0.0
  %v1172 = vmax.f32 %v1099, 0.0
  %v1173 = vmax.f32 %v1100, 0.0
  %v1174 = vmax.f32 %v1101, 0.0
  %v1175 = vmax.f32 %v1102, 0.0
  %v1176 = vmax.f32 %v1103, 0.0
  %v1177 = vmax.f32 %v1104, 0.0
  %v1178 = vmax.f32 %v1105, 0.0
  %v1179 = vmax.f32 %v1106, 0.0
  %v1180 = vmax.f32 %v1107, 0.0
  %v1181 = vmax.f32 %v1108, 0.0
  %v1182 = vmax.f32 %v1109, 0.0
  %v1183 = vmax.f32 %v1110, 0.0
  %v1184 = vmax.f32 %v1111, 0.0
  %v1185 = vmax.f32 %v1112, 0.0
  %v1186 = vmax.f32 %v1113, 0.0
  %v1187 = vmax.f32 %v1114, 0.0
  %v1188 = vmax.f32 %v1115, 0.0
  %v1189 = vmax.f32 %v1116, 0.0
  %v1190 = vmax.f32 %v1117, 0.0
  %v1191 = vmax.f32 %v1118, 0.0
  %v1192 = vmax.f32 %v1119, 0.0
  %v1193 = vmax.f32 %v1120, 0.0
  %v1194 = vmax.f32 %v1121, 0.0
  %v1195 = vmax.f32 %v1122, 0.0
  %v1196 = vmax.f32 %v1123, 0.0
  %v1197 = vmax.f32 %v1124, 0.0
  %v1198 = vpack.c.bf16 %v1125, %v1125
  %v1199 = vpack.c.bf16 %v1126, %v1126
  %v1200 = vpack.c.bf16 %v1127, %v1127
  %v1201 = vpack.c.bf16 %v1128, %v1128
  %v1202 = vpack.c.bf16 %v1129, %v1129
  %v1203 = vpack.c.bf16 %v1130, %v1130
  %v1204 = vpack.c.bf16 %v1131, %v1131
  %v1205 = vpack.c.bf16 %v1132, %v1132
  %v1206 = vpack.c.bf16 %v1133, %v1133
  %v1207 = vpack.c.bf16 %v1134, %v1134
  %v1208 = vpack.c.bf16 %v1135, %v1135
  %v1209 = vpack.c.bf16 %v1136, %v1136
  %v1210 = vpack.c.bf16 %v1137, %v1137
  %v1211 = vpack.c.bf16 %v1138, %v1138
  %v1212 = vpack.c.bf16 %v1139, %v1139
  %v1213 = vpack.c.bf16 %v1140, %v1140
  %v1214 = vpack.c.bf16 %v1141, %v1141
  %v1215 = vpack.c.bf16 %v1142, %v1142
  %v1216 = vpack.c.bf16 %v1143, %v1143
  %v1217 = vpack.c.bf16 %v1144, %v1144
  %v1218 = vpack.c.bf16 %v1145, %v1145
  %v1219 = vpack.c.bf16 %v1146, %v1146
  %v1220 = vpack.c.bf16 %v1147, %v1147
  %v1221 = vpack.c.bf16 %v1148, %v1148
  %v1222 = vpack.c.bf16 %v1149, %v1149
  %v1223 = vpack.c.bf16 %v1150, %v1150
  %v1224 = vpack.c.bf16 %v1151, %v1151
  %v1225 = vpack.c.bf16 %v1152, %v1152
  %v1226 = vpack.c.bf16 %v1153, %v1153
  %v1227 = vpack.c.bf16 %v1154, %v1154
  %v1228 = vpack.c.bf16 %v1155, %v1155
  %v1229 = vpack.c.bf16 %v1156, %v1156
  %v1230 = vpack.c.bf16 %v1157, %v1157
  %v1231 = vpack.c.bf16 %v1158, %v1158
  %v1232 = vpack.c.bf16 %v1159, %v1159
  %v1233 = vpack.c.bf16 %v1160, %v1160
  %v1234 = vpack.c.bf16 %v1161, %v1161
  %v1235 = vpack.c.bf16 %v1162, %v1162
  %v1236 = vpack.c.bf16 %v1163, %v1163
  %v1237 = vpack.c.bf16 %v1164, %v1164
  %v1238 = vpack.c.bf16 %v1165, %v1165
  %v1239 = vpack.c.bf16 %v1166, %v1166
  %v1240 = vpack.c.bf16 %v1167, %v1167
  %v1241 = vpack.c.bf16 %v1168, %v1168
  %v1242 = vpack.c.bf16 %v1169, %v1169
  %v1243 = vpack.c.bf16 %v1170, %v1170
  %v1244 = vpack.c.bf16 %v1171, %v1171
  %v1245 = vpack.c.bf16 %v1172, %v1172
  %v1246 = vpack.c.bf16 %v1173, %v1173
  %v1247 = vpack.c.bf16 %v1174, %v1174
  %v1248 = vpack.c.bf16 %v1175, %v1175
  %v1249 = vpack.c.bf16 %v1176, %v1176
  %v1250 = vpack.c.bf16 %v1177, %v1177
  %v1251 = vpack.c.bf16 %v1178, %v1178
  %v1252 = vpack.c.bf16 %v1179, %v1179
  %v1253 = vpack.c.bf16 %v1180, %v1180
  %v1254 = vpack.c.bf16 %v1181, %v1181
  %v1255 = vpack.c.bf16 %v1182, %v1182
  %v1256 = vpack.c.bf16 %v1183, %v1183
  %v1257 = vpack.c.bf16 %v1184, %v1184
  %v1258 = vpack.c.bf16 %v1185, %v1185
  %v1259 = vpack.c.bf16 %v1186, %v1186
  %v1260 = vpack.c.bf16 %v1187, %v1187
  %v1261 = vpack.c.bf16 %v1188, %v1188
  %v1262 = vpack.c.bf16 %v1189, %v1189
  %v1263 = vpack.c.bf16 %v1190, %v1190
  %v1264 = vpack.c.bf16 %v1191, %v1191
  %v1265 = vpack.c.bf16 %v1192, %v1192
  %v1266 = vpack.c.bf16 %v1193, %v1193
  %v1267 = vpack.c.bf16 %v1194, %v1194
  %v1268 = vpack.c.bf16 %v1195, %v1195
  %v1269 = vpack.c.bf16 %v1196, %v1196
  %v1270 = vpack.c.bf16 %v1197, %v1197
  %1271 = vst [vmem:[%s4] sm:$0xf] %v1198
  %1272 = vst [vmem:[%s4 + $0x4] sm:$0xf] %v1199
  %1273 = vst [vmem:[%s4 + $0x8] sm:$0xf] %v1200
  %1274 = vst [vmem:[%s4 + $0xc] sm:$0xf] %v1201
  %1275 = vst [vmem:[%s4 + $0x10] sm:$0xf] %v1202
  %1276 = vst [vmem:[%s4 + $0x14] sm:$0xf] %v1203
  %1277 = vst [vmem:[%s4 + $0x18] sm:$0xf] %v1204
  %1278 = vst [vmem:[%s4 + $0x1c] sm:$0xf] %v1205
  %1279 = vst [vmem:[%s4 + $0x20] sm:$0xf] %v1206
  %1280 = vst [vmem:[%s4 + $0x24] sm:$0xf] %v1207
  %1281 = vst [vmem:[%s4 + $0x28] sm:$0xf] %v1208
  %1282 = vst [vmem:[%s4 + $0x2c] sm:$0xf] %v1209
  %1283 = vst [vmem:[%s4 + $0x30] sm:$0xf] %v1210
  %1284 = vst [vmem:[%s4 + $0x34] sm:$0xf] %v1211
  %1285 = vst [vmem:[%s4 + $0x38] sm:$0xf] %v1212
  %1286 = vst [vmem:[%s4 + $0x3c] sm:$0xf] %v1213
  %1287 = vst [vmem:[%s4 + $0x40] sm:$0xf] %v1214
  %1288 = vst [vmem:[%s4 + $0x44] sm:$0xf] %v1215
  %1289 = vst [vmem:[%s4 + $0x48] sm:$0xf] %v1216
  %1290 = vst [vmem:[%s4 + $0x4c] sm:$0xf] %v1217
  %1291 = vst [vmem:[%s4 + $0x50] sm:$0xf] %v1218
  %1292 = vst [vmem:[%s4 + $0x54] sm:$0xf] %v1219
  %1293 = vst [vmem:[%s4 + $0x58] sm:$0xf] %v1220
  %1294 = vst [vmem:[%s4 + $0x5c] sm:$0xf] %v1221
  %1295 = vst [vmem:[%s4 + $0x60] sm:$0xf] %v1222
  %1296 = vst [vmem:[%s4 + $0x64] sm:$0xf] %v1223
  %1297 = vst [vmem:[%s4 + $0x68] sm:$0xf] %v1224
  %1298 = vst [vmem:[%s4 + $0x6c] sm:$0xf] %v1225
  %1299 = vst [vmem:[%s4 + $0x70] sm:$0xf] %v1226
  %1300 = vst [vmem:[%s4 + $0x74] sm:$0xf] %v1227
  %1301 = vst [vmem:[%s4 + $0x78] sm:$0xf] %v1228
  %1302 = vst [vmem:[%s4 + $0x7c] sm:$0xf] %v1229
  %1303 = vst [vmem:[%s4 + $0x80] sm:$0xf] %v1230
  %1304 = vst [vmem:[%s4 + $0x84] sm:$0xf] %v1231
  %1305 = vst [vmem:[%s4 + $0x88] sm:$0xf] %v1232
  %1306 = vst [vmem:[%s4 + $0x8c] sm:$0xf] %v1233
  %1307 = vst [vmem:[%s4 + $0x90] sm:$0xf] %v1234
  %1308 = vst [vmem:[%s4 + $0x94] sm:$0xf] %v1235
  %1309 = vst [vmem:[%s4 + $0x98] sm:$0xf] %v1236
  %1310 = vst [vmem:[%s4 + $0x9c] sm:$0xf] %v1237
  %1311 = vst [vmem:[%s4 + $0xa0] sm:$0xf] %v1238
  %1312 = vst [vmem:[%s4 + $0xa4] sm:$0xf] %v1239
  %1313 = vst [vmem:[%s4 + $0xa8] sm:$0xf] %v1240
  %1314 = vst [vmem:[%s4 + $0xac] sm:$0xf] %v1241
  %1315 = vst [vmem:[%s4 + $0xb0] sm:$0xf] %v1242
  %1316 = vst [vmem:[%s4 + $0xb4] sm:$0xf] %v1243
  %1317 = vst [vmem:[%s4 + $0xb8] sm:$0xf] %v1244
  %1318 = vst [vmem:[%s4 + $0xbc] sm:$0xf] %v1245
  %1319 = vst [vmem:[%s4 + $0xc0] sm:$0xf] %v1246
  %1320 = vst [vmem:[%s4 + $0xc4] sm:$0xf] %v1247
  %1321 = vst [vmem:[%s4 + $0xc8] sm:$0xf] %v1248
  %1322 = vst [vmem:[%s4 + $0xcc] sm:$0xf] %v1249
  %1323 = vst [vmem:[%s4 + $0xd0] sm:$0xf] %v1250
  %1324 = vst [vmem:[%s4 + $0xd4] sm:$0xf] %v1251
  %1325 = vst [vmem:[%s4 + $0xd8] sm:$0xf] %v1252
  %1326 = vst [vmem:[%s4 + $0xdc] sm:$0xf] %v1253
  %1327 = vst [vmem:[%s4 + $0xe0] sm:$0xf] %v1254
  %1328 = vst [vmem:[%s4 + $0xe4] sm:$0xf] %v1255
  %1329 = vst [vmem:[%s4 + $0xe8] sm:$0xf] %v1256
  %1330 = vst [vmem:[%s4 + $0xec] sm:$0xf] %v1257
  %1331 = vst [vmem:[%s4 + $0xf0] sm:$0xf] %v1258
  %1332 = vst [vmem:[%s4 + $0xf4] sm:$0xf] %v1259
  %1333 = vst [vmem:[%s4 + $0xf8] sm:$0xf] %v1260
  %1334 = vst [vmem:[%s4 + $0xfc] sm:$0xf] %v1261
  %1335 = vst [vmem:[%s4 + $0x100] sm:$0xf] %v1262
  %1336 = vst [vmem:[%s4 + $0x104] sm:$0xf] %v1263
  %1337 = vst [vmem:[%s4 + $0x108] sm:$0xf] %v1264
  %1338 = vst [vmem:[%s4 + $0x10c] sm:$0xf] %v1265
  %1339 = vst [vmem:[%s4 + $0x110] sm:$0xf] %v1266
  %1340 = vst [vmem:[%s4 + $0x114] sm:$0xf] %v1267
  %1341 = vst [vmem:[%s4 + $0x118] sm:$0xf] %v1268
  %1342 = vst [vmem:[%s4 + $0x11c] sm:$0xf] %v1269
  %1343 = vst [vmem:[%s4 + $0x120] sm:$0xf] %v1270
  // Predicated region
  $region18: #{generator_forward.8} parent=0 // pred_check
    _
  $region19: #{generator_forward.8} parent=0 // pred_check_branch
    %1345 = sbr.rel (0) target = $region21
  $region20: #{generator_forward.8} parent=0 // pred_region
    _
  $region21: #{generator_forward.8} parent=0 // pred_fallthru
    _
  // Predicated region
  $region22: #{generator_forward.8} parent=0 // pred_check
    _
  $region23: #{generator_forward.8} parent=0 // pred_check_branch
    %1347 = sbr.rel (0) target = $region25
  $region24: #{generator_forward.8} parent=0 // pred_region
    _
  $region25: #{generator_forward.8} parent=0 // pred_fallthru
    _

// kernel: generator_forward.9
$region0: #{generator_forward.9}
  #allocation0 [shape = 'u32[]', space=smem, size = 0x4, offset = 0x4, fixed_abs, tag = 'smem constant byte address 0x4 - core index']
  #allocation1 [shape = 'u32[72,128]{1,0:T(1,128)}', space=vmem, size = 0x9000, scoped, tag = 'internal scratch']
  %s0 = inlined_call_operand.vmem [shape: bf16[2184,128], index: 0, kind: input, shape index: {}]
  %s1 = inlined_call_operand.vmem [shape: bf16[128,128], index: 1, kind: input, shape index: {}]
  %s2 = inlined_call_operand.vmem [shape: f32[1,128], index: 2, kind: input, shape index: {}]
  %s3 = inlined_call_operand.vmem [shape: f32[1,128], index: 3, kind: input, shape index: {}]
  %s4 = inlined_call_operand.vmem [shape: bf16[2184,128], index: 4, kind: output, shape index: {}]
  %s5 = sld [smem:[#allocation0]]
  $region26: #{generator_forward.9} parent=0
    _
  %s7 = ssub.s32 1, %s5
  %s8 = scalar_select 0, %s7, %s5
  // Predicated region
  $region2: #{generator_forward.9} parent=0 // pred_check
    _
  $region3: #{generator_forward.9} parent=0 // pred_check_branch
    %10 = sbr.rel (0) target = $region5
  $region4: #{generator_forward.9} parent=0 // pred_region
    _
  $region5: #{generator_forward.9} parent=0 // pred_fallthru
    _
  // Predicated region
  $region6: #{generator_forward.9} parent=0 // pred_check
    _
  $region7: #{generator_forward.9} parent=0 // pred_check_branch
    %12 = sbr.rel (0) target = $region9
  $region8: #{generator_forward.9} parent=0 // pred_region
    _
  $region9: #{generator_forward.9} parent=0 // pred_fallthru
    _
  // Predicated region
  $region10: #{generator_forward.9} parent=0 // pred_check
    _
  $region11: #{generator_forward.9} parent=0 // pred_check_branch
    %14 = sbr.rel (0) target = $region13
  $region12: #{generator_forward.9} parent=0 // pred_region
    _
  $region13: #{generator_forward.9} parent=0 // pred_fallthru
    _
  // Predicated region
  $region14: #{generator_forward.9} parent=0 // pred_check
    _
  $region15: #{generator_forward.9} parent=0 // pred_check_branch
    %16 = sbr.rel (0) target = $region17
  $region16: #{generator_forward.9} parent=0 // pred_region
    _
  $region17: #{generator_forward.9} parent=0 // pred_fallthru
    _
  %v17 = vld [vmem:[%s0] sm:$0xf]
  %v18 = vld [vmem:[%s0 + $0x4] sm:$0xf]
  %v19 = vld [vmem:[%s0 + $0x8] sm:$0xf]
  %v20 = vld [vmem:[%s0 + $0xc] sm:$0xf]
  %v21 = vld [vmem:[%s0 + $0x10] sm:$0xf]
  %v22 = vld [vmem:[%s0 + $0x14] sm:$0xf]
  %v23 = vld [vmem:[%s0 + $0x18] sm:$0xf]
  %v24 = vld [vmem:[%s0 + $0x1c] sm:$0xf]
  %v25 = vld [vmem:[%s0 + $0x20] sm:$0xf]
  %v26 = vld [vmem:[%s0 + $0x24] sm:$0xf]
  %v27 = vld [vmem:[%s0 + $0x28] sm:$0xf]
  %v28 = vld [vmem:[%s0 + $0x2c] sm:$0xf]
  %v29 = vld [vmem:[%s0 + $0x30] sm:$0xf]
  %v30 = vld [vmem:[%s0 + $0x34] sm:$0xf]
  %v31 = vld [vmem:[%s0 + $0x38] sm:$0xf]
  %v32 = vld [vmem:[%s0 + $0x3c] sm:$0xf]
  %v33 = vld [vmem:[%s0 + $0x40] sm:$0xf]
  %v34 = vld [vmem:[%s0 + $0x44] sm:$0xf]
  %v35 = vld [vmem:[%s0 + $0x48] sm:$0xf]
  %v36 = vld [vmem:[%s0 + $0x4c] sm:$0xf]
  %v37 = vld [vmem:[%s0 + $0x50] sm:$0xf]
  %v38 = vld [vmem:[%s0 + $0x54] sm:$0xf]
  %v39 = vld [vmem:[%s0 + $0x58] sm:$0xf]
  %v40 = vld [vmem:[%s0 + $0x5c] sm:$0xf]
  %v41 = vld [vmem:[%s0 + $0x60] sm:$0xf]
  %v42 = vld [vmem:[%s0 + $0x64] sm:$0xf]
  %v43 = vld [vmem:[%s0 + $0x68] sm:$0xf]
  %v44 = vld [vmem:[%s0 + $0x6c] sm:$0xf]
  %v45 = vld [vmem:[%s0 + $0x70] sm:$0xf]
  %v46 = vld [vmem:[%s0 + $0x74] sm:$0xf]
  %v47 = vld [vmem:[%s0 + $0x78] sm:$0xf]
  %v48 = vld [vmem:[%s0 + $0x7c] sm:$0xf]
  %v49 = vld [vmem:[%s0 + $0x80] sm:$0xf]
  %v50 = vld [vmem:[%s0 + $0x84] sm:$0xf]
  %v51 = vld [vmem:[%s0 + $0x88] sm:$0xf]
  %v52 = vld [vmem:[%s0 + $0x8c] sm:$0xf]
  %v53 = vld [vmem:[%s0 + $0x90] sm:$0xf]
  %v54 = vld [vmem:[%s0 + $0x94] sm:$0xf]
  %v55 = vld [vmem:[%s0 + $0x98] sm:$0xf]
  %v56 = vld [vmem:[%s0 + $0x9c] sm:$0xf]
  %v57 = vld [vmem:[%s0 + $0xa0] sm:$0xf]
  %v58 = vld [vmem:[%s0 + $0xa4] sm:$0xf]
  %v59 = vld [vmem:[%s0 + $0xa8] sm:$0xf]
  %v60 = vld [vmem:[%s0 + $0xac] sm:$0xf]
  %v61 = vld [vmem:[%s0 + $0xb0] sm:$0xf]
  %v62 = vld [vmem:[%s0 + $0xb4] sm:$0xf]
  %v63 = vld [vmem:[%s0 + $0xb8] sm:$0xf]
  %v64 = vld [vmem:[%s0 + $0xbc] sm:$0xf]
  %v65 = vld [vmem:[%s0 + $0xc0] sm:$0xf]
  %v66 = vld [vmem:[%s0 + $0xc4] sm:$0xf]
  %v67 = vld [vmem:[%s0 + $0xc8] sm:$0xf]
  %v68 = vld [vmem:[%s0 + $0xcc] sm:$0xf]
  %v69 = vld [vmem:[%s0 + $0xd0] sm:$0xf]
  %v70 = vld [vmem:[%s0 + $0xd4] sm:$0xf]
  %v71 = vld [vmem:[%s0 + $0xd8] sm:$0xf]
  %v72 = vld [vmem:[%s0 + $0xdc] sm:$0xf]
  %v73 = vld [vmem:[%s0 + $0xe0] sm:$0xf]
  %v74 = vld [vmem:[%s0 + $0xe4] sm:$0xf]
  %v75 = vld [vmem:[%s0 + $0xe8] sm:$0xf]
  %v76 = vld [vmem:[%s0 + $0xec] sm:$0xf]
  %v77 = vld [vmem:[%s0 + $0xf0] sm:$0xf]
  %v78 = vld [vmem:[%s0 + $0xf4] sm:$0xf]
  %v79 = vld [vmem:[%s0 + $0xf8] sm:$0xf]
  %v80 = vld [vmem:[%s0 + $0xfc] sm:$0xf]
  %v81 = vld [vmem:[%s0 + $0x100] sm:$0xf]
  %v82 = vld [vmem:[%s0 + $0x104] sm:$0xf]
  %v83 = vld [vmem:[%s0 + $0x108] sm:$0xf]
  %v84 = vld [vmem:[%s0 + $0x10c] sm:$0xf]
  %v85 = vld [vmem:[%s0 + $0x110] sm:$0xf]
  %v86 = vld [vmem:[%s0 + $0x114] sm:$0xf]
  %v87 = vld [vmem:[%s0 + $0x118] sm:$0xf]
  %v88 = vld [vmem:[%s0 + $0x11c] sm:$0xf]
  %v89 = vld [vmem:[%s0 + $0x120] sm:$0xf]
  %v90 = vld [vmem:[%s0 + $0x124] sm:$0xf]
  %v91 = vld [vmem:[%s0 + $0x128] sm:$0xf]
  %v92 = vld [vmem:[%s0 + $0x12c] sm:$0xf]
  %v93 = vld [vmem:[%s0 + $0x130] sm:$0xf]
  %v94 = vld [vmem:[%s0 + $0x134] sm:$0xf]
  %v95 = vld [vmem:[%s0 + $0x138] sm:$0xf]
  %v96 = vld [vmem:[%s0 + $0x13c] sm:$0xf]
  %v97 = vld [vmem:[%s0 + $0x140] sm:$0xf]
  %v98 = vld [vmem:[%s0 + $0x144] sm:$0xf]
  %v99 = vld [vmem:[%s0 + $0x148] sm:$0xf]
  %v100 = vld [vmem:[%s0 + $0x14c] sm:$0xf]
  %v101 = vld [vmem:[%s0 + $0x150] sm:$0xf]
  %v102 = vld [vmem:[%s0 + $0x154] sm:$0xf]
  %v103 = vld [vmem:[%s0 + $0x158] sm:$0xf]
  %v104 = vld [vmem:[%s0 + $0x15c] sm:$0xf]
  %v105 = vld [vmem:[%s0 + $0x160] sm:$0xf]
  %v106 = vld [vmem:[%s0 + $0x164] sm:$0xf]
  %v107 = vld [vmem:[%s0 + $0x168] sm:$0xf]
  %v108 = vld [vmem:[%s0 + $0x16c] sm:$0xf]
  %v109 = vld [vmem:[%s0 + $0x170] sm:$0xf]
  %v110 = vld [vmem:[%s0 + $0x174] sm:$0xf]
  %v111 = vld [vmem:[%s0 + $0x178] sm:$0xf]
  %v112 = vld [vmem:[%s0 + $0x17c] sm:$0xf]
  %v113 = vld [vmem:[%s0 + $0x180] sm:$0xf]
  %v114 = vld [vmem:[%s0 + $0x184] sm:$0xf]
  %v115 = vld [vmem:[%s0 + $0x188] sm:$0xf]
  %v116 = vld [vmem:[%s0 + $0x18c] sm:$0xf]
  %v117 = vld [vmem:[%s0 + $0x190] sm:$0xf]
  %v118 = vld [vmem:[%s0 + $0x194] sm:$0xf]
  %v119 = vld [vmem:[%s0 + $0x198] sm:$0xf]
  %v120 = vld [vmem:[%s0 + $0x19c] sm:$0xf]
  %v121 = vld [vmem:[%s0 + $0x1a0] sm:$0xf]
  %v122 = vld [vmem:[%s0 + $0x1a4] sm:$0xf]
  %v123 = vld [vmem:[%s0 + $0x1a8] sm:$0xf]
  %v124 = vld [vmem:[%s0 + $0x1ac] sm:$0xf]
  %v125 = vld [vmem:[%s0 + $0x1b0] sm:$0xf]
  %v126 = vld [vmem:[%s0 + $0x1b4] sm:$0xf]
  %v127 = vld [vmem:[%s0 + $0x1b8] sm:$0xf]
  %v128 = vld [vmem:[%s0 + $0x1bc] sm:$0xf]
  %v129 = vld [vmem:[%s0 + $0x1c0] sm:$0xf]
  %v130 = vld [vmem:[%s0 + $0x1c4] sm:$0xf]
  %v131 = vld [vmem:[%s0 + $0x1c8] sm:$0xf]
  %v132 = vld [vmem:[%s0 + $0x1cc] sm:$0xf]
  %v133 = vld [vmem:[%s0 + $0x1d0] sm:$0xf]
  %v134 = vld [vmem:[%s0 + $0x1d4] sm:$0xf]
  %v135 = vld [vmem:[%s0 + $0x1d8] sm:$0xf]
  %v136 = vld [vmem:[%s0 + $0x1dc] sm:$0xf]
  %v137 = vld [vmem:[%s0 + $0x1e0] sm:$0xf]
  %v138 = vld [vmem:[%s0 + $0x1e4] sm:$0xf]
  %v139 = vld [vmem:[%s0 + $0x1e8] sm:$0xf]
  %v140 = vld [vmem:[%s0 + $0x1ec] sm:$0xf]
  %v141 = vld [vmem:[%s0 + $0x1f0] sm:$0xf]
  %v142 = vld [vmem:[%s0 + $0x1f4] sm:$0xf]
  %v143 = vld [vmem:[%s0 + $0x1f8] sm:$0xf]
  %v144 = vld [vmem:[%s0 + $0x1fc] sm:$0xf]
  %v145 = vld [vmem:[%s0 + $0x200] sm:$0xf]
  %v146 = vld [vmem:[%s0 + $0x204] sm:$0xf]
  %v147 = vld [vmem:[%s0 + $0x208] sm:$0xf]
  %v148 = vld [vmem:[%s0 + $0x20c] sm:$0xf]
  %v149 = vld [vmem:[%s0 + $0x210] sm:$0xf]
  %v150 = vld [vmem:[%s0 + $0x214] sm:$0xf]
  %v151 = vld [vmem:[%s0 + $0x218] sm:$0xf]
  %v152 = vld [vmem:[%s0 + $0x21c] sm:$0xf]
  %v153 = vld [vmem:[%s0 + $0x220] sm:$0xf]
  %v154 = vld [vmem:[%s0 + $0x224] sm:$0xf]
  %v155 = vld [vmem:[%s0 + $0x228] sm:$0xf]
  %v156 = vld [vmem:[%s0 + $0x22c] sm:$0xf]
  %v157 = vld [vmem:[%s0 + $0x230] sm:$0xf]
  %v158 = vld [vmem:[%s0 + $0x234] sm:$0xf]
  %v159 = vld [vmem:[%s0 + $0x238] sm:$0xf]
  %v160 = vld [vmem:[%s0 + $0x23c] sm:$0xf]
  %v161 = vld [vmem:[%s0 + $0x240] sm:$0xf]
  %v162 = vld [vmem:[%s0 + $0x244] sm:$0xf]
  %v163 = vld [vmem:[%s0 + $0x248] sm:$0xf]
  %v164 = vld [vmem:[%s0 + $0x24c] sm:$0xf]
  %v165 = vld [vmem:[%s0 + $0x250] sm:$0xf]
  %v166 = vld [vmem:[%s0 + $0x254] sm:$0xf]
  %v167 = vld [vmem:[%s0 + $0x258] sm:$0xf]
  %v168 = vld [vmem:[%s0 + $0x25c] sm:$0xf]
  %v169 = vld [vmem:[%s0 + $0x260] sm:$0xf]
  %v170 = vld [vmem:[%s0 + $0x264] sm:$0xf]
  %v171 = vld [vmem:[%s0 + $0x268] sm:$0xf]
  %v172 = vld [vmem:[%s0 + $0x26c] sm:$0xf]
  %v173 = vld [vmem:[%s0 + $0x270] sm:$0xf]
  %v174 = vld [vmem:[%s0 + $0x274] sm:$0xf]
  %v175 = vld [vmem:[%s0 + $0x278] sm:$0xf]
  %v176 = vld [vmem:[%s0 + $0x27c] sm:$0xf]
  %v177 = vld [vmem:[%s0 + $0x280] sm:$0xf]
  %v178 = vld [vmem:[%s0 + $0x284] sm:$0xf]
  %v179 = vld [vmem:[%s0 + $0x288] sm:$0xf]
  %v180 = vld [vmem:[%s0 + $0x28c] sm:$0xf]
  %v181 = vld [vmem:[%s0 + $0x290] sm:$0xf]
  %v182 = vld [vmem:[%s0 + $0x294] sm:$0xf]
  %v183 = vld [vmem:[%s0 + $0x298] sm:$0xf]
  %v184 = vld [vmem:[%s0 + $0x29c] sm:$0xf]
  %v185 = vld [vmem:[%s0 + $0x2a0] sm:$0xf]
  %v186 = vld [vmem:[%s0 + $0x2a4] sm:$0xf]
  %v187 = vld [vmem:[%s0 + $0x2a8] sm:$0xf]
  %v188 = vld [vmem:[%s0 + $0x2ac] sm:$0xf]
  %v189 = vld [vmem:[%s0 + $0x2b0] sm:$0xf]
  %v190 = vld [vmem:[%s0 + $0x2b4] sm:$0xf]
  %v191 = vld [vmem:[%s0 + $0x2b8] sm:$0xf]
  %v192 = vld [vmem:[%s0 + $0x2bc] sm:$0xf]
  %v193 = vld [vmem:[%s0 + $0x2c0] sm:$0xf]
  %v194 = vld [vmem:[%s0 + $0x2c4] sm:$0xf]
  %v195 = vld [vmem:[%s0 + $0x2c8] sm:$0xf]
  %v196 = vld [vmem:[%s0 + $0x2cc] sm:$0xf]
  %v197 = vld [vmem:[%s0 + $0x2d0] sm:$0xf]
  %v198 = vld [vmem:[%s0 + $0x2d4] sm:$0xf]
  %v199 = vld [vmem:[%s0 + $0x2d8] sm:$0xf]
  %v200 = vld [vmem:[%s0 + $0x2dc] sm:$0xf]
  %v201 = vld [vmem:[%s0 + $0x2e0] sm:$0xf]
  %v202 = vld [vmem:[%s0 + $0x2e4] sm:$0xf]
  %v203 = vld [vmem:[%s0 + $0x2e8] sm:$0xf]
  %v204 = vld [vmem:[%s0 + $0x2ec] sm:$0xf]
  %v205 = vld [vmem:[%s0 + $0x2f0] sm:$0xf]
  %v206 = vld [vmem:[%s0 + $0x2f4] sm:$0xf]
  %v207 = vld [vmem:[%s0 + $0x2f8] sm:$0xf]
  %v208 = vld [vmem:[%s0 + $0x2fc] sm:$0xf]
  %v209 = vld [vmem:[%s0 + $0x300] sm:$0xf]
  %v210 = vld [vmem:[%s0 + $0x304] sm:$0xf]
  %v211 = vld [vmem:[%s0 + $0x308] sm:$0xf]
  %v212 = vld [vmem:[%s0 + $0x30c] sm:$0xf]
  %v213 = vld [vmem:[%s0 + $0x310] sm:$0xf]
  %v214 = vld [vmem:[%s0 + $0x314] sm:$0xf]
  %v215 = vld [vmem:[%s0 + $0x318] sm:$0xf]
  %v216 = vld [vmem:[%s0 + $0x31c] sm:$0xf]
  %v217 = vld [vmem:[%s0 + $0x320] sm:$0xf]
  %v218 = vld [vmem:[%s0 + $0x324] sm:$0xf]
  %v219 = vld [vmem:[%s0 + $0x328] sm:$0xf]
  %v220 = vld [vmem:[%s0 + $0x32c] sm:$0xf]
  %v221 = vld [vmem:[%s0 + $0x330] sm:$0xf]
  %v222 = vld [vmem:[%s0 + $0x334] sm:$0xf]
  %v223 = vld [vmem:[%s0 + $0x338] sm:$0xf]
  %v224 = vld [vmem:[%s0 + $0x33c] sm:$0xf]
  %v225 = vld [vmem:[%s0 + $0x340] sm:$0xf]
  %v226 = vld [vmem:[%s0 + $0x344] sm:$0xf]
  %v227 = vld [vmem:[%s0 + $0x348] sm:$0xf]
  %v228 = vld [vmem:[%s0 + $0x34c] sm:$0xf]
  %v229 = vld [vmem:[%s0 + $0x350] sm:$0xf]
  %v230 = vld [vmem:[%s0 + $0x354] sm:$0xf]
  %v231 = vld [vmem:[%s0 + $0x358] sm:$0xf]
  %v232 = vld [vmem:[%s0 + $0x35c] sm:$0xf]
  %v233 = vld [vmem:[%s0 + $0x360] sm:$0xf]
  %v234 = vld [vmem:[%s0 + $0x364] sm:$0xf]
  %v235 = vld [vmem:[%s0 + $0x368] sm:$0xf]
  %v236 = vld [vmem:[%s0 + $0x36c] sm:$0xf]
  %v237 = vld [vmem:[%s0 + $0x370] sm:$0xf]
  %v238 = vld [vmem:[%s0 + $0x374] sm:$0xf]
  %v239 = vld [vmem:[%s0 + $0x378] sm:$0xf]
  %v240 = vld [vmem:[%s0 + $0x37c] sm:$0xf]
  %v241 = vld [vmem:[%s0 + $0x380] sm:$0xf]
  %v242 = vld [vmem:[%s0 + $0x384] sm:$0xf]
  %v243 = vld [vmem:[%s0 + $0x388] sm:$0xf]
  %v244 = vld [vmem:[%s0 + $0x38c] sm:$0xf]
  %v245 = vld [vmem:[%s0 + $0x390] sm:$0xf]
  %v246 = vld [vmem:[%s0 + $0x394] sm:$0xf]
  %v247 = vld [vmem:[%s0 + $0x398] sm:$0xf]
  %v248 = vld [vmem:[%s0 + $0x39c] sm:$0xf]
  %v249 = vld [vmem:[%s0 + $0x3a0] sm:$0xf]
  %v250 = vld [vmem:[%s0 + $0x3a4] sm:$0xf]
  %v251 = vld [vmem:[%s0 + $0x3a8] sm:$0xf]
  %v252 = vld [vmem:[%s0 + $0x3ac] sm:$0xf]
  %v253 = vld [vmem:[%s0 + $0x3b0] sm:$0xf]
  %v254 = vld [vmem:[%s0 + $0x3b4] sm:$0xf]
  %v255 = vld [vmem:[%s0 + $0x3b8] sm:$0xf]
  %v256 = vld [vmem:[%s0 + $0x3bc] sm:$0xf]
  %v257 = vld [vmem:[%s0 + $0x3c0] sm:$0xf]
  %v258 = vld [vmem:[%s0 + $0x3c4] sm:$0xf]
  %v259 = vld [vmem:[%s0 + $0x3c8] sm:$0xf]
  %v260 = vld [vmem:[%s0 + $0x3cc] sm:$0xf]
  %v261 = vld [vmem:[%s0 + $0x3d0] sm:$0xf]
  %v262 = vld [vmem:[%s0 + $0x3d4] sm:$0xf]
  %v263 = vld [vmem:[%s0 + $0x3d8] sm:$0xf]
  %v264 = vld [vmem:[%s0 + $0x3dc] sm:$0xf]
  %v265 = vld [vmem:[%s0 + $0x3e0] sm:$0xf]
  %v266 = vld [vmem:[%s0 + $0x3e4] sm:$0xf]
  %v267 = vld [vmem:[%s0 + $0x3e8] sm:$0xf]
  %v268 = vld [vmem:[%s0 + $0x3ec] sm:$0xf]
  %v269 = vld [vmem:[%s0 + $0x3f0] sm:$0xf]
  %v270 = vld [vmem:[%s0 + $0x3f4] sm:$0xf]
  %v271 = vld [vmem:[%s0 + $0x3f8] sm:$0xf]
  %v272 = vld [vmem:[%s0 + $0x3fc] sm:$0xf]
  %v273 = vld [vmem:[%s0 + $0x400] sm:$0xf]
  %v274 = vld [vmem:[%s0 + $0x404] sm:$0xf]
  %v275 = vld [vmem:[%s0 + $0x408] sm:$0xf]
  %v276 = vld [vmem:[%s0 + $0x40c] sm:$0xf]
  %v277 = vld [vmem:[%s0 + $0x410] sm:$0xf]
  %v278 = vld [vmem:[%s0 + $0x414] sm:$0xf]
  %v279 = vld [vmem:[%s0 + $0x418] sm:$0xf]
  %v280 = vld [vmem:[%s0 + $0x41c] sm:$0xf]
  %v281 = vld [vmem:[%s0 + $0x420] sm:$0xf]
  %v282 = vld [vmem:[%s0 + $0x424] sm:$0xf]
  %v283 = vld [vmem:[%s0 + $0x428] sm:$0xf]
  %v284 = vld [vmem:[%s0 + $0x42c] sm:$0xf]
  %v285 = vld [vmem:[%s0 + $0x430] sm:$0xf]
  %v286 = vld [vmem:[%s0 + $0x434] sm:$0xf]
  %v287 = vld [vmem:[%s0 + $0x438] sm:$0xf]
  %v288 = vld [vmem:[%s0 + $0x43c] sm:$0xf]
  %v289 = vld [vmem:[%s0 + $0x440] sm:$0xf]
  %v290 = vld [vmem:[%s1] sm:$0xf]
  %v291 = vld [vmem:[%s1 + $0x4] sm:$0xf]
  %v292 = vld [vmem:[%s1 + $0x8] sm:$0xf]
  %v293 = vld [vmem:[%s1 + $0xc] sm:$0xf]
  %v294 = vld [vmem:[%s1 + $0x10] sm:$0xf]
  %v295 = vld [vmem:[%s1 + $0x14] sm:$0xf]
  %v296 = vld [vmem:[%s1 + $0x18] sm:$0xf]
  %v297 = vld [vmem:[%s1 + $0x1c] sm:$0xf]
  %v298 = vld [vmem:[%s1 + $0x20] sm:$0xf]
  %v299 = vld [vmem:[%s1 + $0x24] sm:$0xf]
  %v300 = vld [vmem:[%s1 + $0x28] sm:$0xf]
  %v301 = vld [vmem:[%s1 + $0x2c] sm:$0xf]
  %v302 = vld [vmem:[%s1 + $0x30] sm:$0xf]
  %v303 = vld [vmem:[%s1 + $0x34] sm:$0xf]
  %v304 = vld [vmem:[%s1 + $0x38] sm:$0xf]
  %v305 = vld [vmem:[%s1 + $0x3c] sm:$0xf]
  %v579 = vunpack.c.l.b16 %v17
  %v580 = vunpack.c.l.b16 %v18
  %v581 = vunpack.c.l.b16 %v19
  %v582 = vunpack.c.l.b16 %v20
  %v583 = vunpack.c.l.b16 %v21
  %v584 = vunpack.c.l.b16 %v22
  %v585 = vunpack.c.l.b16 %v23
  %v586 = vunpack.c.l.b16 %v24
  %v587 = vunpack.c.l.b16 %v25
  %v588 = vunpack.c.l.b16 %v26
  %v589 = vunpack.c.l.b16 %v27
  %v590 = vunpack.c.l.b16 %v28
  %v591 = vunpack.c.l.b16 %v29
  %v592 = vunpack.c.l.b16 %v30
  %v593 = vunpack.c.l.b16 %v31
  %v594 = vunpack.c.l.b16 %v32
  %v595 = vunpack.c.l.b16 %v33
  %v596 = vunpack.c.l.b16 %v34
  %v597 = vunpack.c.l.b16 %v35
  %v598 = vunpack.c.l.b16 %v36
  %v599 = vunpack.c.l.b16 %v37
  %v600 = vunpack.c.l.b16 %v38
  %v601 = vunpack.c.l.b16 %v39
  %v602 = vunpack.c.l.b16 %v40
  %v603 = vunpack.c.l.b16 %v41
  %v604 = vunpack.c.l.b16 %v42
  %v605 = vunpack.c.l.b16 %v43
  %v606 = vunpack.c.l.b16 %v44
  %v607 = vunpack.c.l.b16 %v45
  %v608 = vunpack.c.l.b16 %v46
  %v609 = vunpack.c.l.b16 %v47
  %v610 = vunpack.c.l.b16 %v48
  %v611 = vunpack.c.l.b16 %v49
  %v612 = vunpack.c.l.b16 %v50
  %v613 = vunpack.c.l.b16 %v51
  %v614 = vunpack.c.l.b16 %v52
  %v615 = vunpack.c.l.b16 %v53
  %v616 = vunpack.c.l.b16 %v54
  %v617 = vunpack.c.l.b16 %v55
  %v618 = vunpack.c.l.b16 %v56
  %v619 = vunpack.c.l.b16 %v57
  %v620 = vunpack.c.l.b16 %v58
  %v621 = vunpack.c.l.b16 %v59
  %v622 = vunpack.c.l.b16 %v60
  %v623 = vunpack.c.l.b16 %v61
  %v624 = vunpack.c.l.b16 %v62
  %v625 = vunpack.c.l.b16 %v63
  %v626 = vunpack.c.l.b16 %v64
  %v627 = vunpack.c.l.b16 %v65
  %v628 = vunpack.c.l.b16 %v66
  %v629 = vunpack.c.l.b16 %v67
  %v630 = vunpack.c.l.b16 %v68
  %v631 = vunpack.c.l.b16 %v69
  %v632 = vunpack.c.l.b16 %v70
  %v633 = vunpack.c.l.b16 %v71
  %v634 = vunpack.c.l.b16 %v72
  %v635 = vunpack.c.l.b16 %v73
  %v636 = vunpack.c.l.b16 %v74
  %v637 = vunpack.c.l.b16 %v75
  %v638 = vunpack.c.l.b16 %v76
  %v639 = vunpack.c.l.b16 %v77
  %v640 = vunpack.c.l.b16 %v78
  %v641 = vunpack.c.l.b16 %v79
  %v642 = vunpack.c.l.b16 %v80
  %v643 = vunpack.c.l.b16 %v81
  %v644 = vunpack.c.l.b16 %v82
  %v645 = vunpack.c.l.b16 %v83
  %v646 = vunpack.c.l.b16 %v84
  %v647 = vunpack.c.l.b16 %v85
  %v648 = vunpack.c.l.b16 %v86
  %v649 = vunpack.c.l.b16 %v87
  %v650 = vunpack.c.l.b16 %v88
  %v651 = vunpack.c.l.b16 %v89
  %v652 = vunpack.c.l.b16 %v90
  %v653 = vunpack.c.l.b16 %v91
  %v654 = vunpack.c.l.b16 %v92
  %v655 = vunpack.c.l.b16 %v93
  %v656 = vunpack.c.l.b16 %v94
  %v657 = vunpack.c.l.b16 %v95
  %v658 = vunpack.c.l.b16 %v96
  %v659 = vunpack.c.l.b16 %v97
  %v660 = vunpack.c.l.b16 %v98
  %v661 = vunpack.c.l.b16 %v99
  %v662 = vunpack.c.l.b16 %v100
  %v663 = vunpack.c.l.b16 %v101
  %v664 = vunpack.c.l.b16 %v102
  %v665 = vunpack.c.l.b16 %v103
  %v666 = vunpack.c.l.b16 %v104
  %v667 = vunpack.c.l.b16 %v105
  %v668 = vunpack.c.l.b16 %v106
  %v669 = vunpack.c.l.b16 %v107
  %v670 = vunpack.c.l.b16 %v108
  %v671 = vunpack.c.l.b16 %v109
  %v672 = vunpack.c.l.b16 %v110
  %v673 = vunpack.c.l.b16 %v111
  %v674 = vunpack.c.l.b16 %v112
  %v675 = vunpack.c.l.b16 %v113
  %v676 = vunpack.c.l.b16 %v114
  %v677 = vunpack.c.l.b16 %v115
  %v678 = vunpack.c.l.b16 %v116
  %v679 = vunpack.c.l.b16 %v117
  %v680 = vunpack.c.l.b16 %v118
  %v681 = vunpack.c.l.b16 %v119
  %v682 = vunpack.c.l.b16 %v120
  %v683 = vunpack.c.l.b16 %v121
  %v684 = vunpack.c.l.b16 %v122
  %v685 = vunpack.c.l.b16 %v123
  %v686 = vunpack.c.l.b16 %v124
  %v687 = vunpack.c.l.b16 %v125
  %v688 = vunpack.c.l.b16 %v126
  %v689 = vunpack.c.l.b16 %v127
  %v690 = vunpack.c.l.b16 %v128
  %v691 = vunpack.c.l.b16 %v129
  %v692 = vunpack.c.l.b16 %v130
  %v693 = vunpack.c.l.b16 %v131
  %v694 = vunpack.c.l.b16 %v132
  %v695 = vunpack.c.l.b16 %v133
  %v696 = vunpack.c.l.b16 %v134
  %v697 = vunpack.c.l.b16 %v135
  %v698 = vunpack.c.l.b16 %v136
  %v699 = vunpack.c.l.b16 %v137
  %v700 = vunpack.c.l.b16 %v138
  %v701 = vunpack.c.l.b16 %v139
  %v702 = vunpack.c.l.b16 %v140
  %v703 = vunpack.c.l.b16 %v141
  %v704 = vunpack.c.l.b16 %v142
  %v705 = vunpack.c.l.b16 %v143
  %v706 = vunpack.c.l.b16 %v144
  %v707 = vunpack.c.l.b16 %v145
  %v708 = vunpack.c.l.b16 %v146
  %v709 = vunpack.c.l.b16 %v147
  %v710 = vunpack.c.l.b16 %v148
  %v711 = vunpack.c.l.b16 %v149
  %v712 = vunpack.c.l.b16 %v150
  %v713 = vunpack.c.l.b16 %v151
  %v714 = vunpack.c.l.b16 %v152
  %v715 = vunpack.c.l.b16 %v153
  %v716 = vunpack.c.l.b16 %v154
  %v717 = vunpack.c.l.b16 %v155
  %v718 = vunpack.c.l.b16 %v156
  %v719 = vunpack.c.l.b16 %v157
  %v720 = vunpack.c.l.b16 %v158
  %v721 = vunpack.c.l.b16 %v159
  %v722 = vunpack.c.l.b16 %v160
  %v723 = vunpack.c.l.b16 %v161
  %v724 = vunpack.c.l.b16 %v162
  %v725 = vunpack.c.l.b16 %v163
  %v726 = vunpack.c.l.b16 %v164
  %v727 = vunpack.c.l.b16 %v165
  %v728 = vunpack.c.l.b16 %v166
  %v729 = vunpack.c.l.b16 %v167
  %v730 = vunpack.c.l.b16 %v168
  %v731 = vunpack.c.l.b16 %v169
  %v732 = vunpack.c.l.b16 %v170
  %v733 = vunpack.c.l.b16 %v171
  %v734 = vunpack.c.l.b16 %v172
  %v735 = vunpack.c.l.b16 %v173
  %v736 = vunpack.c.l.b16 %v174
  %v737 = vunpack.c.l.b16 %v175
  %v738 = vunpack.c.l.b16 %v176
  %v739 = vunpack.c.l.b16 %v177
  %v740 = vunpack.c.l.b16 %v178
  %v741 = vunpack.c.l.b16 %v179
  %v742 = vunpack.c.l.b16 %v180
  %v743 = vunpack.c.l.b16 %v181
  %v744 = vunpack.c.l.b16 %v182
  %v745 = vunpack.c.l.b16 %v183
  %v746 = vunpack.c.l.b16 %v184
  %v747 = vunpack.c.l.b16 %v185
  %v748 = vunpack.c.l.b16 %v186
  %v749 = vunpack.c.l.b16 %v187
  %v750 = vunpack.c.l.b16 %v188
  %v751 = vunpack.c.l.b16 %v189
  %v752 = vunpack.c.l.b16 %v190
  %v753 = vunpack.c.l.b16 %v191
  %v754 = vunpack.c.l.b16 %v192
  %v755 = vunpack.c.l.b16 %v193
  %v756 = vunpack.c.l.b16 %v194
  %v757 = vunpack.c.l.b16 %v195
  %v758 = vunpack.c.l.b16 %v196
  %v759 = vunpack.c.l.b16 %v197
  %v760 = vunpack.c.l.b16 %v198
  %v761 = vunpack.c.l.b16 %v199
  %v762 = vunpack.c.l.b16 %v200
  %v763 = vunpack.c.l.b16 %v201
  %v764 = vunpack.c.l.b16 %v202
  %v765 = vunpack.c.l.b16 %v203
  %v766 = vunpack.c.l.b16 %v204
  %v767 = vunpack.c.l.b16 %v205
  %v768 = vunpack.c.l.b16 %v206
  %v769 = vunpack.c.l.b16 %v207
  %v770 = vunpack.c.l.b16 %v208
  %v771 = vunpack.c.l.b16 %v209
  %v772 = vunpack.c.l.b16 %v210
  %v773 = vunpack.c.l.b16 %v211
  %v774 = vunpack.c.l.b16 %v212
  %v775 = vunpack.c.l.b16 %v213
  %v776 = vunpack.c.l.b16 %v214
  %v777 = vunpack.c.l.b16 %v215
  %v778 = vunpack.c.l.b16 %v216
  %v779 = vunpack.c.l.b16 %v217
  %v780 = vunpack.c.l.b16 %v218
  %v781 = vunpack.c.l.b16 %v219
  %v782 = vunpack.c.l.b16 %v220
  %v783 = vunpack.c.l.b16 %v221
  %v784 = vunpack.c.l.b16 %v222
  %v785 = vunpack.c.l.b16 %v223
  %v786 = vunpack.c.l.b16 %v224
  %v787 = vunpack.c.l.b16 %v225
  %v788 = vunpack.c.l.b16 %v226
  %v789 = vunpack.c.l.b16 %v227
  %v790 = vunpack.c.l.b16 %v228
  %v791 = vunpack.c.l.b16 %v229
  %v792 = vunpack.c.l.b16 %v230
  %v793 = vunpack.c.l.b16 %v231
  %v794 = vunpack.c.l.b16 %v232
  %v795 = vunpack.c.l.b16 %v233
  %v796 = vunpack.c.l.b16 %v234
  %v797 = vunpack.c.l.b16 %v235
  %v798 = vunpack.c.l.b16 %v236
  %v799 = vunpack.c.l.b16 %v237
  %v800 = vunpack.c.l.b16 %v238
  %v801 = vunpack.c.l.b16 %v239
  %v802 = vunpack.c.l.b16 %v240
  %v803 = vunpack.c.l.b16 %v241
  %v804 = vunpack.c.l.b16 %v242
  %v805 = vunpack.c.l.b16 %v243
  %v806 = vunpack.c.l.b16 %v244
  %v807 = vunpack.c.l.b16 %v245
  %v808 = vunpack.c.l.b16 %v246
  %v809 = vunpack.c.l.b16 %v247
  %v810 = vunpack.c.l.b16 %v248
  %v811 = vunpack.c.l.b16 %v249
  %v812 = vunpack.c.l.b16 %v250
  %v813 = vunpack.c.l.b16 %v251
  %v814 = vunpack.c.l.b16 %v252
  %v815 = vunpack.c.l.b16 %v253
  %v816 = vunpack.c.l.b16 %v254
  %v817 = vunpack.c.l.b16 %v255
  %v818 = vunpack.c.l.b16 %v256
  %v819 = vunpack.c.l.b16 %v257
  %v820 = vunpack.c.l.b16 %v258
  %v821 = vunpack.c.l.b16 %v259
  %v822 = vunpack.c.l.b16 %v260
  %v823 = vunpack.c.l.b16 %v261
  %v824 = vunpack.c.l.b16 %v262
  %v825 = vunpack.c.l.b16 %v263
  %v826 = vunpack.c.l.b16 %v264
  %v827 = vunpack.c.l.b16 %v265
  %v828 = vunpack.c.l.b16 %v266
  %v829 = vunpack.c.l.b16 %v267
  %v830 = vunpack.c.l.b16 %v268
  %v831 = vunpack.c.l.b16 %v269
  %v832 = vunpack.c.l.b16 %v270
  %v833 = vunpack.c.l.b16 %v271
  %v834 = vunpack.c.l.b16 %v272
  %v835 = vunpack.c.l.b16 %v273
  %v836 = vunpack.c.l.b16 %v274
  %v837 = vunpack.c.l.b16 %v275
  %v838 = vunpack.c.l.b16 %v276
  %v839 = vunpack.c.l.b16 %v277
  %v840 = vunpack.c.l.b16 %v278
  %v841 = vunpack.c.l.b16 %v279
  %v842 = vunpack.c.l.b16 %v280
  %v843 = vunpack.c.l.b16 %v281
  %v844 = vunpack.c.l.b16 %v282
  %v845 = vunpack.c.l.b16 %v283
  %v846 = vunpack.c.l.b16 %v284
  %v847 = vunpack.c.l.b16 %v285
  %v848 = vunpack.c.l.b16 %v286
  %v849 = vunpack.c.l.b16 %v287
  %v850 = vunpack.c.l.b16 %v288
  %v851 = vunpack.c.l.b16 %v289
  %v852 = vpack.c.b16 %v580, %v579
  %v853 = vpack.c.b16 %v582, %v581
  %v854 = vpack.c.b16 %v584, %v583
  %v855 = vpack.c.b16 %v586, %v585
  %v856 = vpack.c.b16 %v588, %v587
  %v857 = vpack.c.b16 %v590, %v589
  %v858 = vpack.c.b16 %v592, %v591
  %v859 = vpack.c.b16 %v594, %v593
  %v860 = vpack.c.b16 %v596, %v595
  %v861 = vpack.c.b16 %v598, %v597
  %v862 = vpack.c.b16 %v600, %v599
  %v863 = vpack.c.b16 %v602, %v601
  %v864 = vpack.c.b16 %v604, %v603
  %v865 = vpack.c.b16 %v606, %v605
  %v866 = vpack.c.b16 %v608, %v607
  %v867 = vpack.c.b16 %v610, %v609
  %v868 = vpack.c.b16 %v612, %v611
  %v869 = vpack.c.b16 %v614, %v613
  %v870 = vpack.c.b16 %v616, %v615
  %v871 = vpack.c.b16 %v618, %v617
  %v872 = vpack.c.b16 %v620, %v619
  %v873 = vpack.c.b16 %v622, %v621
  %v874 = vpack.c.b16 %v624, %v623
  %v875 = vpack.c.b16 %v626, %v625
  %v876 = vpack.c.b16 %v628, %v627
  %v877 = vpack.c.b16 %v630, %v629
  %v878 = vpack.c.b16 %v632, %v631
  %v879 = vpack.c.b16 %v634, %v633
  %v880 = vpack.c.b16 %v636, %v635
  %v881 = vpack.c.b16 %v638, %v637
  %v882 = vpack.c.b16 %v640, %v639
  %v883 = vpack.c.b16 %v642, %v641
  %v884 = vpack.c.b16 %v644, %v643
  %v885 = vpack.c.b16 %v646, %v645
  %v886 = vpack.c.b16 %v648, %v647
  %v887 = vpack.c.b16 %v650, %v649
  %v888 = vpack.c.b16 %v652, %v651
  %v889 = vpack.c.b16 %v654, %v653
  %v890 = vpack.c.b16 %v656, %v655
  %v891 = vpack.c.b16 %v658, %v657
  %v892 = vpack.c.b16 %v660, %v659
  %v893 = vpack.c.b16 %v662, %v661
  %v894 = vpack.c.b16 %v664, %v663
  %v895 = vpack.c.b16 %v666, %v665
  %v896 = vpack.c.b16 %v668, %v667
  %v897 = vpack.c.b16 %v670, %v669
  %v898 = vpack.c.b16 %v672, %v671
  %v899 = vpack.c.b16 %v674, %v673
  %v900 = vpack.c.b16 %v676, %v675
  %v901 = vpack.c.b16 %v678, %v677
  %v902 = vpack.c.b16 %v680, %v679
  %v903 = vpack.c.b16 %v682, %v681
  %v904 = vpack.c.b16 %v684, %v683
  %v905 = vpack.c.b16 %v686, %v685
  %v906 = vpack.c.b16 %v688, %v687
  %v907 = vpack.c.b16 %v690, %v689
  %v908 = vpack.c.b16 %v692, %v691
  %v909 = vpack.c.b16 %v694, %v693
  %v910 = vpack.c.b16 %v696, %v695
  %v911 = vpack.c.b16 %v698, %v697
  %v912 = vpack.c.b16 %v700, %v699
  %v913 = vpack.c.b16 %v702, %v701
  %v914 = vpack.c.b16 %v704, %v703
  %v915 = vpack.c.b16 %v706, %v705
  %v916 = vpack.c.b16 %v708, %v707
  %v917 = vpack.c.b16 %v710, %v709
  %v918 = vpack.c.b16 %v712, %v711
  %v919 = vpack.c.b16 %v714, %v713
  %v920 = vpack.c.b16 %v716, %v715
  %v921 = vpack.c.b16 %v718, %v717
  %v922 = vpack.c.b16 %v720, %v719
  %v923 = vpack.c.b16 %v722, %v721
  %v924 = vpack.c.b16 %v724, %v723
  %v925 = vpack.c.b16 %v726, %v725
  %v926 = vpack.c.b16 %v728, %v727
  %v927 = vpack.c.b16 %v730, %v729
  %v928 = vpack.c.b16 %v732, %v731
  %v929 = vpack.c.b16 %v734, %v733
  %v930 = vpack.c.b16 %v736, %v735
  %v931 = vpack.c.b16 %v738, %v737
  %v932 = vpack.c.b16 %v740, %v739
  %v933 = vpack.c.b16 %v742, %v741
  %v934 = vpack.c.b16 %v744, %v743
  %v935 = vpack.c.b16 %v746, %v745
  %v936 = vpack.c.b16 %v748, %v747
  %v937 = vpack.c.b16 %v750, %v749
  %v938 = vpack.c.b16 %v752, %v751
  %v939 = vpack.c.b16 %v754, %v753
  %v940 = vpack.c.b16 %v756, %v755
  %v941 = vpack.c.b16 %v758, %v757
  %v942 = vpack.c.b16 %v760, %v759
  %v943 = vpack.c.b16 %v762, %v761
  %v944 = vpack.c.b16 %v764, %v763
  %v945 = vpack.c.b16 %v766, %v765
  %v946 = vpack.c.b16 %v768, %v767
  %v947 = vpack.c.b16 %v770, %v769
  %v948 = vpack.c.b16 %v772, %v771
  %v949 = vpack.c.b16 %v774, %v773
  %v950 = vpack.c.b16 %v776, %v775
  %v951 = vpack.c.b16 %v778, %v777
  %v952 = vpack.c.b16 %v780, %v779
  %v953 = vpack.c.b16 %v782, %v781
  %v954 = vpack.c.b16 %v784, %v783
  %v955 = vpack.c.b16 %v786, %v785
  %v956 = vpack.c.b16 %v788, %v787
  %v957 = vpack.c.b16 %v790, %v789
  %v958 = vpack.c.b16 %v792, %v791
  %v959 = vpack.c.b16 %v794, %v793
  %v960 = vpack.c.b16 %v796, %v795
  %v961 = vpack.c.b16 %v798, %v797
  %v962 = vpack.c.b16 %v800, %v799
  %v963 = vpack.c.b16 %v802, %v801
  %v964 = vpack.c.b16 %v804, %v803
  %v965 = vpack.c.b16 %v806, %v805
  %v966 = vpack.c.b16 %v808, %v807
  %v967 = vpack.c.b16 %v810, %v809
  %v968 = vpack.c.b16 %v812, %v811
  %v969 = vpack.c.b16 %v814, %v813
  %v970 = vpack.c.b16 %v816, %v815
  %v971 = vpack.c.b16 %v818, %v817
  %v972 = vpack.c.b16 %v820, %v819
  %v973 = vpack.c.b16 %v822, %v821
  %v974 = vpack.c.b16 %v824, %v823
  %v975 = vpack.c.b16 %v826, %v825
  %v976 = vpack.c.b16 %v828, %v827
  %v977 = vpack.c.b16 %v830, %v829
  %v978 = vpack.c.b16 %v832, %v831
  %v979 = vpack.c.b16 %v834, %v833
  %v980 = vpack.c.b16 %v836, %v835
  %v981 = vpack.c.b16 %v838, %v837
  %v982 = vpack.c.b16 %v840, %v839
  %v983 = vpack.c.b16 %v842, %v841
  %v984 = vpack.c.b16 %v844, %v843
  %v985 = vpack.c.b16 %v846, %v845
  %v986 = vpack.c.b16 %v848, %v847
  %v987 = vpack.c.b16 %v850, %v849
  %v988 = vpack.c.b16 %v851, %v851
  %v1142 = vunpack.c.l.b16 %v290
  %v1143 = vunpack.c.l.b16 %v291
  %v1144 = vunpack.c.l.b16 %v292
  %v1145 = vunpack.c.l.b16 %v293
  %v1146 = vunpack.c.l.b16 %v294
  %v1147 = vunpack.c.l.b16 %v295
  %v1148 = vunpack.c.l.b16 %v296
  %v1149 = vunpack.c.l.b16 %v297
  %v1150 = vunpack.c.l.b16 %v298
  %v1151 = vunpack.c.l.b16 %v299
  %v1152 = vunpack.c.l.b16 %v300
  %v1153 = vunpack.c.l.b16 %v301
  %v1154 = vunpack.c.l.b16 %v302
  %v1155 = vunpack.c.l.b16 %v303
  %v1156 = vunpack.c.l.b16 %v304
  %v1157 = vunpack.c.l.b16 %v305
  %v1158 = vpack.c.b16 %v1143, %v1142
  %v1159 = vpack.c.b16 %v1145, %v1144
  %v1160 = vpack.c.b16 %v1147, %v1146
  %v1161 = vpack.c.b16 %v1149, %v1148
  %v1162 = vpack.c.b16 %v1151, %v1150
  %v1163 = vpack.c.b16 %v1153, %v1152
  %v1164 = vpack.c.b16 %v1155, %v1154
  %v1165 = vpack.c.b16 %v1157, %v1156
  %1174 = vmatpush.bf16.msra.mxu0 %v1165
  %1175 = vmatpush.bf16.msra.mxu0 %v1164
  %1176 = vmatpush.bf16.msra.mxu0 %v1163
  %1177 = vmatpush.bf16.msra.mxu0 %v1162
  %1178 = vmatpush.bf16.msra.mxu0 %v1161
  %1179 = vmatpush.bf16.msra.mxu0 %v1160
  %1180 = vmatpush.bf16.msra.mxu0 %v1159
  %1181 = vmatpush.bf16.msra.mxu0 %v1158
  %1182 = vmatmul.bf16.gmra.mxu0 %v852
  %v1183 = vpop.f32.mrf.mxu0
  %v1184 = vadd.f32 0.0, %v1183
  %v1185 = vpop.f32.mrf.mxu0
  %v1186 = vadd.f32 0.0, %v1185
  %1187 = vmatmul.bf16.gmra.mxu0 %v853
  %v1188 = vpop.f32.mrf.mxu0
  %v1189 = vadd.f32 0.0, %v1188
  %v1190 = vpop.f32.mrf.mxu0
  %v1191 = vadd.f32 0.0, %v1190
  %1192 = vmatmul.bf16.gmra.mxu0 %v854
  %v1193 = vpop.f32.mrf.mxu0
  %v1194 = vadd.f32 0.0, %v1193
  %v1195 = vpop.f32.mrf.mxu0
  %v1196 = vadd.f32 0.0, %v1195
  %1197 = vmatmul.bf16.gmra.mxu0 %v855
  %v1198 = vpop.f32.mrf.mxu0
  %v1199 = vadd.f32 0.0, %v1198
  %v1200 = vpop.f32.mrf.mxu0
  %v1201 = vadd.f32 0.0, %v1200
  %1202 = vmatmul.bf16.gmra.mxu0 %v856
  %v1203 = vpop.f32.mrf.mxu0
  %v1204 = vadd.f32 0.0, %v1203
  %v1205 = vpop.f32.mrf.mxu0
  %v1206 = vadd.f32 0.0, %v1205
  %1207 = vmatmul.bf16.gmra.mxu0 %v857
  %v1208 = vpop.f32.mrf.mxu0
  %v1209 = vadd.f32 0.0, %v1208
  %v1210 = vpop.f32.mrf.mxu0
  %v1211 = vadd.f32 0.0, %v1210
  %1212 = vmatmul.bf16.gmra.mxu0 %v858
  %v1213 = vpop.f32.mrf.mxu0
  %v1214 = vadd.f32 0.0, %v1213
  %v1215 = vpop.f32.mrf.mxu0
  %v1216 = vadd.f32 0.0, %v1215
  %1217 = vmatmul.bf16.gmra.mxu0 %v859
  %v1218 = vpop.f32.mrf.mxu0
  %v1219 = vadd.f32 0.0, %v1218
  %v1220 = vpop.f32.mrf.mxu0
  %v1221 = vadd.f32 0.0, %v1220
  %1222 = vmatmul.bf16.gmra.mxu0 %v860
  %v1223 = vpop.f32.mrf.mxu0
  %v1224 = vadd.f32 0.0, %v1223
  %v1225 = vpop.f32.mrf.mxu0
  %v1226 = vadd.f32 0.0, %v1225
  %1227 = vmatmul.bf16.gmra.mxu0 %v861
  %v1228 = vpop.f32.mrf.mxu0
  %v1229 = vadd.f32 0.0, %v1228
  %v1230 = vpop.f32.mrf.mxu0
  %v1231 = vadd.f32 0.0, %v1230
  %1232 = vmatmul.bf16.gmra.mxu0 %v862
  %v1233 = vpop.f32.mrf.mxu0
  %v1234 = vadd.f32 0.0, %v1233
  %v1235 = vpop.f32.mrf.mxu0
  %v1236 = vadd.f32 0.0, %v1235
  %1237 = vmatmul.bf16.gmra.mxu0 %v863
  %v1238 = vpop.f32.mrf.mxu0
  %v1239 = vadd.f32 0.0, %v1238
  %v1240 = vpop.f32.mrf.mxu0
  %v1241 = vadd.f32 0.0, %v1240
  %1242 = vmatmul.bf16.gmra.mxu0 %v864
  %v1243 = vpop.f32.mrf.mxu0
  %v1244 = vadd.f32 0.0, %v1243
  %v1245 = vpop.f32.mrf.mxu0
  %v1246 = vadd.f32 0.0, %v1245
  %1247 = vmatmul.bf16.gmra.mxu0 %v865
  %v1248 = vpop.f32.mrf.mxu0
  %v1249 = vadd.f32 0.0, %v1248
  %v1250 = vpop.f32.mrf.mxu0
  %v1251 = vadd.f32 0.0, %v1250
  %1252 = vmatmul.bf16.gmra.mxu0 %v866
  %v1253 = vpop.f32.mrf.mxu0
  %v1254 = vadd.f32 0.0, %v1253
  %v1255 = vpop.f32.mrf.mxu0
  %v1256 = vadd.f32 0.0, %v1255
  %1257 = vmatmul.bf16.gmra.mxu0 %v867
  %v1258 = vpop.f32.mrf.mxu0
  %v1259 = vadd.f32 0.0, %v1258
  %v1260 = vpop.f32.mrf.mxu0
  %v1261 = vadd.f32 0.0, %v1260
  %1262 = vmatmul.bf16.gmra.mxu0 %v868
  %v1263 = vpop.f32.mrf.mxu0
  %v1264 = vadd.f32 0.0, %v1263
  %v1265 = vpop.f32.mrf.mxu0
  %v1266 = vadd.f32 0.0, %v1265
  %1267 = vmatmul.bf16.gmra.mxu0 %v869
  %v1268 = vpop.f32.mrf.mxu0
  %v1269 = vadd.f32 0.0, %v1268
  %v1270 = vpop.f32.mrf.mxu0
  %v1271 = vadd.f32 0.0, %v1270
  %1272 = vmatmul.bf16.gmra.mxu0 %v870
  %v1273 = vpop.f32.mrf.mxu0
  %v1274 = vadd.f32 0.0, %v1273
  %v1275 = vpop.f32.mrf.mxu0
  %v1276 = vadd.f32 0.0, %v1275
  %1277 = vmatmul.bf16.gmra.mxu0 %v871
  %v1278 = vpop.f32.mrf.mxu0
  %v1279 = vadd.f32 0.0, %v1278
  %v1280 = vpop.f32.mrf.mxu0
  %v1281 = vadd.f32 0.0, %v1280
  %1282 = vmatmul.bf16.gmra.mxu0 %v872
  %v1283 = vpop.f32.mrf.mxu0
  %v1284 = vadd.f32 0.0, %v1283
  %v1285 = vpop.f32.mrf.mxu0
  %v1286 = vadd.f32 0.0, %v1285
  %1287 = vmatmul.bf16.gmra.mxu0 %v873
  %v1288 = vpop.f32.mrf.mxu0
  %v1289 = vadd.f32 0.0, %v1288
  %v1290 = vpop.f32.mrf.mxu0
  %v1291 = vadd.f32 0.0, %v1290
  %1292 = vmatmul.bf16.gmra.mxu0 %v874
  %v1293 = vpop.f32.mrf.mxu0
  %v1294 = vadd.f32 0.0, %v1293
  %v1295 = vpop.f32.mrf.mxu0
  %v1296 = vadd.f32 0.0, %v1295
  %1297 = vmatmul.bf16.gmra.mxu0 %v875
  %v1298 = vpop.f32.mrf.mxu0
  %v1299 = vadd.f32 0.0, %v1298
  %v1300 = vpop.f32.mrf.mxu0
  %v1301 = vadd.f32 0.0, %v1300
  %1302 = vmatmul.bf16.gmra.mxu0 %v876
  %v1303 = vpop.f32.mrf.mxu0
  %v1304 = vadd.f32 0.0, %v1303
  %v1305 = vpop.f32.mrf.mxu0
  %v1306 = vadd.f32 0.0, %v1305
  %1307 = vmatmul.bf16.gmra.mxu0 %v877
  %v1308 = vpop.f32.mrf.mxu0
  %v1309 = vadd.f32 0.0, %v1308
  %v1310 = vpop.f32.mrf.mxu0
  %v1311 = vadd.f32 0.0, %v1310
  %1312 = vmatmul.bf16.gmra.mxu0 %v878
  %v1313 = vpop.f32.mrf.mxu0
  %v1314 = vadd.f32 0.0, %v1313
  %v1315 = vpop.f32.mrf.mxu0
  %v1316 = vadd.f32 0.0, %v1315
  %1317 = vmatmul.bf16.gmra.mxu0 %v879
  %v1318 = vpop.f32.mrf.mxu0
  %v1319 = vadd.f32 0.0, %v1318
  %v1320 = vpop.f32.mrf.mxu0
  %v1321 = vadd.f32 0.0, %v1320
  %1322 = vmatmul.bf16.gmra.mxu0 %v880
  %v1323 = vpop.f32.mrf.mxu0
  %v1324 = vadd.f32 0.0, %v1323
  %v1325 = vpop.f32.mrf.mxu0
  %v1326 = vadd.f32 0.0, %v1325
  %1327 = vmatmul.bf16.gmra.mxu0 %v881
  %v1328 = vpop.f32.mrf.mxu0
  %v1329 = vadd.f32 0.0, %v1328
  %v1330 = vpop.f32.mrf.mxu0
  %v1331 = vadd.f32 0.0, %v1330
  %1332 = vmatmul.bf16.gmra.mxu0 %v882
  %v1333 = vpop.f32.mrf.mxu0
  %v1334 = vadd.f32 0.0, %v1333
  %v1335 = vpop.f32.mrf.mxu0
  %v1336 = vadd.f32 0.0, %v1335
  %1337 = vmatmul.bf16.gmra.mxu0 %v883
  %v1338 = vpop.f32.mrf.mxu0
  %v1339 = vadd.f32 0.0, %v1338
  %v1340 = vpop.f32.mrf.mxu0
  %v1341 = vadd.f32 0.0, %v1340
  %1342 = vmatmul.bf16.gmra.mxu0 %v884
  %v1343 = vpop.f32.mrf.mxu0
  %v1344 = vadd.f32 0.0, %v1343
  %v1345 = vpop.f32.mrf.mxu0
  %v1346 = vadd.f32 0.0, %v1345
  %1347 = vmatmul.bf16.gmra.mxu0 %v885
  %v1348 = vpop.f32.mrf.mxu0
  %v1349 = vadd.f32 0.0, %v1348
  %v1350 = vpop.f32.mrf.mxu0
  %v1351 = vadd.f32 0.0, %v1350
  %1352 = vmatmul.bf16.gmra.mxu0 %v886
  %v1353 = vpop.f32.mrf.mxu0
  %v1354 = vadd.f32 0.0, %v1353
  %v1355 = vpop.f32.mrf.mxu0
  %v1356 = vadd.f32 0.0, %v1355
  %1357 = vmatmul.bf16.gmra.mxu0 %v887
  %v1358 = vpop.f32.mrf.mxu0
  %v1359 = vadd.f32 0.0, %v1358
  %v1360 = vpop.f32.mrf.mxu0
  %v1361 = vadd.f32 0.0, %v1360
  %1362 = vmatmul.bf16.gmra.mxu0 %v888
  %v1363 = vpop.f32.mrf.mxu0
  %v1364 = vadd.f32 0.0, %v1363
  %v1365 = vpop.f32.mrf.mxu0
  %v1366 = vadd.f32 0.0, %v1365
  %1367 = vmatmul.bf16.gmra.mxu0 %v889
  %v1368 = vpop.f32.mrf.mxu0
  %v1369 = vadd.f32 0.0, %v1368
  %v1370 = vpop.f32.mrf.mxu0
  %v1371 = vadd.f32 0.0, %v1370
  %1372 = vmatmul.bf16.gmra.mxu0 %v890
  %v1373 = vpop.f32.mrf.mxu0
  %v1374 = vadd.f32 0.0, %v1373
  %v1375 = vpop.f32.mrf.mxu0
  %v1376 = vadd.f32 0.0, %v1375
  %1377 = vmatmul.bf16.gmra.mxu0 %v891
  %v1378 = vpop.f32.mrf.mxu0
  %v1379 = vadd.f32 0.0, %v1378
  %v1380 = vpop.f32.mrf.mxu0
  %v1381 = vadd.f32 0.0, %v1380
  %1382 = vmatmul.bf16.gmra.mxu0 %v892
  %v1383 = vpop.f32.mrf.mxu0
  %v1384 = vadd.f32 0.0, %v1383
  %v1385 = vpop.f32.mrf.mxu0
  %v1386 = vadd.f32 0.0, %v1385
  %1387 = vmatmul.bf16.gmra.mxu0 %v893
  %v1388 = vpop.f32.mrf.mxu0
  %v1389 = vadd.f32 0.0, %v1388
  %v1390 = vpop.f32.mrf.mxu0
  %v1391 = vadd.f32 0.0, %v1390
  %1392 = vmatmul.bf16.gmra.mxu0 %v894
  %v1393 = vpop.f32.mrf.mxu0
  %v1394 = vadd.f32 0.0, %v1393
  %v1395 = vpop.f32.mrf.mxu0
  %v1396 = vadd.f32 0.0, %v1395
  %1397 = vmatmul.bf16.gmra.mxu0 %v895
  %v1398 = vpop.f32.mrf.mxu0
  %v1399 = vadd.f32 0.0, %v1398
  %v1400 = vpop.f32.mrf.mxu0
  %v1401 = vadd.f32 0.0, %v1400
  %1402 = vmatmul.bf16.gmra.mxu0 %v896
  %v1403 = vpop.f32.mrf.mxu0
  %v1404 = vadd.f32 0.0, %v1403
  %v1405 = vpop.f32.mrf.mxu0
  %v1406 = vadd.f32 0.0, %v1405
  %1407 = vmatmul.bf16.gmra.mxu0 %v897
  %v1408 = vpop.f32.mrf.mxu0
  %v1409 = vadd.f32 0.0, %v1408
  %v1410 = vpop.f32.mrf.mxu0
  %v1411 = vadd.f32 0.0, %v1410
  %1412 = vmatmul.bf16.gmra.mxu0 %v898
  %v1413 = vpop.f32.mrf.mxu0
  %v1414 = vadd.f32 0.0, %v1413
  %v1415 = vpop.f32.mrf.mxu0
  %v1416 = vadd.f32 0.0, %v1415
  %1417 = vmatmul.bf16.gmra.mxu0 %v899
  %v1418 = vpop.f32.mrf.mxu0
  %v1419 = vadd.f32 0.0, %v1418
  %v1420 = vpop.f32.mrf.mxu0
  %v1421 = vadd.f32 0.0, %v1420
  %1422 = vmatmul.bf16.gmra.mxu0 %v900
  %v1423 = vpop.f32.mrf.mxu0
  %v1424 = vadd.f32 0.0, %v1423
  %v1425 = vpop.f32.mrf.mxu0
  %v1426 = vadd.f32 0.0, %v1425
  %1427 = vmatmul.bf16.gmra.mxu0 %v901
  %v1428 = vpop.f32.mrf.mxu0
  %v1429 = vadd.f32 0.0, %v1428
  %v1430 = vpop.f32.mrf.mxu0
  %v1431 = vadd.f32 0.0, %v1430
  %1432 = vmatmul.bf16.gmra.mxu0 %v902
  %v1433 = vpop.f32.mrf.mxu0
  %v1434 = vadd.f32 0.0, %v1433
  %v1435 = vpop.f32.mrf.mxu0
  %v1436 = vadd.f32 0.0, %v1435
  %1437 = vmatmul.bf16.gmra.mxu0 %v903
  %v1438 = vpop.f32.mrf.mxu0
  %v1439 = vadd.f32 0.0, %v1438
  %v1440 = vpop.f32.mrf.mxu0
  %v1441 = vadd.f32 0.0, %v1440
  %1442 = vmatmul.bf16.gmra.mxu0 %v904
  %v1443 = vpop.f32.mrf.mxu0
  %v1444 = vadd.f32 0.0, %v1443
  %v1445 = vpop.f32.mrf.mxu0
  %v1446 = vadd.f32 0.0, %v1445
  %1447 = vmatmul.bf16.gmra.mxu0 %v905
  %v1448 = vpop.f32.mrf.mxu0
  %v1449 = vadd.f32 0.0, %v1448
  %v1450 = vpop.f32.mrf.mxu0
  %v1451 = vadd.f32 0.0, %v1450
  %1452 = vmatmul.bf16.gmra.mxu0 %v906
  %v1453 = vpop.f32.mrf.mxu0
  %v1454 = vadd.f32 0.0, %v1453
  %v1455 = vpop.f32.mrf.mxu0
  %v1456 = vadd.f32 0.0, %v1455
  %1457 = vmatmul.bf16.gmra.mxu0 %v907
  %v1458 = vpop.f32.mrf.mxu0
  %v1459 = vadd.f32 0.0, %v1458
  %v1460 = vpop.f32.mrf.mxu0
  %v1461 = vadd.f32 0.0, %v1460
  %1462 = vmatmul.bf16.gmra.mxu0 %v908
  %v1463 = vpop.f32.mrf.mxu0
  %v1464 = vadd.f32 0.0, %v1463
  %v1465 = vpop.f32.mrf.mxu0
  %v1466 = vadd.f32 0.0, %v1465
  %1467 = vmatmul.bf16.gmra.mxu0 %v909
  %v1468 = vpop.f32.mrf.mxu0
  %v1469 = vadd.f32 0.0, %v1468
  %v1470 = vpop.f32.mrf.mxu0
  %v1471 = vadd.f32 0.0, %v1470
  %1472 = vmatmul.bf16.gmra.mxu0 %v910
  %v1473 = vpop.f32.mrf.mxu0
  %v1474 = vadd.f32 0.0, %v1473
  %v1475 = vpop.f32.mrf.mxu0
  %v1476 = vadd.f32 0.0, %v1475
  %1477 = vmatmul.bf16.gmra.mxu0 %v911
  %v1478 = vpop.f32.mrf.mxu0
  %v1479 = vadd.f32 0.0, %v1478
  %v1480 = vpop.f32.mrf.mxu0
  %v1481 = vadd.f32 0.0, %v1480
  %1482 = vmatmul.bf16.gmra.mxu0 %v912
  %v1483 = vpop.f32.mrf.mxu0
  %v1484 = vadd.f32 0.0, %v1483
  %v1485 = vpop.f32.mrf.mxu0
  %v1486 = vadd.f32 0.0, %v1485
  %1487 = vmatmul.bf16.gmra.mxu0 %v913
  %v1488 = vpop.f32.mrf.mxu0
  %v1489 = vadd.f32 0.0, %v1488
  %v1490 = vpop.f32.mrf.mxu0
  %v1491 = vadd.f32 0.0, %v1490
  %1492 = vmatmul.bf16.gmra.mxu0 %v914
  %v1493 = vpop.f32.mrf.mxu0
  %v1494 = vadd.f32 0.0, %v1493
  %v1495 = vpop.f32.mrf.mxu0
  %v1496 = vadd.f32 0.0, %v1495
  %1497 = vmatmul.bf16.gmra.mxu0 %v915
  %v1498 = vpop.f32.mrf.mxu0
  %v1499 = vadd.f32 0.0, %v1498
  %v1500 = vpop.f32.mrf.mxu0
  %v1501 = vadd.f32 0.0, %v1500
  %1502 = vmatmul.bf16.gmra.mxu0 %v916
  %v1503 = vpop.f32.mrf.mxu0
  %v1504 = vadd.f32 0.0, %v1503
  %v1505 = vpop.f32.mrf.mxu0
  %v1506 = vadd.f32 0.0, %v1505
  %1507 = vmatmul.bf16.gmra.mxu0 %v917
  %v1508 = vpop.f32.mrf.mxu0
  %v1509 = vadd.f32 0.0, %v1508
  %v1510 = vpop.f32.mrf.mxu0
  %v1511 = vadd.f32 0.0, %v1510
  %1512 = vmatmul.bf16.gmra.mxu0 %v918
  %v1513 = vpop.f32.mrf.mxu0
  %v1514 = vadd.f32 0.0, %v1513
  %v1515 = vpop.f32.mrf.mxu0
  %v1516 = vadd.f32 0.0, %v1515
  %1517 = vmatmul.bf16.gmra.mxu0 %v919
  %v1518 = vpop.f32.mrf.mxu0
  %v1519 = vadd.f32 0.0, %v1518
  %v1520 = vpop.f32.mrf.mxu0
  %v1521 = vadd.f32 0.0, %v1520
  %1522 = vmatmul.bf16.gmra.mxu0 %v920
  %v1523 = vpop.f32.mrf.mxu0
  %v1524 = vadd.f32 0.0, %v1523
  %v1525 = vpop.f32.mrf.mxu0
  %v1526 = vadd.f32 0.0, %v1525
  %1527 = vmatmul.bf16.gmra.mxu0 %v921
  %v1528 = vpop.f32.mrf.mxu0
  %v1529 = vadd.f32 0.0, %v1528
  %v1530 = vpop.f32.mrf.mxu0
  %v1531 = vadd.f32 0.0, %v1530
  %1532 = vmatmul.bf16.gmra.mxu0 %v922
  %v1533 = vpop.f32.mrf.mxu0
  %v1534 = vadd.f32 0.0, %v1533
  %v1535 = vpop.f32.mrf.mxu0
  %v1536 = vadd.f32 0.0, %v1535
  %1537 = vmatmul.bf16.gmra.mxu0 %v923
  %v1538 = vpop.f32.mrf.mxu0
  %v1539 = vadd.f32 0.0, %v1538
  %v1540 = vpop.f32.mrf.mxu0
  %v1541 = vadd.f32 0.0, %v1540
  %1542 = vmatmul.bf16.gmra.mxu0 %v924
  %v1543 = vpop.f32.mrf.mxu0
  %v1544 = vadd.f32 0.0, %v1543
  %v1545 = vpop.f32.mrf.mxu0
  %v1546 = vadd.f32 0.0, %v1545
  %1547 = vmatmul.bf16.gmra.mxu0 %v925
  %v1548 = vpop.f32.mrf.mxu0
  %v1549 = vadd.f32 0.0, %v1548
  %v1550 = vpop.f32.mrf.mxu0
  %v1551 = vadd.f32 0.0, %v1550
  %1552 = vmatmul.bf16.gmra.mxu0 %v926
  %v1553 = vpop.f32.mrf.mxu0
  %v1554 = vadd.f32 0.0, %v1553
  %v1555 = vpop.f32.mrf.mxu0
  %v1556 = vadd.f32 0.0, %v1555
  %1557 = vmatmul.bf16.gmra.mxu0 %v927
  %v1558 = vpop.f32.mrf.mxu0
  %v1559 = vadd.f32 0.0, %v1558
  %v1560 = vpop.f32.mrf.mxu0
  %v1561 = vadd.f32 0.0, %v1560
  %1562 = vmatmul.bf16.gmra.mxu0 %v928
  %v1563 = vpop.f32.mrf.mxu0
  %v1564 = vadd.f32 0.0, %v1563
  %v1565 = vpop.f32.mrf.mxu0
  %v1566 = vadd.f32 0.0, %v1565
  %1567 = vmatmul.bf16.gmra.mxu0 %v929
  %v1568 = vpop.f32.mrf.mxu0
  %v1569 = vadd.f32 0.0, %v1568
  %v1570 = vpop.f32.mrf.mxu0
  %v1571 = vadd.f32 0.0, %v1570
  %1572 = vmatmul.bf16.gmra.mxu0 %v930
  %v1573 = vpop.f32.mrf.mxu0
  %v1574 = vadd.f32 0.0, %v1573
  %v1575 = vpop.f32.mrf.mxu0
  %v1576 = vadd.f32 0.0, %v1575
  %1577 = vmatmul.bf16.gmra.mxu0 %v931
  %v1578 = vpop.f32.mrf.mxu0
  %v1579 = vadd.f32 0.0, %v1578
  %v1580 = vpop.f32.mrf.mxu0
  %v1581 = vadd.f32 0.0, %v1580
  %1582 = vmatmul.bf16.gmra.mxu0 %v932
  %v1583 = vpop.f32.mrf.mxu0
  %v1584 = vadd.f32 0.0, %v1583
  %v1585 = vpop.f32.mrf.mxu0
  %v1586 = vadd.f32 0.0, %v1585
  %1587 = vmatmul.bf16.gmra.mxu0 %v933
  %v1588 = vpop.f32.mrf.mxu0
  %v1589 = vadd.f32 0.0, %v1588
  %v1590 = vpop.f32.mrf.mxu0
  %v1591 = vadd.f32 0.0, %v1590
  %1592 = vmatmul.bf16.gmra.mxu0 %v934
  %v1593 = vpop.f32.mrf.mxu0
  %v1594 = vadd.f32 0.0, %v1593
  %v1595 = vpop.f32.mrf.mxu0
  %v1596 = vadd.f32 0.0, %v1595
  %1597 = vmatmul.bf16.gmra.mxu0 %v935
  %v1598 = vpop.f32.mrf.mxu0
  %v1599 = vadd.f32 0.0, %v1598
  %v1600 = vpop.f32.mrf.mxu0
  %v1601 = vadd.f32 0.0, %v1600
  %1602 = vmatmul.bf16.gmra.mxu0 %v936
  %v1603 = vpop.f32.mrf.mxu0
  %v1604 = vadd.f32 0.0, %v1603
  %v1605 = vpop.f32.mrf.mxu0
  %v1606 = vadd.f32 0.0, %v1605
  %1607 = vmatmul.bf16.gmra.mxu0 %v937
  %v1608 = vpop.f32.mrf.mxu0
  %v1609 = vadd.f32 0.0, %v1608
  %v1610 = vpop.f32.mrf.mxu0
  %v1611 = vadd.f32 0.0, %v1610
  %1612 = vmatmul.bf16.gmra.mxu0 %v938
  %v1613 = vpop.f32.mrf.mxu0
  %v1614 = vadd.f32 0.0, %v1613
  %v1615 = vpop.f32.mrf.mxu0
  %v1616 = vadd.f32 0.0, %v1615
  %1617 = vmatmul.bf16.gmra.mxu0 %v939
  %v1618 = vpop.f32.mrf.mxu0
  %v1619 = vadd.f32 0.0, %v1618
  %v1620 = vpop.f32.mrf.mxu0
  %v1621 = vadd.f32 0.0, %v1620
  %1622 = vmatmul.bf16.gmra.mxu0 %v940
  %v1623 = vpop.f32.mrf.mxu0
  %v1624 = vadd.f32 0.0, %v1623
  %v1625 = vpop.f32.mrf.mxu0
  %v1626 = vadd.f32 0.0, %v1625
  %1627 = vmatmul.bf16.gmra.mxu0 %v941
  %v1628 = vpop.f32.mrf.mxu0
  %v1629 = vadd.f32 0.0, %v1628
  %v1630 = vpop.f32.mrf.mxu0
  %v1631 = vadd.f32 0.0, %v1630
  %1632 = vmatmul.bf16.gmra.mxu0 %v942
  %v1633 = vpop.f32.mrf.mxu0
  %v1634 = vadd.f32 0.0, %v1633
  %v1635 = vpop.f32.mrf.mxu0
  %v1636 = vadd.f32 0.0, %v1635
  %1637 = vmatmul.bf16.gmra.mxu0 %v943
  %v1638 = vpop.f32.mrf.mxu0
  %v1639 = vadd.f32 0.0, %v1638
  %v1640 = vpop.f32.mrf.mxu0
  %v1641 = vadd.f32 0.0, %v1640
  %1642 = vmatmul.bf16.gmra.mxu0 %v944
  %v1643 = vpop.f32.mrf.mxu0
  %v1644 = vadd.f32 0.0, %v1643
  %v1645 = vpop.f32.mrf.mxu0
  %v1646 = vadd.f32 0.0, %v1645
  %1647 = vmatmul.bf16.gmra.mxu0 %v945
  %v1648 = vpop.f32.mrf.mxu0
  %v1649 = vadd.f32 0.0, %v1648
  %v1650 = vpop.f32.mrf.mxu0
  %v1651 = vadd.f32 0.0, %v1650
  %1652 = vmatmul.bf16.gmra.mxu0 %v946
  %v1653 = vpop.f32.mrf.mxu0
  %v1654 = vadd.f32 0.0, %v1653
  %v1655 = vpop.f32.mrf.mxu0
  %v1656 = vadd.f32 0.0, %v1655
  %1657 = vmatmul.bf16.gmra.mxu0 %v947
  %v1658 = vpop.f32.mrf.mxu0
  %v1659 = vadd.f32 0.0, %v1658
  %v1660 = vpop.f32.mrf.mxu0
  %v1661 = vadd.f32 0.0, %v1660
  %1662 = vmatmul.bf16.gmra.mxu0 %v948
  %v1663 = vpop.f32.mrf.mxu0
  %v1664 = vadd.f32 0.0, %v1663
  %v1665 = vpop.f32.mrf.mxu0
  %v1666 = vadd.f32 0.0, %v1665
  %1667 = vmatmul.bf16.gmra.mxu0 %v949
  %v1668 = vpop.f32.mrf.mxu0
  %v1669 = vadd.f32 0.0, %v1668
  %v1670 = vpop.f32.mrf.mxu0
  %v1671 = vadd.f32 0.0, %v1670
  %1672 = vmatmul.bf16.gmra.mxu0 %v950
  %v1673 = vpop.f32.mrf.mxu0
  %v1674 = vadd.f32 0.0, %v1673
  %v1675 = vpop.f32.mrf.mxu0
  %v1676 = vadd.f32 0.0, %v1675
  %1677 = vmatmul.bf16.gmra.mxu0 %v951
  %v1678 = vpop.f32.mrf.mxu0
  %v1679 = vadd.f32 0.0, %v1678
  %v1680 = vpop.f32.mrf.mxu0
  %v1681 = vadd.f32 0.0, %v1680
  %1682 = vmatmul.bf16.gmra.mxu0 %v952
  %v1683 = vpop.f32.mrf.mxu0
  %v1684 = vadd.f32 0.0, %v1683
  %v1685 = vpop.f32.mrf.mxu0
  %v1686 = vadd.f32 0.0, %v1685
  %1687 = vmatmul.bf16.gmra.mxu0 %v953
  %v1688 = vpop.f32.mrf.mxu0
  %v1689 = vadd.f32 0.0, %v1688
  %v1690 = vpop.f32.mrf.mxu0
  %v1691 = vadd.f32 0.0, %v1690
  %1692 = vmatmul.bf16.gmra.mxu0 %v954
  %v1693 = vpop.f32.mrf.mxu0
  %v1694 = vadd.f32 0.0, %v1693
  %v1695 = vpop.f32.mrf.mxu0
  %v1696 = vadd.f32 0.0, %v1695
  %1697 = vmatmul.bf16.gmra.mxu0 %v955
  %v1698 = vpop.f32.mrf.mxu0
  %v1699 = vadd.f32 0.0, %v1698
  %v1700 = vpop.f32.mrf.mxu0
  %v1701 = vadd.f32 0.0, %v1700
  %1702 = vmatmul.bf16.gmra.mxu0 %v956
  %v1703 = vpop.f32.mrf.mxu0
  %v1704 = vadd.f32 0.0, %v1703
  %v1705 = vpop.f32.mrf.mxu0
  %v1706 = vadd.f32 0.0, %v1705
  %1707 = vmatmul.bf16.gmra.mxu0 %v957
  %v1708 = vpop.f32.mrf.mxu0
  %v1709 = vadd.f32 0.0, %v1708
  %v1710 = vpop.f32.mrf.mxu0
  %v1711 = vadd.f32 0.0, %v1710
  %1712 = vmatmul.bf16.gmra.mxu0 %v958
  %v1713 = vpop.f32.mrf.mxu0
  %v1714 = vadd.f32 0.0, %v1713
  %v1715 = vpop.f32.mrf.mxu0
  %v1716 = vadd.f32 0.0, %v1715
  %1717 = vmatmul.bf16.gmra.mxu0 %v959
  %v1718 = vpop.f32.mrf.mxu0
  %v1719 = vadd.f32 0.0, %v1718
  %v1720 = vpop.f32.mrf.mxu0
  %v1721 = vadd.f32 0.0, %v1720
  %1722 = vmatmul.bf16.gmra.mxu0 %v960
  %v1723 = vpop.f32.mrf.mxu0
  %v1724 = vadd.f32 0.0, %v1723
  %v1725 = vpop.f32.mrf.mxu0
  %v1726 = vadd.f32 0.0, %v1725
  %1727 = vmatmul.bf16.gmra.mxu0 %v961
  %v1728 = vpop.f32.mrf.mxu0
  %v1729 = vadd.f32 0.0, %v1728
  %v1730 = vpop.f32.mrf.mxu0
  %v1731 = vadd.f32 0.0, %v1730
  %1732 = vmatmul.bf16.gmra.mxu0 %v962
  %v1733 = vpop.f32.mrf.mxu0
  %v1734 = vadd.f32 0.0, %v1733
  %v1735 = vpop.f32.mrf.mxu0
  %v1736 = vadd.f32 0.0, %v1735
  %1737 = vmatmul.bf16.gmra.mxu0 %v963
  %v1738 = vpop.f32.mrf.mxu0
  %v1739 = vadd.f32 0.0, %v1738
  %v1740 = vpop.f32.mrf.mxu0
  %v1741 = vadd.f32 0.0, %v1740
  %1742 = vmatmul.bf16.gmra.mxu0 %v964
  %v1743 = vpop.f32.mrf.mxu0
  %v1744 = vadd.f32 0.0, %v1743
  %v1745 = vpop.f32.mrf.mxu0
  %v1746 = vadd.f32 0.0, %v1745
  %1747 = vmatmul.bf16.gmra.mxu0 %v965
  %v1748 = vpop.f32.mrf.mxu0
  %v1749 = vadd.f32 0.0, %v1748
  %v1750 = vpop.f32.mrf.mxu0
  %v1751 = vadd.f32 0.0, %v1750
  %1752 = vmatmul.bf16.gmra.mxu0 %v966
  %v1753 = vpop.f32.mrf.mxu0
  %v1754 = vadd.f32 0.0, %v1753
  %v1755 = vpop.f32.mrf.mxu0
  %v1756 = vadd.f32 0.0, %v1755
  %1757 = vmatmul.bf16.gmra.mxu0 %v967
  %v1758 = vpop.f32.mrf.mxu0
  %v1759 = vadd.f32 0.0, %v1758
  %v1760 = vpop.f32.mrf.mxu0
  %v1761 = vadd.f32 0.0, %v1760
  %1762 = vmatmul.bf16.gmra.mxu0 %v968
  %v1763 = vpop.f32.mrf.mxu0
  %v1764 = vadd.f32 0.0, %v1763
  %v1765 = vpop.f32.mrf.mxu0
  %v1766 = vadd.f32 0.0, %v1765
  %1767 = vmatmul.bf16.gmra.mxu0 %v969
  %v1768 = vpop.f32.mrf.mxu0
  %v1769 = vadd.f32 0.0, %v1768
  %v1770 = vpop.f32.mrf.mxu0
  %v1771 = vadd.f32 0.0, %v1770
  %1772 = vmatmul.bf16.gmra.mxu0 %v970
  %v1773 = vpop.f32.mrf.mxu0
  %v1774 = vadd.f32 0.0, %v1773
  %v1775 = vpop.f32.mrf.mxu0
  %v1776 = vadd.f32 0.0, %v1775
  %1777 = vmatmul.bf16.gmra.mxu0 %v971
  %v1778 = vpop.f32.mrf.mxu0
  %v1779 = vadd.f32 0.0, %v1778
  %v1780 = vpop.f32.mrf.mxu0
  %v1781 = vadd.f32 0.0, %v1780
  %1782 = vmatmul.bf16.gmra.mxu0 %v972
  %v1783 = vpop.f32.mrf.mxu0
  %v1784 = vadd.f32 0.0, %v1783
  %v1785 = vpop.f32.mrf.mxu0
  %v1786 = vadd.f32 0.0, %v1785
  %1787 = vmatmul.bf16.gmra.mxu0 %v973
  %v1788 = vpop.f32.mrf.mxu0
  %v1789 = vadd.f32 0.0, %v1788
  %v1790 = vpop.f32.mrf.mxu0
  %v1791 = vadd.f32 0.0, %v1790
  %1792 = vmatmul.bf16.gmra.mxu0 %v974
  %v1793 = vpop.f32.mrf.mxu0
  %v1794 = vadd.f32 0.0, %v1793
  %v1795 = vpop.f32.mrf.mxu0
  %v1796 = vadd.f32 0.0, %v1795
  %1797 = vmatmul.bf16.gmra.mxu0 %v975
  %v1798 = vpop.f32.mrf.mxu0
  %v1799 = vadd.f32 0.0, %v1798
  %v1800 = vpop.f32.mrf.mxu0
  %v1801 = vadd.f32 0.0, %v1800
  %1802 = vmatmul.bf16.gmra.mxu0 %v976
  %v1803 = vpop.f32.mrf.mxu0
  %v1804 = vadd.f32 0.0, %v1803
  %v1805 = vpop.f32.mrf.mxu0
  %v1806 = vadd.f32 0.0, %v1805
  %1807 = vmatmul.bf16.gmra.mxu0 %v977
  %v1808 = vpop.f32.mrf.mxu0
  %v1809 = vadd.f32 0.0, %v1808
  %v1810 = vpop.f32.mrf.mxu0
  %v1811 = vadd.f32 0.0, %v1810
  %1812 = vmatmul.bf16.gmra.mxu0 %v978
  %v1813 = vpop.f32.mrf.mxu0
  %v1814 = vadd.f32 0.0, %v1813
  %v1815 = vpop.f32.mrf.mxu0
  %v1816 = vadd.f32 0.0, %v1815
  %1817 = vmatmul.bf16.gmra.mxu0 %v979
  %v1818 = vpop.f32.mrf.mxu0
  %v1819 = vadd.f32 0.0, %v1818
  %v1820 = vpop.f32.mrf.mxu0
  %v1821 = vadd.f32 0.0, %v1820
  %1822 = vmatmul.bf16.gmra.mxu0 %v980
  %v1823 = vpop.f32.mrf.mxu0
  %v1824 = vadd.f32 0.0, %v1823
  %v1825 = vpop.f32.mrf.mxu0
  %v1826 = vadd.f32 0.0, %v1825
  %1827 = vmatmul.bf16.gmra.mxu0 %v981
  %v1828 = vpop.f32.mrf.mxu0
  %v1829 = vadd.f32 0.0, %v1828
  %v1830 = vpop.f32.mrf.mxu0
  %v1831 = vadd.f32 0.0, %v1830
  %1832 = vmatmul.bf16.gmra.mxu0 %v982
  %v1833 = vpop.f32.mrf.mxu0
  %v1834 = vadd.f32 0.0, %v1833
  %v1835 = vpop.f32.mrf.mxu0
  %v1836 = vadd.f32 0.0, %v1835
  %1837 = vmatmul.bf16.gmra.mxu0 %v983
  %v1838 = vpop.f32.mrf.mxu0
  %v1839 = vadd.f32 0.0, %v1838
  %v1840 = vpop.f32.mrf.mxu0
  %v1841 = vadd.f32 0.0, %v1840
  %1842 = vmatmul.bf16.gmra.mxu0 %v984
  %v1843 = vpop.f32.mrf.mxu0
  %v1844 = vadd.f32 0.0, %v1843
  %v1845 = vpop.f32.mrf.mxu0
  %v1846 = vadd.f32 0.0, %v1845
  %1847 = vmatmul.bf16.gmra.mxu0 %v985
  %v1848 = vpop.f32.mrf.mxu0
  %v1849 = vadd.f32 0.0, %v1848
  %v1850 = vpop.f32.mrf.mxu0
  %v1851 = vadd.f32 0.0, %v1850
  %1852 = vmatmul.bf16.gmra.mxu0 %v986
  %v1853 = vpop.f32.mrf.mxu0
  %v1854 = vadd.f32 0.0, %v1853
  %v1855 = vpop.f32.mrf.mxu0
  %v1856 = vadd.f32 0.0, %v1855
  %1857 = vmatmul.bf16.gmra.mxu0 %v987
  %v1858 = vpop.f32.mrf.mxu0
  %v1859 = vadd.f32 0.0, %v1858
  %v1860 = vpop.f32.mrf.mxu0
  %v1861 = vadd.f32 0.0, %v1860
  %1862 = vmatmul.bf16.gmra.mxu0 %v988
  %v1863 = vpop.f32.mrf.mxu0
  %v1864 = vadd.f32 0.0, %v1863
  %v1865 = vpop.f32.mrf.mxu0
  %1866 = vdwg.mxu0
  %v1867 = vld [vmem:[%s2] sm:$0x1]
  %v1869 = vperm.slane %v1867, 0
  %v1871 = vmul.f32 %v1184, %v1869
  %v1872 = vmul.f32 %v1186, %v1869
  %v1873 = vmul.f32 %v1189, %v1869
  %v1874 = vmul.f32 %v1191, %v1869
  %v1875 = vmul.f32 %v1194, %v1869
  %v1876 = vmul.f32 %v1196, %v1869
  %v1877 = vmul.f32 %v1199, %v1869
  %v1878 = vmul.f32 %v1201, %v1869
  %v1879 = vmul.f32 %v1204, %v1869
  %v1880 = vmul.f32 %v1206, %v1869
  %v1881 = vmul.f32 %v1209, %v1869
  %v1882 = vmul.f32 %v1211, %v1869
  %v1883 = vmul.f32 %v1214, %v1869
  %v1884 = vmul.f32 %v1216, %v1869
  %v1885 = vmul.f32 %v1219, %v1869
  %v1886 = vmul.f32 %v1221, %v1869
  %v1887 = vmul.f32 %v1224, %v1869
  %v1888 = vmul.f32 %v1226, %v1869
  %v1889 = vmul.f32 %v1229, %v1869
  %v1890 = vmul.f32 %v1231, %v1869
  %v1891 = vmul.f32 %v1234, %v1869
  %v1892 = vmul.f32 %v1236, %v1869
  %v1893 = vmul.f32 %v1239, %v1869
  %v1894 = vmul.f32 %v1241, %v1869
  %v1895 = vmul.f32 %v1244, %v1869
  %v1896 = vmul.f32 %v1246, %v1869
  %v1897 = vmul.f32 %v1249, %v1869
  %v1898 = vmul.f32 %v1251, %v1869
  %v1899 = vmul.f32 %v1254, %v1869
  %v1900 = vmul.f32 %v1256, %v1869
  %v1901 = vmul.f32 %v1259, %v1869
  %v1902 = vmul.f32 %v1261, %v1869
  %v1903 = vmul.f32 %v1264, %v1869
  %v1904 = vmul.f32 %v1266, %v1869
  %v1905 = vmul.f32 %v1269, %v1869
  %v1906 = vmul.f32 %v1271, %v1869
  %v1907 = vmul.f32 %v1274, %v1869
  %v1908 = vmul.f32 %v1276, %v1869
  %v1909 = vmul.f32 %v1279, %v1869
  %v1910 = vmul.f32 %v1281, %v1869
  %v1911 = vmul.f32 %v1284, %v1869
  %v1912 = vmul.f32 %v1286, %v1869
  %v1913 = vmul.f32 %v1289, %v1869
  %v1914 = vmul.f32 %v1291, %v1869
  %v1915 = vmul.f32 %v1294, %v1869
  %v1916 = vmul.f32 %v1296, %v1869
  %v1917 = vmul.f32 %v1299, %v1869
  %v1918 = vmul.f32 %v1301, %v1869
  %v1919 = vmul.f32 %v1304, %v1869
  %v1920 = vmul.f32 %v1306, %v1869
  %v1921 = vmul.f32 %v1309, %v1869
  %v1922 = vmul.f32 %v1311, %v1869
  %v1923 = vmul.f32 %v1314, %v1869
  %v1924 = vmul.f32 %v1316, %v1869
  %v1925 = vmul.f32 %v1319, %v1869
  %v1926 = vmul.f32 %v1321, %v1869
  %v1927 = vmul.f32 %v1324, %v1869
  %v1928 = vmul.f32 %v1326, %v1869
  %v1929 = vmul.f32 %v1329, %v1869
  %v1930 = vmul.f32 %v1331, %v1869
  %v1931 = vmul.f32 %v1334, %v1869
  %v1932 = vmul.f32 %v1336, %v1869
  %v1933 = vmul.f32 %v1339, %v1869
  %v1934 = vmul.f32 %v1341, %v1869
  %v1935 = vmul.f32 %v1344, %v1869
  %v1936 = vmul.f32 %v1346, %v1869
  %v1937 = vmul.f32 %v1349, %v1869
  %v1938 = vmul.f32 %v1351, %v1869
  %v1939 = vmul.f32 %v1354, %v1869
  %v1940 = vmul.f32 %v1356, %v1869
  %v1941 = vmul.f32 %v1359, %v1869
  %v1942 = vmul.f32 %v1361, %v1869
  %v1943 = vmul.f32 %v1364, %v1869
  %v1944 = vmul.f32 %v1366, %v1869
  %v1945 = vmul.f32 %v1369, %v1869
  %v1946 = vmul.f32 %v1371, %v1869
  %v1947 = vmul.f32 %v1374, %v1869
  %v1948 = vmul.f32 %v1376, %v1869
  %v1949 = vmul.f32 %v1379, %v1869
  %v1950 = vmul.f32 %v1381, %v1869
  %v1951 = vmul.f32 %v1384, %v1869
  %v1952 = vmul.f32 %v1386, %v1869
  %v1953 = vmul.f32 %v1389, %v1869
  %v1954 = vmul.f32 %v1391, %v1869
  %v1955 = vmul.f32 %v1394, %v1869
  %v1956 = vmul.f32 %v1396, %v1869
  %v1957 = vmul.f32 %v1399, %v1869
  %v1958 = vmul.f32 %v1401, %v1869
  %v1959 = vmul.f32 %v1404, %v1869
  %v1960 = vmul.f32 %v1406, %v1869
  %v1961 = vmul.f32 %v1409, %v1869
  %v1962 = vmul.f32 %v1411, %v1869
  %v1963 = vmul.f32 %v1414, %v1869
  %v1964 = vmul.f32 %v1416, %v1869
  %v1965 = vmul.f32 %v1419, %v1869
  %v1966 = vmul.f32 %v1421, %v1869
  %v1967 = vmul.f32 %v1424, %v1869
  %v1968 = vmul.f32 %v1426, %v1869
  %v1969 = vmul.f32 %v1429, %v1869
  %v1970 = vmul.f32 %v1431, %v1869
  %v1971 = vmul.f32 %v1434, %v1869
  %v1972 = vmul.f32 %v1436, %v1869
  %v1973 = vmul.f32 %v1439, %v1869
  %v1974 = vmul.f32 %v1441, %v1869
  %v1975 = vmul.f32 %v1444, %v1869
  %v1976 = vmul.f32 %v1446, %v1869
  %v1977 = vmul.f32 %v1449, %v1869
  %v1978 = vmul.f32 %v1451, %v1869
  %v1979 = vmul.f32 %v1454, %v1869
  %v1980 = vmul.f32 %v1456, %v1869
  %v1981 = vmul.f32 %v1459, %v1869
  %v1982 = vmul.f32 %v1461, %v1869
  %v1983 = vmul.f32 %v1464, %v1869
  %v1984 = vmul.f32 %v1466, %v1869
  %v1985 = vmul.f32 %v1469, %v1869
  %v1986 = vmul.f32 %v1471, %v1869
  %v1987 = vmul.f32 %v1474, %v1869
  %v1988 = vmul.f32 %v1476, %v1869
  %v1989 = vmul.f32 %v1479, %v1869
  %v1990 = vmul.f32 %v1481, %v1869
  %v1991 = vmul.f32 %v1484, %v1869
  %v1992 = vmul.f32 %v1486, %v1869
  %v1993 = vmul.f32 %v1489, %v1869
  %v1994 = vmul.f32 %v1491, %v1869
  %v1995 = vmul.f32 %v1494, %v1869
  %v1996 = vmul.f32 %v1496, %v1869
  %v1997 = vmul.f32 %v1499, %v1869
  %v1998 = vmul.f32 %v1501, %v1869
  %v1999 = vmul.f32 %v1504, %v1869
  %v2000 = vmul.f32 %v1506, %v1869
  %v2001 = vmul.f32 %v1509, %v1869
  %v2002 = vmul.f32 %v1511, %v1869
  %v2003 = vmul.f32 %v1514, %v1869
  %v2004 = vmul.f32 %v1516, %v1869
  %v2005 = vmul.f32 %v1519, %v1869
  %v2006 = vmul.f32 %v1521, %v1869
  %v2007 = vmul.f32 %v1524, %v1869
  %v2008 = vmul.f32 %v1526, %v1869
  %v2009 = vmul.f32 %v1529, %v1869
  %v2010 = vmul.f32 %v1531, %v1869
  %v2011 = vmul.f32 %v1534, %v1869
  %v2012 = vmul.f32 %v1536, %v1869
  %v2013 = vmul.f32 %v1539, %v1869
  %v2014 = vmul.f32 %v1541, %v1869
  %v2015 = vmul.f32 %v1544, %v1869
  %v2016 = vmul.f32 %v1546, %v1869
  %v2017 = vmul.f32 %v1549, %v1869
  %v2018 = vmul.f32 %v1551, %v1869
  %v2019 = vmul.f32 %v1554, %v1869
  %v2020 = vmul.f32 %v1556, %v1869
  %v2021 = vmul.f32 %v1559, %v1869
  %v2022 = vmul.f32 %v1561, %v1869
  %v2023 = vmul.f32 %v1564, %v1869
  %v2024 = vmul.f32 %v1566, %v1869
  %v2025 = vmul.f32 %v1569, %v1869
  %v2026 = vmul.f32 %v1571, %v1869
  %v2027 = vmul.f32 %v1574, %v1869
  %v2028 = vmul.f32 %v1576, %v1869
  %v2029 = vmul.f32 %v1579, %v1869
  %v2030 = vmul.f32 %v1581, %v1869
  %v2031 = vmul.f32 %v1584, %v1869
  %v2032 = vmul.f32 %v1586, %v1869
  %v2033 = vmul.f32 %v1589, %v1869
  %v2034 = vmul.f32 %v1591, %v1869
  %v2035 = vmul.f32 %v1594, %v1869
  %v2036 = vmul.f32 %v1596, %v1869
  %v2037 = vmul.f32 %v1599, %v1869
  %v2038 = vmul.f32 %v1601, %v1869
  %v2039 = vmul.f32 %v1604, %v1869
  %v2040 = vmul.f32 %v1606, %v1869
  %v2041 = vmul.f32 %v1609, %v1869
  %v2042 = vmul.f32 %v1611, %v1869
  %v2043 = vmul.f32 %v1614, %v1869
  %v2044 = vmul.f32 %v1616, %v1869
  %v2045 = vmul.f32 %v1619, %v1869
  %v2046 = vmul.f32 %v1621, %v1869
  %v2047 = vmul.f32 %v1624, %v1869
  %v2048 = vmul.f32 %v1626, %v1869
  %v2049 = vmul.f32 %v1629, %v1869
  %v2050 = vmul.f32 %v1631, %v1869
  %v2051 = vmul.f32 %v1634, %v1869
  %v2052 = vmul.f32 %v1636, %v1869
  %v2053 = vmul.f32 %v1639, %v1869
  %v2054 = vmul.f32 %v1641, %v1869
  %v2055 = vmul.f32 %v1644, %v1869
  %v2056 = vmul.f32 %v1646, %v1869
  %v2057 = vmul.f32 %v1649, %v1869
  %v2058 = vmul.f32 %v1651, %v1869
  %v2059 = vmul.f32 %v1654, %v1869
  %v2060 = vmul.f32 %v1656, %v1869
  %v2061 = vmul.f32 %v1659, %v1869
  %v2062 = vmul.f32 %v1661, %v1869
  %v2063 = vmul.f32 %v1664, %v1869
  %v2064 = vmul.f32 %v1666, %v1869
  %v2065 = vmul.f32 %v1669, %v1869
  %v2066 = vmul.f32 %v1671, %v1869
  %v2067 = vmul.f32 %v1674, %v1869
  %v2068 = vmul.f32 %v1676, %v1869
  %v2069 = vmul.f32 %v1679, %v1869
  %v2070 = vmul.f32 %v1681, %v1869
  %v2071 = vmul.f32 %v1684, %v1869
  %v2072 = vmul.f32 %v1686, %v1869
  %v2073 = vmul.f32 %v1689, %v1869
  %v2074 = vmul.f32 %v1691, %v1869
  %v2075 = vmul.f32 %v1694, %v1869
  %v2076 = vmul.f32 %v1696, %v1869
  %v2077 = vmul.f32 %v1699, %v1869
  %v2078 = vmul.f32 %v1701, %v1869
  %v2079 = vmul.f32 %v1704, %v1869
  %v2080 = vmul.f32 %v1706, %v1869
  %v2081 = vmul.f32 %v1709, %v1869
  %v2082 = vmul.f32 %v1711, %v1869
  %v2083 = vmul.f32 %v1714, %v1869
  %v2084 = vmul.f32 %v1716, %v1869
  %v2085 = vmul.f32 %v1719, %v1869
  %v2086 = vmul.f32 %v1721, %v1869
  %v2087 = vmul.f32 %v1724, %v1869
  %v2088 = vmul.f32 %v1726, %v1869
  %v2089 = vmul.f32 %v1729, %v1869
  %v2090 = vmul.f32 %v1731, %v1869
  %v2091 = vmul.f32 %v1734, %v1869
  %v2092 = vmul.f32 %v1736, %v1869
  %v2093 = vmul.f32 %v1739, %v1869
  %v2094 = vmul.f32 %v1741, %v1869
  %v2095 = vmul.f32 %v1744, %v1869
  %v2096 = vmul.f32 %v1746, %v1869
  %v2097 = vmul.f32 %v1749, %v1869
  %v2098 = vmul.f32 %v1751, %v1869
  %v2099 = vmul.f32 %v1754, %v1869
  %v2100 = vmul.f32 %v1756, %v1869
  %v2101 = vmul.f32 %v1759, %v1869
  %v2102 = vmul.f32 %v1761, %v1869
  %v2103 = vmul.f32 %v1764, %v1869
  %v2104 = vmul.f32 %v1766, %v1869
  %v2105 = vmul.f32 %v1769, %v1869
  %v2106 = vmul.f32 %v1771, %v1869
  %v2107 = vmul.f32 %v1774, %v1869
  %v2108 = vmul.f32 %v1776, %v1869
  %v2109 = vmul.f32 %v1779, %v1869
  %v2110 = vmul.f32 %v1781, %v1869
  %v2111 = vmul.f32 %v1784, %v1869
  %v2112 = vmul.f32 %v1786, %v1869
  %v2113 = vmul.f32 %v1789, %v1869
  %v2114 = vmul.f32 %v1791, %v1869
  %v2115 = vmul.f32 %v1794, %v1869
  %v2116 = vmul.f32 %v1796, %v1869
  %v2117 = vmul.f32 %v1799, %v1869
  %v2118 = vmul.f32 %v1801, %v1869
  %v2119 = vmul.f32 %v1804, %v1869
  %v2120 = vmul.f32 %v1806, %v1869
  %v2121 = vmul.f32 %v1809, %v1869
  %v2122 = vmul.f32 %v1811, %v1869
  %v2123 = vmul.f32 %v1814, %v1869
  %v2124 = vmul.f32 %v1816, %v1869
  %v2125 = vmul.f32 %v1819, %v1869
  %v2126 = vmul.f32 %v1821, %v1869
  %v2127 = vmul.f32 %v1824, %v1869
  %v2128 = vmul.f32 %v1826, %v1869
  %v2129 = vmul.f32 %v1829, %v1869
  %v2130 = vmul.f32 %v1831, %v1869
  %v2131 = vmul.f32 %v1834, %v1869
  %v2132 = vmul.f32 %v1836, %v1869
  %v2133 = vmul.f32 %v1839, %v1869
  %v2134 = vmul.f32 %v1841, %v1869
  %v2135 = vmul.f32 %v1844, %v1869
  %v2136 = vmul.f32 %v1846, %v1869
  %v2137 = vmul.f32 %v1849, %v1869
  %v2138 = vmul.f32 %v1851, %v1869
  %v2139 = vmul.f32 %v1854, %v1869
  %v2140 = vmul.f32 %v1856, %v1869
  %v2141 = vmul.f32 %v1859, %v1869
  %v2142 = vmul.f32 %v1861, %v1869
  %v2143 = vmul.f32 %v1864, %v1869
  %v2144 = vld [vmem:[%s3] sm:$0x1]
  %v2146 = vperm.slane %v2144, 0
  %v2148 = vadd.f32 %v1871, %v2146
  %v2149 = vadd.f32 %v1872, %v2146
  %v2150 = vadd.f32 %v1873, %v2146
  %v2151 = vadd.f32 %v1874, %v2146
  %v2152 = vadd.f32 %v1875, %v2146
  %v2153 = vadd.f32 %v1876, %v2146
  %v2154 = vadd.f32 %v1877, %v2146
  %v2155 = vadd.f32 %v1878, %v2146
  %v2156 = vadd.f32 %v1879, %v2146
  %v2157 = vadd.f32 %v1880, %v2146
  %v2158 = vadd.f32 %v1881, %v2146
  %v2159 = vadd.f32 %v1882, %v2146
  %v2160 = vadd.f32 %v1883, %v2146
  %v2161 = vadd.f32 %v1884, %v2146
  %v2162 = vadd.f32 %v1885, %v2146
  %v2163 = vadd.f32 %v1886, %v2146
  %v2164 = vadd.f32 %v1887, %v2146
  %v2165 = vadd.f32 %v1888, %v2146
  %v2166 = vadd.f32 %v1889, %v2146
  %v2167 = vadd.f32 %v1890, %v2146
  %v2168 = vadd.f32 %v1891, %v2146
  %v2169 = vadd.f32 %v1892, %v2146
  %v2170 = vadd.f32 %v1893, %v2146
  %v2171 = vadd.f32 %v1894, %v2146
  %v2172 = vadd.f32 %v1895, %v2146
  %v2173 = vadd.f32 %v1896, %v2146
  %v2174 = vadd.f32 %v1897, %v2146
  %v2175 = vadd.f32 %v1898, %v2146
  %v2176 = vadd.f32 %v1899, %v2146
  %v2177 = vadd.f32 %v1900, %v2146
  %v2178 = vadd.f32 %v1901, %v2146
  %v2179 = vadd.f32 %v1902, %v2146
  %v2180 = vadd.f32 %v1903, %v2146
  %v2181 = vadd.f32 %v1904, %v2146
  %v2182 = vadd.f32 %v1905, %v2146
  %v2183 = vadd.f32 %v1906, %v2146
  %v2184 = vadd.f32 %v1907, %v2146
  %v2185 = vadd.f32 %v1908, %v2146
  %v2186 = vadd.f32 %v1909, %v2146
  %v2187 = vadd.f32 %v1910, %v2146
  %v2188 = vadd.f32 %v1911, %v2146
  %v2189 = vadd.f32 %v1912, %v2146
  %v2190 = vadd.f32 %v1913, %v2146
  %v2191 = vadd.f32 %v1914, %v2146
  %v2192 = vadd.f32 %v1915, %v2146
  %v2193 = vadd.f32 %v1916, %v2146
  %v2194 = vadd.f32 %v1917, %v2146
  %v2195 = vadd.f32 %v1918, %v2146
  %v2196 = vadd.f32 %v1919, %v2146
  %v2197 = vadd.f32 %v1920, %v2146
  %v2198 = vadd.f32 %v1921, %v2146
  %v2199 = vadd.f32 %v1922, %v2146
  %v2200 = vadd.f32 %v1923, %v2146
  %v2201 = vadd.f32 %v1924, %v2146
  %v2202 = vadd.f32 %v1925, %v2146
  %v2203 = vadd.f32 %v1926, %v2146
  %v2204 = vadd.f32 %v1927, %v2146
  %v2205 = vadd.f32 %v1928, %v2146
  %v2206 = vadd.f32 %v1929, %v2146
  %v2207 = vadd.f32 %v1930, %v2146
  %v2208 = vadd.f32 %v1931, %v2146
  %v2209 = vadd.f32 %v1932, %v2146
  %v2210 = vadd.f32 %v1933, %v2146
  %v2211 = vadd.f32 %v1934, %v2146
  %v2212 = vadd.f32 %v1935, %v2146
  %v2213 = vadd.f32 %v1936, %v2146
  %v2214 = vadd.f32 %v1937, %v2146
  %v2215 = vadd.f32 %v1938, %v2146
  %v2216 = vadd.f32 %v1939, %v2146
  %v2217 = vadd.f32 %v1940, %v2146
  %v2218 = vadd.f32 %v1941, %v2146
  %v2219 = vadd.f32 %v1942, %v2146
  %v2220 = vadd.f32 %v1943, %v2146
  %v2221 = vadd.f32 %v1944, %v2146
  %v2222 = vadd.f32 %v1945, %v2146
  %v2223 = vadd.f32 %v1946, %v2146
  %v2224 = vadd.f32 %v1947, %v2146
  %v2225 = vadd.f32 %v1948, %v2146
  %v2226 = vadd.f32 %v1949, %v2146
  %v2227 = vadd.f32 %v1950, %v2146
  %v2228 = vadd.f32 %v1951, %v2146
  %v2229 = vadd.f32 %v1952, %v2146
  %v2230 = vadd.f32 %v1953, %v2146
  %v2231 = vadd.f32 %v1954, %v2146
  %v2232 = vadd.f32 %v1955, %v2146
  %v2233 = vadd.f32 %v1956, %v2146
  %v2234 = vadd.f32 %v1957, %v2146
  %v2235 = vadd.f32 %v1958, %v2146
  %v2236 = vadd.f32 %v1959, %v2146
  %v2237 = vadd.f32 %v1960, %v2146
  %v2238 = vadd.f32 %v1961, %v2146
  %v2239 = vadd.f32 %v1962, %v2146
  %v2240 = vadd.f32 %v1963, %v2146
  %v2241 = vadd.f32 %v1964, %v2146
  %v2242 = vadd.f32 %v1965, %v2146
  %v2243 = vadd.f32 %v1966, %v2146
  %v2244 = vadd.f32 %v1967, %v2146
  %v2245 = vadd.f32 %v1968, %v2146
  %v2246 = vadd.f32 %v1969, %v2146
  %v2247 = vadd.f32 %v1970, %v2146
  %v2248 = vadd.f32 %v1971, %v2146
  %v2249 = vadd.f32 %v1972, %v2146
  %v2250 = vadd.f32 %v1973, %v2146
  %v2251 = vadd.f32 %v1974, %v2146
  %v2252 = vadd.f32 %v1975, %v2146
  %v2253 = vadd.f32 %v1976, %v2146
  %v2254 = vadd.f32 %v1977, %v2146
  %v2255 = vadd.f32 %v1978, %v2146
  %v2256 = vadd.f32 %v1979, %v2146
  %v2257 = vadd.f32 %v1980, %v2146
  %v2258 = vadd.f32 %v1981, %v2146
  %v2259 = vadd.f32 %v1982, %v2146
  %v2260 = vadd.f32 %v1983, %v2146
  %v2261 = vadd.f32 %v1984, %v2146
  %v2262 = vadd.f32 %v1985, %v2146
  %v2263 = vadd.f32 %v1986, %v2146
  %v2264 = vadd.f32 %v1987, %v2146
  %v2265 = vadd.f32 %v1988, %v2146
  %v2266 = vadd.f32 %v1989, %v2146
  %v2267 = vadd.f32 %v1990, %v2146
  %v2268 = vadd.f32 %v1991, %v2146
  %v2269 = vadd.f32 %v1992, %v2146
  %v2270 = vadd.f32 %v1993, %v2146
  %v2271 = vadd.f32 %v1994, %v2146
  %v2272 = vadd.f32 %v1995, %v2146
  %v2273 = vadd.f32 %v1996, %v2146
  %v2274 = vadd.f32 %v1997, %v2146
  %v2275 = vadd.f32 %v1998, %v2146
  %v2276 = vadd.f32 %v1999, %v2146
  %v2277 = vadd.f32 %v2000, %v2146
  %v2278 = vadd.f32 %v2001, %v2146
  %v2279 = vadd.f32 %v2002, %v2146
  %v2280 = vadd.f32 %v2003, %v2146
  %v2281 = vadd.f32 %v2004, %v2146
  %v2282 = vadd.f32 %v2005, %v2146
  %v2283 = vadd.f32 %v2006, %v2146
  %v2284 = vadd.f32 %v2007, %v2146
  %v2285 = vadd.f32 %v2008, %v2146
  %v2286 = vadd.f32 %v2009, %v2146
  %v2287 = vadd.f32 %v2010, %v2146
  %v2288 = vadd.f32 %v2011, %v2146
  %v2289 = vadd.f32 %v2012, %v2146
  %v2290 = vadd.f32 %v2013, %v2146
  %v2291 = vadd.f32 %v2014, %v2146
  %v2292 = vadd.f32 %v2015, %v2146
  %v2293 = vadd.f32 %v2016, %v2146
  %v2294 = vadd.f32 %v2017, %v2146
  %v2295 = vadd.f32 %v2018, %v2146
  %v2296 = vadd.f32 %v2019, %v2146
  %v2297 = vadd.f32 %v2020, %v2146
  %v2298 = vadd.f32 %v2021, %v2146
  %v2299 = vadd.f32 %v2022, %v2146
  %v2300 = vadd.f32 %v2023, %v2146
  %v2301 = vadd.f32 %v2024, %v2146
  %v2302 = vadd.f32 %v2025, %v2146
  %v2303 = vadd.f32 %v2026, %v2146
  %v2304 = vadd.f32 %v2027, %v2146
  %v2305 = vadd.f32 %v2028, %v2146
  %v2306 = vadd.f32 %v2029, %v2146
  %v2307 = vadd.f32 %v2030, %v2146
  %v2308 = vadd.f32 %v2031, %v2146
  %v2309 = vadd.f32 %v2032, %v2146
  %v2310 = vadd.f32 %v2033, %v2146
  %v2311 = vadd.f32 %v2034, %v2146
  %v2312 = vadd.f32 %v2035, %v2146
  %v2313 = vadd.f32 %v2036, %v2146
  %v2314 = vadd.f32 %v2037, %v2146
  %v2315 = vadd.f32 %v2038, %v2146
  %v2316 = vadd.f32 %v2039, %v2146
  %v2317 = vadd.f32 %v2040, %v2146
  %v2318 = vadd.f32 %v2041, %v2146
  %v2319 = vadd.f32 %v2042, %v2146
  %v2320 = vadd.f32 %v2043, %v2146
  %v2321 = vadd.f32 %v2044, %v2146
  %v2322 = vadd.f32 %v2045, %v2146
  %v2323 = vadd.f32 %v2046, %v2146
  %v2324 = vadd.f32 %v2047, %v2146
  %v2325 = vadd.f32 %v2048, %v2146
  %v2326 = vadd.f32 %v2049, %v2146
  %v2327 = vadd.f32 %v2050, %v2146
  %v2328 = vadd.f32 %v2051, %v2146
  %v2329 = vadd.f32 %v2052, %v2146
  %v2330 = vadd.f32 %v2053, %v2146
  %v2331 = vadd.f32 %v2054, %v2146
  %v2332 = vadd.f32 %v2055, %v2146
  %v2333 = vadd.f32 %v2056, %v2146
  %v2334 = vadd.f32 %v2057, %v2146
  %v2335 = vadd.f32 %v2058, %v2146
  %v2336 = vadd.f32 %v2059, %v2146
  %v2337 = vadd.f32 %v2060, %v2146
  %v2338 = vadd.f32 %v2061, %v2146
  %v2339 = vadd.f32 %v2062, %v2146
  %v2340 = vadd.f32 %v2063, %v2146
  %v2341 = vadd.f32 %v2064, %v2146
  %v2342 = vadd.f32 %v2065, %v2146
  %v2343 = vadd.f32 %v2066, %v2146
  %v2344 = vadd.f32 %v2067, %v2146
  %v2345 = vadd.f32 %v2068, %v2146
  %v2346 = vadd.f32 %v2069, %v2146
  %v2347 = vadd.f32 %v2070, %v2146
  %v2348 = vadd.f32 %v2071, %v2146
  %v2349 = vadd.f32 %v2072, %v2146
  %v2350 = vadd.f32 %v2073, %v2146
  %v2351 = vadd.f32 %v2074, %v2146
  %v2352 = vadd.f32 %v2075, %v2146
  %v2353 = vadd.f32 %v2076, %v2146
  %v2354 = vadd.f32 %v2077, %v2146
  %v2355 = vadd.f32 %v2078, %v2146
  %v2356 = vadd.f32 %v2079, %v2146
  %v2357 = vadd.f32 %v2080, %v2146
  %v2358 = vadd.f32 %v2081, %v2146
  %v2359 = vadd.f32 %v2082, %v2146
  %v2360 = vadd.f32 %v2083, %v2146
  %v2361 = vadd.f32 %v2084, %v2146
  %v2362 = vadd.f32 %v2085, %v2146
  %v2363 = vadd.f32 %v2086, %v2146
  %v2364 = vadd.f32 %v2087, %v2146
  %v2365 = vadd.f32 %v2088, %v2146
  %v2366 = vadd.f32 %v2089, %v2146
  %v2367 = vadd.f32 %v2090, %v2146
  %v2368 = vadd.f32 %v2091, %v2146
  %v2369 = vadd.f32 %v2092, %v2146
  %v2370 = vadd.f32 %v2093, %v2146
  %v2371 = vadd.f32 %v2094, %v2146
  %v2372 = vadd.f32 %v2095, %v2146
  %v2373 = vadd.f32 %v2096, %v2146
  %v2374 = vadd.f32 %v2097, %v2146
  %v2375 = vadd.f32 %v2098, %v2146
  %v2376 = vadd.f32 %v2099, %v2146
  %v2377 = vadd.f32 %v2100, %v2146
  %v2378 = vadd.f32 %v2101, %v2146
  %v2379 = vadd.f32 %v2102, %v2146
  %v2380 = vadd.f32 %v2103, %v2146
  %v2381 = vadd.f32 %v2104, %v2146
  %v2382 = vadd.f32 %v2105, %v2146
  %v2383 = vadd.f32 %v2106, %v2146
  %v2384 = vadd.f32 %v2107, %v2146
  %v2385 = vadd.f32 %v2108, %v2146
  %v2386 = vadd.f32 %v2109, %v2146
  %v2387 = vadd.f32 %v2110, %v2146
  %v2388 = vadd.f32 %v2111, %v2146
  %v2389 = vadd.f32 %v2112, %v2146
  %v2390 = vadd.f32 %v2113, %v2146
  %v2391 = vadd.f32 %v2114, %v2146
  %v2392 = vadd.f32 %v2115, %v2146
  %v2393 = vadd.f32 %v2116, %v2146
  %v2394 = vadd.f32 %v2117, %v2146
  %v2395 = vadd.f32 %v2118, %v2146
  %v2396 = vadd.f32 %v2119, %v2146
  %v2397 = vadd.f32 %v2120, %v2146
  %v2398 = vadd.f32 %v2121, %v2146
  %v2399 = vadd.f32 %v2122, %v2146
  %v2400 = vadd.f32 %v2123, %v2146
  %v2401 = vadd.f32 %v2124, %v2146
  %v2402 = vadd.f32 %v2125, %v2146
  %v2403 = vadd.f32 %v2126, %v2146
  %v2404 = vadd.f32 %v2127, %v2146
  %v2405 = vadd.f32 %v2128, %v2146
  %v2406 = vadd.f32 %v2129, %v2146
  %v2407 = vadd.f32 %v2130, %v2146
  %v2408 = vadd.f32 %v2131, %v2146
  %v2409 = vadd.f32 %v2132, %v2146
  %v2410 = vadd.f32 %v2133, %v2146
  %v2411 = vadd.f32 %v2134, %v2146
  %v2412 = vadd.f32 %v2135, %v2146
  %v2413 = vadd.f32 %v2136, %v2146
  %v2414 = vadd.f32 %v2137, %v2146
  %v2415 = vadd.f32 %v2138, %v2146
  %v2416 = vadd.f32 %v2139, %v2146
  %v2417 = vadd.f32 %v2140, %v2146
  %v2418 = vadd.f32 %v2141, %v2146
  %v2419 = vadd.f32 %v2142, %v2146
  %v2420 = vadd.f32 %v2143, %v2146
  %v2421 = vtanh.pop %v2148
  %v2422 = vtanh.pop %v2149
  %v2423 = vtanh.pop %v2150
  %v2424 = vtanh.pop %v2151
  %v2425 = vtanh.pop %v2152
  %v2426 = vtanh.pop %v2153
  %v2427 = vtanh.pop %v2154
  %v2428 = vtanh.pop %v2155
  %v2429 = vtanh.pop %v2156
  %v2430 = vtanh.pop %v2157
  %v2431 = vtanh.pop %v2158
  %v2432 = vtanh.pop %v2159
  %v2433 = vtanh.pop %v2160
  %v2434 = vtanh.pop %v2161
  %v2435 = vtanh.pop %v2162
  %v2436 = vtanh.pop %v2163
  %v2437 = vtanh.pop %v2164
  %v2438 = vtanh.pop %v2165
  %v2439 = vtanh.pop %v2166
  %v2440 = vtanh.pop %v2167
  %v2441 = vtanh.pop %v2168
  %v2442 = vtanh.pop %v2169
  %v2443 = vtanh.pop %v2170
  %v2444 = vtanh.pop %v2171
  %v2445 = vtanh.pop %v2172
  %v2446 = vtanh.pop %v2173
  %v2447 = vtanh.pop %v2174
  %v2448 = vtanh.pop %v2175
  %v2449 = vtanh.pop %v2176
  %v2450 = vtanh.pop %v2177
  %v2451 = vtanh.pop %v2178
  %v2452 = vtanh.pop %v2179
  %v2453 = vtanh.pop %v2180
  %v2454 = vtanh.pop %v2181
  %v2455 = vtanh.pop %v2182
  %v2456 = vtanh.pop %v2183
  %v2457 = vtanh.pop %v2184
  %v2458 = vtanh.pop %v2185
  %v2459 = vtanh.pop %v2186
  %v2460 = vtanh.pop %v2187
  %v2461 = vtanh.pop %v2188
  %v2462 = vtanh.pop %v2189
  %v2463 = vtanh.pop %v2190
  %v2464 = vtanh.pop %v2191
  %v2465 = vtanh.pop %v2192
  %v2466 = vtanh.pop %v2193
  %v2467 = vtanh.pop %v2194
  %v2468 = vtanh.pop %v2195
  %v2469 = vtanh.pop %v2196
  %v2470 = vtanh.pop %v2197
  %v2471 = vtanh.pop %v2198
  %v2472 = vtanh.pop %v2199
  %v2473 = vtanh.pop %v2200
  %v2474 = vtanh.pop %v2201
  %v2475 = vtanh.pop %v2202
  %v2476 = vtanh.pop %v2203
  %v2477 = vtanh.pop %v2204
  %v2478 = vtanh.pop %v2205
  %v2479 = vtanh.pop %v2206
  %v2480 = vtanh.pop %v2207
  %v2481 = vtanh.pop %v2208
  %v2482 = vtanh.pop %v2209
  %v2483 = vtanh.pop %v2210
  %v2484 = vtanh.pop %v2211
  %v2485 = vtanh.pop %v2212
  %v2486 = vtanh.pop %v2213
  %v2487 = vtanh.pop %v2214
  %v2488 = vtanh.pop %v2215
  %v2489 = vtanh.pop %v2216
  %v2490 = vtanh.pop %v2217
  %v2491 = vtanh.pop %v2218
  %v2492 = vtanh.pop %v2219
  %v2493 = vtanh.pop %v2220
  %v2494 = vtanh.pop %v2221
  %v2495 = vtanh.pop %v2222
  %v2496 = vtanh.pop %v2223
  %v2497 = vtanh.pop %v2224
  %v2498 = vtanh.pop %v2225
  %v2499 = vtanh.pop %v2226
  %v2500 = vtanh.pop %v2227
  %v2501 = vtanh.pop %v2228
  %v2502 = vtanh.pop %v2229
  %v2503 = vtanh.pop %v2230
  %v2504 = vtanh.pop %v2231
  %v2505 = vtanh.pop %v2232
  %v2506 = vtanh.pop %v2233
  %v2507 = vtanh.pop %v2234
  %v2508 = vtanh.pop %v2235
  %v2509 = vtanh.pop %v2236
  %v2510 = vtanh.pop %v2237
  %v2511 = vtanh.pop %v2238
  %v2512 = vtanh.pop %v2239
  %v2513 = vtanh.pop %v2240
  %v2514 = vtanh.pop %v2241
  %v2515 = vtanh.pop %v2242
  %v2516 = vtanh.pop %v2243
  %v2517 = vtanh.pop %v2244
  %v2518 = vtanh.pop %v2245
  %v2519 = vtanh.pop %v2246
  %v2520 = vtanh.pop %v2247
  %v2521 = vtanh.pop %v2248
  %v2522 = vtanh.pop %v2249
  %v2523 = vtanh.pop %v2250
  %v2524 = vtanh.pop %v2251
  %v2525 = vtanh.pop %v2252
  %v2526 = vtanh.pop %v2253
  %v2527 = vtanh.pop %v2254
  %v2528 = vtanh.pop %v2255
  %v2529 = vtanh.pop %v2256
  %v2530 = vtanh.pop %v2257
  %v2531 = vtanh.pop %v2258
  %v2532 = vtanh.pop %v2259
  %v2533 = vtanh.pop %v2260
  %v2534 = vtanh.pop %v2261
  %v2535 = vtanh.pop %v2262
  %v2536 = vtanh.pop %v2263
  %v2537 = vtanh.pop %v2264
  %v2538 = vtanh.pop %v2265
  %v2539 = vtanh.pop %v2266
  %v2540 = vtanh.pop %v2267
  %v2541 = vtanh.pop %v2268
  %v2542 = vtanh.pop %v2269
  %v2543 = vtanh.pop %v2270
  %v2544 = vtanh.pop %v2271
  %v2545 = vtanh.pop %v2272
  %v2546 = vtanh.pop %v2273
  %v2547 = vtanh.pop %v2274
  %v2548 = vtanh.pop %v2275
  %v2549 = vtanh.pop %v2276
  %v2550 = vtanh.pop %v2277
  %v2551 = vtanh.pop %v2278
  %v2552 = vtanh.pop %v2279
  %v2553 = vtanh.pop %v2280
  %v2554 = vtanh.pop %v2281
  %v2555 = vtanh.pop %v2282
  %v2556 = vtanh.pop %v2283
  %v2557 = vtanh.pop %v2284
  %v2558 = vtanh.pop %v2285
  %v2559 = vtanh.pop %v2286
  %v2560 = vtanh.pop %v2287
  %v2561 = vtanh.pop %v2288
  %v2562 = vtanh.pop %v2289
  %v2563 = vtanh.pop %v2290
  %v2564 = vtanh.pop %v2291
  %v2565 = vtanh.pop %v2292
  %v2566 = vtanh.pop %v2293
  %v2567 = vtanh.pop %v2294
  %v2568 = vtanh.pop %v2295
  %v2569 = vtanh.pop %v2296
  %v2570 = vtanh.pop %v2297
  %v2571 = vtanh.pop %v2298
  %v2572 = vtanh.pop %v2299
  %v2573 = vtanh.pop %v2300
  %v2574 = vtanh.pop %v2301
  %v2575 = vtanh.pop %v2302
  %v2576 = vtanh.pop %v2303
  %v2577 = vtanh.pop %v2304
  %v2578 = vtanh.pop %v2305
  %v2579 = vtanh.pop %v2306
  %v2580 = vtanh.pop %v2307
  %v2581 = vtanh.pop %v2308
  %v2582 = vtanh.pop %v2309
  %v2583 = vtanh.pop %v2310
  %v2584 = vtanh.pop %v2311
  %v2585 = vtanh.pop %v2312
  %v2586 = vtanh.pop %v2313
  %v2587 = vtanh.pop %v2314
  %v2588 = vtanh.pop %v2315
  %v2589 = vtanh.pop %v2316
  %v2590 = vtanh.pop %v2317
  %v2591 = vtanh.pop %v2318
  %v2592 = vtanh.pop %v2319
  %v2593 = vtanh.pop %v2320
  %v2594 = vtanh.pop %v2321
  %v2595 = vtanh.pop %v2322
  %v2596 = vtanh.pop %v2323
  %v2597 = vtanh.pop %v2324
  %v2598 = vtanh.pop %v2325
  %v2599 = vtanh.pop %v2326
  %v2600 = vtanh.pop %v2327
  %v2601 = vtanh.pop %v2328
  %v2602 = vtanh.pop %v2329
  %v2603 = vtanh.pop %v2330
  %v2604 = vtanh.pop %v2331
  %v2605 = vtanh.pop %v2332
  %v2606 = vtanh.pop %v2333
  %v2607 = vtanh.pop %v2334
  %v2608 = vtanh.pop %v2335
  %v2609 = vtanh.pop %v2336
  %v2610 = vtanh.pop %v2337
  %v2611 = vtanh.pop %v2338
  %v2612 = vtanh.pop %v2339
  %v2613 = vtanh.pop %v2340
  %v2614 = vtanh.pop %v2341
  %v2615 = vtanh.pop %v2342
  %v2616 = vtanh.pop %v2343
  %v2617 = vtanh.pop %v2344
  %v2618 = vtanh.pop %v2345
  %v2619 = vtanh.pop %v2346
  %v2620 = vtanh.pop %v2347
  %v2621 = vtanh.pop %v2348
  %v2622 = vtanh.pop %v2349
  %v2623 = vtanh.pop %v2350
  %v2624 = vtanh.pop %v2351
  %v2625 = vtanh.pop %v2352
  %v2626 = vtanh.pop %v2353
  %v2627 = vtanh.pop %v2354
  %v2628 = vtanh.pop %v2355
  %v2629 = vtanh.pop %v2356
  %v2630 = vtanh.pop %v2357
  %v2631 = vtanh.pop %v2358
  %v2632 = vtanh.pop %v2359
  %v2633 = vtanh.pop %v2360
  %v2634 = vtanh.pop %v2361
  %v2635 = vtanh.pop %v2362
  %v2636 = vtanh.pop %v2363
  %v2637 = vtanh.pop %v2364
  %v2638 = vtanh.pop %v2365
  %v2639 = vtanh.pop %v2366
  %v2640 = vtanh.pop %v2367
  %v2641 = vtanh.pop %v2368
  %v2642 = vtanh.pop %v2369
  %v2643 = vtanh.pop %v2370
  %v2644 = vtanh.pop %v2371
  %v2645 = vtanh.pop %v2372
  %v2646 = vtanh.pop %v2373
  %v2647 = vtanh.pop %v2374
  %v2648 = vtanh.pop %v2375
  %v2649 = vtanh.pop %v2376
  %v2650 = vtanh.pop %v2377
  %v2651 = vtanh.pop %v2378
  %v2652 = vtanh.pop %v2379
  %v2653 = vtanh.pop %v2380
  %v2654 = vtanh.pop %v2381
  %v2655 = vtanh.pop %v2382
  %v2656 = vtanh.pop %v2383
  %v2657 = vtanh.pop %v2384
  %v2658 = vtanh.pop %v2385
  %v2659 = vtanh.pop %v2386
  %v2660 = vtanh.pop %v2387
  %v2661 = vtanh.pop %v2388
  %v2662 = vtanh.pop %v2389
  %v2663 = vtanh.pop %v2390
  %v2664 = vtanh.pop %v2391
  %v2665 = vtanh.pop %v2392
  %v2666 = vtanh.pop %v2393
  %v2667 = vtanh.pop %v2394
  %v2668 = vtanh.pop %v2395
  %v2669 = vtanh.pop %v2396
  %v2670 = vtanh.pop %v2397
  %v2671 = vtanh.pop %v2398
  %v2672 = vtanh.pop %v2399
  %v2673 = vtanh.pop %v2400
  %v2674 = vtanh.pop %v2401
  %v2675 = vtanh.pop %v2402
  %v2676 = vtanh.pop %v2403
  %v2677 = vtanh.pop %v2404
  %v2678 = vtanh.pop %v2405
  %v2679 = vtanh.pop %v2406
  %v2680 = vtanh.pop %v2407
  %v2681 = vtanh.pop %v2408
  %v2682 = vtanh.pop %v2409
  %v2683 = vtanh.pop %v2410
  %v2684 = vtanh.pop %v2411
  %v2685 = vtanh.pop %v2412
  %v2686 = vtanh.pop %v2413
  %v2687 = vtanh.pop %v2414
  %v2688 = vtanh.pop %v2415
  %v2689 = vtanh.pop %v2416
  %v2690 = vtanh.pop %v2417
  %v2691 = vtanh.pop %v2418
  %v2692 = vtanh.pop %v2419
  %v2693 = vtanh.pop %v2420
  %v2694 = vpack.c.bf16 %v2421, %v2421
  %v2695 = vpack.c.bf16 %v2422, %v2422
  %v2696 = vpack.c.bf16 %v2423, %v2423
  %v2697 = vpack.c.bf16 %v2424, %v2424
  %v2698 = vpack.c.bf16 %v2425, %v2425
  %v2699 = vpack.c.bf16 %v2426, %v2426
  %v2700 = vpack.c.bf16 %v2427, %v2427
  %v2701 = vpack.c.bf16 %v2428, %v2428
  %v2702 = vpack.c.bf16 %v2429, %v2429
  %v2703 = vpack.c.bf16 %v2430, %v2430
  %v2704 = vpack.c.bf16 %v2431, %v2431
  %v2705 = vpack.c.bf16 %v2432, %v2432
  %v2706 = vpack.c.bf16 %v2433, %v2433
  %v2707 = vpack.c.bf16 %v2434, %v2434
  %v2708 = vpack.c.bf16 %v2435, %v2435
  %v2709 = vpack.c.bf16 %v2436, %v2436
  %v2710 = vpack.c.bf16 %v2437, %v2437
  %v2711 = vpack.c.bf16 %v2438, %v2438
  %v2712 = vpack.c.bf16 %v2439, %v2439
  %v2713 = vpack.c.bf16 %v2440, %v2440
  %v2714 = vpack.c.bf16 %v2441, %v2441
  %v2715 = vpack.c.bf16 %v2442, %v2442
  %v2716 = vpack.c.bf16 %v2443, %v2443
  %v2717 = vpack.c.bf16 %v2444, %v2444
  %v2718 = vpack.c.bf16 %v2445, %v2445
  %v2719 = vpack.c.bf16 %v2446, %v2446
  %v2720 = vpack.c.bf16 %v2447, %v2447
  %v2721 = vpack.c.bf16 %v2448, %v2448
  %v2722 = vpack.c.bf16 %v2449, %v2449
  %v2723 = vpack.c.bf16 %v2450, %v2450
  %v2724 = vpack.c.bf16 %v2451, %v2451
  %v2725 = vpack.c.bf16 %v2452, %v2452
  %v2726 = vpack.c.bf16 %v2453, %v2453
  %v2727 = vpack.c.bf16 %v2454, %v2454
  %v2728 = vpack.c.bf16 %v2455, %v2455
  %v2729 = vpack.c.bf16 %v2456, %v2456
  %v2730 = vpack.c.bf16 %v2457, %v2457
  %v2731 = vpack.c.bf16 %v2458, %v2458
  %v2732 = vpack.c.bf16 %v2459, %v2459
  %v2733 = vpack.c.bf16 %v2460, %v2460
  %v2734 = vpack.c.bf16 %v2461, %v2461
  %v2735 = vpack.c.bf16 %v2462, %v2462
  %v2736 = vpack.c.bf16 %v2463, %v2463
  %v2737 = vpack.c.bf16 %v2464, %v2464
  %v2738 = vpack.c.bf16 %v2465, %v2465
  %v2739 = vpack.c.bf16 %v2466, %v2466
  %v2740 = vpack.c.bf16 %v2467, %v2467
  %v2741 = vpack.c.bf16 %v2468, %v2468
  %v2742 = vpack.c.bf16 %v2469, %v2469
  %v2743 = vpack.c.bf16 %v2470, %v2470
  %v2744 = vpack.c.bf16 %v2471, %v2471
  %v2745 = vpack.c.bf16 %v2472, %v2472
  %v2746 = vpack.c.bf16 %v2473, %v2473
  %v2747 = vpack.c.bf16 %v2474, %v2474
  %v2748 = vpack.c.bf16 %v2475, %v2475
  %v2749 = vpack.c.bf16 %v2476, %v2476
  %v2750 = vpack.c.bf16 %v2477, %v2477
  %v2751 = vpack.c.bf16 %v2478, %v2478
  %v2752 = vpack.c.bf16 %v2479, %v2479
  %v2753 = vpack.c.bf16 %v2480, %v2480
  %v2754 = vpack.c.bf16 %v2481, %v2481
  %v2755 = vpack.c.bf16 %v2482, %v2482
  %v2756 = vpack.c.bf16 %v2483, %v2483
  %v2757 = vpack.c.bf16 %v2484, %v2484
  %v2758 = vpack.c.bf16 %v2485, %v2485
  %v2759 = vpack.c.bf16 %v2486, %v2486
  %v2760 = vpack.c.bf16 %v2487, %v2487
  %v2761 = vpack.c.bf16 %v2488, %v2488
  %v2762 = vpack.c.bf16 %v2489, %v2489
  %v2763 = vpack.c.bf16 %v2490, %v2490
  %v2764 = vpack.c.bf16 %v2491, %v2491
  %v2765 = vpack.c.bf16 %v2492, %v2492
  %v2766 = vpack.c.bf16 %v2493, %v2493
  %v2767 = vpack.c.bf16 %v2494, %v2494
  %v2768 = vpack.c.bf16 %v2495, %v2495
  %v2769 = vpack.c.bf16 %v2496, %v2496
  %v2770 = vpack.c.bf16 %v2497, %v2497
  %v2771 = vpack.c.bf16 %v2498, %v2498
  %v2772 = vpack.c.bf16 %v2499, %v2499
  %v2773 = vpack.c.bf16 %v2500, %v2500
  %v2774 = vpack.c.bf16 %v2501, %v2501
  %v2775 = vpack.c.bf16 %v2502, %v2502
  %v2776 = vpack.c.bf16 %v2503, %v2503
  %v2777 = vpack.c.bf16 %v2504, %v2504
  %v2778 = vpack.c.bf16 %v2505, %v2505
  %v2779 = vpack.c.bf16 %v2506, %v2506
  %v2780 = vpack.c.bf16 %v2507, %v2507
  %v2781 = vpack.c.bf16 %v2508, %v2508
  %v2782 = vpack.c.bf16 %v2509, %v2509
  %v2783 = vpack.c.bf16 %v2510, %v2510
  %v2784 = vpack.c.bf16 %v2511, %v2511
  %v2785 = vpack.c.bf16 %v2512, %v2512
  %v2786 = vpack.c.bf16 %v2513, %v2513
  %v2787 = vpack.c.bf16 %v2514, %v2514
  %v2788 = vpack.c.bf16 %v2515, %v2515
  %v2789 = vpack.c.bf16 %v2516, %v2516
  %v2790 = vpack.c.bf16 %v2517, %v2517
  %v2791 = vpack.c.bf16 %v2518, %v2518
  %v2792 = vpack.c.bf16 %v2519, %v2519
  %v2793 = vpack.c.bf16 %v2520, %v2520
  %v2794 = vpack.c.bf16 %v2521, %v2521
  %v2795 = vpack.c.bf16 %v2522, %v2522
  %v2796 = vpack.c.bf16 %v2523, %v2523
  %v2797 = vpack.c.bf16 %v2524, %v2524
  %v2798 = vpack.c.bf16 %v2525, %v2525
  %v2799 = vpack.c.bf16 %v2526, %v2526
  %v2800 = vpack.c.bf16 %v2527, %v2527
  %v2801 = vpack.c.bf16 %v2528, %v2528
  %v2802 = vpack.c.bf16 %v2529, %v2529
  %v2803 = vpack.c.bf16 %v2530, %v2530
  %v2804 = vpack.c.bf16 %v2531, %v2531
  %v2805 = vpack.c.bf16 %v2532, %v2532
  %v2806 = vpack.c.bf16 %v2533, %v2533
  %v2807 = vpack.c.bf16 %v2534, %v2534
  %v2808 = vpack.c.bf16 %v2535, %v2535
  %v2809 = vpack.c.bf16 %v2536, %v2536
  %v2810 = vpack.c.bf16 %v2537, %v2537
  %v2811 = vpack.c.bf16 %v2538, %v2538
  %v2812 = vpack.c.bf16 %v2539, %v2539
  %v2813 = vpack.c.bf16 %v2540, %v2540
  %v2814 = vpack.c.bf16 %v2541, %v2541
  %v2815 = vpack.c.bf16 %v2542, %v2542
  %v2816 = vpack.c.bf16 %v2543, %v2543
  %v2817 = vpack.c.bf16 %v2544, %v2544
  %v2818 = vpack.c.bf16 %v2545, %v2545
  %v2819 = vpack.c.bf16 %v2546, %v2546
  %v2820 = vpack.c.bf16 %v2547, %v2547
  %v2821 = vpack.c.bf16 %v2548, %v2548
  %v2822 = vpack.c.bf16 %v2549, %v2549
  %v2823 = vpack.c.bf16 %v2550, %v2550
  %v2824 = vpack.c.bf16 %v2551, %v2551
  %v2825 = vpack.c.bf16 %v2552, %v2552
  %v2826 = vpack.c.bf16 %v2553, %v2553
  %v2827 = vpack.c.bf16 %v2554, %v2554
  %v2828 = vpack.c.bf16 %v2555, %v2555
  %v2829 = vpack.c.bf16 %v2556, %v2556
  %v2830 = vpack.c.bf16 %v2557, %v2557
  %v2831 = vpack.c.bf16 %v2558, %v2558
  %v2832 = vpack.c.bf16 %v2559, %v2559
  %v2833 = vpack.c.bf16 %v2560, %v2560
  %v2834 = vpack.c.bf16 %v2561, %v2561
  %v2835 = vpack.c.bf16 %v2562, %v2562
  %v2836 = vpack.c.bf16 %v2563, %v2563
  %v2837 = vpack.c.bf16 %v2564, %v2564
  %v2838 = vpack.c.bf16 %v2565, %v2565
  %v2839 = vpack.c.bf16 %v2566, %v2566
  %v2840 = vpack.c.bf16 %v2567, %v2567
  %v2841 = vpack.c.bf16 %v2568, %v2568
  %v2842 = vpack.c.bf16 %v2569, %v2569
  %v2843 = vpack.c.bf16 %v2570, %v2570
  %v2844 = vpack.c.bf16 %v2571, %v2571
  %v2845 = vpack.c.bf16 %v2572, %v2572
  %v2846 = vpack.c.bf16 %v2573, %v2573
  %v2847 = vpack.c.bf16 %v2574, %v2574
  %v2848 = vpack.c.bf16 %v2575, %v2575
  %v2849 = vpack.c.bf16 %v2576, %v2576
  %v2850 = vpack.c.bf16 %v2577, %v2577
  %v2851 = vpack.c.bf16 %v2578, %v2578
  %v2852 = vpack.c.bf16 %v2579, %v2579
  %v2853 = vpack.c.bf16 %v2580, %v2580
  %v2854 = vpack.c.bf16 %v2581, %v2581
  %v2855 = vpack.c.bf16 %v2582, %v2582
  %v2856 = vpack.c.bf16 %v2583, %v2583
  %v2857 = vpack.c.bf16 %v2584, %v2584
  %v2858 = vpack.c.bf16 %v2585, %v2585
  %v2859 = vpack.c.bf16 %v2586, %v2586
  %v2860 = vpack.c.bf16 %v2587, %v2587
  %v2861 = vpack.c.bf16 %v2588, %v2588
  %v2862 = vpack.c.bf16 %v2589, %v2589
  %v2863 = vpack.c.bf16 %v2590, %v2590
  %v2864 = vpack.c.bf16 %v2591, %v2591
  %v2865 = vpack.c.bf16 %v2592, %v2592
  %v2866 = vpack.c.bf16 %v2593, %v2593
  %v2867 = vpack.c.bf16 %v2594, %v2594
  %v2868 = vpack.c.bf16 %v2595, %v2595
  %v2869 = vpack.c.bf16 %v2596, %v2596
  %v2870 = vpack.c.bf16 %v2597, %v2597
  %v2871 = vpack.c.bf16 %v2598, %v2598
  %v2872 = vpack.c.bf16 %v2599, %v2599
  %v2873 = vpack.c.bf16 %v2600, %v2600
  %v2874 = vpack.c.bf16 %v2601, %v2601
  %v2875 = vpack.c.bf16 %v2602, %v2602
  %v2876 = vpack.c.bf16 %v2603, %v2603
  %v2877 = vpack.c.bf16 %v2604, %v2604
  %v2878 = vpack.c.bf16 %v2605, %v2605
  %v2879 = vpack.c.bf16 %v2606, %v2606
  %v2880 = vpack.c.bf16 %v2607, %v2607
  %v2881 = vpack.c.bf16 %v2608, %v2608
  %v2882 = vpack.c.bf16 %v2609, %v2609
  %v2883 = vpack.c.bf16 %v2610, %v2610
  %v2884 = vpack.c.bf16 %v2611, %v2611
  %v2885 = vpack.c.bf16 %v2612, %v2612
  %v2886 = vpack.c.bf16 %v2613, %v2613
  %v2887 = vpack.c.bf16 %v2614, %v2614
  %v2888 = vpack.c.bf16 %v2615, %v2615
  %v2889 = vpack.c.bf16 %v2616, %v2616
  %v2890 = vpack.c.bf16 %v2617, %v2617
  %v2891 = vpack.c.bf16 %v2618, %v2618
  %v2892 = vpack.c.bf16 %v2619, %v2619
  %v2893 = vpack.c.bf16 %v2620, %v2620
  %v2894 = vpack.c.bf16 %v2621, %v2621
  %v2895 = vpack.c.bf16 %v2622, %v2622
  %v2896 = vpack.c.bf16 %v2623, %v2623
  %v2897 = vpack.c.bf16 %v2624, %v2624
  %v2898 = vpack.c.bf16 %v2625, %v2625
  %v2899 = vpack.c.bf16 %v2626, %v2626
  %v2900 = vpack.c.bf16 %v2627, %v2627
  %v2901 = vpack.c.bf16 %v2628, %v2628
  %v2902 = vpack.c.bf16 %v2629, %v2629
  %v2903 = vpack.c.bf16 %v2630, %v2630
  %v2904 = vpack.c.bf16 %v2631, %v2631
  %v2905 = vpack.c.bf16 %v2632, %v2632
  %v2906 = vpack.c.bf16 %v2633, %v2633
  %v2907 = vpack.c.bf16 %v2634, %v2634
  %v2908 = vpack.c.bf16 %v2635, %v2635
  %v2909 = vpack.c.bf16 %v2636, %v2636
  %v2910 = vpack.c.bf16 %v2637, %v2637
  %v2911 = vpack.c.bf16 %v2638, %v2638
  %v2912 = vpack.c.bf16 %v2639, %v2639
  %v2913 = vpack.c.bf16 %v2640, %v2640
  %v2914 = vpack.c.bf16 %v2641, %v2641
  %v2915 = vpack.c.bf16 %v2642, %v2642
  %v2916 = vpack.c.bf16 %v2643, %v2643
  %v2917 = vpack.c.bf16 %v2644, %v2644
  %v2918 = vpack.c.bf16 %v2645, %v2645
  %v2919 = vpack.c.bf16 %v2646, %v2646
  %v2920 = vpack.c.bf16 %v2647, %v2647
  %v2921 = vpack.c.bf16 %v2648, %v2648
  %v2922 = vpack.c.bf16 %v2649, %v2649
  %v2923 = vpack.c.bf16 %v2650, %v2650
  %v2924 = vpack.c.bf16 %v2651, %v2651
  %v2925 = vpack.c.bf16 %v2652, %v2652
  %v2926 = vpack.c.bf16 %v2653, %v2653
  %v2927 = vpack.c.bf16 %v2654, %v2654
  %v2928 = vpack.c.bf16 %v2655, %v2655
  %v2929 = vpack.c.bf16 %v2656, %v2656
  %v2930 = vpack.c.bf16 %v2657, %v2657
  %v2931 = vpack.c.bf16 %v2658, %v2658
  %v2932 = vpack.c.bf16 %v2659, %v2659
  %v2933 = vpack.c.bf16 %v2660, %v2660
  %v2934 = vpack.c.bf16 %v2661, %v2661
  %v2935 = vpack.c.bf16 %v2662, %v2662
  %v2936 = vpack.c.bf16 %v2663, %v2663
  %v2937 = vpack.c.bf16 %v2664, %v2664
  %v2938 = vpack.c.bf16 %v2665, %v2665
  %v2939 = vpack.c.bf16 %v2666, %v2666
  %v2940 = vpack.c.bf16 %v2667, %v2667
  %v2941 = vpack.c.bf16 %v2668, %v2668
  %v2942 = vpack.c.bf16 %v2669, %v2669
  %v2943 = vpack.c.bf16 %v2670, %v2670
  %v2944 = vpack.c.bf16 %v2671, %v2671
  %v2945 = vpack.c.bf16 %v2672, %v2672
  %v2946 = vpack.c.bf16 %v2673, %v2673
  %v2947 = vpack.c.bf16 %v2674, %v2674
  %v2948 = vpack.c.bf16 %v2675, %v2675
  %v2949 = vpack.c.bf16 %v2676, %v2676
  %v2950 = vpack.c.bf16 %v2677, %v2677
  %v2951 = vpack.c.bf16 %v2678, %v2678
  %v2952 = vpack.c.bf16 %v2679, %v2679
  %v2953 = vpack.c.bf16 %v2680, %v2680
  %v2954 = vpack.c.bf16 %v2681, %v2681
  %v2955 = vpack.c.bf16 %v2682, %v2682
  %v2956 = vpack.c.bf16 %v2683, %v2683
  %v2957 = vpack.c.bf16 %v2684, %v2684
  %v2958 = vpack.c.bf16 %v2685, %v2685
  %v2959 = vpack.c.bf16 %v2686, %v2686
  %v2960 = vpack.c.bf16 %v2687, %v2687
  %v2961 = vpack.c.bf16 %v2688, %v2688
  %v2962 = vpack.c.bf16 %v2689, %v2689
  %v2963 = vpack.c.bf16 %v2690, %v2690
  %v2964 = vpack.c.bf16 %v2691, %v2691
  %v2965 = vpack.c.bf16 %v2692, %v2692
  %v2966 = vpack.c.bf16 %v2693, %v2693
  %2967 = vst [vmem:[%s4] sm:$0xf] %v2694
  %2968 = vst [vmem:[%s4 + $0x4] sm:$0xf] %v2695
  %2969 = vst [vmem:[%s4 + $0x8] sm:$0xf] %v2696
  %2970 = vst [vmem:[%s4 + $0xc] sm:$0xf] %v2697
  %2971 = vst [vmem:[%s4 + $0x10] sm:$0xf] %v2698
  %2972 = vst [vmem:[%s4 + $0x14] sm:$0xf] %v2699
  %2973 = vst [vmem:[%s4 + $0x18] sm:$0xf] %v2700
  %2974 = vst [vmem:[%s4 + $0x1c] sm:$0xf] %v2701
  %2975 = vst [vmem:[%s4 + $0x20] sm:$0xf] %v2702
  %2976 = vst [vmem:[%s4 + $0x24] sm:$0xf] %v2703
  %2977 = vst [vmem:[%s4 + $0x28] sm:$0xf] %v2704
  %2978 = vst [vmem:[%s4 + $0x2c] sm:$0xf] %v2705
  %2979 = vst [vmem:[%s4 + $0x30] sm:$0xf] %v2706
  %2980 = vst [vmem:[%s4 + $0x34] sm:$0xf] %v2707
  %2981 = vst [vmem:[%s4 + $0x38] sm:$0xf] %v2708
  %2982 = vst [vmem:[%s4 + $0x3c] sm:$0xf] %v2709
  %2983 = vst [vmem:[%s4 + $0x40] sm:$0xf] %v2710
  %2984 = vst [vmem:[%s4 + $0x44] sm:$0xf] %v2711
  %2985 = vst [vmem:[%s4 + $0x48] sm:$0xf] %v2712
  %2986 = vst [vmem:[%s4 + $0x4c] sm:$0xf] %v2713
  %2987 = vst [vmem:[%s4 + $0x50] sm:$0xf] %v2714
  %2988 = vst [vmem:[%s4 + $0x54] sm:$0xf] %v2715
  %2989 = vst [vmem:[%s4 + $0x58] sm:$0xf] %v2716
  %2990 = vst [vmem:[%s4 + $0x5c] sm:$0xf] %v2717
  %2991 = vst [vmem:[%s4 + $0x60] sm:$0xf] %v2718
  %2992 = vst [vmem:[%s4 + $0x64] sm:$0xf] %v2719
  %2993 = vst [vmem:[%s4 + $0x68] sm:$0xf] %v2720
  %2994 = vst [vmem:[%s4 + $0x6c] sm:$0xf] %v2721
  %2995 = vst [vmem:[%s4 + $0x70] sm:$0xf] %v2722
  %2996 = vst [vmem:[%s4 + $0x74] sm:$0xf] %v2723
  %2997 = vst [vmem:[%s4 + $0x78] sm:$0xf] %v2724
  %2998 = vst [vmem:[%s4 + $0x7c] sm:$0xf] %v2725
  %2999 = vst [vmem:[%s4 + $0x80] sm:$0xf] %v2726
  %3000 = vst [vmem:[%s4 + $0x84] sm:$0xf] %v2727
  %3001 = vst [vmem:[%s4 + $0x88] sm:$0xf] %v2728
  %3002 = vst [vmem:[%s4 + $0x8c] sm:$0xf] %v2729
  %3003 = vst [vmem:[%s4 + $0x90] sm:$0xf] %v2730
  %3004 = vst [vmem:[%s4 + $0x94] sm:$0xf] %v2731
  %3005 = vst [vmem:[%s4 + $0x98] sm:$0xf] %v2732
  %3006 = vst [vmem:[%s4 + $0x9c] sm:$0xf] %v2733
  %3007 = vst [vmem:[%s4 + $0xa0] sm:$0xf] %v2734
  %3008 = vst [vmem:[%s4 + $0xa4] sm:$0xf] %v2735
  %3009 = vst [vmem:[%s4 + $0xa8] sm:$0xf] %v2736
  %3010 = vst [vmem:[%s4 + $0xac] sm:$0xf] %v2737
  %3011 = vst [vmem:[%s4 + $0xb0] sm:$0xf] %v2738
  %3012 = vst [vmem:[%s4 + $0xb4] sm:$0xf] %v2739
  %3013 = vst [vmem:[%s4 + $0xb8] sm:$0xf] %v2740
  %3014 = vst [vmem:[%s4 + $0xbc] sm:$0xf] %v2741
  %3015 = vst [vmem:[%s4 + $0xc0] sm:$0xf] %v2742
  %3016 = vst [vmem:[%s4 + $0xc4] sm:$0xf] %v2743
  %3017 = vst [vmem:[%s4 + $0xc8] sm:$0xf] %v2744
  %3018 = vst [vmem:[%s4 + $0xcc] sm:$0xf] %v2745
  %3019 = vst [vmem:[%s4 + $0xd0] sm:$0xf] %v2746
  %3020 = vst [vmem:[%s4 + $0xd4] sm:$0xf] %v2747
  %3021 = vst [vmem:[%s4 + $0xd8] sm:$0xf] %v2748
  %3022 = vst [vmem:[%s4 + $0xdc] sm:$0xf] %v2749
  %3023 = vst [vmem:[%s4 + $0xe0] sm:$0xf] %v2750
  %3024 = vst [vmem:[%s4 + $0xe4] sm:$0xf] %v2751
  %3025 = vst [vmem:[%s4 + $0xe8] sm:$0xf] %v2752
  %3026 = vst [vmem:[%s4 + $0xec] sm:$0xf] %v2753
  %3027 = vst [vmem:[%s4 + $0xf0] sm:$0xf] %v2754
  %3028 = vst [vmem:[%s4 + $0xf4] sm:$0xf] %v2755
  %3029 = vst [vmem:[%s4 + $0xf8] sm:$0xf] %v2756
  %3030 = vst [vmem:[%s4 + $0xfc] sm:$0xf] %v2757
  %3031 = vst [vmem:[%s4 + $0x100] sm:$0xf] %v2758
  %3032 = vst [vmem:[%s4 + $0x104] sm:$0xf] %v2759
  %3033 = vst [vmem:[%s4 + $0x108] sm:$0xf] %v2760
  %3034 = vst [vmem:[%s4 + $0x10c] sm:$0xf] %v2761
  %3035 = vst [vmem:[%s4 + $0x110] sm:$0xf] %v2762
  %3036 = vst [vmem:[%s4 + $0x114] sm:$0xf] %v2763
  %3037 = vst [vmem:[%s4 + $0x118] sm:$0xf] %v2764
  %3038 = vst [vmem:[%s4 + $0x11c] sm:$0xf] %v2765
  %3039 = vst [vmem:[%s4 + $0x120] sm:$0xf] %v2766
  %3040 = vst [vmem:[%s4 + $0x124] sm:$0xf] %v2767
  %3041 = vst [vmem:[%s4 + $0x128] sm:$0xf] %v2768
  %3042 = vst [vmem:[%s4 + $0x12c] sm:$0xf] %v2769
  %3043 = vst [vmem:[%s4 + $0x130] sm:$0xf] %v2770
  %3044 = vst [vmem:[%s4 + $0x134] sm:$0xf] %v2771
  %3045 = vst [vmem:[%s4 + $0x138] sm:$0xf] %v2772
  %3046 = vst [vmem:[%s4 + $0x13c] sm:$0xf] %v2773
  %3047 = vst [vmem:[%s4 + $0x140] sm:$0xf] %v2774
  %3048 = vst [vmem:[%s4 + $0x144] sm:$0xf] %v2775
  %3049 = vst [vmem:[%s4 + $0x148] sm:$0xf] %v2776
  %3050 = vst [vmem:[%s4 + $0x14c] sm:$0xf] %v2777
  %3051 = vst [vmem:[%s4 + $0x150] sm:$0xf] %v2778
  %3052 = vst [vmem:[%s4 + $0x154] sm:$0xf] %v2779
  %3053 = vst [vmem:[%s4 + $0x158] sm:$0xf] %v2780
  %3054 = vst [vmem:[%s4 + $0x15c] sm:$0xf] %v2781
  %3055 = vst [vmem:[%s4 + $0x160] sm:$0xf] %v2782
  %3056 = vst [vmem:[%s4 + $0x164] sm:$0xf] %v2783
  %3057 = vst [vmem:[%s4 + $0x168] sm:$0xf] %v2784
  %3058 = vst [vmem:[%s4 + $0x16c] sm:$0xf] %v2785
  %3059 = vst [vmem:[%s4 + $0x170] sm:$0xf] %v2786
  %3060 = vst [vmem:[%s4 + $0x174] sm:$0xf] %v2787
  %3061 = vst [vmem:[%s4 + $0x178] sm:$0xf] %v2788
  %3062 = vst [vmem:[%s4 + $0x17c] sm:$0xf] %v2789
  %3063 = vst [vmem:[%s4 + $0x180] sm:$0xf] %v2790
  %3064 = vst [vmem:[%s4 + $0x184] sm:$0xf] %v2791
  %3065 = vst [vmem:[%s4 + $0x188] sm:$0xf] %v2792
  %3066 = vst [vmem:[%s4 + $0x18c] sm:$0xf] %v2793
  %3067 = vst [vmem:[%s4 + $0x190] sm:$0xf] %v2794
  %3068 = vst [vmem:[%s4 + $0x194] sm:$0xf] %v2795
  %3069 = vst [vmem:[%s4 + $0x198] sm:$0xf] %v2796
  %3070 = vst [vmem:[%s4 + $0x19c] sm:$0xf] %v2797
  %3071 = vst [vmem:[%s4 + $0x1a0] sm:$0xf] %v2798
  %3072 = vst [vmem:[%s4 + $0x1a4] sm:$0xf] %v2799
  %3073 = vst [vmem:[%s4 + $0x1a8] sm:$0xf] %v2800
  %3074 = vst [vmem:[%s4 + $0x1ac] sm:$0xf] %v2801
  %3075 = vst [vmem:[%s4 + $0x1b0] sm:$0xf] %v2802
  %3076 = vst [vmem:[%s4 + $0x1b4] sm:$0xf] %v2803
  %3077 = vst [vmem:[%s4 + $0x1b8] sm:$0xf] %v2804
  %3078 = vst [vmem:[%s4 + $0x1bc] sm:$0xf] %v2805
  %3079 = vst [vmem:[%s4 + $0x1c0] sm:$0xf] %v2806
  %3080 = vst [vmem:[%s4 + $0x1c4] sm:$0xf] %v2807
  %3081 = vst [vmem:[%s4 + $0x1c8] sm:$0xf] %v2808
  %3082 = vst [vmem:[%s4 + $0x1cc] sm:$0xf] %v2809
  %3083 = vst [vmem:[%s4 + $0x1d0] sm:$0xf] %v2810
  %3084 = vst [vmem:[%s4 + $0x1d4] sm:$0xf] %v2811
  %3085 = vst [vmem:[%s4 + $0x1d8] sm:$0xf] %v2812
  %3086 = vst [vmem:[%s4 + $0x1dc] sm:$0xf] %v2813
  %3087 = vst [vmem:[%s4 + $0x1e0] sm:$0xf] %v2814
  %3088 = vst [vmem:[%s4 + $0x1e4] sm:$0xf] %v2815
  %3089 = vst [vmem:[%s4 + $0x1e8] sm:$0xf] %v2816
  %3090 = vst [vmem:[%s4 + $0x1ec] sm:$0xf] %v2817
  %3091 = vst [vmem:[%s4 + $0x1f0] sm:$0xf] %v2818
  %3092 = vst [vmem:[%s4 + $0x1f4] sm:$0xf] %v2819
  %3093 = vst [vmem:[%s4 + $0x1f8] sm:$0xf] %v2820
  %3094 = vst [vmem:[%s4 + $0x1fc] sm:$0xf] %v2821
  %3095 = vst [vmem:[%s4 + $0x200] sm:$0xf] %v2822
  %3096 = vst [vmem:[%s4 + $0x204] sm:$0xf] %v2823
  %3097 = vst [vmem:[%s4 + $0x208] sm:$0xf] %v2824
  %3098 = vst [vmem:[%s4 + $0x20c] sm:$0xf] %v2825
  %3099 = vst [vmem:[%s4 + $0x210] sm:$0xf] %v2826
  %3100 = vst [vmem:[%s4 + $0x214] sm:$0xf] %v2827
  %3101 = vst [vmem:[%s4 + $0x218] sm:$0xf] %v2828
  %3102 = vst [vmem:[%s4 + $0x21c] sm:$0xf] %v2829
  %3103 = vst [vmem:[%s4 + $0x220] sm:$0xf] %v2830
  %3104 = vst [vmem:[%s4 + $0x224] sm:$0xf] %v2831
  %3105 = vst [vmem:[%s4 + $0x228] sm:$0xf] %v2832
  %3106 = vst [vmem:[%s4 + $0x22c] sm:$0xf] %v2833
  %3107 = vst [vmem:[%s4 + $0x230] sm:$0xf] %v2834
  %3108 = vst [vmem:[%s4 + $0x234] sm:$0xf] %v2835
  %3109 = vst [vmem:[%s4 + $0x238] sm:$0xf] %v2836
  %3110 = vst [vmem:[%s4 + $0x23c] sm:$0xf] %v2837
  %3111 = vst [vmem:[%s4 + $0x240] sm:$0xf] %v2838
  %3112 = vst [vmem:[%s4 + $0x244] sm:$0xf] %v2839
  %3113 = vst [vmem:[%s4 + $0x248] sm:$0xf] %v2840
  %3114 = vst [vmem:[%s4 + $0x24c] sm:$0xf] %v2841
  %3115 = vst [vmem:[%s4 + $0x250] sm:$0xf] %v2842
  %3116 = vst [vmem:[%s4 + $0x254] sm:$0xf] %v2843
  %3117 = vst [vmem:[%s4 + $0x258] sm:$0xf] %v2844
  %3118 = vst [vmem:[%s4 + $0x25c] sm:$0xf] %v2845
  %3119 = vst [vmem:[%s4 + $0x260] sm:$0xf] %v2846
  %3120 = vst [vmem:[%s4 + $0x264] sm:$0xf] %v2847
  %3121 = vst [vmem:[%s4 + $0x268] sm:$0xf] %v2848
  %3122 = vst [vmem:[%s4 + $0x26c] sm:$0xf] %v2849
  %3123 = vst [vmem:[%s4 + $0x270] sm:$0xf] %v2850
  %3124 = vst [vmem:[%s4 + $0x274] sm:$0xf] %v2851
  %3125 = vst [vmem:[%s4 + $0x278] sm:$0xf] %v2852
  %3126 = vst [vmem:[%s4 + $0x27c] sm:$0xf] %v2853
  %3127 = vst [vmem:[%s4 + $0x280] sm:$0xf] %v2854
  %3128 = vst [vmem:[%s4 + $0x284] sm:$0xf] %v2855
  %3129 = vst [vmem:[%s4 + $0x288] sm:$0xf] %v2856
  %3130 = vst [vmem:[%s4 + $0x28c] sm:$0xf] %v2857
  %3131 = vst [vmem:[%s4 + $0x290] sm:$0xf] %v2858
  %3132 = vst [vmem:[%s4 + $0x294] sm:$0xf] %v2859
  %3133 = vst [vmem:[%s4 + $0x298] sm:$0xf] %v2860
  %3134 = vst [vmem:[%s4 + $0x29c] sm:$0xf] %v2861
  %3135 = vst [vmem:[%s4 + $0x2a0] sm:$0xf] %v2862
  %3136 = vst [vmem:[%s4 + $0x2a4] sm:$0xf] %v2863
  %3137 = vst [vmem:[%s4 + $0x2a8] sm:$0xf] %v2864
  %3138 = vst [vmem:[%s4 + $0x2ac] sm:$0xf] %v2865
  %3139 = vst [vmem:[%s4 + $0x2b0] sm:$0xf] %v2866
  %3140 = vst [vmem:[%s4 + $0x2b4] sm:$0xf] %v2867
  %3141 = vst [vmem:[%s4 + $0x2b8] sm:$0xf] %v2868
  %3142 = vst [vmem:[%s4 + $0x2bc] sm:$0xf] %v2869
  %3143 = vst [vmem:[%s4 + $0x2c0] sm:$0xf] %v2870
  %3144 = vst [vmem:[%s4 + $0x2c4] sm:$0xf] %v2871
  %3145 = vst [vmem:[%s4 + $0x2c8] sm:$0xf] %v2872
  %3146 = vst [vmem:[%s4 + $0x2cc] sm:$0xf] %v2873
  %3147 = vst [vmem:[%s4 + $0x2d0] sm:$0xf] %v2874
  %3148 = vst [vmem:[%s4 + $0x2d4] sm:$0xf] %v2875
  %3149 = vst [vmem:[%s4 + $0x2d8] sm:$0xf] %v2876
  %3150 = vst [vmem:[%s4 + $0x2dc] sm:$0xf] %v2877
  %3151 = vst [vmem:[%s4 + $0x2e0] sm:$0xf] %v2878
  %3152 = vst [vmem:[%s4 + $0x2e4] sm:$0xf] %v2879
  %3153 = vst [vmem:[%s4 + $0x2e8] sm:$0xf] %v2880
  %3154 = vst [vmem:[%s4 + $0x2ec] sm:$0xf] %v2881
  %3155 = vst [vmem:[%s4 + $0x2f0] sm:$0xf] %v2882
  %3156 = vst [vmem:[%s4 + $0x2f4] sm:$0xf] %v2883
  %3157 = vst [vmem:[%s4 + $0x2f8] sm:$0xf] %v2884
  %3158 = vst [vmem:[%s4 + $0x2fc] sm:$0xf] %v2885
  %3159 = vst [vmem:[%s4 + $0x300] sm:$0xf] %v2886
  %3160 = vst [vmem:[%s4 + $0x304] sm:$0xf] %v2887
  %3161 = vst [vmem:[%s4 + $0x308] sm:$0xf] %v2888
  %3162 = vst [vmem:[%s4 + $0x30c] sm:$0xf] %v2889
  %3163 = vst [vmem:[%s4 + $0x310] sm:$0xf] %v2890
  %3164 = vst [vmem:[%s4 + $0x314] sm:$0xf] %v2891
  %3165 = vst [vmem:[%s4 + $0x318] sm:$0xf] %v2892
  %3166 = vst [vmem:[%s4 + $0x31c] sm:$0xf] %v2893
  %3167 = vst [vmem:[%s4 + $0x320] sm:$0xf] %v2894
  %3168 = vst [vmem:[%s4 + $0x324] sm:$0xf] %v2895
  %3169 = vst [vmem:[%s4 + $0x328] sm:$0xf] %v2896
  %3170 = vst [vmem:[%s4 + $0x32c] sm:$0xf] %v2897
  %3171 = vst [vmem:[%s4 + $0x330] sm:$0xf] %v2898
  %3172 = vst [vmem:[%s4 + $0x334] sm:$0xf] %v2899
  %3173 = vst [vmem:[%s4 + $0x338] sm:$0xf] %v2900
  %3174 = vst [vmem:[%s4 + $0x33c] sm:$0xf] %v2901
  %3175 = vst [vmem:[%s4 + $0x340] sm:$0xf] %v2902
  %3176 = vst [vmem:[%s4 + $0x344] sm:$0xf] %v2903
  %3177 = vst [vmem:[%s4 + $0x348] sm:$0xf] %v2904
  %3178 = vst [vmem:[%s4 + $0x34c] sm:$0xf] %v2905
  %3179 = vst [vmem:[%s4 + $0x350] sm:$0xf] %v2906
  %3180 = vst [vmem:[%s4 + $0x354] sm:$0xf] %v2907
  %3181 = vst [vmem:[%s4 + $0x358] sm:$0xf] %v2908
  %3182 = vst [vmem:[%s4 + $0x35c] sm:$0xf] %v2909
  %3183 = vst [vmem:[%s4 + $0x360] sm:$0xf] %v2910
  %3184 = vst [vmem:[%s4 + $0x364] sm:$0xf] %v2911
  %3185 = vst [vmem:[%s4 + $0x368] sm:$0xf] %v2912
  %3186 = vst [vmem:[%s4 + $0x36c] sm:$0xf] %v2913
  %3187 = vst [vmem:[%s4 + $0x370] sm:$0xf] %v2914
  %3188 = vst [vmem:[%s4 + $0x374] sm:$0xf] %v2915
  %3189 = vst [vmem:[%s4 + $0x378] sm:$0xf] %v2916
  %3190 = vst [vmem:[%s4 + $0x37c] sm:$0xf] %v2917
  %3191 = vst [vmem:[%s4 + $0x380] sm:$0xf] %v2918
  %3192 = vst [vmem:[%s4 + $0x384] sm:$0xf] %v2919
  %3193 = vst [vmem:[%s4 + $0x388] sm:$0xf] %v2920
  %3194 = vst [vmem:[%s4 + $0x38c] sm:$0xf] %v2921
  %3195 = vst [vmem:[%s4 + $0x390] sm:$0xf] %v2922
  %3196 = vst [vmem:[%s4 + $0x394] sm:$0xf] %v2923
  %3197 = vst [vmem:[%s4 + $0x398] sm:$0xf] %v2924
  %3198 = vst [vmem:[%s4 + $0x39c] sm:$0xf] %v2925
  %3199 = vst [vmem:[%s4 + $0x3a0] sm:$0xf] %v2926
  %3200 = vst [vmem:[%s4 + $0x3a4] sm:$0xf] %v2927
  %3201 = vst [vmem:[%s4 + $0x3a8] sm:$0xf] %v2928
  %3202 = vst [vmem:[%s4 + $0x3ac] sm:$0xf] %v2929
  %3203 = vst [vmem:[%s4 + $0x3b0] sm:$0xf] %v2930
  %3204 = vst [vmem:[%s4 + $0x3b4] sm:$0xf] %v2931
  %3205 = vst [vmem:[%s4 + $0x3b8] sm:$0xf] %v2932
  %3206 = vst [vmem:[%s4 + $0x3bc] sm:$0xf] %v2933
  %3207 = vst [vmem:[%s4 + $0x3c0] sm:$0xf] %v2934
  %3208 = vst [vmem:[%s4 + $0x3c4] sm:$0xf] %v2935
  %3209 = vst [vmem:[%s4 + $0x3c8] sm:$0xf] %v2936
  %3210 = vst [vmem:[%s4 + $0x3cc] sm:$0xf] %v2937
  %3211 = vst [vmem:[%s4 + $0x3d0] sm:$0xf] %v2938
  %3212 = vst [vmem:[%s4 + $0x3d4] sm:$0xf] %v2939
  %3213 = vst [vmem:[%s4 + $0x3d8] sm:$0xf] %v2940
  %3214 = vst [vmem:[%s4 + $0x3dc] sm:$0xf] %v2941
  %3215 = vst [vmem:[%s4 + $0x3e0] sm:$0xf] %v2942
  %3216 = vst [vmem:[%s4 + $0x3e4] sm:$0xf] %v2943
  %3217 = vst [vmem:[%s4 + $0x3e8] sm:$0xf] %v2944
  %3218 = vst [vmem:[%s4 + $0x3ec] sm:$0xf] %v2945
  %3219 = vst [vmem:[%s4 + $0x3f0] sm:$0xf] %v2946
  %3220 = vst [vmem:[%s4 + $0x3f4] sm:$0xf] %v2947
  %3221 = vst [vmem:[%s4 + $0x3f8] sm:$0xf] %v2948
  %3222 = vst [vmem:[%s4 + $0x3fc] sm:$0xf] %v2949
  %3223 = vst [vmem:[%s4 + $0x400] sm:$0xf] %v2950
  %3224 = vst [vmem:[%s4 + $0x404] sm:$0xf] %v2951
  %3225 = vst [vmem:[%s4 + $0x408] sm:$0xf] %v2952
  %3226 = vst [vmem:[%s4 + $0x40c] sm:$0xf] %v2953
  %3227 = vst [vmem:[%s4 + $0x410] sm:$0xf] %v2954
  %3228 = vst [vmem:[%s4 + $0x414] sm:$0xf] %v2955
  %3229 = vst [vmem:[%s4 + $0x418] sm:$0xf] %v2956
  %3230 = vst [vmem:[%s4 + $0x41c] sm:$0xf] %v2957
  %3231 = vst [vmem:[%s4 + $0x420] sm:$0xf] %v2958
  %3232 = vst [vmem:[%s4 + $0x424] sm:$0xf] %v2959
  %3233 = vst [vmem:[%s4 + $0x428] sm:$0xf] %v2960
  %3234 = vst [vmem:[%s4 + $0x42c] sm:$0xf] %v2961
  %3235 = vst [vmem:[%s4 + $0x430] sm:$0xf] %v2962
  %3236 = vst [vmem:[%s4 + $0x434] sm:$0xf] %v2963
  %3237 = vst [vmem:[%s4 + $0x438] sm:$0xf] %v2964
  %3238 = vst [vmem:[%s4 + $0x43c] sm:$0xf] %v2965
  %3239 = vst [vmem:[%s4 + $0x440] sm:$0xf] %v2966
  // Predicated region
  $region18: #{generator_forward.9} parent=0 // pred_check
    _
  $region19: #{generator_forward.9} parent=0 // pred_check_branch
    %3241 = sbr.rel (0) target = $region21
  $region20: #{generator_forward.9} parent=0 // pred_region
    _
  $region21: #{generator_forward.9} parent=0 // pred_fallthru
    _
  // Predicated region
  $region22: #{generator_forward.9} parent=0 // pred_check
    _
  $region23: #{generator_forward.9} parent=0 // pred_check_branch
    %3243 = sbr.rel (0) target = $region25
  $region24: #{generator_forward.9} parent=0 // pred_region
    _
  $region25: #{generator_forward.9} parent=0 // pred_fallthru
    _

</llo_original>
